<compile_context>
chip_gen: v7x
topology: tpu7x:2x2x1
jax: 0.10.0
libtpu: 0.0.40
codegen_flags: <defaults>
</compile_context>

<pallas_src>
import jax
import jax.numpy as jnp
from jax.experimental import pallas as pl
from jax.experimental.pallas import tpu as pltpu

BN_EPS = 1e-5


def _round_up(n, m):
    return ((n + m - 1) // m) * m


# ----------------------------------------------------------------------------
# Fused kernel (one batch tile per grid step):
#   conv1+bn1+relu+pool -> conv2+bn2+relu+pool -> conv3+bn3+relu
#   -> flatten -> fc1+relu -> fc2       (all in VMEM / vregs)
# ----------------------------------------------------------------------------
def fused_forward_kernel(x_ref, w1_ref, b1_ref, w2p_ref, b2p_ref,
                         w3c_ref, b3_ref, wf1_ref, bf1_ref, wf2_ref, bf2_ref,
                         o_ref):
    relu = lambda v: jnp.maximum(v, 0.0)

    # ---- conv1: Conv1d(1, 256, k=3, pad=1) [BN folded] + ReLU + MaxPool(2) ----
    # Cin == 1 -> each tap is an exact-f32 VPU broadcast outer product.
    x = x_ref[...]                                   # (TB, 4) f32
    w1 = w1_ref[...]                                 # (3, 256) f32 (BN-folded)
    b1 = b1_ref[...]                                 # (1, 256)
    wl, wc, wr = w1[0:1, :], w1[1:2, :], w1[2:3, :]
    x0, x1, x2, x3 = x[:, 0:1], x[:, 1:2], x[:, 2:3], x[:, 3:4]
    h0 = x0 * wc + x1 * wr                           # left edge (zero pad)
    h1 = x0 * wl + x1 * wc + x2 * wr
    h2 = x1 * wl + x2 * wc + x3 * wr
    h3 = x2 * wl + x3 * wc                           # right edge (zero pad)
    # ReLU is monotone -> max-then-relu == relu-then-max; bias added once.
    p0 = relu(jnp.maximum(h0, h1) + b1)              # pooled pos 0  (TB, 256)
    p1 = relu(jnp.maximum(h2, h3) + b1)              # pooled pos 1  (TB, 256)

    # ---- conv2: Conv1d(256, 512) [BN folded] + ReLU + MaxPool(2) ----
    # Packed as ONE matmul: [p0|p1] @ [[w2c, w2l], [w2r, w2c]] + [b2|b2].
    pcat = jnp.concatenate([p0, p1], axis=-1).astype(jnp.bfloat16)      # (TB, 512)
    q = jnp.dot(pcat, w2p_ref[...],
                preferred_element_type=jnp.float32) + b2p_ref[...]      # (TB, 1024)
    r = relu(jnp.maximum(q[:, :512], q[:, 512:]))                       # (TB, 512)

    # ---- conv3: Conv1d(512, 1024) [BN folded] + ReLU ----
    # Input length is 1 -> only the center tap multiplies real data
    # (side taps only see zero padding; dropped host-side).
    s = relu(jnp.dot(r.astype(jnp.bfloat16), w3c_ref[...],
                     preferred_element_type=jnp.float32) + b3_ref[...])  # (TB, 1024)

    # ---- flatten: feature length is 1 -> s already is (TB, 1024) ----

    # ---- fc1 + ReLU ----
    t = relu(jnp.dot(s.astype(jnp.bfloat16), wf1_ref[...],
                     preferred_element_type=jnp.float32) + bf1_ref[...])  # (TB, 2048)

    # ---- fc2 (output padded to 128 lanes; sliced to 120 in the wrapper) ----
    o_ref[...] = (jnp.dot(t.astype(jnp.bfloat16), wf2_ref[...],
                          preferred_element_type=jnp.float32)
                  + bf2_ref[...]).astype(o_ref.dtype)


# ----------------------------------------------------------------------------
# Host-side parameter prep: fold BN into conv weights, cast big weights to bf16,
# pack conv2 into one (512, 1024) matrix, drop conv3's dead side taps,
# pad fc2 to 128 output lanes.
# ----------------------------------------------------------------------------
def prepare_params(params):
    def fold(p):
        w, b, g, beta, mu, var = p
        scale = g * jax.lax.rsqrt(var + BN_EPS)          # (1, Cout)
        return w * scale, (b - mu) * scale + beta

    w1, b1 = fold(params["c1"])                          # (3,1,256), (1,256)
    w1 = w1[:, 0, :].astype(jnp.float32)                 # (3,256) tiny -> keep f32

    w2, b2 = fold(params["c2"])                          # (3,256,512), (1,512)
    w2l, w2c, w2r = w2[0], w2[1], w2[2]
    w2p = jnp.concatenate(                               # (512, 1024) packed conv2
        [jnp.concatenate([w2c, w2l], axis=1),
         jnp.concatenate([w2r, w2c], axis=1)], axis=0).astype(jnp.bfloat16)
    b2p = jnp.concatenate([b2, b2], axis=1)              # (1, 1024)

    w3, b3 = fold(params["c3"])                          # (3,512,1024), (1,1024)
    w3c = w3[1].astype(jnp.bfloat16)                     # only center tap is live (L=1)

    wf1, bf1 = params["fc1"]                             # (1024,2048), (1,2048)
    wf2, bf2 = params["fc2"]                             # (2048,120),  (1,120)
    wf2p = jnp.pad(wf2, ((0, 0), (0, 128 - wf2.shape[1]))).astype(jnp.bfloat16)
    bf2p = jnp.pad(bf2, ((0, 0), (0, 128 - bf2.shape[1])))

    return (w1, b1, w2p, b2p, w3c, b3,
            wf1.astype(jnp.bfloat16), bf1, wf2p, bf2p)


def forward_pallas(x_nlc, prep, *, tb=256):
    B, L, Cin = x_nlc.shape
    assert (L, Cin) == (4, 1), "fc1(1024, .) after flatten forces (L, Cin) == (4, 1)"
    x2d = x_nlc[:, :, 0].astype(jnp.float32)             # (B, 4)

    # Batch tile: full 256-row MXU tiles at realistic B; minimal padding when tiny.
    TB = tb if B >= tb else _round_up(B, 8)
    B_pad = _round_up(B, TB)
    if B_pad != B:
        x2d = jnp.pad(x2d, ((0, B_pad - B), (0, 0)))
    grid = (B_pad // TB,)

    def const_spec(a):
        n = a.ndim
        return pl.BlockSpec(a.shape, lambda i: (0,) * n)  # weight: VMEM-resident

    in_specs = ([pl.BlockSpec((TB, 4), lambda i: (i, 0))]
                + [const_spec(a) for a in prep])
    out_specs = pl.BlockSpec((TB, 128), lambda i: (i, 0))

    flops = 2 * B_pad * (512 * 1024        # conv2 packed
                         + 512 * 1024      # conv3 center tap
                         + 1024 * 2048     # fc1
                         + 2048 * 128)     # fc2
    flops += B_pad * 30 * 256              # conv1 VPU work (approx)
    bytes_accessed = (int(x2d.size) * 4
                      + sum(int(a.size) * a.dtype.itemsize for a in prep)
                      + B_pad * 128 * 4)

    out_pad = pl.pallas_call(
        fused_forward_kernel,
        out_shape=jax.ShapeDtypeStruct((B_pad, 128), jnp.float32),
        grid=grid,
        in_specs=in_specs,
        out_specs=out_specs,
        compiler_params=pltpu.CompilerParams(
            dimension_semantics=("parallel",),
            vmem_limit_bytes=48 * 1024 * 1024),
        cost_estimate=pl.CostEstimate(flops=flops, transcendentals=0,
                                      bytes_accessed=bytes_accessed),
    )(x2d, *prep)
    return out_pad[:B, :120]


# ----------------------------------------------------------------------------
# Pure-JAX f32 reference (unfolded BN, full conv taps) for correctness check
# ----------------------------------------------------------------------------
def forward_ref(x_nlc, params):
    def block(x, p, pool):
        w, b, g, be, mu, var = p
        xpad = jnp.pad(x, ((0, 0), (1, 1), (0, 0)))
        L = xpad.shape[1] - 2
        acc = sum(jnp.einsum("blc,cd->bld", xpad[:, k:k + L, :], w[k])
                  for k in range(3))
        acc = acc + b
        acc = (acc - mu) * (g / jnp.sqrt(var + BN_EPS)) + be
        acc = jnp.maximum(acc, 0.0)
        if pool:
            acc = jnp.maximum(acc[:, 0::2, :], acc[:, 1::2, :])
        return acc

    h = block(x_nlc, params["c1"], True)
    h = block(h, params["c2"], True)
    h = block(h, params["c3"], False)
    h = h.reshape(h.shape[0], -1)
    w1, b1 = params["fc1"]
    h = jnp.maximum(h @ w1 + b1, 0.0)
    w2, b2 = params["fc2"]
    return h @ w2 + b2


# ----------------------------------------------------------------------------
# Deterministic parameter init (synthetic; shapes match the nn.Module)
# ----------------------------------------------------------------------------
def init_params(key):
    ks = iter(jax.random.split(key, 32))

    def conv_p(cin, cout):
        w = jax.random.normal(next(ks), (3, cin, cout), jnp.float32) / jnp.sqrt(3.0 * cin)
        b = 0.05 * jax.random.normal(next(ks), (1, cout), jnp.float32)
        g = 1.0 + 0.1 * jax.random.normal(next(ks), (1, cout), jnp.float32)
        be = 0.1 * jax.random.normal(next(ks), (1, cout), jnp.float32)
        mu = 0.1 * jax.random.normal(next(ks), (1, cout), jnp.float32)
        var = 1.0 + 0.1 * jnp.abs(jax.random.normal(next(ks), (1, cout), jnp.float32))
        return (w, b, g, be, mu, var)

    def lin_p(din, dout):
        w = jax.random.normal(next(ks), (din, dout), jnp.float32) / jnp.sqrt(float(din))
        b = 0.05 * jax.random.normal(next(ks), (1, dout), jnp.float32)
        return (w, b)

    return dict(c1=conv_p(1, 256), c2=conv_p(256, 512), c3=conv_p(512, 1024),
                fc1=lin_p(1024, 2048), fc2=lin_p(2048, 120))


if __name__ == "__main__":
    key = jax.random.PRNGKey(0)
    k_x, k_p = jax.random.split(key)

    B, L = 2, 4                          # L = 4 is forced by fc1(1024, ...) after flatten
    x_ncw = jax.random.normal(k_x, (B, 1, L), jnp.float32)   # PyTorch-style (N, C, W)
    x_nlc = jnp.transpose(x_ncw, (0, 2, 1))                  # kernel layout (B, L, C)

    params = init_params(k_p)
    prep = prepare_params(params)        # fold BN, bf16 weights, pack conv2, pad fc2

    out = jax.block_until_ready(forward_pallas(x_nlc, prep))
    assert out.shape == (B, 120), out.shape

    ref = jax.block_until_ready(forward_ref(x_nlc, params))
    max_err = float(jnp.max(jnp.abs(out - ref)))
    # bf16 weights vs f32 reference -> widened tolerance
    assert jnp.allclose(out, ref, atol=3e-2, rtol=3e-2), max_err

    print("KERNEL_OK")
</pallas_src>

<mosaic_0001>
module attributes {stable_mosaic.version = 11 : i64} {
  func.func @fused_forward_kernel(%arg0: i32, %arg1: memref<8x4xf32, #tpu.memory_space<vmem>>, %arg2: memref<3x256xf32, #tpu.memory_space<vmem>>, %arg3: memref<1x256xf32, #tpu.memory_space<vmem>>, %arg4: memref<512x1024xbf16, #tpu.memory_space<vmem>>, %arg5: memref<1x1024xf32, #tpu.memory_space<vmem>>, %arg6: memref<512x1024xbf16, #tpu.memory_space<vmem>>, %arg7: memref<1x1024xf32, #tpu.memory_space<vmem>>, %arg8: memref<1024x2048xbf16, #tpu.memory_space<vmem>>, %arg9: memref<1x2048xf32, #tpu.memory_space<vmem>>, %arg10: memref<2048x128xbf16, #tpu.memory_space<vmem>>, %arg11: memref<1x128xf32, #tpu.memory_space<vmem>>, %arg12: memref<8x128xf32, #tpu.memory_space<vmem>>) attributes {dimension_semantics = [#tpu.dimension_semantics<parallel>], iteration_bounds = array<i64: 1>, scalar_prefetch = 0 : i64, scratch_operands = 0 : i64, tpu.core_type = #tpu.core_type<tc>, window_params = [{transform_indices = @transform_0, window_bounds = array<i64: 8, 4>}, {pipeline_mode = #tpu.pipeline_mode<synchronous>, transform_indices = @transform_1, window_bounds = array<i64: 3, 256>}, {pipeline_mode = #tpu.pipeline_mode<synchronous>, transform_indices = @transform_2, window_bounds = array<i64: 1, 256>}, {pipeline_mode = #tpu.pipeline_mode<synchronous>, transform_indices = @transform_3, window_bounds = array<i64: 512, 1024>}, {pipeline_mode = #tpu.pipeline_mode<synchronous>, transform_indices = @transform_4, window_bounds = array<i64: 1, 1024>}, {pipeline_mode = #tpu.pipeline_mode<synchronous>, transform_indices = @transform_5, window_bounds = array<i64: 512, 1024>}, {pipeline_mode = #tpu.pipeline_mode<synchronous>, transform_indices = @transform_6, window_bounds = array<i64: 1, 1024>}, {pipeline_mode = #tpu.pipeline_mode<synchronous>, transform_indices = @transform_7, window_bounds = array<i64: 1024, 2048>}, {pipeline_mode = #tpu.pipeline_mode<synchronous>, transform_indices = @transform_8, window_bounds = array<i64: 1, 2048>}, {pipeline_mode = #tpu.pipeline_mode<synchronous>, transform_indices = @transform_9, window_bounds = array<i64: 2048, 128>}, {pipeline_mode = #tpu.pipeline_mode<synchronous>, transform_indices = @transform_10, window_bounds = array<i64: 1, 128>}, {transform_indices = @transform_11, window_bounds = array<i64: 8, 128>}]} {
    %c0 = arith.constant 0 : index
    %c0_0 = arith.constant 0 : index
    %0 = vector.load %arg1[%c0, %c0_0] : memref<8x4xf32, #tpu.memory_space<vmem>>, vector<8x4xf32>
    %c0_1 = arith.constant 0 : index
    %c0_2 = arith.constant 0 : index
    %1 = vector.load %arg2[%c0_1, %c0_2] : memref<3x256xf32, #tpu.memory_space<vmem>>, vector<3x256xf32>
    %c0_3 = arith.constant 0 : index
    %c0_4 = arith.constant 0 : index
    %2 = vector.load %arg3[%c0_3, %c0_4] : memref<1x256xf32, #tpu.memory_space<vmem>>, vector<1x256xf32>
    %3 = vector.extract_strided_slice %1 {offsets = [0, 0], sizes = [1, 256], strides = [1, 1]} : vector<3x256xf32> to vector<1x256xf32>
    %4 = vector.extract_strided_slice %1 {offsets = [1, 0], sizes = [1, 256], strides = [1, 1]} : vector<3x256xf32> to vector<1x256xf32>
    %5 = vector.extract_strided_slice %1 {offsets = [2, 0], sizes = [1, 256], strides = [1, 1]} : vector<3x256xf32> to vector<1x256xf32>
    %6 = vector.extract_strided_slice %0 {offsets = [0, 0], sizes = [8, 1], strides = [1, 1]} : vector<8x4xf32> to vector<8x1xf32>
    %7 = vector.extract_strided_slice %0 {offsets = [0, 1], sizes = [8, 1], strides = [1, 1]} : vector<8x4xf32> to vector<8x1xf32>
    %8 = vector.extract_strided_slice %0 {offsets = [0, 2], sizes = [8, 1], strides = [1, 1]} : vector<8x4xf32> to vector<8x1xf32>
    %9 = vector.extract_strided_slice %0 {offsets = [0, 3], sizes = [8, 1], strides = [1, 1]} : vector<8x4xf32> to vector<8x1xf32>
    %10 = vector.broadcast %6 : vector<8x1xf32> to vector<8x256xf32>
    %11 = vector.broadcast %4 : vector<1x256xf32> to vector<8x256xf32>
    %12 = arith.mulf %10, %11 : vector<8x256xf32>
    %13 = vector.broadcast %7 : vector<8x1xf32> to vector<8x256xf32>
    %14 = vector.broadcast %5 : vector<1x256xf32> to vector<8x256xf32>
    %15 = arith.mulf %13, %14 : vector<8x256xf32>
    %16 = arith.addf %12, %15 : vector<8x256xf32>
    %17 = vector.broadcast %6 : vector<8x1xf32> to vector<8x256xf32>
    %18 = vector.broadcast %3 : vector<1x256xf32> to vector<8x256xf32>
    %19 = arith.mulf %17, %18 : vector<8x256xf32>
    %20 = vector.broadcast %7 : vector<8x1xf32> to vector<8x256xf32>
    %21 = vector.broadcast %4 : vector<1x256xf32> to vector<8x256xf32>
    %22 = arith.mulf %20, %21 : vector<8x256xf32>
    %23 = arith.addf %19, %22 : vector<8x256xf32>
    %24 = vector.broadcast %8 : vector<8x1xf32> to vector<8x256xf32>
    %25 = vector.broadcast %5 : vector<1x256xf32> to vector<8x256xf32>
    %26 = arith.mulf %24, %25 : vector<8x256xf32>
    %27 = arith.addf %23, %26 : vector<8x256xf32>
    %28 = vector.broadcast %7 : vector<8x1xf32> to vector<8x256xf32>
    %29 = vector.broadcast %3 : vector<1x256xf32> to vector<8x256xf32>
    %30 = arith.mulf %28, %29 : vector<8x256xf32>
    %31 = vector.broadcast %8 : vector<8x1xf32> to vector<8x256xf32>
    %32 = vector.broadcast %4 : vector<1x256xf32> to vector<8x256xf32>
    %33 = arith.mulf %31, %32 : vector<8x256xf32>
    %34 = arith.addf %30, %33 : vector<8x256xf32>
    %35 = vector.broadcast %9 : vector<8x1xf32> to vector<8x256xf32>
    %36 = vector.broadcast %5 : vector<1x256xf32> to vector<8x256xf32>
    %37 = arith.mulf %35, %36 : vector<8x256xf32>
    %38 = arith.addf %34, %37 : vector<8x256xf32>
    %39 = vector.broadcast %8 : vector<8x1xf32> to vector<8x256xf32>
    %40 = vector.broadcast %3 : vector<1x256xf32> to vector<8x256xf32>
    %41 = arith.mulf %39, %40 : vector<8x256xf32>
    %42 = vector.broadcast %9 : vector<8x1xf32> to vector<8x256xf32>
    %43 = vector.broadcast %4 : vector<1x256xf32> to vector<8x256xf32>
    %44 = arith.mulf %42, %43 : vector<8x256xf32>
    %45 = arith.addf %41, %44 : vector<8x256xf32>
    %46 = arith.maximumf %16, %27 : vector<8x256xf32>
    %47 = vector.broadcast %2 : vector<1x256xf32> to vector<8x256xf32>
    %48 = arith.addf %46, %47 : vector<8x256xf32>
    %cst = arith.constant 0.000000e+00 : f32
    %49 = vector.broadcast %cst : f32 to vector<8x256xf32>
    %50 = arith.maximumf %48, %49 : vector<8x256xf32>
    %51 = arith.maximumf %38, %45 : vector<8x256xf32>
    %52 = vector.broadcast %2 : vector<1x256xf32> to vector<8x256xf32>
    %53 = arith.addf %51, %52 : vector<8x256xf32>
    %cst_5 = arith.constant 0.000000e+00 : f32
    %54 = vector.broadcast %cst_5 : f32 to vector<8x256xf32>
    %55 = arith.maximumf %53, %54 : vector<8x256xf32>
    %56 = tpu.concatenate %50, %55 in 1 : vector<8x256xf32>, vector<8x256xf32> -> vector<8x512xf32>
    %57 = arith.truncf %56 : vector<8x512xf32> to vector<8x512xbf16>
    %c0_6 = arith.constant 0 : index
    %c0_7 = arith.constant 0 : index
    %58 = vector.load %arg4[%c0_6, %c0_7] : memref<512x1024xbf16, #tpu.memory_space<vmem>>, vector<512x1024xbf16>
    %cst_8 = arith.constant dense<0.000000e+00> : vector<8x1024xf32>
    %59 = tpu.matmul %57, %58, %cst_8 {dimension_numbers = #tpu.dot_dimension_numbers<[1], [0], [0], [1], [0, 0, 1, 1], [], []>} : vector<8x512xbf16>, vector<512x1024xbf16>, vector<8x1024xf32> -> vector<8x1024xf32>
    %c0_9 = arith.constant 0 : index
    %c0_10 = arith.constant 0 : index
    %60 = vector.load %arg5[%c0_9, %c0_10] : memref<1x1024xf32, #tpu.memory_space<vmem>>, vector<1x1024xf32>
    %61 = vector.broadcast %60 : vector<1x1024xf32> to vector<8x1024xf32>
    %62 = arith.addf %59, %61 : vector<8x1024xf32>
    %63 = vector.extract_strided_slice %62 {offsets = [0, 0], sizes = [8, 512], strides = [1, 1]} : vector<8x1024xf32> to vector<8x512xf32>
    %64 = vector.extract_strided_slice %62 {offsets = [0, 512], sizes = [8, 512], strides = [1, 1]} : vector<8x1024xf32> to vector<8x512xf32>
    %65 = arith.maximumf %63, %64 : vector<8x512xf32>
    %cst_11 = arith.constant 0.000000e+00 : f32
    %66 = vector.broadcast %cst_11 : f32 to vector<8x512xf32>
    %67 = arith.maximumf %65, %66 : vector<8x512xf32>
    %68 = arith.truncf %67 : vector<8x512xf32> to vector<8x512xbf16>
    %c0_12 = arith.constant 0 : index
    %c0_13 = arith.constant 0 : index
    %69 = vector.load %arg6[%c0_12, %c0_13] : memref<512x1024xbf16, #tpu.memory_space<vmem>>, vector<512x1024xbf16>
    %cst_14 = arith.constant dense<0.000000e+00> : vector<8x1024xf32>
    %70 = tpu.matmul %68, %69, %cst_14 {dimension_numbers = #tpu.dot_dimension_numbers<[1], [0], [0], [1], [0, 0, 1, 1], [], []>} : vector<8x512xbf16>, vector<512x1024xbf16>, vector<8x1024xf32> -> vector<8x1024xf32>
    %c0_15 = arith.constant 0 : index
    %c0_16 = arith.constant 0 : index
    %71 = vector.load %arg7[%c0_15, %c0_16] : memref<1x1024xf32, #tpu.memory_space<vmem>>, vector<1x1024xf32>
    %72 = vector.broadcast %71 : vector<1x1024xf32> to vector<8x1024xf32>
    %73 = arith.addf %70, %72 : vector<8x1024xf32>
    %cst_17 = arith.constant 0.000000e+00 : f32
    %74 = vector.broadcast %cst_17 : f32 to vector<8x1024xf32>
    %75 = arith.maximumf %73, %74 : vector<8x1024xf32>
    %76 = arith.truncf %75 : vector<8x1024xf32> to vector<8x1024xbf16>
    %c0_18 = arith.constant 0 : index
    %c0_19 = arith.constant 0 : index
    %77 = vector.load %arg8[%c0_18, %c0_19] : memref<1024x2048xbf16, #tpu.memory_space<vmem>>, vector<1024x2048xbf16>
    %cst_20 = arith.constant dense<0.000000e+00> : vector<8x2048xf32>
    %78 = tpu.matmul %76, %77, %cst_20 {dimension_numbers = #tpu.dot_dimension_numbers<[1], [0], [0], [1], [0, 0, 1, 1], [], []>} : vector<8x1024xbf16>, vector<1024x2048xbf16>, vector<8x2048xf32> -> vector<8x2048xf32>
    %c0_21 = arith.constant 0 : index
    %c0_22 = arith.constant 0 : index
    %79 = vector.load %arg9[%c0_21, %c0_22] : memref<1x2048xf32, #tpu.memory_space<vmem>>, vector<1x2048xf32>
    %80 = vector.broadcast %79 : vector<1x2048xf32> to vector<8x2048xf32>
    %81 = arith.addf %78, %80 : vector<8x2048xf32>
    %cst_23 = arith.constant 0.000000e+00 : f32
    %82 = vector.broadcast %cst_23 : f32 to vector<8x2048xf32>
    %83 = arith.maximumf %81, %82 : vector<8x2048xf32>
    %84 = arith.truncf %83 : vector<8x2048xf32> to vector<8x2048xbf16>
    %c0_24 = arith.constant 0 : index
    %c0_25 = arith.constant 0 : index
    %85 = vector.load %arg10[%c0_24, %c0_25] : memref<2048x128xbf16, #tpu.memory_space<vmem>>, vector<2048x128xbf16>
    %cst_26 = arith.constant dense<0.000000e+00> : vector<8x128xf32>
    %86 = tpu.matmul %84, %85, %cst_26 {dimension_numbers = #tpu.dot_dimension_numbers<[1], [0], [0], [1], [0, 0, 1, 1], [], []>} : vector<8x2048xbf16>, vector<2048x128xbf16>, vector<8x128xf32> -> vector<8x128xf32>
    %c0_27 = arith.constant 0 : index
    %c0_28 = arith.constant 0 : index
    %87 = vector.load %arg11[%c0_27, %c0_28] : memref<1x128xf32, #tpu.memory_space<vmem>>, vector<1x128xf32>
    %88 = vector.broadcast %87 : vector<1x128xf32> to vector<8x128xf32>
    %89 = arith.addf %86, %88 : vector<8x128xf32>
    %c0_29 = arith.constant 0 : index
    %c0_30 = arith.constant 0 : index
    %90 = vector.load %arg12[%c0_29, %c0_30] : memref<8x128xf32, #tpu.memory_space<vmem>>, vector<8x128xf32>
    tpu.vector_store %arg12[%c0_29, %c0_30], %89 {strides = array<i32>} : memref<8x128xf32, #tpu.memory_space<vmem>>, vector<8x128xf32>,
    return
  }
  func.func @transform_0(%arg0: i32) -> (i32, i32) {
    %c0_i32 = arith.constant 0 : i32
    %c0_i32_0 = arith.constant 0 : i32
    return %arg0, %c0_i32 : i32, i32
  }
  func.func @transform_1(%arg0: i32) -> (i32, i32) {
    %c0_i32 = arith.constant 0 : i32
    %c0_i32_0 = arith.constant 0 : i32
    %c0_i32_1 = arith.constant 0 : i32
    return %c0_i32, %c0_i32_0 : i32, i32
  }
  func.func @transform_2(%arg0: i32) -> (i32, i32) {
    %c0_i32 = arith.constant 0 : i32
    %c0_i32_0 = arith.constant 0 : i32
    %c0_i32_1 = arith.constant 0 : i32
    return %c0_i32, %c0_i32_0 : i32, i32
  }
  func.func @transform_3(%arg0: i32) -> (i32, i32) {
    %c0_i32 = arith.constant 0 : i32
    %c0_i32_0 = arith.constant 0 : i32
    %c0_i32_1 = arith.constant 0 : i32
    return %c0_i32, %c0_i32_0 : i32, i32
  }
  func.func @transform_4(%arg0: i32) -> (i32, i32) {
    %c0_i32 = arith.constant 0 : i32
    %c0_i32_0 = arith.constant 0 : i32
    %c0_i32_1 = arith.constant 0 : i32
    return %c0_i32, %c0_i32_0 : i32, i32
  }
  func.func @transform_5(%arg0: i32) -> (i32, i32) {
    %c0_i32 = arith.constant 0 : i32
    %c0_i32_0 = arith.constant 0 : i32
    %c0_i32_1 = arith.constant 0 : i32
    return %c0_i32, %c0_i32_0 : i32, i32
  }
  func.func @transform_6(%arg0: i32) -> (i32, i32) {
    %c0_i32 = arith.constant 0 : i32
    %c0_i32_0 = arith.constant 0 : i32
    %c0_i32_1 = arith.constant 0 : i32
    return %c0_i32, %c0_i32_0 : i32, i32
  }
  func.func @transform_7(%arg0: i32) -> (i32, i32) {
    %c0_i32 = arith.constant 0 : i32
    %c0_i32_0 = arith.constant 0 : i32
    %c0_i32_1 = arith.constant 0 : i32
    return %c0_i32, %c0_i32_0 : i32, i32
  }
  func.func @transform_8(%arg0: i32) -> (i32, i32) {
    %c0_i32 = arith.constant 0 : i32
    %c0_i32_0 = arith.constant 0 : i32
    %c0_i32_1 = arith.constant 0 : i32
    return %c0_i32, %c0_i32_0 : i32, i32
  }
  func.func @transform_9(%arg0: i32) -> (i32, i32) {
    %c0_i32 = arith.constant 0 : i32
    %c0_i32_0 = arith.constant 0 : i32
    %c0_i32_1 = arith.constant 0 : i32
    return %c0_i32, %c0_i32_0 : i32, i32
  }
  func.func @transform_10(%arg0: i32) -> (i32, i32) {
    %c0_i32 = arith.constant 0 : i32
    %c0_i32_0 = arith.constant 0 : i32
    %c0_i32_1 = arith.constant 0 : i32
    return %c0_i32, %c0_i32_0 : i32, i32
  }
  func.func @transform_11(%arg0: i32) -> (i32, i32) {
    %c0_i32 = arith.constant 0 : i32
    %c0_i32_0 = arith.constant 0 : i32
    return %arg0, %c0_i32 : i32, i32
  }
}

</mosaic_0001>

<llo_original>
// kernel: tpu_custom_call.1
$region0: #{tpu_custom_call.1}
  #allocation0 [shape = 'u32[]', space=smem, size = 0x4, offset = 0x4, fixed_abs, tag = 'smem constant byte address 0x4 - core index']
  #allocation1 [shape = 'u32[144,128]{1,0:T(1,128)}', space=vmem, size = 0x12000, scoped, tag = 'internal scratch']
  %s0 = inlined_call_operand.vmem [shape: f32[8,4], index: 0, kind: input, shape index: {}]
  %s1 = inlined_call_operand.hbm [shape: f32[3,256], index: 1, kind: input, shape index: {}]
  %s2 = inlined_call_operand.hbm [shape: f32[1,256], index: 2, kind: input, shape index: {}]
  %s3 = inlined_call_operand.hbm [shape: bf16[512,1024], index: 3, kind: input, shape index: {}]
  %s4 = inlined_call_operand.hbm [shape: f32[1,1024], index: 4, kind: input, shape index: {}]
  %s5 = inlined_call_operand.hbm [shape: bf16[512,1024], index: 5, kind: input, shape index: {}]
  %s6 = inlined_call_operand.hbm [shape: f32[1,1024], index: 6, kind: input, shape index: {}]
  %s7 = inlined_call_operand.hbm [shape: bf16[1024,2048], index: 7, kind: input, shape index: {}]
  %s8 = inlined_call_operand.hbm [shape: f32[1,2048], index: 8, kind: input, shape index: {}]
  %s9 = inlined_call_operand.hbm [shape: bf16[2048,128], index: 9, kind: input, shape index: {}]
  %s10 = inlined_call_operand.hbm [shape: f32[1,128], index: 10, kind: input, shape index: {}]
  %s11 = inlined_call_operand.hbm [shape: f32[8,128], index: 11, kind: output, shape index: {}]
  %s12 = sld [smem:[#allocation0]]
  $region94: #{tpu_custom_call.1} parent=0
    _
  %s14 = ssub.s32 1, %s12
  %s15 = scalar_select 0, %s14, %s12
  $region1: #{tpu_custom_call.1} parent=0
    #allocation2 [shape = 'u8[4096]{0}', space=vmem, size = 0x1000, scoped, tag = 'input window, operand 1, single buffered']
    #allocation3 [shape = 's32[1]{0}', space=sflag, size = 0x4, scoped, tag = 'scoped memory for tpu_custom_call.1']
    #allocation4 [shape = 's32[1]{0}', space=sflag, size = 0x4, scoped, tag = 'scoped memory for tpu_custom_call.1']
    #allocation5 [shape = 'u8[1024]{0}', space=vmem, size = 0x400, scoped, tag = 'input window, operand 2, single buffered']
    #allocation6 [shape = 's32[1]{0}', space=sflag, size = 0x4, scoped, tag = 'scoped memory for tpu_custom_call.1']
    #allocation7 [shape = 'u8[1048576]{0}', space=vmem, size = 0x100000, scoped, tag = 'input window, operand 3, single buffered']
    #allocation8 [shape = 'u8[4096]{0}', space=vmem, size = 0x1000, scoped, tag = 'input window, operand 4, single buffered']
    #allocation9 [shape = 's32[1]{0}', space=sflag, size = 0x4, scoped, tag = 'scoped memory for tpu_custom_call.1']
    #allocation10 [shape = 'u8[1048576]{0}', space=vmem, size = 0x100000, scoped, tag = 'input window, operand 5, single buffered']
    #allocation11 [shape = 'u8[4096]{0}', space=vmem, size = 0x1000, scoped, tag = 'input window, operand 6, single buffered']
    #allocation12 [shape = 's32[1]{0}', space=sflag, size = 0x4, scoped, tag = 'scoped memory for tpu_custom_call.1']
    #allocation13 [shape = 'u8[4194304]{0}', space=vmem, size = 0x400000, scoped, tag = 'input window, operand 7, single buffered']
    #allocation14 [shape = 'u8[8192]{0}', space=vmem, size = 0x2000, scoped, tag = 'input window, operand 8, single buffered']
    #allocation15 [shape = 's32[1]{0}', space=sflag, size = 0x4, scoped, tag = 'scoped memory for tpu_custom_call.1']
    #allocation16 [shape = 'u8[524288]{0}', space=vmem, size = 0x80000, scoped, tag = 'input window, operand 9, single buffered']
    #allocation17 [shape = 'u8[512]{0}', space=vmem, size = 0x400, scoped, tag = 'input window, operand 10, single buffered']
    #allocation18 [shape = 's32[1]{0}', space=sflag, size = 0x4, scoped, tag = 'scoped memory for tpu_custom_call.1']
    #allocation19 [shape = 'u8[4096]{0}', space=vmem, size = 0x1000, scoped, tag = 'output window, operand 0, single buffered']
    %16 = vsyncpa [#allocation3], 0
    %17 = vsyncpa [#allocation6], 0
    %18 = vsyncpa [#allocation9], 0
    %19 = vsyncpa [#allocation12], 0
    %20 = vsyncpa [#allocation15], 0
    %21 = vsyncpa [#allocation18], 0
    %22 = vsyncpa [#allocation4], 0
    // Predicated region
    $region2: #{tpu_custom_call.1} parent=1 // pred_check
      _
    $region3: #{tpu_custom_call.1} parent=1 // pred_check_branch
      %24 = sbr.rel (0) target = $region5
    $region4: #{tpu_custom_call.1} parent=1 // pred_region
      _
    $region5: #{tpu_custom_call.1} parent=1 // pred_fallthru
      _
    // Predicated region
    $region6: #{tpu_custom_call.1} parent=1 // pred_check
      _
    $region7: #{tpu_custom_call.1} parent=1 // pred_check_branch
      %26 = sbr.rel (0) target = $region9
    $region8: #{tpu_custom_call.1} parent=1 // pred_region
      %s28 = ssub.s32 128, 128
      %29 = vsyncadd [#allocation3], %s28
      %s31 = sshll.u32 [#allocation2], 4
      %s32 = int_to_ptr.vmem [resolvable:$true] %s31
      %34 = dma.hbm_to_vmem [thread:$0]  %s1, 128, %s32, [#allocation3]
    $region9: #{tpu_custom_call.1} parent=1 // pred_fallthru
      _
    // Predicated region
    $region10: #{tpu_custom_call.1} parent=1 // pred_check
      _
    $region11: #{tpu_custom_call.1} parent=1 // pred_check_branch
      %36 = sbr.rel (0) target = $region13
    $region12: #{tpu_custom_call.1} parent=1 // pred_region
      %s38 = ssub.s32 32, 32
      %39 = vsyncadd [#allocation6], %s38
      %s41 = sshll.u32 [#allocation5], 4
      %s42 = int_to_ptr.vmem [resolvable:$true] %s41
      %44 = dma.hbm_to_vmem [thread:$0]  %s2, 32, %s42, [#allocation6]
    $region13: #{tpu_custom_call.1} parent=1 // pred_fallthru
      _
    // Predicated region
    $region14: #{tpu_custom_call.1} parent=1 // pred_check
      _
    $region15: #{tpu_custom_call.1} parent=1 // pred_check_branch
      %46 = sbr.rel (0) target = $region17
    $region16: #{tpu_custom_call.1} parent=1 // pred_region
      %s48 = ssub.s32 32768, 32768
      %49 = vsyncadd [#allocation6], %s48
      %s50 = sshll.u32 [#allocation7], 4
      %s51 = int_to_ptr.vmem [resolvable:$true] %s50
      %56 = dma.hbm_to_vmem [thread:$0]  %s3, 32768, %s51, [#allocation6], 512, 512, 32
    $region17: #{tpu_custom_call.1} parent=1 // pred_fallthru
      _
    // Predicated region
    $region18: #{tpu_custom_call.1} parent=1 // pred_check
      _
    $region19: #{tpu_custom_call.1} parent=1 // pred_check_branch
      %58 = sbr.rel (0) target = $region21
    $region20: #{tpu_custom_call.1} parent=1 // pred_region
      %s60 = ssub.s32 128, 128
      %61 = vsyncadd [#allocation9], %s60
      %s63 = sshll.u32 [#allocation8], 4
      %s64 = int_to_ptr.vmem [resolvable:$true] %s63
      %66 = dma.hbm_to_vmem [thread:$0]  %s4, 128, %s64, [#allocation9]
    $region21: #{tpu_custom_call.1} parent=1 // pred_fallthru
      _
    // Predicated region
    $region22: #{tpu_custom_call.1} parent=1 // pred_check
      _
    $region23: #{tpu_custom_call.1} parent=1 // pred_check_branch
      %68 = sbr.rel (0) target = $region25
    $region24: #{tpu_custom_call.1} parent=1 // pred_region
      %s70 = ssub.s32 32768, 32768
      %71 = vsyncadd [#allocation9], %s70
      %s72 = sshll.u32 [#allocation10], 4
      %s73 = int_to_ptr.vmem [resolvable:$true] %s72
      %78 = dma.hbm_to_vmem [thread:$0]  %s5, 32768, %s73, [#allocation9], 512, 512, 32
    $region25: #{tpu_custom_call.1} parent=1 // pred_fallthru
      _
    // Predicated region
    $region26: #{tpu_custom_call.1} parent=1 // pred_check
      _
    $region27: #{tpu_custom_call.1} parent=1 // pred_check_branch
      %80 = sbr.rel (0) target = $region29
    $region28: #{tpu_custom_call.1} parent=1 // pred_region
      %s82 = ssub.s32 128, 128
      %83 = vsyncadd [#allocation12], %s82
      %s85 = sshll.u32 [#allocation11], 4
      %s86 = int_to_ptr.vmem [resolvable:$true] %s85
      %88 = dma.hbm_to_vmem [thread:$0]  %s6, 128, %s86, [#allocation12]
    $region29: #{tpu_custom_call.1} parent=1 // pred_fallthru
      _
    // Predicated region
    $region30: #{tpu_custom_call.1} parent=1 // pred_check
      _
    $region31: #{tpu_custom_call.1} parent=1 // pred_check_branch
      %90 = sbr.rel (0) target = $region33
    $region32: #{tpu_custom_call.1} parent=1 // pred_region
      %s92 = ssub.s32 131072, 131072
      %93 = vsyncadd [#allocation12], %s92
      %s94 = sshll.u32 [#allocation13], 4
      %s95 = int_to_ptr.vmem [resolvable:$true] %s94
      %100 = dma.hbm_to_vmem [thread:$0]  %s7, 131072, %s95, [#allocation12], 1024, 1024, 64
    $region33: #{tpu_custom_call.1} parent=1 // pred_fallthru
      _
    // Predicated region
    $region34: #{tpu_custom_call.1} parent=1 // pred_check
      _
    $region35: #{tpu_custom_call.1} parent=1 // pred_check_branch
      %102 = sbr.rel (0) target = $region37
    $region36: #{tpu_custom_call.1} parent=1 // pred_region
      %s104 = ssub.s32 256, 256
      %105 = vsyncadd [#allocation15], %s104
      %s107 = sshll.u32 [#allocation14], 4
      %s108 = int_to_ptr.vmem [resolvable:$true] %s107
      %110 = dma.hbm_to_vmem [thread:$0]  %s8, 256, %s108, [#allocation15]
    $region37: #{tpu_custom_call.1} parent=1 // pred_fallthru
      _
    // Predicated region
    $region38: #{tpu_custom_call.1} parent=1 // pred_check
      _
    $region39: #{tpu_custom_call.1} parent=1 // pred_check_branch
      %112 = sbr.rel (0) target = $region41
    $region40: #{tpu_custom_call.1} parent=1 // pred_region
      %s114 = ssub.s32 16384, 16384
      %115 = vsyncadd [#allocation15], %s114
      %s116 = sshll.u32 [#allocation16], 4
      %s117 = int_to_ptr.vmem [resolvable:$true] %s116
      %122 = dma.hbm_to_vmem [thread:$0]  %s9, 16384, %s117, [#allocation15], 64, 64, 4
    $region41: #{tpu_custom_call.1} parent=1 // pred_fallthru
      _
    // Predicated region
    $region42: #{tpu_custom_call.1} parent=1 // pred_check
      _
    $region43: #{tpu_custom_call.1} parent=1 // pred_check_branch
      %124 = sbr.rel (0) target = $region45
    $region44: #{tpu_custom_call.1} parent=1 // pred_region
      %s126 = ssub.s32 16, 16
      %127 = vsyncadd [#allocation18], %s126
      %s129 = sshll.u32 [#allocation17], 4
      %s130 = int_to_ptr.vmem [resolvable:$true] %s129
      %132 = dma.hbm_to_vmem [thread:$0]  %s10, 16, %s130, [#allocation18]
    $region45: #{tpu_custom_call.1} parent=1 // pred_fallthru
      _
    // Predicated region
    $region46: #{tpu_custom_call.1} parent=1 // pred_check
      _
    $region47: #{tpu_custom_call.1} parent=1 // pred_check_branch
      %134 = sbr.rel (0) target = $region49
    $region48: #{tpu_custom_call.1} parent=1 // pred_region
      %135 = dma.done [#allocation3], 128
    $region49: #{tpu_custom_call.1} parent=1 // pred_fallthru
      _
    // Predicated region
    $region50: #{tpu_custom_call.1} parent=1 // pred_check
      _
    $region51: #{tpu_custom_call.1} parent=1 // pred_check_branch
      %137 = sbr.rel (0) target = $region53
    $region52: #{tpu_custom_call.1} parent=1 // pred_region
      %138 = dma.done [#allocation6], 32
    $region53: #{tpu_custom_call.1} parent=1 // pred_fallthru
      _
    // Predicated region
    $region54: #{tpu_custom_call.1} parent=1 // pred_check
      _
    $region55: #{tpu_custom_call.1} parent=1 // pred_check_branch
      %140 = sbr.rel (0) target = $region57
    $region56: #{tpu_custom_call.1} parent=1 // pred_region
      %141 = dma.done [#allocation6], 32768
    $region57: #{tpu_custom_call.1} parent=1 // pred_fallthru
      _
    // Predicated region
    $region58: #{tpu_custom_call.1} parent=1 // pred_check
      _
    $region59: #{tpu_custom_call.1} parent=1 // pred_check_branch
      %143 = sbr.rel (0) target = $region61
    $region60: #{tpu_custom_call.1} parent=1 // pred_region
      %144 = dma.done [#allocation9], 128
    $region61: #{tpu_custom_call.1} parent=1 // pred_fallthru
      _
    // Predicated region
    $region62: #{tpu_custom_call.1} parent=1 // pred_check
      _
    $region63: #{tpu_custom_call.1} parent=1 // pred_check_branch
      %146 = sbr.rel (0) target = $region65
    $region64: #{tpu_custom_call.1} parent=1 // pred_region
      %147 = dma.done [#allocation9], 32768
    $region65: #{tpu_custom_call.1} parent=1 // pred_fallthru
      _
    // Predicated region
    $region66: #{tpu_custom_call.1} parent=1 // pred_check
      _
    $region67: #{tpu_custom_call.1} parent=1 // pred_check_branch
      %149 = sbr.rel (0) target = $region69
    $region68: #{tpu_custom_call.1} parent=1 // pred_region
      %150 = dma.done [#allocation12], 128
    $region69: #{tpu_custom_call.1} parent=1 // pred_fallthru
      _
    // Predicated region
    $region70: #{tpu_custom_call.1} parent=1 // pred_check
      _
    $region71: #{tpu_custom_call.1} parent=1 // pred_check_branch
      %152 = sbr.rel (0) target = $region73
    $region72: #{tpu_custom_call.1} parent=1 // pred_region
      %153 = dma.done [#allocation12], 131072
    $region73: #{tpu_custom_call.1} parent=1 // pred_fallthru
      _
    // Predicated region
    $region74: #{tpu_custom_call.1} parent=1 // pred_check
      _
    $region75: #{tpu_custom_call.1} parent=1 // pred_check_branch
      %155 = sbr.rel (0) target = $region77
    $region76: #{tpu_custom_call.1} parent=1 // pred_region
      %156 = dma.done [#allocation15], 256
    $region77: #{tpu_custom_call.1} parent=1 // pred_fallthru
      _
    // Predicated region
    $region78: #{tpu_custom_call.1} parent=1 // pred_check
      _
    $region79: #{tpu_custom_call.1} parent=1 // pred_check_branch
      %158 = sbr.rel (0) target = $region81
    $region80: #{tpu_custom_call.1} parent=1 // pred_region
      %159 = dma.done [#allocation15], 16384
    $region81: #{tpu_custom_call.1} parent=1 // pred_fallthru
      _
    // Predicated region
    $region82: #{tpu_custom_call.1} parent=1 // pred_check
      _
    $region83: #{tpu_custom_call.1} parent=1 // pred_check_branch
      %161 = sbr.rel (0) target = $region85
    $region84: #{tpu_custom_call.1} parent=1 // pred_region
      %162 = dma.done [#allocation18], 16
    $region85: #{tpu_custom_call.1} parent=1 // pred_fallthru
      _
    %v164 = vld [vmem:[%s0] sm:$0xff]
    %v165 = vld [vmem:[#allocation2] sm:$0x77]
    %v166 = vld [vmem:[#allocation5] sm:$0x3]
    %168 = vset.pattern.permute.xlu0 0
    %169 = vperm.xlu0 %168, %v164
    %v170 = vpop.permute.xlu0 %169
    %v173 = vlaneseq
    %v174 = vshrl.u32 %v173, 7
    %v175 = vsub.s32 1, %v174
    %v176 = vrot.slane %v165, %v175
    %v177 = vlaneseq
    %v178 = vshrl.u32 %v177, 7
    %v179 = vsub.s32 5, %v178
    %v180 = vrot.slane %v165, %v179
    %v183 = vlaneseq
    %v184 = vshrl.u32 %v183, 7
    %v185 = vsub.s32 1, %v184
    %v186 = vrot.slane %v176, %v185
    %v187 = vlaneseq
    %v188 = vshrl.u32 %v187, 7
    %v189 = vsub.s32 1, %v188
    %v190 = vrot.slane %v180, %v189
    %v191 = vmul.f32 %v170, %v186
    %v192 = vmul.f32 %v170, %v190
    %193 = vset.pattern.permute.xlu0 1
    %194 = vperm.xlu0 %193, %v164
    %v195 = vpop.permute.xlu0 %194
    %v197 = vlaneseq
    %v198 = vshrl.u32 %v197, 7
    %v199 = vsub.s32 2, %v198
    %v200 = vrot.slane %v165, %v199
    %v201 = vlaneseq
    %v202 = vshrl.u32 %v201, 7
    %v203 = vsub.s32 6, %v202
    %v204 = vrot.slane %v165, %v203
    %v207 = vlaneseq
    %v208 = vshrl.u32 %v207, 7
    %v209 = vsub.s32 2, %v208
    %v210 = vrot.slane %v200, %v209
    %v211 = vlaneseq
    %v212 = vshrl.u32 %v211, 7
    %v213 = vsub.s32 2, %v212
    %v214 = vrot.slane %v204, %v213
    %v215 = vmul.f32 %v195, %v210
    %v216 = vmul.f32 %v195, %v214
    %v217 = vadd.f32 %v191, %v215
    %v218 = vadd.f32 %v192, %v216
    %v219 = vlaneseq
    %v220 = vshrl.u32 %v219, 7
    %v221 = vsub.s32 0, %v220
    %v222 = vrot.slane %v165, %v221
    %v223 = vlaneseq
    %v224 = vshrl.u32 %v223, 7
    %v225 = vsub.s32 4, %v224
    %v226 = vrot.slane %v165, %v225
    %v229 = vlaneseq
    %v230 = vshrl.u32 %v229, 7
    %v231 = vsub.s32 0, %v230
    %v232 = vrot.slane %v222, %v231
    %v233 = vlaneseq
    %v234 = vshrl.u32 %v233, 7
    %v235 = vsub.s32 0, %v234
    %v236 = vrot.slane %v226, %v235
    %v237 = vmul.f32 %v170, %v232
    %v238 = vmul.f32 %v170, %v236
    %v239 = vmul.f32 %v195, %v186
    %v240 = vmul.f32 %v195, %v190
    %v241 = vadd.f32 %v237, %v239
    %v242 = vadd.f32 %v238, %v240
    %243 = vset.pattern.permute.xlu0 2
    %244 = vperm.xlu0 %243, %v164
    %v245 = vpop.permute.xlu0 %244
    %v247 = vmul.f32 %v245, %v210
    %v248 = vmul.f32 %v245, %v214
    %v249 = vadd.f32 %v241, %v247
    %v250 = vadd.f32 %v242, %v248
    %v251 = vmul.f32 %v195, %v232
    %v252 = vmul.f32 %v195, %v236
    %v253 = vmul.f32 %v245, %v186
    %v254 = vmul.f32 %v245, %v190
    %v255 = vadd.f32 %v251, %v253
    %v256 = vadd.f32 %v252, %v254
    %257 = vset.pattern.permute.xlu0 3
    %258 = vperm.xlu0 %257, %v164
    %v259 = vpop.permute.xlu0 %258
    %v261 = vmul.f32 %v259, %v210
    %v262 = vmul.f32 %v259, %v214
    %v263 = vadd.f32 %v255, %v261
    %v264 = vadd.f32 %v256, %v262
    %v265 = vmul.f32 %v245, %v232
    %v266 = vmul.f32 %v245, %v236
    %v267 = vmul.f32 %v259, %v186
    %v268 = vmul.f32 %v259, %v190
    %v269 = vadd.f32 %v265, %v267
    %v270 = vadd.f32 %v266, %v268
    %v271 = vmax.f32 %v217, %v249
    %v272 = vmax.f32 %v218, %v250
    %v274 = vlaneseq
    %v275 = vshrl.u32 %v274, 7
    %v276 = vsub.s32 0, %v275
    %v277 = vrot.slane %v166, %v276
    %v278 = vlaneseq
    %v279 = vshrl.u32 %v278, 7
    %v280 = vsub.s32 1, %v279
    %v281 = vrot.slane %v166, %v280
    %v284 = vadd.f32 %v271, %v277
    %v285 = vadd.f32 %v272, %v281
    %v286 = vmax.f32 %v284, 0.0
    %v287 = vmax.f32 %v285, 0.0
    %v288 = vmax.f32 %v263, %v269
    %v289 = vmax.f32 %v264, %v270
    %v290 = vadd.f32 %v288, %v277
    %v291 = vadd.f32 %v289, %v281
    %v292 = vmax.f32 %v290, 0.0
    %v293 = vmax.f32 %v291, 0.0
    %v294 = vpack.c.bf16 %v286, %v286
    %v295 = vpack.c.bf16 %v287, %v287
    %v296 = vpack.c.bf16 %v292, %v292
    %v297 = vpack.c.bf16 %v293, %v293
    %v298 = vld [vmem:[#allocation7] sm:$0xff]
    %v299 = vld [vmem:[#allocation7 + $0x8] sm:$0xff]
    %v300 = vld [vmem:[#allocation7 + $0x10] sm:$0xff]
    %v301 = vld [vmem:[#allocation7 + $0x18] sm:$0xff]
    %v302 = vld [vmem:[#allocation7 + $0x20] sm:$0xff]
    %v303 = vld [vmem:[#allocation7 + $0x28] sm:$0xff]
    %v304 = vld [vmem:[#allocation7 + $0x30] sm:$0xff]
    %v305 = vld [vmem:[#allocation7 + $0x38] sm:$0xff]
    %v306 = vld [vmem:[#allocation7 + $0x40] sm:$0xff]
    %v307 = vld [vmem:[#allocation7 + $0x48] sm:$0xff]
    %v308 = vld [vmem:[#allocation7 + $0x50] sm:$0xff]
    %v309 = vld [vmem:[#allocation7 + $0x58] sm:$0xff]
    %v310 = vld [vmem:[#allocation7 + $0x60] sm:$0xff]
    %v311 = vld [vmem:[#allocation7 + $0x68] sm:$0xff]
    %v312 = vld [vmem:[#allocation7 + $0x70] sm:$0xff]
    %v313 = vld [vmem:[#allocation7 + $0x78] sm:$0xff]
    %v314 = vld [vmem:[#allocation7 + $0x80] sm:$0xff]
    %v315 = vld [vmem:[#allocation7 + $0x88] sm:$0xff]
    %v316 = vld [vmem:[#allocation7 + $0x90] sm:$0xff]
    %v317 = vld [vmem:[#allocation7 + $0x98] sm:$0xff]
    %v318 = vld [vmem:[#allocation7 + $0xa0] sm:$0xff]
    %v319 = vld [vmem:[#allocation7 + $0xa8] sm:$0xff]
    %v320 = vld [vmem:[#allocation7 + $0xb0] sm:$0xff]
    %v321 = vld [vmem:[#allocation7 + $0xb8] sm:$0xff]
    %v322 = vld [vmem:[#allocation7 + $0xc0] sm:$0xff]
    %v323 = vld [vmem:[#allocation7 + $0xc8] sm:$0xff]
    %v324 = vld [vmem:[#allocation7 + $0xd0] sm:$0xff]
    %v325 = vld [vmem:[#allocation7 + $0xd8] sm:$0xff]
    %v326 = vld [vmem:[#allocation7 + $0xe0] sm:$0xff]
    %v327 = vld [vmem:[#allocation7 + $0xe8] sm:$0xff]
    %v328 = vld [vmem:[#allocation7 + $0xf0] sm:$0xff]
    %v329 = vld [vmem:[#allocation7 + $0xf8] sm:$0xff]
    %v330 = vld [vmem:[#allocation7 + $0x100] sm:$0xff]
    %v331 = vld [vmem:[#allocation7 + $0x108] sm:$0xff]
    %v332 = vld [vmem:[#allocation7 + $0x110] sm:$0xff]
    %v333 = vld [vmem:[#allocation7 + $0x118] sm:$0xff]
    %v334 = vld [vmem:[#allocation7 + $0x120] sm:$0xff]
    %v335 = vld [vmem:[#allocation7 + $0x128] sm:$0xff]
    %v336 = vld [vmem:[#allocation7 + $0x130] sm:$0xff]
    %v337 = vld [vmem:[#allocation7 + $0x138] sm:$0xff]
    %v338 = vld [vmem:[#allocation7 + $0x140] sm:$0xff]
    %v339 = vld [vmem:[#allocation7 + $0x148] sm:$0xff]
    %v340 = vld [vmem:[#allocation7 + $0x150] sm:$0xff]
    %v341 = vld [vmem:[#allocation7 + $0x158] sm:$0xff]
    %v342 = vld [vmem:[#allocation7 + $0x160] sm:$0xff]
    %v343 = vld [vmem:[#allocation7 + $0x168] sm:$0xff]
    %v344 = vld [vmem:[#allocation7 + $0x170] sm:$0xff]
    %v345 = vld [vmem:[#allocation7 + $0x178] sm:$0xff]
    %v346 = vld [vmem:[#allocation7 + $0x180] sm:$0xff]
    %v347 = vld [vmem:[#allocation7 + $0x188] sm:$0xff]
    %v348 = vld [vmem:[#allocation7 + $0x190] sm:$0xff]
    %v349 = vld [vmem:[#allocation7 + $0x198] sm:$0xff]
    %v350 = vld [vmem:[#allocation7 + $0x1a0] sm:$0xff]
    %v351 = vld [vmem:[#allocation7 + $0x1a8] sm:$0xff]
    %v352 = vld [vmem:[#allocation7 + $0x1b0] sm:$0xff]
    %v353 = vld [vmem:[#allocation7 + $0x1b8] sm:$0xff]
    %v354 = vld [vmem:[#allocation7 + $0x1c0] sm:$0xff]
    %v355 = vld [vmem:[#allocation7 + $0x1c8] sm:$0xff]
    %v356 = vld [vmem:[#allocation7 + $0x1d0] sm:$0xff]
    %v357 = vld [vmem:[#allocation7 + $0x1d8] sm:$0xff]
    %v358 = vld [vmem:[#allocation7 + $0x1e0] sm:$0xff]
    %v359 = vld [vmem:[#allocation7 + $0x1e8] sm:$0xff]
    %v360 = vld [vmem:[#allocation7 + $0x1f0] sm:$0xff]
    %v361 = vld [vmem:[#allocation7 + $0x1f8] sm:$0xff]
    %v362 = vld [vmem:[#allocation7 + $0x200] sm:$0xff]
    %v363 = vld [vmem:[#allocation7 + $0x208] sm:$0xff]
    %v364 = vld [vmem:[#allocation7 + $0x210] sm:$0xff]
    %v365 = vld [vmem:[#allocation7 + $0x218] sm:$0xff]
    %v366 = vld [vmem:[#allocation7 + $0x220] sm:$0xff]
    %v367 = vld [vmem:[#allocation7 + $0x228] sm:$0xff]
    %v368 = vld [vmem:[#allocation7 + $0x230] sm:$0xff]
    %v369 = vld [vmem:[#allocation7 + $0x238] sm:$0xff]
    %v370 = vld [vmem:[#allocation7 + $0x240] sm:$0xff]
    %v371 = vld [vmem:[#allocation7 + $0x248] sm:$0xff]
    %v372 = vld [vmem:[#allocation7 + $0x250] sm:$0xff]
    %v373 = vld [vmem:[#allocation7 + $0x258] sm:$0xff]
    %v374 = vld [vmem:[#allocation7 + $0x260] sm:$0xff]
    %v375 = vld [vmem:[#allocation7 + $0x268] sm:$0xff]
    %v376 = vld [vmem:[#allocation7 + $0x270] sm:$0xff]
    %v377 = vld [vmem:[#allocation7 + $0x278] sm:$0xff]
    %v378 = vld [vmem:[#allocation7 + $0x280] sm:$0xff]
    %v379 = vld [vmem:[#allocation7 + $0x288] sm:$0xff]
    %v380 = vld [vmem:[#allocation7 + $0x290] sm:$0xff]
    %v381 = vld [vmem:[#allocation7 + $0x298] sm:$0xff]
    %v382 = vld [vmem:[#allocation7 + $0x2a0] sm:$0xff]
    %v383 = vld [vmem:[#allocation7 + $0x2a8] sm:$0xff]
    %v384 = vld [vmem:[#allocation7 + $0x2b0] sm:$0xff]
    %v385 = vld [vmem:[#allocation7 + $0x2b8] sm:$0xff]
    %v386 = vld [vmem:[#allocation7 + $0x2c0] sm:$0xff]
    %v387 = vld [vmem:[#allocation7 + $0x2c8] sm:$0xff]
    %v388 = vld [vmem:[#allocation7 + $0x2d0] sm:$0xff]
    %v389 = vld [vmem:[#allocation7 + $0x2d8] sm:$0xff]
    %v390 = vld [vmem:[#allocation7 + $0x2e0] sm:$0xff]
    %v391 = vld [vmem:[#allocation7 + $0x2e8] sm:$0xff]
    %v392 = vld [vmem:[#allocation7 + $0x2f0] sm:$0xff]
    %v393 = vld [vmem:[#allocation7 + $0x2f8] sm:$0xff]
    %v394 = vld [vmem:[#allocation7 + $0x300] sm:$0xff]
    %v395 = vld [vmem:[#allocation7 + $0x308] sm:$0xff]
    %v396 = vld [vmem:[#allocation7 + $0x310] sm:$0xff]
    %v397 = vld [vmem:[#allocation7 + $0x318] sm:$0xff]
    %v398 = vld [vmem:[#allocation7 + $0x320] sm:$0xff]
    %v399 = vld [vmem:[#allocation7 + $0x328] sm:$0xff]
    %v400 = vld [vmem:[#allocation7 + $0x330] sm:$0xff]
    %v401 = vld [vmem:[#allocation7 + $0x338] sm:$0xff]
    %v402 = vld [vmem:[#allocation7 + $0x340] sm:$0xff]
    %v403 = vld [vmem:[#allocation7 + $0x348] sm:$0xff]
    %v404 = vld [vmem:[#allocation7 + $0x350] sm:$0xff]
    %v405 = vld [vmem:[#allocation7 + $0x358] sm:$0xff]
    %v406 = vld [vmem:[#allocation7 + $0x360] sm:$0xff]
    %v407 = vld [vmem:[#allocation7 + $0x368] sm:$0xff]
    %v408 = vld [vmem:[#allocation7 + $0x370] sm:$0xff]
    %v409 = vld [vmem:[#allocation7 + $0x378] sm:$0xff]
    %v410 = vld [vmem:[#allocation7 + $0x380] sm:$0xff]
    %v411 = vld [vmem:[#allocation7 + $0x388] sm:$0xff]
    %v412 = vld [vmem:[#allocation7 + $0x390] sm:$0xff]
    %v413 = vld [vmem:[#allocation7 + $0x398] sm:$0xff]
    %v414 = vld [vmem:[#allocation7 + $0x3a0] sm:$0xff]
    %v415 = vld [vmem:[#allocation7 + $0x3a8] sm:$0xff]
    %v416 = vld [vmem:[#allocation7 + $0x3b0] sm:$0xff]
    %v417 = vld [vmem:[#allocation7 + $0x3b8] sm:$0xff]
    %v418 = vld [vmem:[#allocation7 + $0x3c0] sm:$0xff]
    %v419 = vld [vmem:[#allocation7 + $0x3c8] sm:$0xff]
    %v420 = vld [vmem:[#allocation7 + $0x3d0] sm:$0xff]
    %v421 = vld [vmem:[#allocation7 + $0x3d8] sm:$0xff]
    %v422 = vld [vmem:[#allocation7 + $0x3e0] sm:$0xff]
    %v423 = vld [vmem:[#allocation7 + $0x3e8] sm:$0xff]
    %v424 = vld [vmem:[#allocation7 + $0x3f0] sm:$0xff]
    %v425 = vld [vmem:[#allocation7 + $0x3f8] sm:$0xff]
    %v426 = vld [vmem:[#allocation7 + $0x400] sm:$0xff]
    %v427 = vld [vmem:[#allocation7 + $0x408] sm:$0xff]
    %v428 = vld [vmem:[#allocation7 + $0x410] sm:$0xff]
    %v429 = vld [vmem:[#allocation7 + $0x418] sm:$0xff]
    %v430 = vld [vmem:[#allocation7 + $0x420] sm:$0xff]
    %v431 = vld [vmem:[#allocation7 + $0x428] sm:$0xff]
    %v432 = vld [vmem:[#allocation7 + $0x430] sm:$0xff]
    %v433 = vld [vmem:[#allocation7 + $0x438] sm:$0xff]
    %v434 = vld [vmem:[#allocation7 + $0x440] sm:$0xff]
    %v435 = vld [vmem:[#allocation7 + $0x448] sm:$0xff]
    %v436 = vld [vmem:[#allocation7 + $0x450] sm:$0xff]
    %v437 = vld [vmem:[#allocation7 + $0x458] sm:$0xff]
    %v438 = vld [vmem:[#allocation7 + $0x460] sm:$0xff]
    %v439 = vld [vmem:[#allocation7 + $0x468] sm:$0xff]
    %v440 = vld [vmem:[#allocation7 + $0x470] sm:$0xff]
    %v441 = vld [vmem:[#allocation7 + $0x478] sm:$0xff]
    %v442 = vld [vmem:[#allocation7 + $0x480] sm:$0xff]
    %v443 = vld [vmem:[#allocation7 + $0x488] sm:$0xff]
    %v444 = vld [vmem:[#allocation7 + $0x490] sm:$0xff]
    %v445 = vld [vmem:[#allocation7 + $0x498] sm:$0xff]
    %v446 = vld [vmem:[#allocation7 + $0x4a0] sm:$0xff]
    %v447 = vld [vmem:[#allocation7 + $0x4a8] sm:$0xff]
    %v448 = vld [vmem:[#allocation7 + $0x4b0] sm:$0xff]
    %v449 = vld [vmem:[#allocation7 + $0x4b8] sm:$0xff]
    %v450 = vld [vmem:[#allocation7 + $0x4c0] sm:$0xff]
    %v451 = vld [vmem:[#allocation7 + $0x4c8] sm:$0xff]
    %v452 = vld [vmem:[#allocation7 + $0x4d0] sm:$0xff]
    %v453 = vld [vmem:[#allocation7 + $0x4d8] sm:$0xff]
    %v454 = vld [vmem:[#allocation7 + $0x4e0] sm:$0xff]
    %v455 = vld [vmem:[#allocation7 + $0x4e8] sm:$0xff]
    %v456 = vld [vmem:[#allocation7 + $0x4f0] sm:$0xff]
    %v457 = vld [vmem:[#allocation7 + $0x4f8] sm:$0xff]
    %v458 = vld [vmem:[#allocation7 + $0x500] sm:$0xff]
    %v459 = vld [vmem:[#allocation7 + $0x508] sm:$0xff]
    %v460 = vld [vmem:[#allocation7 + $0x510] sm:$0xff]
    %v461 = vld [vmem:[#allocation7 + $0x518] sm:$0xff]
    %v462 = vld [vmem:[#allocation7 + $0x520] sm:$0xff]
    %v463 = vld [vmem:[#allocation7 + $0x528] sm:$0xff]
    %v464 = vld [vmem:[#allocation7 + $0x530] sm:$0xff]
    %v465 = vld [vmem:[#allocation7 + $0x538] sm:$0xff]
    %v466 = vld [vmem:[#allocation7 + $0x540] sm:$0xff]
    %v467 = vld [vmem:[#allocation7 + $0x548] sm:$0xff]
    %v468 = vld [vmem:[#allocation7 + $0x550] sm:$0xff]
    %v469 = vld [vmem:[#allocation7 + $0x558] sm:$0xff]
    %v470 = vld [vmem:[#allocation7 + $0x560] sm:$0xff]
    %v471 = vld [vmem:[#allocation7 + $0x568] sm:$0xff]
    %v472 = vld [vmem:[#allocation7 + $0x570] sm:$0xff]
    %v473 = vld [vmem:[#allocation7 + $0x578] sm:$0xff]
    %v474 = vld [vmem:[#allocation7 + $0x580] sm:$0xff]
    %v475 = vld [vmem:[#allocation7 + $0x588] sm:$0xff]
    %v476 = vld [vmem:[#allocation7 + $0x590] sm:$0xff]
    %v477 = vld [vmem:[#allocation7 + $0x598] sm:$0xff]
    %v478 = vld [vmem:[#allocation7 + $0x5a0] sm:$0xff]
    %v479 = vld [vmem:[#allocation7 + $0x5a8] sm:$0xff]
    %v480 = vld [vmem:[#allocation7 + $0x5b0] sm:$0xff]
    %v481 = vld [vmem:[#allocation7 + $0x5b8] sm:$0xff]
    %v482 = vld [vmem:[#allocation7 + $0x5c0] sm:$0xff]
    %v483 = vld [vmem:[#allocation7 + $0x5c8] sm:$0xff]
    %v484 = vld [vmem:[#allocation7 + $0x5d0] sm:$0xff]
    %v485 = vld [vmem:[#allocation7 + $0x5d8] sm:$0xff]
    %v486 = vld [vmem:[#allocation7 + $0x5e0] sm:$0xff]
    %v487 = vld [vmem:[#allocation7 + $0x5e8] sm:$0xff]
    %v488 = vld [vmem:[#allocation7 + $0x5f0] sm:$0xff]
    %v489 = vld [vmem:[#allocation7 + $0x5f8] sm:$0xff]
    %v490 = vld [vmem:[#allocation7 + $0x600] sm:$0xff]
    %v491 = vld [vmem:[#allocation7 + $0x608] sm:$0xff]
    %v492 = vld [vmem:[#allocation7 + $0x610] sm:$0xff]
    %v493 = vld [vmem:[#allocation7 + $0x618] sm:$0xff]
    %v494 = vld [vmem:[#allocation7 + $0x620] sm:$0xff]
    %v495 = vld [vmem:[#allocation7 + $0x628] sm:$0xff]
    %v496 = vld [vmem:[#allocation7 + $0x630] sm:$0xff]
    %v497 = vld [vmem:[#allocation7 + $0x638] sm:$0xff]
    %v498 = vld [vmem:[#allocation7 + $0x640] sm:$0xff]
    %v499 = vld [vmem:[#allocation7 + $0x648] sm:$0xff]
    %v500 = vld [vmem:[#allocation7 + $0x650] sm:$0xff]
    %v501 = vld [vmem:[#allocation7 + $0x658] sm:$0xff]
    %v502 = vld [vmem:[#allocation7 + $0x660] sm:$0xff]
    %v503 = vld [vmem:[#allocation7 + $0x668] sm:$0xff]
    %v504 = vld [vmem:[#allocation7 + $0x670] sm:$0xff]
    %v505 = vld [vmem:[#allocation7 + $0x678] sm:$0xff]
    %v506 = vld [vmem:[#allocation7 + $0x680] sm:$0xff]
    %v507 = vld [vmem:[#allocation7 + $0x688] sm:$0xff]
    %v508 = vld [vmem:[#allocation7 + $0x690] sm:$0xff]
    %v509 = vld [vmem:[#allocation7 + $0x698] sm:$0xff]
    %v510 = vld [vmem:[#allocation7 + $0x6a0] sm:$0xff]
    %v511 = vld [vmem:[#allocation7 + $0x6a8] sm:$0xff]
    %v512 = vld [vmem:[#allocation7 + $0x6b0] sm:$0xff]
    %v513 = vld [vmem:[#allocation7 + $0x6b8] sm:$0xff]
    %v514 = vld [vmem:[#allocation7 + $0x6c0] sm:$0xff]
    %v515 = vld [vmem:[#allocation7 + $0x6c8] sm:$0xff]
    %v516 = vld [vmem:[#allocation7 + $0x6d0] sm:$0xff]
    %v517 = vld [vmem:[#allocation7 + $0x6d8] sm:$0xff]
    %v518 = vld [vmem:[#allocation7 + $0x6e0] sm:$0xff]
    %v519 = vld [vmem:[#allocation7 + $0x6e8] sm:$0xff]
    %v520 = vld [vmem:[#allocation7 + $0x6f0] sm:$0xff]
    %v521 = vld [vmem:[#allocation7 + $0x6f8] sm:$0xff]
    %v522 = vld [vmem:[#allocation7 + $0x700] sm:$0xff]
    %v523 = vld [vmem:[#allocation7 + $0x708] sm:$0xff]
    %v524 = vld [vmem:[#allocation7 + $0x710] sm:$0xff]
    %v525 = vld [vmem:[#allocation7 + $0x718] sm:$0xff]
    %v526 = vld [vmem:[#allocation7 + $0x720] sm:$0xff]
    %v527 = vld [vmem:[#allocation7 + $0x728] sm:$0xff]
    %v528 = vld [vmem:[#allocation7 + $0x730] sm:$0xff]
    %v529 = vld [vmem:[#allocation7 + $0x738] sm:$0xff]
    %v530 = vld [vmem:[#allocation7 + $0x740] sm:$0xff]
    %v531 = vld [vmem:[#allocation7 + $0x748] sm:$0xff]
    %v532 = vld [vmem:[#allocation7 + $0x750] sm:$0xff]
    %v533 = vld [vmem:[#allocation7 + $0x758] sm:$0xff]
    %v534 = vld [vmem:[#allocation7 + $0x760] sm:$0xff]
    %v535 = vld [vmem:[#allocation7 + $0x768] sm:$0xff]
    %v536 = vld [vmem:[#allocation7 + $0x770] sm:$0xff]
    %v537 = vld [vmem:[#allocation7 + $0x778] sm:$0xff]
    %v538 = vld [vmem:[#allocation7 + $0x780] sm:$0xff]
    %v539 = vld [vmem:[#allocation7 + $0x788] sm:$0xff]
    %v540 = vld [vmem:[#allocation7 + $0x790] sm:$0xff]
    %v541 = vld [vmem:[#allocation7 + $0x798] sm:$0xff]
    %v542 = vld [vmem:[#allocation7 + $0x7a0] sm:$0xff]
    %v543 = vld [vmem:[#allocation7 + $0x7a8] sm:$0xff]
    %v544 = vld [vmem:[#allocation7 + $0x7b0] sm:$0xff]
    %v545 = vld [vmem:[#allocation7 + $0x7b8] sm:$0xff]
    %v546 = vld [vmem:[#allocation7 + $0x7c0] sm:$0xff]
    %v547 = vld [vmem:[#allocation7 + $0x7c8] sm:$0xff]
    %v548 = vld [vmem:[#allocation7 + $0x7d0] sm:$0xff]
    %v549 = vld [vmem:[#allocation7 + $0x7d8] sm:$0xff]
    %v550 = vld [vmem:[#allocation7 + $0x7e0] sm:$0xff]
    %v551 = vld [vmem:[#allocation7 + $0x7e8] sm:$0xff]
    %v552 = vld [vmem:[#allocation7 + $0x7f0] sm:$0xff]
    %v553 = vld [vmem:[#allocation7 + $0x7f8] sm:$0xff]
    %v554 = vld [vmem:[#allocation8] sm:$0xff]
    %v556 = vlaneseq
    %v557 = vshrl.u32 %v556, 7
    %v558 = vsub.s32 0, %v557
    %v559 = vrot.slane %v554, %v558
    %v560 = vlaneseq
    %v561 = vshrl.u32 %v560, 7
    %v562 = vsub.s32 1, %v561
    %v563 = vrot.slane %v554, %v562
    %v564 = vlaneseq
    %v565 = vshrl.u32 %v564, 7
    %v566 = vsub.s32 2, %v565
    %v567 = vrot.slane %v554, %v566
    %v568 = vlaneseq
    %v569 = vshrl.u32 %v568, 7
    %v570 = vsub.s32 3, %v569
    %v571 = vrot.slane %v554, %v570
    %v572 = vlaneseq
    %v573 = vshrl.u32 %v572, 7
    %v574 = vsub.s32 4, %v573
    %v575 = vrot.slane %v554, %v574
    %v576 = vlaneseq
    %v577 = vshrl.u32 %v576, 7
    %v578 = vsub.s32 5, %v577
    %v579 = vrot.slane %v554, %v578
    %v580 = vlaneseq
    %v581 = vshrl.u32 %v580, 7
    %v582 = vsub.s32 6, %v581
    %v583 = vrot.slane %v554, %v582
    %v584 = vlaneseq
    %v585 = vshrl.u32 %v584, 7
    %v586 = vsub.s32 7, %v585
    %v587 = vrot.slane %v554, %v586
    %v852 = vunpack.c.l.b16 %v298
    %v853 = vunpack.c.h.b16 %v298
    %v854 = vunpack.c.l.b16 %v299
    %v855 = vunpack.c.h.b16 %v299
    %v856 = vunpack.c.l.b16 %v300
    %v857 = vunpack.c.h.b16 %v300
    %v858 = vunpack.c.l.b16 %v301
    %v859 = vunpack.c.h.b16 %v301
    %v860 = vunpack.c.l.b16 %v302
    %v861 = vunpack.c.h.b16 %v302
    %v862 = vunpack.c.l.b16 %v303
    %v863 = vunpack.c.h.b16 %v303
    %v864 = vunpack.c.l.b16 %v304
    %v865 = vunpack.c.h.b16 %v304
    %v866 = vunpack.c.l.b16 %v305
    %v867 = vunpack.c.h.b16 %v305
    %v868 = vunpack.c.l.b16 %v306
    %v869 = vunpack.c.h.b16 %v306
    %v870 = vunpack.c.l.b16 %v307
    %v871 = vunpack.c.h.b16 %v307
    %v872 = vunpack.c.l.b16 %v308
    %v873 = vunpack.c.h.b16 %v308
    %v874 = vunpack.c.l.b16 %v309
    %v875 = vunpack.c.h.b16 %v309
    %v876 = vunpack.c.l.b16 %v310
    %v877 = vunpack.c.h.b16 %v310
    %v878 = vunpack.c.l.b16 %v311
    %v879 = vunpack.c.h.b16 %v311
    %v880 = vunpack.c.l.b16 %v312
    %v881 = vunpack.c.h.b16 %v312
    %v882 = vunpack.c.l.b16 %v313
    %v883 = vunpack.c.h.b16 %v313
    %v884 = vunpack.c.l.b16 %v314
    %v885 = vunpack.c.h.b16 %v314
    %v886 = vunpack.c.l.b16 %v315
    %v887 = vunpack.c.h.b16 %v315
    %v888 = vunpack.c.l.b16 %v316
    %v889 = vunpack.c.h.b16 %v316
    %v890 = vunpack.c.l.b16 %v317
    %v891 = vunpack.c.h.b16 %v317
    %v892 = vunpack.c.l.b16 %v318
    %v893 = vunpack.c.h.b16 %v318
    %v894 = vunpack.c.l.b16 %v319
    %v895 = vunpack.c.h.b16 %v319
    %v896 = vunpack.c.l.b16 %v320
    %v897 = vunpack.c.h.b16 %v320
    %v898 = vunpack.c.l.b16 %v321
    %v899 = vunpack.c.h.b16 %v321
    %v900 = vunpack.c.l.b16 %v322
    %v901 = vunpack.c.h.b16 %v322
    %v902 = vunpack.c.l.b16 %v323
    %v903 = vunpack.c.h.b16 %v323
    %v904 = vunpack.c.l.b16 %v324
    %v905 = vunpack.c.h.b16 %v324
    %v906 = vunpack.c.l.b16 %v325
    %v907 = vunpack.c.h.b16 %v325
    %v908 = vunpack.c.l.b16 %v326
    %v909 = vunpack.c.h.b16 %v326
    %v910 = vunpack.c.l.b16 %v327
    %v911 = vunpack.c.h.b16 %v327
    %v912 = vunpack.c.l.b16 %v328
    %v913 = vunpack.c.h.b16 %v328
    %v914 = vunpack.c.l.b16 %v329
    %v915 = vunpack.c.h.b16 %v329
    %v916 = vunpack.c.l.b16 %v330
    %v917 = vunpack.c.h.b16 %v330
    %v918 = vunpack.c.l.b16 %v331
    %v919 = vunpack.c.h.b16 %v331
    %v920 = vunpack.c.l.b16 %v332
    %v921 = vunpack.c.h.b16 %v332
    %v922 = vunpack.c.l.b16 %v333
    %v923 = vunpack.c.h.b16 %v333
    %v924 = vunpack.c.l.b16 %v334
    %v925 = vunpack.c.h.b16 %v334
    %v926 = vunpack.c.l.b16 %v335
    %v927 = vunpack.c.h.b16 %v335
    %v928 = vunpack.c.l.b16 %v336
    %v929 = vunpack.c.h.b16 %v336
    %v930 = vunpack.c.l.b16 %v337
    %v931 = vunpack.c.h.b16 %v337
    %v932 = vunpack.c.l.b16 %v338
    %v933 = vunpack.c.h.b16 %v338
    %v934 = vunpack.c.l.b16 %v339
    %v935 = vunpack.c.h.b16 %v339
    %v936 = vunpack.c.l.b16 %v340
    %v937 = vunpack.c.h.b16 %v340
    %v938 = vunpack.c.l.b16 %v341
    %v939 = vunpack.c.h.b16 %v341
    %v940 = vunpack.c.l.b16 %v342
    %v941 = vunpack.c.h.b16 %v342
    %v942 = vunpack.c.l.b16 %v343
    %v943 = vunpack.c.h.b16 %v343
    %v944 = vunpack.c.l.b16 %v344
    %v945 = vunpack.c.h.b16 %v344
    %v946 = vunpack.c.l.b16 %v345
    %v947 = vunpack.c.h.b16 %v345
    %v948 = vunpack.c.l.b16 %v346
    %v949 = vunpack.c.h.b16 %v346
    %v950 = vunpack.c.l.b16 %v347
    %v951 = vunpack.c.h.b16 %v347
    %v952 = vunpack.c.l.b16 %v348
    %v953 = vunpack.c.h.b16 %v348
    %v954 = vunpack.c.l.b16 %v349
    %v955 = vunpack.c.h.b16 %v349
    %v956 = vunpack.c.l.b16 %v350
    %v957 = vunpack.c.h.b16 %v350
    %v958 = vunpack.c.l.b16 %v351
    %v959 = vunpack.c.h.b16 %v351
    %v960 = vunpack.c.l.b16 %v352
    %v961 = vunpack.c.h.b16 %v352
    %v962 = vunpack.c.l.b16 %v353
    %v963 = vunpack.c.h.b16 %v353
    %v964 = vunpack.c.l.b16 %v354
    %v965 = vunpack.c.h.b16 %v354
    %v966 = vunpack.c.l.b16 %v355
    %v967 = vunpack.c.h.b16 %v355
    %v968 = vunpack.c.l.b16 %v356
    %v969 = vunpack.c.h.b16 %v356
    %v970 = vunpack.c.l.b16 %v357
    %v971 = vunpack.c.h.b16 %v357
    %v972 = vunpack.c.l.b16 %v358
    %v973 = vunpack.c.h.b16 %v358
    %v974 = vunpack.c.l.b16 %v359
    %v975 = vunpack.c.h.b16 %v359
    %v976 = vunpack.c.l.b16 %v360
    %v977 = vunpack.c.h.b16 %v360
    %v978 = vunpack.c.l.b16 %v361
    %v979 = vunpack.c.h.b16 %v361
    %v980 = vunpack.c.l.b16 %v362
    %v981 = vunpack.c.h.b16 %v362
    %v982 = vunpack.c.l.b16 %v363
    %v983 = vunpack.c.h.b16 %v363
    %v984 = vunpack.c.l.b16 %v364
    %v985 = vunpack.c.h.b16 %v364
    %v986 = vunpack.c.l.b16 %v365
    %v987 = vunpack.c.h.b16 %v365
    %v988 = vunpack.c.l.b16 %v366
    %v989 = vunpack.c.h.b16 %v366
    %v990 = vunpack.c.l.b16 %v367
    %v991 = vunpack.c.h.b16 %v367
    %v992 = vunpack.c.l.b16 %v368
    %v993 = vunpack.c.h.b16 %v368
    %v994 = vunpack.c.l.b16 %v369
    %v995 = vunpack.c.h.b16 %v369
    %v996 = vunpack.c.l.b16 %v370
    %v997 = vunpack.c.h.b16 %v370
    %v998 = vunpack.c.l.b16 %v371
    %v999 = vunpack.c.h.b16 %v371
    %v1000 = vunpack.c.l.b16 %v372
    %v1001 = vunpack.c.h.b16 %v372
    %v1002 = vunpack.c.l.b16 %v373
    %v1003 = vunpack.c.h.b16 %v373
    %v1004 = vunpack.c.l.b16 %v374
    %v1005 = vunpack.c.h.b16 %v374
    %v1006 = vunpack.c.l.b16 %v375
    %v1007 = vunpack.c.h.b16 %v375
    %v1008 = vunpack.c.l.b16 %v376
    %v1009 = vunpack.c.h.b16 %v376
    %v1010 = vunpack.c.l.b16 %v377
    %v1011 = vunpack.c.h.b16 %v377
    %v1012 = vunpack.c.l.b16 %v378
    %v1013 = vunpack.c.h.b16 %v378
    %v1014 = vunpack.c.l.b16 %v379
    %v1015 = vunpack.c.h.b16 %v379
    %v1016 = vunpack.c.l.b16 %v380
    %v1017 = vunpack.c.h.b16 %v380
    %v1018 = vunpack.c.l.b16 %v381
    %v1019 = vunpack.c.h.b16 %v381
    %v1020 = vunpack.c.l.b16 %v382
    %v1021 = vunpack.c.h.b16 %v382
    %v1022 = vunpack.c.l.b16 %v383
    %v1023 = vunpack.c.h.b16 %v383
    %v1024 = vunpack.c.l.b16 %v384
    %v1025 = vunpack.c.h.b16 %v384
    %v1026 = vunpack.c.l.b16 %v385
    %v1027 = vunpack.c.h.b16 %v385
    %v1028 = vunpack.c.l.b16 %v386
    %v1029 = vunpack.c.h.b16 %v386
    %v1030 = vunpack.c.l.b16 %v387
    %v1031 = vunpack.c.h.b16 %v387
    %v1032 = vunpack.c.l.b16 %v388
    %v1033 = vunpack.c.h.b16 %v388
    %v1034 = vunpack.c.l.b16 %v389
    %v1035 = vunpack.c.h.b16 %v389
    %v1036 = vunpack.c.l.b16 %v390
    %v1037 = vunpack.c.h.b16 %v390
    %v1038 = vunpack.c.l.b16 %v391
    %v1039 = vunpack.c.h.b16 %v391
    %v1040 = vunpack.c.l.b16 %v392
    %v1041 = vunpack.c.h.b16 %v392
    %v1042 = vunpack.c.l.b16 %v393
    %v1043 = vunpack.c.h.b16 %v393
    %v1044 = vunpack.c.l.b16 %v394
    %v1045 = vunpack.c.h.b16 %v394
    %v1046 = vunpack.c.l.b16 %v395
    %v1047 = vunpack.c.h.b16 %v395
    %v1048 = vunpack.c.l.b16 %v396
    %v1049 = vunpack.c.h.b16 %v396
    %v1050 = vunpack.c.l.b16 %v397
    %v1051 = vunpack.c.h.b16 %v397
    %v1052 = vunpack.c.l.b16 %v398
    %v1053 = vunpack.c.h.b16 %v398
    %v1054 = vunpack.c.l.b16 %v399
    %v1055 = vunpack.c.h.b16 %v399
    %v1056 = vunpack.c.l.b16 %v400
    %v1057 = vunpack.c.h.b16 %v400
    %v1058 = vunpack.c.l.b16 %v401
    %v1059 = vunpack.c.h.b16 %v401
    %v1060 = vunpack.c.l.b16 %v402
    %v1061 = vunpack.c.h.b16 %v402
    %v1062 = vunpack.c.l.b16 %v403
    %v1063 = vunpack.c.h.b16 %v403
    %v1064 = vunpack.c.l.b16 %v404
    %v1065 = vunpack.c.h.b16 %v404
    %v1066 = vunpack.c.l.b16 %v405
    %v1067 = vunpack.c.h.b16 %v405
    %v1068 = vunpack.c.l.b16 %v406
    %v1069 = vunpack.c.h.b16 %v406
    %v1070 = vunpack.c.l.b16 %v407
    %v1071 = vunpack.c.h.b16 %v407
    %v1072 = vunpack.c.l.b16 %v408
    %v1073 = vunpack.c.h.b16 %v408
    %v1074 = vunpack.c.l.b16 %v409
    %v1075 = vunpack.c.h.b16 %v409
    %v1076 = vunpack.c.l.b16 %v410
    %v1077 = vunpack.c.h.b16 %v410
    %v1078 = vunpack.c.l.b16 %v411
    %v1079 = vunpack.c.h.b16 %v411
    %v1080 = vunpack.c.l.b16 %v412
    %v1081 = vunpack.c.h.b16 %v412
    %v1082 = vunpack.c.l.b16 %v413
    %v1083 = vunpack.c.h.b16 %v413
    %v1084 = vunpack.c.l.b16 %v414
    %v1085 = vunpack.c.h.b16 %v414
    %v1086 = vunpack.c.l.b16 %v415
    %v1087 = vunpack.c.h.b16 %v415
    %v1088 = vunpack.c.l.b16 %v416
    %v1089 = vunpack.c.h.b16 %v416
    %v1090 = vunpack.c.l.b16 %v417
    %v1091 = vunpack.c.h.b16 %v417
    %v1092 = vunpack.c.l.b16 %v418
    %v1093 = vunpack.c.h.b16 %v418
    %v1094 = vunpack.c.l.b16 %v419
    %v1095 = vunpack.c.h.b16 %v419
    %v1096 = vunpack.c.l.b16 %v420
    %v1097 = vunpack.c.h.b16 %v420
    %v1098 = vunpack.c.l.b16 %v421
    %v1099 = vunpack.c.h.b16 %v421
    %v1100 = vunpack.c.l.b16 %v422
    %v1101 = vunpack.c.h.b16 %v422
    %v1102 = vunpack.c.l.b16 %v423
    %v1103 = vunpack.c.h.b16 %v423
    %v1104 = vunpack.c.l.b16 %v424
    %v1105 = vunpack.c.h.b16 %v424
    %v1106 = vunpack.c.l.b16 %v425
    %v1107 = vunpack.c.h.b16 %v425
    %v1108 = vunpack.c.l.b16 %v426
    %v1109 = vunpack.c.h.b16 %v426
    %v1110 = vunpack.c.l.b16 %v427
    %v1111 = vunpack.c.h.b16 %v427
    %v1112 = vunpack.c.l.b16 %v428
    %v1113 = vunpack.c.h.b16 %v428
    %v1114 = vunpack.c.l.b16 %v429
    %v1115 = vunpack.c.h.b16 %v429
    %v1116 = vunpack.c.l.b16 %v430
    %v1117 = vunpack.c.h.b16 %v430
    %v1118 = vunpack.c.l.b16 %v431
    %v1119 = vunpack.c.h.b16 %v431
    %v1120 = vunpack.c.l.b16 %v432
    %v1121 = vunpack.c.h.b16 %v432
    %v1122 = vunpack.c.l.b16 %v433
    %v1123 = vunpack.c.h.b16 %v433
    %v1124 = vunpack.c.l.b16 %v434
    %v1125 = vunpack.c.h.b16 %v434
    %v1126 = vunpack.c.l.b16 %v435
    %v1127 = vunpack.c.h.b16 %v435
    %v1128 = vunpack.c.l.b16 %v436
    %v1129 = vunpack.c.h.b16 %v436
    %v1130 = vunpack.c.l.b16 %v437
    %v1131 = vunpack.c.h.b16 %v437
    %v1132 = vunpack.c.l.b16 %v438
    %v1133 = vunpack.c.h.b16 %v438
    %v1134 = vunpack.c.l.b16 %v439
    %v1135 = vunpack.c.h.b16 %v439
    %v1136 = vunpack.c.l.b16 %v440
    %v1137 = vunpack.c.h.b16 %v440
    %v1138 = vunpack.c.l.b16 %v441
    %v1139 = vunpack.c.h.b16 %v441
    %v1140 = vunpack.c.l.b16 %v442
    %v1141 = vunpack.c.h.b16 %v442
    %v1142 = vunpack.c.l.b16 %v443
    %v1143 = vunpack.c.h.b16 %v443
    %v1144 = vunpack.c.l.b16 %v444
    %v1145 = vunpack.c.h.b16 %v444
    %v1146 = vunpack.c.l.b16 %v445
    %v1147 = vunpack.c.h.b16 %v445
    %v1148 = vunpack.c.l.b16 %v446
    %v1149 = vunpack.c.h.b16 %v446
    %v1150 = vunpack.c.l.b16 %v447
    %v1151 = vunpack.c.h.b16 %v447
    %v1152 = vunpack.c.l.b16 %v448
    %v1153 = vunpack.c.h.b16 %v448
    %v1154 = vunpack.c.l.b16 %v449
    %v1155 = vunpack.c.h.b16 %v449
    %v1156 = vunpack.c.l.b16 %v450
    %v1157 = vunpack.c.h.b16 %v450
    %v1158 = vunpack.c.l.b16 %v451
    %v1159 = vunpack.c.h.b16 %v451
    %v1160 = vunpack.c.l.b16 %v452
    %v1161 = vunpack.c.h.b16 %v452
    %v1162 = vunpack.c.l.b16 %v453
    %v1163 = vunpack.c.h.b16 %v453
    %v1164 = vunpack.c.l.b16 %v454
    %v1165 = vunpack.c.h.b16 %v454
    %v1166 = vunpack.c.l.b16 %v455
    %v1167 = vunpack.c.h.b16 %v455
    %v1168 = vunpack.c.l.b16 %v456
    %v1169 = vunpack.c.h.b16 %v456
    %v1170 = vunpack.c.l.b16 %v457
    %v1171 = vunpack.c.h.b16 %v457
    %v1172 = vunpack.c.l.b16 %v458
    %v1173 = vunpack.c.h.b16 %v458
    %v1174 = vunpack.c.l.b16 %v459
    %v1175 = vunpack.c.h.b16 %v459
    %v1176 = vunpack.c.l.b16 %v460
    %v1177 = vunpack.c.h.b16 %v460
    %v1178 = vunpack.c.l.b16 %v461
    %v1179 = vunpack.c.h.b16 %v461
    %v1180 = vunpack.c.l.b16 %v462
    %v1181 = vunpack.c.h.b16 %v462
    %v1182 = vunpack.c.l.b16 %v463
    %v1183 = vunpack.c.h.b16 %v463
    %v1184 = vunpack.c.l.b16 %v464
    %v1185 = vunpack.c.h.b16 %v464
    %v1186 = vunpack.c.l.b16 %v465
    %v1187 = vunpack.c.h.b16 %v465
    %v1188 = vunpack.c.l.b16 %v466
    %v1189 = vunpack.c.h.b16 %v466
    %v1190 = vunpack.c.l.b16 %v467
    %v1191 = vunpack.c.h.b16 %v467
    %v1192 = vunpack.c.l.b16 %v468
    %v1193 = vunpack.c.h.b16 %v468
    %v1194 = vunpack.c.l.b16 %v469
    %v1195 = vunpack.c.h.b16 %v469
    %v1196 = vunpack.c.l.b16 %v470
    %v1197 = vunpack.c.h.b16 %v470
    %v1198 = vunpack.c.l.b16 %v471
    %v1199 = vunpack.c.h.b16 %v471
    %v1200 = vunpack.c.l.b16 %v472
    %v1201 = vunpack.c.h.b16 %v472
    %v1202 = vunpack.c.l.b16 %v473
    %v1203 = vunpack.c.h.b16 %v473
    %v1204 = vunpack.c.l.b16 %v474
    %v1205 = vunpack.c.h.b16 %v474
    %v1206 = vunpack.c.l.b16 %v475
    %v1207 = vunpack.c.h.b16 %v475
    %v1208 = vunpack.c.l.b16 %v476
    %v1209 = vunpack.c.h.b16 %v476
    %v1210 = vunpack.c.l.b16 %v477
    %v1211 = vunpack.c.h.b16 %v477
    %v1212 = vunpack.c.l.b16 %v478
    %v1213 = vunpack.c.h.b16 %v478
    %v1214 = vunpack.c.l.b16 %v479
    %v1215 = vunpack.c.h.b16 %v479
    %v1216 = vunpack.c.l.b16 %v480
    %v1217 = vunpack.c.h.b16 %v480
    %v1218 = vunpack.c.l.b16 %v481
    %v1219 = vunpack.c.h.b16 %v481
    %v1220 = vunpack.c.l.b16 %v482
    %v1221 = vunpack.c.h.b16 %v482
    %v1222 = vunpack.c.l.b16 %v483
    %v1223 = vunpack.c.h.b16 %v483
    %v1224 = vunpack.c.l.b16 %v484
    %v1225 = vunpack.c.h.b16 %v484
    %v1226 = vunpack.c.l.b16 %v485
    %v1227 = vunpack.c.h.b16 %v485
    %v1228 = vunpack.c.l.b16 %v486
    %v1229 = vunpack.c.h.b16 %v486
    %v1230 = vunpack.c.l.b16 %v487
    %v1231 = vunpack.c.h.b16 %v487
    %v1232 = vunpack.c.l.b16 %v488
    %v1233 = vunpack.c.h.b16 %v488
    %v1234 = vunpack.c.l.b16 %v489
    %v1235 = vunpack.c.h.b16 %v489
    %v1236 = vunpack.c.l.b16 %v490
    %v1237 = vunpack.c.h.b16 %v490
    %v1238 = vunpack.c.l.b16 %v491
    %v1239 = vunpack.c.h.b16 %v491
    %v1240 = vunpack.c.l.b16 %v492
    %v1241 = vunpack.c.h.b16 %v492
    %v1242 = vunpack.c.l.b16 %v493
    %v1243 = vunpack.c.h.b16 %v493
    %v1244 = vunpack.c.l.b16 %v494
    %v1245 = vunpack.c.h.b16 %v494
    %v1246 = vunpack.c.l.b16 %v495
    %v1247 = vunpack.c.h.b16 %v495
    %v1248 = vunpack.c.l.b16 %v496
    %v1249 = vunpack.c.h.b16 %v496
    %v1250 = vunpack.c.l.b16 %v497
    %v1251 = vunpack.c.h.b16 %v497
    %v1252 = vunpack.c.l.b16 %v498
    %v1253 = vunpack.c.h.b16 %v498
    %v1254 = vunpack.c.l.b16 %v499
    %v1255 = vunpack.c.h.b16 %v499
    %v1256 = vunpack.c.l.b16 %v500
    %v1257 = vunpack.c.h.b16 %v500
    %v1258 = vunpack.c.l.b16 %v501
    %v1259 = vunpack.c.h.b16 %v501
    %v1260 = vunpack.c.l.b16 %v502
    %v1261 = vunpack.c.h.b16 %v502
    %v1262 = vunpack.c.l.b16 %v503
    %v1263 = vunpack.c.h.b16 %v503
    %v1264 = vunpack.c.l.b16 %v504
    %v1265 = vunpack.c.h.b16 %v504
    %v1266 = vunpack.c.l.b16 %v505
    %v1267 = vunpack.c.h.b16 %v505
    %v1268 = vunpack.c.l.b16 %v506
    %v1269 = vunpack.c.h.b16 %v506
    %v1270 = vunpack.c.l.b16 %v507
    %v1271 = vunpack.c.h.b16 %v507
    %v1272 = vunpack.c.l.b16 %v508
    %v1273 = vunpack.c.h.b16 %v508
    %v1274 = vunpack.c.l.b16 %v509
    %v1275 = vunpack.c.h.b16 %v509
    %v1276 = vunpack.c.l.b16 %v510
    %v1277 = vunpack.c.h.b16 %v510
    %v1278 = vunpack.c.l.b16 %v511
    %v1279 = vunpack.c.h.b16 %v511
    %v1280 = vunpack.c.l.b16 %v512
    %v1281 = vunpack.c.h.b16 %v512
    %v1282 = vunpack.c.l.b16 %v513
    %v1283 = vunpack.c.h.b16 %v513
    %v1284 = vunpack.c.l.b16 %v514
    %v1285 = vunpack.c.h.b16 %v514
    %v1286 = vunpack.c.l.b16 %v515
    %v1287 = vunpack.c.h.b16 %v515
    %v1288 = vunpack.c.l.b16 %v516
    %v1289 = vunpack.c.h.b16 %v516
    %v1290 = vunpack.c.l.b16 %v517
    %v1291 = vunpack.c.h.b16 %v517
    %v1292 = vunpack.c.l.b16 %v518
    %v1293 = vunpack.c.h.b16 %v518
    %v1294 = vunpack.c.l.b16 %v519
    %v1295 = vunpack.c.h.b16 %v519
    %v1296 = vunpack.c.l.b16 %v520
    %v1297 = vunpack.c.h.b16 %v520
    %v1298 = vunpack.c.l.b16 %v521
    %v1299 = vunpack.c.h.b16 %v521
    %v1300 = vunpack.c.l.b16 %v522
    %v1301 = vunpack.c.h.b16 %v522
    %v1302 = vunpack.c.l.b16 %v523
    %v1303 = vunpack.c.h.b16 %v523
    %v1304 = vunpack.c.l.b16 %v524
    %v1305 = vunpack.c.h.b16 %v524
    %v1306 = vunpack.c.l.b16 %v525
    %v1307 = vunpack.c.h.b16 %v525
    %v1308 = vunpack.c.l.b16 %v526
    %v1309 = vunpack.c.h.b16 %v526
    %v1310 = vunpack.c.l.b16 %v527
    %v1311 = vunpack.c.h.b16 %v527
    %v1312 = vunpack.c.l.b16 %v528
    %v1313 = vunpack.c.h.b16 %v528
    %v1314 = vunpack.c.l.b16 %v529
    %v1315 = vunpack.c.h.b16 %v529
    %v1316 = vunpack.c.l.b16 %v530
    %v1317 = vunpack.c.h.b16 %v530
    %v1318 = vunpack.c.l.b16 %v531
    %v1319 = vunpack.c.h.b16 %v531
    %v1320 = vunpack.c.l.b16 %v532
    %v1321 = vunpack.c.h.b16 %v532
    %v1322 = vunpack.c.l.b16 %v533
    %v1323 = vunpack.c.h.b16 %v533
    %v1324 = vunpack.c.l.b16 %v534
    %v1325 = vunpack.c.h.b16 %v534
    %v1326 = vunpack.c.l.b16 %v535
    %v1327 = vunpack.c.h.b16 %v535
    %v1328 = vunpack.c.l.b16 %v536
    %v1329 = vunpack.c.h.b16 %v536
    %v1330 = vunpack.c.l.b16 %v537
    %v1331 = vunpack.c.h.b16 %v537
    %v1332 = vunpack.c.l.b16 %v538
    %v1333 = vunpack.c.h.b16 %v538
    %v1334 = vunpack.c.l.b16 %v539
    %v1335 = vunpack.c.h.b16 %v539
    %v1336 = vunpack.c.l.b16 %v540
    %v1337 = vunpack.c.h.b16 %v540
    %v1338 = vunpack.c.l.b16 %v541
    %v1339 = vunpack.c.h.b16 %v541
    %v1340 = vunpack.c.l.b16 %v542
    %v1341 = vunpack.c.h.b16 %v542
    %v1342 = vunpack.c.l.b16 %v543
    %v1343 = vunpack.c.h.b16 %v543
    %v1344 = vunpack.c.l.b16 %v544
    %v1345 = vunpack.c.h.b16 %v544
    %v1346 = vunpack.c.l.b16 %v545
    %v1347 = vunpack.c.h.b16 %v545
    %v1348 = vunpack.c.l.b16 %v546
    %v1349 = vunpack.c.h.b16 %v546
    %v1350 = vunpack.c.l.b16 %v547
    %v1351 = vunpack.c.h.b16 %v547
    %v1352 = vunpack.c.l.b16 %v548
    %v1353 = vunpack.c.h.b16 %v548
    %v1354 = vunpack.c.l.b16 %v549
    %v1355 = vunpack.c.h.b16 %v549
    %v1356 = vunpack.c.l.b16 %v550
    %v1357 = vunpack.c.h.b16 %v550
    %v1358 = vunpack.c.l.b16 %v551
    %v1359 = vunpack.c.h.b16 %v551
    %v1360 = vunpack.c.l.b16 %v552
    %v1361 = vunpack.c.h.b16 %v552
    %v1362 = vunpack.c.l.b16 %v553
    %v1363 = vunpack.c.h.b16 %v553
    %v1364 = vpack.c.b16 %v860, %v852
    %v1365 = vpack.c.b16 %v861, %v853
    %v1366 = vpack.c.b16 %v862, %v854
    %v1367 = vpack.c.b16 %v863, %v855
    %v1368 = vpack.c.b16 %v864, %v856
    %v1369 = vpack.c.b16 %v865, %v857
    %v1370 = vpack.c.b16 %v866, %v858
    %v1371 = vpack.c.b16 %v867, %v859
    %v1372 = vpack.c.b16 %v876, %v868
    %v1373 = vpack.c.b16 %v877, %v869
    %v1374 = vpack.c.b16 %v878, %v870
    %v1375 = vpack.c.b16 %v879, %v871
    %v1376 = vpack.c.b16 %v880, %v872
    %v1377 = vpack.c.b16 %v881, %v873
    %v1378 = vpack.c.b16 %v882, %v874
    %v1379 = vpack.c.b16 %v883, %v875
    %v1380 = vpack.c.b16 %v892, %v884
    %v1381 = vpack.c.b16 %v893, %v885
    %v1382 = vpack.c.b16 %v894, %v886
    %v1383 = vpack.c.b16 %v895, %v887
    %v1384 = vpack.c.b16 %v896, %v888
    %v1385 = vpack.c.b16 %v897, %v889
    %v1386 = vpack.c.b16 %v898, %v890
    %v1387 = vpack.c.b16 %v899, %v891
    %v1388 = vpack.c.b16 %v908, %v900
    %v1389 = vpack.c.b16 %v909, %v901
    %v1390 = vpack.c.b16 %v910, %v902
    %v1391 = vpack.c.b16 %v911, %v903
    %v1392 = vpack.c.b16 %v912, %v904
    %v1393 = vpack.c.b16 %v913, %v905
    %v1394 = vpack.c.b16 %v914, %v906
    %v1395 = vpack.c.b16 %v915, %v907
    %v1396 = vpack.c.b16 %v924, %v916
    %v1397 = vpack.c.b16 %v925, %v917
    %v1398 = vpack.c.b16 %v926, %v918
    %v1399 = vpack.c.b16 %v927, %v919
    %v1400 = vpack.c.b16 %v928, %v920
    %v1401 = vpack.c.b16 %v929, %v921
    %v1402 = vpack.c.b16 %v930, %v922
    %v1403 = vpack.c.b16 %v931, %v923
    %v1404 = vpack.c.b16 %v940, %v932
    %v1405 = vpack.c.b16 %v941, %v933
    %v1406 = vpack.c.b16 %v942, %v934
    %v1407 = vpack.c.b16 %v943, %v935
    %v1408 = vpack.c.b16 %v944, %v936
    %v1409 = vpack.c.b16 %v945, %v937
    %v1410 = vpack.c.b16 %v946, %v938
    %v1411 = vpack.c.b16 %v947, %v939
    %v1412 = vpack.c.b16 %v956, %v948
    %v1413 = vpack.c.b16 %v957, %v949
    %v1414 = vpack.c.b16 %v958, %v950
    %v1415 = vpack.c.b16 %v959, %v951
    %v1416 = vpack.c.b16 %v960, %v952
    %v1417 = vpack.c.b16 %v961, %v953
    %v1418 = vpack.c.b16 %v962, %v954
    %v1419 = vpack.c.b16 %v963, %v955
    %v1420 = vpack.c.b16 %v972, %v964
    %v1421 = vpack.c.b16 %v973, %v965
    %v1422 = vpack.c.b16 %v974, %v966
    %v1423 = vpack.c.b16 %v975, %v967
    %v1424 = vpack.c.b16 %v976, %v968
    %v1425 = vpack.c.b16 %v977, %v969
    %v1426 = vpack.c.b16 %v978, %v970
    %v1427 = vpack.c.b16 %v979, %v971
    %v1428 = vpack.c.b16 %v988, %v980
    %v1429 = vpack.c.b16 %v989, %v981
    %v1430 = vpack.c.b16 %v990, %v982
    %v1431 = vpack.c.b16 %v991, %v983
    %v1432 = vpack.c.b16 %v992, %v984
    %v1433 = vpack.c.b16 %v993, %v985
    %v1434 = vpack.c.b16 %v994, %v986
    %v1435 = vpack.c.b16 %v995, %v987
    %v1436 = vpack.c.b16 %v1004, %v996
    %v1437 = vpack.c.b16 %v1005, %v997
    %v1438 = vpack.c.b16 %v1006, %v998
    %v1439 = vpack.c.b16 %v1007, %v999
    %v1440 = vpack.c.b16 %v1008, %v1000
    %v1441 = vpack.c.b16 %v1009, %v1001
    %v1442 = vpack.c.b16 %v1010, %v1002
    %v1443 = vpack.c.b16 %v1011, %v1003
    %v1444 = vpack.c.b16 %v1020, %v1012
    %v1445 = vpack.c.b16 %v1021, %v1013
    %v1446 = vpack.c.b16 %v1022, %v1014
    %v1447 = vpack.c.b16 %v1023, %v1015
    %v1448 = vpack.c.b16 %v1024, %v1016
    %v1449 = vpack.c.b16 %v1025, %v1017
    %v1450 = vpack.c.b16 %v1026, %v1018
    %v1451 = vpack.c.b16 %v1027, %v1019
    %v1452 = vpack.c.b16 %v1036, %v1028
    %v1453 = vpack.c.b16 %v1037, %v1029
    %v1454 = vpack.c.b16 %v1038, %v1030
    %v1455 = vpack.c.b16 %v1039, %v1031
    %v1456 = vpack.c.b16 %v1040, %v1032
    %v1457 = vpack.c.b16 %v1041, %v1033
    %v1458 = vpack.c.b16 %v1042, %v1034
    %v1459 = vpack.c.b16 %v1043, %v1035
    %v1460 = vpack.c.b16 %v1052, %v1044
    %v1461 = vpack.c.b16 %v1053, %v1045
    %v1462 = vpack.c.b16 %v1054, %v1046
    %v1463 = vpack.c.b16 %v1055, %v1047
    %v1464 = vpack.c.b16 %v1056, %v1048
    %v1465 = vpack.c.b16 %v1057, %v1049
    %v1466 = vpack.c.b16 %v1058, %v1050
    %v1467 = vpack.c.b16 %v1059, %v1051
    %v1468 = vpack.c.b16 %v1068, %v1060
    %v1469 = vpack.c.b16 %v1069, %v1061
    %v1470 = vpack.c.b16 %v1070, %v1062
    %v1471 = vpack.c.b16 %v1071, %v1063
    %v1472 = vpack.c.b16 %v1072, %v1064
    %v1473 = vpack.c.b16 %v1073, %v1065
    %v1474 = vpack.c.b16 %v1074, %v1066
    %v1475 = vpack.c.b16 %v1075, %v1067
    %v1476 = vpack.c.b16 %v1084, %v1076
    %v1477 = vpack.c.b16 %v1085, %v1077
    %v1478 = vpack.c.b16 %v1086, %v1078
    %v1479 = vpack.c.b16 %v1087, %v1079
    %v1480 = vpack.c.b16 %v1088, %v1080
    %v1481 = vpack.c.b16 %v1089, %v1081
    %v1482 = vpack.c.b16 %v1090, %v1082
    %v1483 = vpack.c.b16 %v1091, %v1083
    %v1484 = vpack.c.b16 %v1100, %v1092
    %v1485 = vpack.c.b16 %v1101, %v1093
    %v1486 = vpack.c.b16 %v1102, %v1094
    %v1487 = vpack.c.b16 %v1103, %v1095
    %v1488 = vpack.c.b16 %v1104, %v1096
    %v1489 = vpack.c.b16 %v1105, %v1097
    %v1490 = vpack.c.b16 %v1106, %v1098
    %v1491 = vpack.c.b16 %v1107, %v1099
    %v1492 = vpack.c.b16 %v1116, %v1108
    %v1493 = vpack.c.b16 %v1117, %v1109
    %v1494 = vpack.c.b16 %v1118, %v1110
    %v1495 = vpack.c.b16 %v1119, %v1111
    %v1496 = vpack.c.b16 %v1120, %v1112
    %v1497 = vpack.c.b16 %v1121, %v1113
    %v1498 = vpack.c.b16 %v1122, %v1114
    %v1499 = vpack.c.b16 %v1123, %v1115
    %v1500 = vpack.c.b16 %v1132, %v1124
    %v1501 = vpack.c.b16 %v1133, %v1125
    %v1502 = vpack.c.b16 %v1134, %v1126
    %v1503 = vpack.c.b16 %v1135, %v1127
    %v1504 = vpack.c.b16 %v1136, %v1128
    %v1505 = vpack.c.b16 %v1137, %v1129
    %v1506 = vpack.c.b16 %v1138, %v1130
    %v1507 = vpack.c.b16 %v1139, %v1131
    %v1508 = vpack.c.b16 %v1148, %v1140
    %v1509 = vpack.c.b16 %v1149, %v1141
    %v1510 = vpack.c.b16 %v1150, %v1142
    %v1511 = vpack.c.b16 %v1151, %v1143
    %v1512 = vpack.c.b16 %v1152, %v1144
    %v1513 = vpack.c.b16 %v1153, %v1145
    %v1514 = vpack.c.b16 %v1154, %v1146
    %v1515 = vpack.c.b16 %v1155, %v1147
    %v1516 = vpack.c.b16 %v1164, %v1156
    %v1517 = vpack.c.b16 %v1165, %v1157
    %v1518 = vpack.c.b16 %v1166, %v1158
    %v1519 = vpack.c.b16 %v1167, %v1159
    %v1520 = vpack.c.b16 %v1168, %v1160
    %v1521 = vpack.c.b16 %v1169, %v1161
    %v1522 = vpack.c.b16 %v1170, %v1162
    %v1523 = vpack.c.b16 %v1171, %v1163
    %v1524 = vpack.c.b16 %v1180, %v1172
    %v1525 = vpack.c.b16 %v1181, %v1173
    %v1526 = vpack.c.b16 %v1182, %v1174
    %v1527 = vpack.c.b16 %v1183, %v1175
    %v1528 = vpack.c.b16 %v1184, %v1176
    %v1529 = vpack.c.b16 %v1185, %v1177
    %v1530 = vpack.c.b16 %v1186, %v1178
    %v1531 = vpack.c.b16 %v1187, %v1179
    %v1532 = vpack.c.b16 %v1196, %v1188
    %v1533 = vpack.c.b16 %v1197, %v1189
    %v1534 = vpack.c.b16 %v1198, %v1190
    %v1535 = vpack.c.b16 %v1199, %v1191
    %v1536 = vpack.c.b16 %v1200, %v1192
    %v1537 = vpack.c.b16 %v1201, %v1193
    %v1538 = vpack.c.b16 %v1202, %v1194
    %v1539 = vpack.c.b16 %v1203, %v1195
    %v1540 = vpack.c.b16 %v1212, %v1204
    %v1541 = vpack.c.b16 %v1213, %v1205
    %v1542 = vpack.c.b16 %v1214, %v1206
    %v1543 = vpack.c.b16 %v1215, %v1207
    %v1544 = vpack.c.b16 %v1216, %v1208
    %v1545 = vpack.c.b16 %v1217, %v1209
    %v1546 = vpack.c.b16 %v1218, %v1210
    %v1547 = vpack.c.b16 %v1219, %v1211
    %v1548 = vpack.c.b16 %v1228, %v1220
    %v1549 = vpack.c.b16 %v1229, %v1221
    %v1550 = vpack.c.b16 %v1230, %v1222
    %v1551 = vpack.c.b16 %v1231, %v1223
    %v1552 = vpack.c.b16 %v1232, %v1224
    %v1553 = vpack.c.b16 %v1233, %v1225
    %v1554 = vpack.c.b16 %v1234, %v1226
    %v1555 = vpack.c.b16 %v1235, %v1227
    %v1556 = vpack.c.b16 %v1244, %v1236
    %v1557 = vpack.c.b16 %v1245, %v1237
    %v1558 = vpack.c.b16 %v1246, %v1238
    %v1559 = vpack.c.b16 %v1247, %v1239
    %v1560 = vpack.c.b16 %v1248, %v1240
    %v1561 = vpack.c.b16 %v1249, %v1241
    %v1562 = vpack.c.b16 %v1250, %v1242
    %v1563 = vpack.c.b16 %v1251, %v1243
    %v1564 = vpack.c.b16 %v1260, %v1252
    %v1565 = vpack.c.b16 %v1261, %v1253
    %v1566 = vpack.c.b16 %v1262, %v1254
    %v1567 = vpack.c.b16 %v1263, %v1255
    %v1568 = vpack.c.b16 %v1264, %v1256
    %v1569 = vpack.c.b16 %v1265, %v1257
    %v1570 = vpack.c.b16 %v1266, %v1258
    %v1571 = vpack.c.b16 %v1267, %v1259
    %v1572 = vpack.c.b16 %v1276, %v1268
    %v1573 = vpack.c.b16 %v1277, %v1269
    %v1574 = vpack.c.b16 %v1278, %v1270
    %v1575 = vpack.c.b16 %v1279, %v1271
    %v1576 = vpack.c.b16 %v1280, %v1272
    %v1577 = vpack.c.b16 %v1281, %v1273
    %v1578 = vpack.c.b16 %v1282, %v1274
    %v1579 = vpack.c.b16 %v1283, %v1275
    %v1580 = vpack.c.b16 %v1292, %v1284
    %v1581 = vpack.c.b16 %v1293, %v1285
    %v1582 = vpack.c.b16 %v1294, %v1286
    %v1583 = vpack.c.b16 %v1295, %v1287
    %v1584 = vpack.c.b16 %v1296, %v1288
    %v1585 = vpack.c.b16 %v1297, %v1289
    %v1586 = vpack.c.b16 %v1298, %v1290
    %v1587 = vpack.c.b16 %v1299, %v1291
    %v1588 = vpack.c.b16 %v1308, %v1300
    %v1589 = vpack.c.b16 %v1309, %v1301
    %v1590 = vpack.c.b16 %v1310, %v1302
    %v1591 = vpack.c.b16 %v1311, %v1303
    %v1592 = vpack.c.b16 %v1312, %v1304
    %v1593 = vpack.c.b16 %v1313, %v1305
    %v1594 = vpack.c.b16 %v1314, %v1306
    %v1595 = vpack.c.b16 %v1315, %v1307
    %v1596 = vpack.c.b16 %v1324, %v1316
    %v1597 = vpack.c.b16 %v1325, %v1317
    %v1598 = vpack.c.b16 %v1326, %v1318
    %v1599 = vpack.c.b16 %v1327, %v1319
    %v1600 = vpack.c.b16 %v1328, %v1320
    %v1601 = vpack.c.b16 %v1329, %v1321
    %v1602 = vpack.c.b16 %v1330, %v1322
    %v1603 = vpack.c.b16 %v1331, %v1323
    %v1604 = vpack.c.b16 %v1340, %v1332
    %v1605 = vpack.c.b16 %v1341, %v1333
    %v1606 = vpack.c.b16 %v1342, %v1334
    %v1607 = vpack.c.b16 %v1343, %v1335
    %v1608 = vpack.c.b16 %v1344, %v1336
    %v1609 = vpack.c.b16 %v1345, %v1337
    %v1610 = vpack.c.b16 %v1346, %v1338
    %v1611 = vpack.c.b16 %v1347, %v1339
    %v1612 = vpack.c.b16 %v1356, %v1348
    %v1613 = vpack.c.b16 %v1357, %v1349
    %v1614 = vpack.c.b16 %v1358, %v1350
    %v1615 = vpack.c.b16 %v1359, %v1351
    %v1616 = vpack.c.b16 %v1360, %v1352
    %v1617 = vpack.c.b16 %v1361, %v1353
    %v1618 = vpack.c.b16 %v1362, %v1354
    %v1619 = vpack.c.b16 %v1363, %v1355
    %1876 = vmatprep.subr.bf16.mxu0 %v1365
    %1877 = vmatpush1.bf16.msra.mxu0 %v1364
    %1878 = vmatprep.subr.bf16.mxu0 %v1373
    %1879 = vmatpush1.bf16.msra.mxu0 %v1372
    %1880 = vmatprep.subr.bf16.mxu0 %v1381
    %1881 = vmatpush1.bf16.msra.mxu0 %v1380
    %1882 = vmatprep.subr.bf16.mxu0 %v1389
    %1883 = vmatpush1.bf16.msra.mxu0 %v1388
    %1884 = vmatprep.subr.bf16.mxu0 %v1397
    %1885 = vmatpush1.bf16.msra.mxu0 %v1396
    %1886 = vmatprep.subr.bf16.mxu0 %v1405
    %1887 = vmatpush1.bf16.msra.mxu0 %v1404
    %1888 = vmatprep.subr.bf16.mxu0 %v1413
    %1889 = vmatpush1.bf16.msra.mxu0 %v1412
    %1890 = vmatprep.subr.bf16.mxu0 %v1421
    %1891 = vmatpush1.bf16.msra.mxu0 %v1420
    %1892 = vmatprep.subr.bf16.mxu0 %v1429
    %1893 = vmatpush1.bf16.msra.mxu0 %v1428
    %1894 = vmatprep.subr.bf16.mxu0 %v1437
    %1895 = vmatpush1.bf16.msra.mxu0 %v1436
    %1896 = vmatprep.subr.bf16.mxu0 %v1445
    %1897 = vmatpush1.bf16.msra.mxu0 %v1444
    %1898 = vmatprep.subr.bf16.mxu0 %v1453
    %1899 = vmatpush1.bf16.msra.mxu0 %v1452
    %1900 = vmatprep.subr.bf16.mxu0 %v1461
    %1901 = vmatpush1.bf16.msra.mxu0 %v1460
    %1902 = vmatprep.subr.bf16.mxu0 %v1469
    %1903 = vmatpush1.bf16.msra.mxu0 %v1468
    %1904 = vmatprep.subr.bf16.mxu0 %v1477
    %1905 = vmatpush1.bf16.msra.mxu0 %v1476
    %1906 = vmatprep.subr.bf16.mxu0 %v1485
    %1907 = vmatpush1.bf16.msra.mxu0 %v1484
    %1908 = vmatprep.mubr.bf16.mxu0 %v295
    %1909 = vmatmul.mubr.bf16.gmra.mrb[0].mxu0 %v294
    %v1910 = vpop.f32.mrb[0].mxu0
    %v1911 = vadd.f32 %v559, %v1910
    %v1912 = vpop.f32.mrb[0].mxu0
    %v1913 = vadd.f32 %v563, %v1912
    %v1914 = vpop.f32.mrb[0].mxu0
    %v1915 = vpop.f32.mrb[0].mxu0
    %1916 = vdwg.mxu0
    %1917 = vmatprep.subr.bf16.mxu0 %v1493
    %1918 = vmatpush1.bf16.msra.mxu0 %v1492
    %1919 = vmatprep.subr.bf16.mxu0 %v1501
    %1920 = vmatpush1.bf16.msra.mxu0 %v1500
    %1921 = vmatprep.subr.bf16.mxu0 %v1509
    %1922 = vmatpush1.bf16.msra.mxu0 %v1508
    %1923 = vmatprep.subr.bf16.mxu0 %v1517
    %1924 = vmatpush1.bf16.msra.mxu0 %v1516
    %1925 = vmatprep.subr.bf16.mxu0 %v1525
    %1926 = vmatpush1.bf16.msra.mxu0 %v1524
    %1927 = vmatprep.subr.bf16.mxu0 %v1533
    %1928 = vmatpush1.bf16.msra.mxu0 %v1532
    %1929 = vmatprep.subr.bf16.mxu0 %v1541
    %1930 = vmatpush1.bf16.msra.mxu0 %v1540
    %1931 = vmatprep.subr.bf16.mxu0 %v1549
    %1932 = vmatpush1.bf16.msra.mxu0 %v1548
    %1933 = vmatprep.subr.bf16.mxu0 %v1557
    %1934 = vmatpush1.bf16.msra.mxu0 %v1556
    %1935 = vmatprep.subr.bf16.mxu0 %v1565
    %1936 = vmatpush1.bf16.msra.mxu0 %v1564
    %1937 = vmatprep.subr.bf16.mxu0 %v1573
    %1938 = vmatpush1.bf16.msra.mxu0 %v1572
    %1939 = vmatprep.subr.bf16.mxu0 %v1581
    %1940 = vmatpush1.bf16.msra.mxu0 %v1580
    %1941 = vmatprep.subr.bf16.mxu0 %v1589
    %1942 = vmatpush1.bf16.msra.mxu0 %v1588
    %1943 = vmatprep.subr.bf16.mxu0 %v1597
    %1944 = vmatpush1.bf16.msra.mxu0 %v1596
    %1945 = vmatprep.subr.bf16.mxu0 %v1605
    %1946 = vmatpush1.bf16.msra.mxu0 %v1604
    %1947 = vmatprep.subr.bf16.mxu0 %v1613
    %1948 = vmatpush1.bf16.msra.mxu0 %v1612
    %1949 = vmatprep.mubr.bf16.mxu0 %v297
    %1950 = vmatmul.mubr.bf16.gmra.mrb[0].mxu0 %v296
    %v1951 = vpop.f32.mrb[0].mxu0
    %v1952 = vadd.f32 %v1911, %v1951
    %v1953 = vpop.f32.mrb[0].mxu0
    %v1954 = vadd.f32 %v1913, %v1953
    %v1955 = vpop.f32.mrb[0].mxu0
    %v1956 = vpop.f32.mrb[0].mxu0
    %1957 = vdwg.mxu0
    %1958 = vmatprep.subr.bf16.mxu0 %v1367
    %1959 = vmatpush1.bf16.msra.mxu0 %v1366
    %1960 = vmatprep.subr.bf16.mxu0 %v1375
    %1961 = vmatpush1.bf16.msra.mxu0 %v1374
    %1962 = vmatprep.subr.bf16.mxu0 %v1383
    %1963 = vmatpush1.bf16.msra.mxu0 %v1382
    %1964 = vmatprep.subr.bf16.mxu0 %v1391
    %1965 = vmatpush1.bf16.msra.mxu0 %v1390
    %1966 = vmatprep.subr.bf16.mxu0 %v1399
    %1967 = vmatpush1.bf16.msra.mxu0 %v1398
    %1968 = vmatprep.subr.bf16.mxu0 %v1407
    %1969 = vmatpush1.bf16.msra.mxu0 %v1406
    %1970 = vmatprep.subr.bf16.mxu0 %v1415
    %1971 = vmatpush1.bf16.msra.mxu0 %v1414
    %1972 = vmatprep.subr.bf16.mxu0 %v1423
    %1973 = vmatpush1.bf16.msra.mxu0 %v1422
    %1974 = vmatprep.subr.bf16.mxu0 %v1431
    %1975 = vmatpush1.bf16.msra.mxu0 %v1430
    %1976 = vmatprep.subr.bf16.mxu0 %v1439
    %1977 = vmatpush1.bf16.msra.mxu0 %v1438
    %1978 = vmatprep.subr.bf16.mxu0 %v1447
    %1979 = vmatpush1.bf16.msra.mxu0 %v1446
    %1980 = vmatprep.subr.bf16.mxu0 %v1455
    %1981 = vmatpush1.bf16.msra.mxu0 %v1454
    %1982 = vmatprep.subr.bf16.mxu0 %v1463
    %1983 = vmatpush1.bf16.msra.mxu0 %v1462
    %1984 = vmatprep.subr.bf16.mxu0 %v1471
    %1985 = vmatpush1.bf16.msra.mxu0 %v1470
    %1986 = vmatprep.subr.bf16.mxu0 %v1479
    %1987 = vmatpush1.bf16.msra.mxu0 %v1478
    %1988 = vmatprep.subr.bf16.mxu0 %v1487
    %1989 = vmatpush1.bf16.msra.mxu0 %v1486
    %1990 = vmatprep.mubr.bf16.mxu0 %v295
    %1991 = vmatmul.mubr.bf16.gmra.mrb[0].mxu0 %v294
    %v1992 = vpop.f32.mrb[0].mxu0
    %v1993 = vadd.f32 %v567, %v1992
    %v1994 = vpop.f32.mrb[0].mxu0
    %v1995 = vadd.f32 %v571, %v1994
    %v1996 = vpop.f32.mrb[0].mxu0
    %v1997 = vpop.f32.mrb[0].mxu0
    %1998 = vdwg.mxu0
    %1999 = vmatprep.subr.bf16.mxu0 %v1495
    %2000 = vmatpush1.bf16.msra.mxu0 %v1494
    %2001 = vmatprep.subr.bf16.mxu0 %v1503
    %2002 = vmatpush1.bf16.msra.mxu0 %v1502
    %2003 = vmatprep.subr.bf16.mxu0 %v1511
    %2004 = vmatpush1.bf16.msra.mxu0 %v1510
    %2005 = vmatprep.subr.bf16.mxu0 %v1519
    %2006 = vmatpush1.bf16.msra.mxu0 %v1518
    %2007 = vmatprep.subr.bf16.mxu0 %v1527
    %2008 = vmatpush1.bf16.msra.mxu0 %v1526
    %2009 = vmatprep.subr.bf16.mxu0 %v1535
    %2010 = vmatpush1.bf16.msra.mxu0 %v1534
    %2011 = vmatprep.subr.bf16.mxu0 %v1543
    %2012 = vmatpush1.bf16.msra.mxu0 %v1542
    %2013 = vmatprep.subr.bf16.mxu0 %v1551
    %2014 = vmatpush1.bf16.msra.mxu0 %v1550
    %2015 = vmatprep.subr.bf16.mxu0 %v1559
    %2016 = vmatpush1.bf16.msra.mxu0 %v1558
    %2017 = vmatprep.subr.bf16.mxu0 %v1567
    %2018 = vmatpush1.bf16.msra.mxu0 %v1566
    %2019 = vmatprep.subr.bf16.mxu0 %v1575
    %2020 = vmatpush1.bf16.msra.mxu0 %v1574
    %2021 = vmatprep.subr.bf16.mxu0 %v1583
    %2022 = vmatpush1.bf16.msra.mxu0 %v1582
    %2023 = vmatprep.subr.bf16.mxu0 %v1591
    %2024 = vmatpush1.bf16.msra.mxu0 %v1590
    %2025 = vmatprep.subr.bf16.mxu0 %v1599
    %2026 = vmatpush1.bf16.msra.mxu0 %v1598
    %2027 = vmatprep.subr.bf16.mxu0 %v1607
    %2028 = vmatpush1.bf16.msra.mxu0 %v1606
    %2029 = vmatprep.subr.bf16.mxu0 %v1615
    %2030 = vmatpush1.bf16.msra.mxu0 %v1614
    %2031 = vmatprep.mubr.bf16.mxu0 %v297
    %2032 = vmatmul.mubr.bf16.gmra.mrb[0].mxu0 %v296
    %v2033 = vpop.f32.mrb[0].mxu0
    %v2034 = vadd.f32 %v1993, %v2033
    %v2035 = vpop.f32.mrb[0].mxu0
    %v2036 = vadd.f32 %v1995, %v2035
    %v2037 = vpop.f32.mrb[0].mxu0
    %v2038 = vpop.f32.mrb[0].mxu0
    %2039 = vdwg.mxu0
    %2040 = vmatprep.subr.bf16.mxu0 %v1369
    %2041 = vmatpush1.bf16.msra.mxu0 %v1368
    %2042 = vmatprep.subr.bf16.mxu0 %v1377
    %2043 = vmatpush1.bf16.msra.mxu0 %v1376
    %2044 = vmatprep.subr.bf16.mxu0 %v1385
    %2045 = vmatpush1.bf16.msra.mxu0 %v1384
    %2046 = vmatprep.subr.bf16.mxu0 %v1393
    %2047 = vmatpush1.bf16.msra.mxu0 %v1392
    %2048 = vmatprep.subr.bf16.mxu0 %v1401
    %2049 = vmatpush1.bf16.msra.mxu0 %v1400
    %2050 = vmatprep.subr.bf16.mxu0 %v1409
    %2051 = vmatpush1.bf16.msra.mxu0 %v1408
    %2052 = vmatprep.subr.bf16.mxu0 %v1417
    %2053 = vmatpush1.bf16.msra.mxu0 %v1416
    %2054 = vmatprep.subr.bf16.mxu0 %v1425
    %2055 = vmatpush1.bf16.msra.mxu0 %v1424
    %2056 = vmatprep.subr.bf16.mxu0 %v1433
    %2057 = vmatpush1.bf16.msra.mxu0 %v1432
    %2058 = vmatprep.subr.bf16.mxu0 %v1441
    %2059 = vmatpush1.bf16.msra.mxu0 %v1440
    %2060 = vmatprep.subr.bf16.mxu0 %v1449
    %2061 = vmatpush1.bf16.msra.mxu0 %v1448
    %2062 = vmatprep.subr.bf16.mxu0 %v1457
    %2063 = vmatpush1.bf16.msra.mxu0 %v1456
    %2064 = vmatprep.subr.bf16.mxu0 %v1465
    %2065 = vmatpush1.bf16.msra.mxu0 %v1464
    %2066 = vmatprep.subr.bf16.mxu0 %v1473
    %2067 = vmatpush1.bf16.msra.mxu0 %v1472
    %2068 = vmatprep.subr.bf16.mxu0 %v1481
    %2069 = vmatpush1.bf16.msra.mxu0 %v1480
    %2070 = vmatprep.subr.bf16.mxu0 %v1489
    %2071 = vmatpush1.bf16.msra.mxu0 %v1488
    %2072 = vmatprep.mubr.bf16.mxu0 %v295
    %2073 = vmatmul.mubr.bf16.gmra.mrb[0].mxu0 %v294
    %v2074 = vpop.f32.mrb[0].mxu0
    %v2075 = vadd.f32 %v575, %v2074
    %v2076 = vpop.f32.mrb[0].mxu0
    %v2077 = vadd.f32 %v579, %v2076
    %v2078 = vpop.f32.mrb[0].mxu0
    %v2079 = vpop.f32.mrb[0].mxu0
    %2080 = vdwg.mxu0
    %2081 = vmatprep.subr.bf16.mxu0 %v1497
    %2082 = vmatpush1.bf16.msra.mxu0 %v1496
    %2083 = vmatprep.subr.bf16.mxu0 %v1505
    %2084 = vmatpush1.bf16.msra.mxu0 %v1504
    %2085 = vmatprep.subr.bf16.mxu0 %v1513
    %2086 = vmatpush1.bf16.msra.mxu0 %v1512
    %2087 = vmatprep.subr.bf16.mxu0 %v1521
    %2088 = vmatpush1.bf16.msra.mxu0 %v1520
    %2089 = vmatprep.subr.bf16.mxu0 %v1529
    %2090 = vmatpush1.bf16.msra.mxu0 %v1528
    %2091 = vmatprep.subr.bf16.mxu0 %v1537
    %2092 = vmatpush1.bf16.msra.mxu0 %v1536
    %2093 = vmatprep.subr.bf16.mxu0 %v1545
    %2094 = vmatpush1.bf16.msra.mxu0 %v1544
    %2095 = vmatprep.subr.bf16.mxu0 %v1553
    %2096 = vmatpush1.bf16.msra.mxu0 %v1552
    %2097 = vmatprep.subr.bf16.mxu0 %v1561
    %2098 = vmatpush1.bf16.msra.mxu0 %v1560
    %2099 = vmatprep.subr.bf16.mxu0 %v1569
    %2100 = vmatpush1.bf16.msra.mxu0 %v1568
    %2101 = vmatprep.subr.bf16.mxu0 %v1577
    %2102 = vmatpush1.bf16.msra.mxu0 %v1576
    %2103 = vmatprep.subr.bf16.mxu0 %v1585
    %2104 = vmatpush1.bf16.msra.mxu0 %v1584
    %2105 = vmatprep.subr.bf16.mxu0 %v1593
    %2106 = vmatpush1.bf16.msra.mxu0 %v1592
    %2107 = vmatprep.subr.bf16.mxu0 %v1601
    %2108 = vmatpush1.bf16.msra.mxu0 %v1600
    %2109 = vmatprep.subr.bf16.mxu0 %v1609
    %2110 = vmatpush1.bf16.msra.mxu0 %v1608
    %2111 = vmatprep.subr.bf16.mxu0 %v1617
    %2112 = vmatpush1.bf16.msra.mxu0 %v1616
    %2113 = vmatprep.mubr.bf16.mxu0 %v297
    %2114 = vmatmul.mubr.bf16.gmra.mrb[0].mxu0 %v296
    %v2115 = vpop.f32.mrb[0].mxu0
    %v2116 = vadd.f32 %v2075, %v2115
    %v2117 = vpop.f32.mrb[0].mxu0
    %v2118 = vadd.f32 %v2077, %v2117
    %v2119 = vpop.f32.mrb[0].mxu0
    %v2120 = vpop.f32.mrb[0].mxu0
    %2121 = vdwg.mxu0
    %2122 = vmatprep.subr.bf16.mxu0 %v1371
    %2123 = vmatpush1.bf16.msra.mxu0 %v1370
    %2124 = vmatprep.subr.bf16.mxu0 %v1379
    %2125 = vmatpush1.bf16.msra.mxu0 %v1378
    %2126 = vmatprep.subr.bf16.mxu0 %v1387
    %2127 = vmatpush1.bf16.msra.mxu0 %v1386
    %2128 = vmatprep.subr.bf16.mxu0 %v1395
    %2129 = vmatpush1.bf16.msra.mxu0 %v1394
    %2130 = vmatprep.subr.bf16.mxu0 %v1403
    %2131 = vmatpush1.bf16.msra.mxu0 %v1402
    %2132 = vmatprep.subr.bf16.mxu0 %v1411
    %2133 = vmatpush1.bf16.msra.mxu0 %v1410
    %2134 = vmatprep.subr.bf16.mxu0 %v1419
    %2135 = vmatpush1.bf16.msra.mxu0 %v1418
    %2136 = vmatprep.subr.bf16.mxu0 %v1427
    %2137 = vmatpush1.bf16.msra.mxu0 %v1426
    %2138 = vmatprep.subr.bf16.mxu0 %v1435
    %2139 = vmatpush1.bf16.msra.mxu0 %v1434
    %2140 = vmatprep.subr.bf16.mxu0 %v1443
    %2141 = vmatpush1.bf16.msra.mxu0 %v1442
    %2142 = vmatprep.subr.bf16.mxu0 %v1451
    %2143 = vmatpush1.bf16.msra.mxu0 %v1450
    %2144 = vmatprep.subr.bf16.mxu0 %v1459
    %2145 = vmatpush1.bf16.msra.mxu0 %v1458
    %2146 = vmatprep.subr.bf16.mxu0 %v1467
    %2147 = vmatpush1.bf16.msra.mxu0 %v1466
    %2148 = vmatprep.subr.bf16.mxu0 %v1475
    %2149 = vmatpush1.bf16.msra.mxu0 %v1474
    %2150 = vmatprep.subr.bf16.mxu0 %v1483
    %2151 = vmatpush1.bf16.msra.mxu0 %v1482
    %2152 = vmatprep.subr.bf16.mxu0 %v1491
    %2153 = vmatpush1.bf16.msra.mxu0 %v1490
    %2154 = vmatprep.mubr.bf16.mxu0 %v295
    %2155 = vmatmul.mubr.bf16.gmra.mrb[0].mxu0 %v294
    %v2156 = vpop.f32.mrb[0].mxu0
    %v2157 = vadd.f32 %v583, %v2156
    %v2158 = vpop.f32.mrb[0].mxu0
    %v2159 = vadd.f32 %v587, %v2158
    %v2160 = vpop.f32.mrb[0].mxu0
    %v2161 = vpop.f32.mrb[0].mxu0
    %2162 = vdwg.mxu0
    %2163 = vmatprep.subr.bf16.mxu0 %v1499
    %2164 = vmatpush1.bf16.msra.mxu0 %v1498
    %2165 = vmatprep.subr.bf16.mxu0 %v1507
    %2166 = vmatpush1.bf16.msra.mxu0 %v1506
    %2167 = vmatprep.subr.bf16.mxu0 %v1515
    %2168 = vmatpush1.bf16.msra.mxu0 %v1514
    %2169 = vmatprep.subr.bf16.mxu0 %v1523
    %2170 = vmatpush1.bf16.msra.mxu0 %v1522
    %2171 = vmatprep.subr.bf16.mxu0 %v1531
    %2172 = vmatpush1.bf16.msra.mxu0 %v1530
    %2173 = vmatprep.subr.bf16.mxu0 %v1539
    %2174 = vmatpush1.bf16.msra.mxu0 %v1538
    %2175 = vmatprep.subr.bf16.mxu0 %v1547
    %2176 = vmatpush1.bf16.msra.mxu0 %v1546
    %2177 = vmatprep.subr.bf16.mxu0 %v1555
    %2178 = vmatpush1.bf16.msra.mxu0 %v1554
    %2179 = vmatprep.subr.bf16.mxu0 %v1563
    %2180 = vmatpush1.bf16.msra.mxu0 %v1562
    %2181 = vmatprep.subr.bf16.mxu0 %v1571
    %2182 = vmatpush1.bf16.msra.mxu0 %v1570
    %2183 = vmatprep.subr.bf16.mxu0 %v1579
    %2184 = vmatpush1.bf16.msra.mxu0 %v1578
    %2185 = vmatprep.subr.bf16.mxu0 %v1587
    %2186 = vmatpush1.bf16.msra.mxu0 %v1586
    %2187 = vmatprep.subr.bf16.mxu0 %v1595
    %2188 = vmatpush1.bf16.msra.mxu0 %v1594
    %2189 = vmatprep.subr.bf16.mxu0 %v1603
    %2190 = vmatpush1.bf16.msra.mxu0 %v1602
    %2191 = vmatprep.subr.bf16.mxu0 %v1611
    %2192 = vmatpush1.bf16.msra.mxu0 %v1610
    %2193 = vmatprep.subr.bf16.mxu0 %v1619
    %2194 = vmatpush1.bf16.msra.mxu0 %v1618
    %2195 = vmatprep.mubr.bf16.mxu0 %v297
    %2196 = vmatmul.mubr.bf16.gmra.mrb[0].mxu0 %v296
    %v2197 = vpop.f32.mrb[0].mxu0
    %v2198 = vadd.f32 %v2157, %v2197
    %v2199 = vpop.f32.mrb[0].mxu0
    %v2200 = vadd.f32 %v2159, %v2199
    %v2201 = vpop.f32.mrb[0].mxu0
    %v2202 = vpop.f32.mrb[0].mxu0
    %2203 = vdwg.mxu0
    %v2204 = vmax.f32 %v1952, %v2116
    %v2205 = vmax.f32 %v1954, %v2118
    %v2206 = vmax.f32 %v2034, %v2198
    %v2207 = vmax.f32 %v2036, %v2200
    %v2208 = vmax.f32 %v2204, 0.0
    %v2209 = vmax.f32 %v2205, 0.0
    %v2210 = vmax.f32 %v2206, 0.0
    %v2211 = vmax.f32 %v2207, 0.0
    %v2212 = vpack.c.bf16 %v2208, %v2208
    %v2213 = vpack.c.bf16 %v2209, %v2209
    %v2214 = vpack.c.bf16 %v2210, %v2210
    %v2215 = vpack.c.bf16 %v2211, %v2211
    %v2216 = vld [vmem:[#allocation10] sm:$0xff]
    %v2217 = vld [vmem:[#allocation10 + $0x8] sm:$0xff]
    %v2218 = vld [vmem:[#allocation10 + $0x10] sm:$0xff]
    %v2219 = vld [vmem:[#allocation10 + $0x18] sm:$0xff]
    %v2220 = vld [vmem:[#allocation10 + $0x20] sm:$0xff]
    %v2221 = vld [vmem:[#allocation10 + $0x28] sm:$0xff]
    %v2222 = vld [vmem:[#allocation10 + $0x30] sm:$0xff]
    %v2223 = vld [vmem:[#allocation10 + $0x38] sm:$0xff]
    %v2224 = vld [vmem:[#allocation10 + $0x40] sm:$0xff]
    %v2225 = vld [vmem:[#allocation10 + $0x48] sm:$0xff]
    %v2226 = vld [vmem:[#allocation10 + $0x50] sm:$0xff]
    %v2227 = vld [vmem:[#allocation10 + $0x58] sm:$0xff]
    %v2228 = vld [vmem:[#allocation10 + $0x60] sm:$0xff]
    %v2229 = vld [vmem:[#allocation10 + $0x68] sm:$0xff]
    %v2230 = vld [vmem:[#allocation10 + $0x70] sm:$0xff]
    %v2231 = vld [vmem:[#allocation10 + $0x78] sm:$0xff]
    %v2232 = vld [vmem:[#allocation10 + $0x80] sm:$0xff]
    %v2233 = vld [vmem:[#allocation10 + $0x88] sm:$0xff]
    %v2234 = vld [vmem:[#allocation10 + $0x90] sm:$0xff]
    %v2235 = vld [vmem:[#allocation10 + $0x98] sm:$0xff]
    %v2236 = vld [vmem:[#allocation10 + $0xa0] sm:$0xff]
    %v2237 = vld [vmem:[#allocation10 + $0xa8] sm:$0xff]
    %v2238 = vld [vmem:[#allocation10 + $0xb0] sm:$0xff]
    %v2239 = vld [vmem:[#allocation10 + $0xb8] sm:$0xff]
    %v2240 = vld [vmem:[#allocation10 + $0xc0] sm:$0xff]
    %v2241 = vld [vmem:[#allocation10 + $0xc8] sm:$0xff]
    %v2242 = vld [vmem:[#allocation10 + $0xd0] sm:$0xff]
    %v2243 = vld [vmem:[#allocation10 + $0xd8] sm:$0xff]
    %v2244 = vld [vmem:[#allocation10 + $0xe0] sm:$0xff]
    %v2245 = vld [vmem:[#allocation10 + $0xe8] sm:$0xff]
    %v2246 = vld [vmem:[#allocation10 + $0xf0] sm:$0xff]
    %v2247 = vld [vmem:[#allocation10 + $0xf8] sm:$0xff]
    %v2248 = vld [vmem:[#allocation10 + $0x100] sm:$0xff]
    %v2249 = vld [vmem:[#allocation10 + $0x108] sm:$0xff]
    %v2250 = vld [vmem:[#allocation10 + $0x110] sm:$0xff]
    %v2251 = vld [vmem:[#allocation10 + $0x118] sm:$0xff]
    %v2252 = vld [vmem:[#allocation10 + $0x120] sm:$0xff]
    %v2253 = vld [vmem:[#allocation10 + $0x128] sm:$0xff]
    %v2254 = vld [vmem:[#allocation10 + $0x130] sm:$0xff]
    %v2255 = vld [vmem:[#allocation10 + $0x138] sm:$0xff]
    %v2256 = vld [vmem:[#allocation10 + $0x140] sm:$0xff]
    %v2257 = vld [vmem:[#allocation10 + $0x148] sm:$0xff]
    %v2258 = vld [vmem:[#allocation10 + $0x150] sm:$0xff]
    %v2259 = vld [vmem:[#allocation10 + $0x158] sm:$0xff]
    %v2260 = vld [vmem:[#allocation10 + $0x160] sm:$0xff]
    %v2261 = vld [vmem:[#allocation10 + $0x168] sm:$0xff]
    %v2262 = vld [vmem:[#allocation10 + $0x170] sm:$0xff]
    %v2263 = vld [vmem:[#allocation10 + $0x178] sm:$0xff]
    %v2264 = vld [vmem:[#allocation10 + $0x180] sm:$0xff]
    %v2265 = vld [vmem:[#allocation10 + $0x188] sm:$0xff]
    %v2266 = vld [vmem:[#allocation10 + $0x190] sm:$0xff]
    %v2267 = vld [vmem:[#allocation10 + $0x198] sm:$0xff]
    %v2268 = vld [vmem:[#allocation10 + $0x1a0] sm:$0xff]
    %v2269 = vld [vmem:[#allocation10 + $0x1a8] sm:$0xff]
    %v2270 = vld [vmem:[#allocation10 + $0x1b0] sm:$0xff]
    %v2271 = vld [vmem:[#allocation10 + $0x1b8] sm:$0xff]
    %v2272 = vld [vmem:[#allocation10 + $0x1c0] sm:$0xff]
    %v2273 = vld [vmem:[#allocation10 + $0x1c8] sm:$0xff]
    %v2274 = vld [vmem:[#allocation10 + $0x1d0] sm:$0xff]
    %v2275 = vld [vmem:[#allocation10 + $0x1d8] sm:$0xff]
    %v2276 = vld [vmem:[#allocation10 + $0x1e0] sm:$0xff]
    %v2277 = vld [vmem:[#allocation10 + $0x1e8] sm:$0xff]
    %v2278 = vld [vmem:[#allocation10 + $0x1f0] sm:$0xff]
    %v2279 = vld [vmem:[#allocation10 + $0x1f8] sm:$0xff]
    %v2280 = vld [vmem:[#allocation10 + $0x200] sm:$0xff]
    %v2281 = vld [vmem:[#allocation10 + $0x208] sm:$0xff]
    %v2282 = vld [vmem:[#allocation10 + $0x210] sm:$0xff]
    %v2283 = vld [vmem:[#allocation10 + $0x218] sm:$0xff]
    %v2284 = vld [vmem:[#allocation10 + $0x220] sm:$0xff]
    %v2285 = vld [vmem:[#allocation10 + $0x228] sm:$0xff]
    %v2286 = vld [vmem:[#allocation10 + $0x230] sm:$0xff]
    %v2287 = vld [vmem:[#allocation10 + $0x238] sm:$0xff]
    %v2288 = vld [vmem:[#allocation10 + $0x240] sm:$0xff]
    %v2289 = vld [vmem:[#allocation10 + $0x248] sm:$0xff]
    %v2290 = vld [vmem:[#allocation10 + $0x250] sm:$0xff]
    %v2291 = vld [vmem:[#allocation10 + $0x258] sm:$0xff]
    %v2292 = vld [vmem:[#allocation10 + $0x260] sm:$0xff]
    %v2293 = vld [vmem:[#allocation10 + $0x268] sm:$0xff]
    %v2294 = vld [vmem:[#allocation10 + $0x270] sm:$0xff]
    %v2295 = vld [vmem:[#allocation10 + $0x278] sm:$0xff]
    %v2296 = vld [vmem:[#allocation10 + $0x280] sm:$0xff]
    %v2297 = vld [vmem:[#allocation10 + $0x288] sm:$0xff]
    %v2298 = vld [vmem:[#allocation10 + $0x290] sm:$0xff]
    %v2299 = vld [vmem:[#allocation10 + $0x298] sm:$0xff]
    %v2300 = vld [vmem:[#allocation10 + $0x2a0] sm:$0xff]
    %v2301 = vld [vmem:[#allocation10 + $0x2a8] sm:$0xff]
    %v2302 = vld [vmem:[#allocation10 + $0x2b0] sm:$0xff]
    %v2303 = vld [vmem:[#allocation10 + $0x2b8] sm:$0xff]
    %v2304 = vld [vmem:[#allocation10 + $0x2c0] sm:$0xff]
    %v2305 = vld [vmem:[#allocation10 + $0x2c8] sm:$0xff]
    %v2306 = vld [vmem:[#allocation10 + $0x2d0] sm:$0xff]
    %v2307 = vld [vmem:[#allocation10 + $0x2d8] sm:$0xff]
    %v2308 = vld [vmem:[#allocation10 + $0x2e0] sm:$0xff]
    %v2309 = vld [vmem:[#allocation10 + $0x2e8] sm:$0xff]
    %v2310 = vld [vmem:[#allocation10 + $0x2f0] sm:$0xff]
    %v2311 = vld [vmem:[#allocation10 + $0x2f8] sm:$0xff]
    %v2312 = vld [vmem:[#allocation10 + $0x300] sm:$0xff]
    %v2313 = vld [vmem:[#allocation10 + $0x308] sm:$0xff]
    %v2314 = vld [vmem:[#allocation10 + $0x310] sm:$0xff]
    %v2315 = vld [vmem:[#allocation10 + $0x318] sm:$0xff]
    %v2316 = vld [vmem:[#allocation10 + $0x320] sm:$0xff]
    %v2317 = vld [vmem:[#allocation10 + $0x328] sm:$0xff]
    %v2318 = vld [vmem:[#allocation10 + $0x330] sm:$0xff]
    %v2319 = vld [vmem:[#allocation10 + $0x338] sm:$0xff]
    %v2320 = vld [vmem:[#allocation10 + $0x340] sm:$0xff]
    %v2321 = vld [vmem:[#allocation10 + $0x348] sm:$0xff]
    %v2322 = vld [vmem:[#allocation10 + $0x350] sm:$0xff]
    %v2323 = vld [vmem:[#allocation10 + $0x358] sm:$0xff]
    %v2324 = vld [vmem:[#allocation10 + $0x360] sm:$0xff]
    %v2325 = vld [vmem:[#allocation10 + $0x368] sm:$0xff]
    %v2326 = vld [vmem:[#allocation10 + $0x370] sm:$0xff]
    %v2327 = vld [vmem:[#allocation10 + $0x378] sm:$0xff]
    %v2328 = vld [vmem:[#allocation10 + $0x380] sm:$0xff]
    %v2329 = vld [vmem:[#allocation10 + $0x388] sm:$0xff]
    %v2330 = vld [vmem:[#allocation10 + $0x390] sm:$0xff]
    %v2331 = vld [vmem:[#allocation10 + $0x398] sm:$0xff]
    %v2332 = vld [vmem:[#allocation10 + $0x3a0] sm:$0xff]
    %v2333 = vld [vmem:[#allocation10 + $0x3a8] sm:$0xff]
    %v2334 = vld [vmem:[#allocation10 + $0x3b0] sm:$0xff]
    %v2335 = vld [vmem:[#allocation10 + $0x3b8] sm:$0xff]
    %v2336 = vld [vmem:[#allocation10 + $0x3c0] sm:$0xff]
    %v2337 = vld [vmem:[#allocation10 + $0x3c8] sm:$0xff]
    %v2338 = vld [vmem:[#allocation10 + $0x3d0] sm:$0xff]
    %v2339 = vld [vmem:[#allocation10 + $0x3d8] sm:$0xff]
    %v2340 = vld [vmem:[#allocation10 + $0x3e0] sm:$0xff]
    %v2341 = vld [vmem:[#allocation10 + $0x3e8] sm:$0xff]
    %v2342 = vld [vmem:[#allocation10 + $0x3f0] sm:$0xff]
    %v2343 = vld [vmem:[#allocation10 + $0x3f8] sm:$0xff]
    %v2344 = vld [vmem:[#allocation10 + $0x400] sm:$0xff]
    %v2345 = vld [vmem:[#allocation10 + $0x408] sm:$0xff]
    %v2346 = vld [vmem:[#allocation10 + $0x410] sm:$0xff]
    %v2347 = vld [vmem:[#allocation10 + $0x418] sm:$0xff]
    %v2348 = vld [vmem:[#allocation10 + $0x420] sm:$0xff]
    %v2349 = vld [vmem:[#allocation10 + $0x428] sm:$0xff]
    %v2350 = vld [vmem:[#allocation10 + $0x430] sm:$0xff]
    %v2351 = vld [vmem:[#allocation10 + $0x438] sm:$0xff]
    %v2352 = vld [vmem:[#allocation10 + $0x440] sm:$0xff]
    %v2353 = vld [vmem:[#allocation10 + $0x448] sm:$0xff]
    %v2354 = vld [vmem:[#allocation10 + $0x450] sm:$0xff]
    %v2355 = vld [vmem:[#allocation10 + $0x458] sm:$0xff]
    %v2356 = vld [vmem:[#allocation10 + $0x460] sm:$0xff]
    %v2357 = vld [vmem:[#allocation10 + $0x468] sm:$0xff]
    %v2358 = vld [vmem:[#allocation10 + $0x470] sm:$0xff]
    %v2359 = vld [vmem:[#allocation10 + $0x478] sm:$0xff]
    %v2360 = vld [vmem:[#allocation10 + $0x480] sm:$0xff]
    %v2361 = vld [vmem:[#allocation10 + $0x488] sm:$0xff]
    %v2362 = vld [vmem:[#allocation10 + $0x490] sm:$0xff]
    %v2363 = vld [vmem:[#allocation10 + $0x498] sm:$0xff]
    %v2364 = vld [vmem:[#allocation10 + $0x4a0] sm:$0xff]
    %v2365 = vld [vmem:[#allocation10 + $0x4a8] sm:$0xff]
    %v2366 = vld [vmem:[#allocation10 + $0x4b0] sm:$0xff]
    %v2367 = vld [vmem:[#allocation10 + $0x4b8] sm:$0xff]
    %v2368 = vld [vmem:[#allocation10 + $0x4c0] sm:$0xff]
    %v2369 = vld [vmem:[#allocation10 + $0x4c8] sm:$0xff]
    %v2370 = vld [vmem:[#allocation10 + $0x4d0] sm:$0xff]
    %v2371 = vld [vmem:[#allocation10 + $0x4d8] sm:$0xff]
    %v2372 = vld [vmem:[#allocation10 + $0x4e0] sm:$0xff]
    %v2373 = vld [vmem:[#allocation10 + $0x4e8] sm:$0xff]
    %v2374 = vld [vmem:[#allocation10 + $0x4f0] sm:$0xff]
    %v2375 = vld [vmem:[#allocation10 + $0x4f8] sm:$0xff]
    %v2376 = vld [vmem:[#allocation10 + $0x500] sm:$0xff]
    %v2377 = vld [vmem:[#allocation10 + $0x508] sm:$0xff]
    %v2378 = vld [vmem:[#allocation10 + $0x510] sm:$0xff]
    %v2379 = vld [vmem:[#allocation10 + $0x518] sm:$0xff]
    %v2380 = vld [vmem:[#allocation10 + $0x520] sm:$0xff]
    %v2381 = vld [vmem:[#allocation10 + $0x528] sm:$0xff]
    %v2382 = vld [vmem:[#allocation10 + $0x530] sm:$0xff]
    %v2383 = vld [vmem:[#allocation10 + $0x538] sm:$0xff]
    %v2384 = vld [vmem:[#allocation10 + $0x540] sm:$0xff]
    %v2385 = vld [vmem:[#allocation10 + $0x548] sm:$0xff]
    %v2386 = vld [vmem:[#allocation10 + $0x550] sm:$0xff]
    %v2387 = vld [vmem:[#allocation10 + $0x558] sm:$0xff]
    %v2388 = vld [vmem:[#allocation10 + $0x560] sm:$0xff]
    %v2389 = vld [vmem:[#allocation10 + $0x568] sm:$0xff]
    %v2390 = vld [vmem:[#allocation10 + $0x570] sm:$0xff]
    %v2391 = vld [vmem:[#allocation10 + $0x578] sm:$0xff]
    %v2392 = vld [vmem:[#allocation10 + $0x580] sm:$0xff]
    %v2393 = vld [vmem:[#allocation10 + $0x588] sm:$0xff]
    %v2394 = vld [vmem:[#allocation10 + $0x590] sm:$0xff]
    %v2395 = vld [vmem:[#allocation10 + $0x598] sm:$0xff]
    %v2396 = vld [vmem:[#allocation10 + $0x5a0] sm:$0xff]
    %v2397 = vld [vmem:[#allocation10 + $0x5a8] sm:$0xff]
    %v2398 = vld [vmem:[#allocation10 + $0x5b0] sm:$0xff]
    %v2399 = vld [vmem:[#allocation10 + $0x5b8] sm:$0xff]
    %v2400 = vld [vmem:[#allocation10 + $0x5c0] sm:$0xff]
    %v2401 = vld [vmem:[#allocation10 + $0x5c8] sm:$0xff]
    %v2402 = vld [vmem:[#allocation10 + $0x5d0] sm:$0xff]
    %v2403 = vld [vmem:[#allocation10 + $0x5d8] sm:$0xff]
    %v2404 = vld [vmem:[#allocation10 + $0x5e0] sm:$0xff]
    %v2405 = vld [vmem:[#allocation10 + $0x5e8] sm:$0xff]
    %v2406 = vld [vmem:[#allocation10 + $0x5f0] sm:$0xff]
    %v2407 = vld [vmem:[#allocation10 + $0x5f8] sm:$0xff]
    %v2408 = vld [vmem:[#allocation10 + $0x600] sm:$0xff]
    %v2409 = vld [vmem:[#allocation10 + $0x608] sm:$0xff]
    %v2410 = vld [vmem:[#allocation10 + $0x610] sm:$0xff]
    %v2411 = vld [vmem:[#allocation10 + $0x618] sm:$0xff]
    %v2412 = vld [vmem:[#allocation10 + $0x620] sm:$0xff]
    %v2413 = vld [vmem:[#allocation10 + $0x628] sm:$0xff]
    %v2414 = vld [vmem:[#allocation10 + $0x630] sm:$0xff]
    %v2415 = vld [vmem:[#allocation10 + $0x638] sm:$0xff]
    %v2416 = vld [vmem:[#allocation10 + $0x640] sm:$0xff]
    %v2417 = vld [vmem:[#allocation10 + $0x648] sm:$0xff]
    %v2418 = vld [vmem:[#allocation10 + $0x650] sm:$0xff]
    %v2419 = vld [vmem:[#allocation10 + $0x658] sm:$0xff]
    %v2420 = vld [vmem:[#allocation10 + $0x660] sm:$0xff]
    %v2421 = vld [vmem:[#allocation10 + $0x668] sm:$0xff]
    %v2422 = vld [vmem:[#allocation10 + $0x670] sm:$0xff]
    %v2423 = vld [vmem:[#allocation10 + $0x678] sm:$0xff]
    %v2424 = vld [vmem:[#allocation10 + $0x680] sm:$0xff]
    %v2425 = vld [vmem:[#allocation10 + $0x688] sm:$0xff]
    %v2426 = vld [vmem:[#allocation10 + $0x690] sm:$0xff]
    %v2427 = vld [vmem:[#allocation10 + $0x698] sm:$0xff]
    %v2428 = vld [vmem:[#allocation10 + $0x6a0] sm:$0xff]
    %v2429 = vld [vmem:[#allocation10 + $0x6a8] sm:$0xff]
    %v2430 = vld [vmem:[#allocation10 + $0x6b0] sm:$0xff]
    %v2431 = vld [vmem:[#allocation10 + $0x6b8] sm:$0xff]
    %v2432 = vld [vmem:[#allocation10 + $0x6c0] sm:$0xff]
    %v2433 = vld [vmem:[#allocation10 + $0x6c8] sm:$0xff]
    %v2434 = vld [vmem:[#allocation10 + $0x6d0] sm:$0xff]
    %v2435 = vld [vmem:[#allocation10 + $0x6d8] sm:$0xff]
    %v2436 = vld [vmem:[#allocation10 + $0x6e0] sm:$0xff]
    %v2437 = vld [vmem:[#allocation10 + $0x6e8] sm:$0xff]
    %v2438 = vld [vmem:[#allocation10 + $0x6f0] sm:$0xff]
    %v2439 = vld [vmem:[#allocation10 + $0x6f8] sm:$0xff]
    %v2440 = vld [vmem:[#allocation10 + $0x700] sm:$0xff]
    %v2441 = vld [vmem:[#allocation10 + $0x708] sm:$0xff]
    %v2442 = vld [vmem:[#allocation10 + $0x710] sm:$0xff]
    %v2443 = vld [vmem:[#allocation10 + $0x718] sm:$0xff]
    %v2444 = vld [vmem:[#allocation10 + $0x720] sm:$0xff]
    %v2445 = vld [vmem:[#allocation10 + $0x728] sm:$0xff]
    %v2446 = vld [vmem:[#allocation10 + $0x730] sm:$0xff]
    %v2447 = vld [vmem:[#allocation10 + $0x738] sm:$0xff]
    %v2448 = vld [vmem:[#allocation10 + $0x740] sm:$0xff]
    %v2449 = vld [vmem:[#allocation10 + $0x748] sm:$0xff]
    %v2450 = vld [vmem:[#allocation10 + $0x750] sm:$0xff]
    %v2451 = vld [vmem:[#allocation10 + $0x758] sm:$0xff]
    %v2452 = vld [vmem:[#allocation10 + $0x760] sm:$0xff]
    %v2453 = vld [vmem:[#allocation10 + $0x768] sm:$0xff]
    %v2454 = vld [vmem:[#allocation10 + $0x770] sm:$0xff]
    %v2455 = vld [vmem:[#allocation10 + $0x778] sm:$0xff]
    %v2456 = vld [vmem:[#allocation10 + $0x780] sm:$0xff]
    %v2457 = vld [vmem:[#allocation10 + $0x788] sm:$0xff]
    %v2458 = vld [vmem:[#allocation10 + $0x790] sm:$0xff]
    %v2459 = vld [vmem:[#allocation10 + $0x798] sm:$0xff]
    %v2460 = vld [vmem:[#allocation10 + $0x7a0] sm:$0xff]
    %v2461 = vld [vmem:[#allocation10 + $0x7a8] sm:$0xff]
    %v2462 = vld [vmem:[#allocation10 + $0x7b0] sm:$0xff]
    %v2463 = vld [vmem:[#allocation10 + $0x7b8] sm:$0xff]
    %v2464 = vld [vmem:[#allocation10 + $0x7c0] sm:$0xff]
    %v2465 = vld [vmem:[#allocation10 + $0x7c8] sm:$0xff]
    %v2466 = vld [vmem:[#allocation10 + $0x7d0] sm:$0xff]
    %v2467 = vld [vmem:[#allocation10 + $0x7d8] sm:$0xff]
    %v2468 = vld [vmem:[#allocation10 + $0x7e0] sm:$0xff]
    %v2469 = vld [vmem:[#allocation10 + $0x7e8] sm:$0xff]
    %v2470 = vld [vmem:[#allocation10 + $0x7f0] sm:$0xff]
    %v2471 = vld [vmem:[#allocation10 + $0x7f8] sm:$0xff]
    %v2472 = vld [vmem:[#allocation11] sm:$0xff]
    %v2474 = vlaneseq
    %v2475 = vshrl.u32 %v2474, 7
    %v2476 = vsub.s32 0, %v2475
    %v2477 = vrot.slane %v2472, %v2476
    %v2478 = vlaneseq
    %v2479 = vshrl.u32 %v2478, 7
    %v2480 = vsub.s32 1, %v2479
    %v2481 = vrot.slane %v2472, %v2480
    %v2482 = vlaneseq
    %v2483 = vshrl.u32 %v2482, 7
    %v2484 = vsub.s32 2, %v2483
    %v2485 = vrot.slane %v2472, %v2484
    %v2486 = vlaneseq
    %v2487 = vshrl.u32 %v2486, 7
    %v2488 = vsub.s32 3, %v2487
    %v2489 = vrot.slane %v2472, %v2488
    %v2490 = vlaneseq
    %v2491 = vshrl.u32 %v2490, 7
    %v2492 = vsub.s32 4, %v2491
    %v2493 = vrot.slane %v2472, %v2492
    %v2494 = vlaneseq
    %v2495 = vshrl.u32 %v2494, 7
    %v2496 = vsub.s32 5, %v2495
    %v2497 = vrot.slane %v2472, %v2496
    %v2498 = vlaneseq
    %v2499 = vshrl.u32 %v2498, 7
    %v2500 = vsub.s32 6, %v2499
    %v2501 = vrot.slane %v2472, %v2500
    %v2502 = vlaneseq
    %v2503 = vshrl.u32 %v2502, 7
    %v2504 = vsub.s32 7, %v2503
    %v2505 = vrot.slane %v2472, %v2504
    %v2770 = vunpack.c.l.b16 %v2216
    %v2771 = vunpack.c.h.b16 %v2216
    %v2772 = vunpack.c.l.b16 %v2217
    %v2773 = vunpack.c.h.b16 %v2217
    %v2774 = vunpack.c.l.b16 %v2218
    %v2775 = vunpack.c.h.b16 %v2218
    %v2776 = vunpack.c.l.b16 %v2219
    %v2777 = vunpack.c.h.b16 %v2219
    %v2778 = vunpack.c.l.b16 %v2220
    %v2779 = vunpack.c.h.b16 %v2220
    %v2780 = vunpack.c.l.b16 %v2221
    %v2781 = vunpack.c.h.b16 %v2221
    %v2782 = vunpack.c.l.b16 %v2222
    %v2783 = vunpack.c.h.b16 %v2222
    %v2784 = vunpack.c.l.b16 %v2223
    %v2785 = vunpack.c.h.b16 %v2223
    %v2786 = vunpack.c.l.b16 %v2224
    %v2787 = vunpack.c.h.b16 %v2224
    %v2788 = vunpack.c.l.b16 %v2225
    %v2789 = vunpack.c.h.b16 %v2225
    %v2790 = vunpack.c.l.b16 %v2226
    %v2791 = vunpack.c.h.b16 %v2226
    %v2792 = vunpack.c.l.b16 %v2227
    %v2793 = vunpack.c.h.b16 %v2227
    %v2794 = vunpack.c.l.b16 %v2228
    %v2795 = vunpack.c.h.b16 %v2228
    %v2796 = vunpack.c.l.b16 %v2229
    %v2797 = vunpack.c.h.b16 %v2229
    %v2798 = vunpack.c.l.b16 %v2230
    %v2799 = vunpack.c.h.b16 %v2230
    %v2800 = vunpack.c.l.b16 %v2231
    %v2801 = vunpack.c.h.b16 %v2231
    %v2802 = vunpack.c.l.b16 %v2232
    %v2803 = vunpack.c.h.b16 %v2232
    %v2804 = vunpack.c.l.b16 %v2233
    %v2805 = vunpack.c.h.b16 %v2233
    %v2806 = vunpack.c.l.b16 %v2234
    %v2807 = vunpack.c.h.b16 %v2234
    %v2808 = vunpack.c.l.b16 %v2235
    %v2809 = vunpack.c.h.b16 %v2235
    %v2810 = vunpack.c.l.b16 %v2236
    %v2811 = vunpack.c.h.b16 %v2236
    %v2812 = vunpack.c.l.b16 %v2237
    %v2813 = vunpack.c.h.b16 %v2237
    %v2814 = vunpack.c.l.b16 %v2238
    %v2815 = vunpack.c.h.b16 %v2238
    %v2816 = vunpack.c.l.b16 %v2239
    %v2817 = vunpack.c.h.b16 %v2239
    %v2818 = vunpack.c.l.b16 %v2240
    %v2819 = vunpack.c.h.b16 %v2240
    %v2820 = vunpack.c.l.b16 %v2241
    %v2821 = vunpack.c.h.b16 %v2241
    %v2822 = vunpack.c.l.b16 %v2242
    %v2823 = vunpack.c.h.b16 %v2242
    %v2824 = vunpack.c.l.b16 %v2243
    %v2825 = vunpack.c.h.b16 %v2243
    %v2826 = vunpack.c.l.b16 %v2244
    %v2827 = vunpack.c.h.b16 %v2244
    %v2828 = vunpack.c.l.b16 %v2245
    %v2829 = vunpack.c.h.b16 %v2245
    %v2830 = vunpack.c.l.b16 %v2246
    %v2831 = vunpack.c.h.b16 %v2246
    %v2832 = vunpack.c.l.b16 %v2247
    %v2833 = vunpack.c.h.b16 %v2247
    %v2834 = vunpack.c.l.b16 %v2248
    %v2835 = vunpack.c.h.b16 %v2248
    %v2836 = vunpack.c.l.b16 %v2249
    %v2837 = vunpack.c.h.b16 %v2249
    %v2838 = vunpack.c.l.b16 %v2250
    %v2839 = vunpack.c.h.b16 %v2250
    %v2840 = vunpack.c.l.b16 %v2251
    %v2841 = vunpack.c.h.b16 %v2251
    %v2842 = vunpack.c.l.b16 %v2252
    %v2843 = vunpack.c.h.b16 %v2252
    %v2844 = vunpack.c.l.b16 %v2253
    %v2845 = vunpack.c.h.b16 %v2253
    %v2846 = vunpack.c.l.b16 %v2254
    %v2847 = vunpack.c.h.b16 %v2254
    %v2848 = vunpack.c.l.b16 %v2255
    %v2849 = vunpack.c.h.b16 %v2255
    %v2850 = vunpack.c.l.b16 %v2256
    %v2851 = vunpack.c.h.b16 %v2256
    %v2852 = vunpack.c.l.b16 %v2257
    %v2853 = vunpack.c.h.b16 %v2257
    %v2854 = vunpack.c.l.b16 %v2258
    %v2855 = vunpack.c.h.b16 %v2258
    %v2856 = vunpack.c.l.b16 %v2259
    %v2857 = vunpack.c.h.b16 %v2259
    %v2858 = vunpack.c.l.b16 %v2260
    %v2859 = vunpack.c.h.b16 %v2260
    %v2860 = vunpack.c.l.b16 %v2261
    %v2861 = vunpack.c.h.b16 %v2261
    %v2862 = vunpack.c.l.b16 %v2262
    %v2863 = vunpack.c.h.b16 %v2262
    %v2864 = vunpack.c.l.b16 %v2263
    %v2865 = vunpack.c.h.b16 %v2263
    %v2866 = vunpack.c.l.b16 %v2264
    %v2867 = vunpack.c.h.b16 %v2264
    %v2868 = vunpack.c.l.b16 %v2265
    %v2869 = vunpack.c.h.b16 %v2265
    %v2870 = vunpack.c.l.b16 %v2266
    %v2871 = vunpack.c.h.b16 %v2266
    %v2872 = vunpack.c.l.b16 %v2267
    %v2873 = vunpack.c.h.b16 %v2267
    %v2874 = vunpack.c.l.b16 %v2268
    %v2875 = vunpack.c.h.b16 %v2268
    %v2876 = vunpack.c.l.b16 %v2269
    %v2877 = vunpack.c.h.b16 %v2269
    %v2878 = vunpack.c.l.b16 %v2270
    %v2879 = vunpack.c.h.b16 %v2270
    %v2880 = vunpack.c.l.b16 %v2271
    %v2881 = vunpack.c.h.b16 %v2271
    %v2882 = vunpack.c.l.b16 %v2272
    %v2883 = vunpack.c.h.b16 %v2272
    %v2884 = vunpack.c.l.b16 %v2273
    %v2885 = vunpack.c.h.b16 %v2273
    %v2886 = vunpack.c.l.b16 %v2274
    %v2887 = vunpack.c.h.b16 %v2274
    %v2888 = vunpack.c.l.b16 %v2275
    %v2889 = vunpack.c.h.b16 %v2275
    %v2890 = vunpack.c.l.b16 %v2276
    %v2891 = vunpack.c.h.b16 %v2276
    %v2892 = vunpack.c.l.b16 %v2277
    %v2893 = vunpack.c.h.b16 %v2277
    %v2894 = vunpack.c.l.b16 %v2278
    %v2895 = vunpack.c.h.b16 %v2278
    %v2896 = vunpack.c.l.b16 %v2279
    %v2897 = vunpack.c.h.b16 %v2279
    %v2898 = vunpack.c.l.b16 %v2280
    %v2899 = vunpack.c.h.b16 %v2280
    %v2900 = vunpack.c.l.b16 %v2281
    %v2901 = vunpack.c.h.b16 %v2281
    %v2902 = vunpack.c.l.b16 %v2282
    %v2903 = vunpack.c.h.b16 %v2282
    %v2904 = vunpack.c.l.b16 %v2283
    %v2905 = vunpack.c.h.b16 %v2283
    %v2906 = vunpack.c.l.b16 %v2284
    %v2907 = vunpack.c.h.b16 %v2284
    %v2908 = vunpack.c.l.b16 %v2285
    %v2909 = vunpack.c.h.b16 %v2285
    %v2910 = vunpack.c.l.b16 %v2286
    %v2911 = vunpack.c.h.b16 %v2286
    %v2912 = vunpack.c.l.b16 %v2287
    %v2913 = vunpack.c.h.b16 %v2287
    %v2914 = vunpack.c.l.b16 %v2288
    %v2915 = vunpack.c.h.b16 %v2288
    %v2916 = vunpack.c.l.b16 %v2289
    %v2917 = vunpack.c.h.b16 %v2289
    %v2918 = vunpack.c.l.b16 %v2290
    %v2919 = vunpack.c.h.b16 %v2290
    %v2920 = vunpack.c.l.b16 %v2291
    %v2921 = vunpack.c.h.b16 %v2291
    %v2922 = vunpack.c.l.b16 %v2292
    %v2923 = vunpack.c.h.b16 %v2292
    %v2924 = vunpack.c.l.b16 %v2293
    %v2925 = vunpack.c.h.b16 %v2293
    %v2926 = vunpack.c.l.b16 %v2294
    %v2927 = vunpack.c.h.b16 %v2294
    %v2928 = vunpack.c.l.b16 %v2295
    %v2929 = vunpack.c.h.b16 %v2295
    %v2930 = vunpack.c.l.b16 %v2296
    %v2931 = vunpack.c.h.b16 %v2296
    %v2932 = vunpack.c.l.b16 %v2297
    %v2933 = vunpack.c.h.b16 %v2297
    %v2934 = vunpack.c.l.b16 %v2298
    %v2935 = vunpack.c.h.b16 %v2298
    %v2936 = vunpack.c.l.b16 %v2299
    %v2937 = vunpack.c.h.b16 %v2299
    %v2938 = vunpack.c.l.b16 %v2300
    %v2939 = vunpack.c.h.b16 %v2300
    %v2940 = vunpack.c.l.b16 %v2301
    %v2941 = vunpack.c.h.b16 %v2301
    %v2942 = vunpack.c.l.b16 %v2302
    %v2943 = vunpack.c.h.b16 %v2302
    %v2944 = vunpack.c.l.b16 %v2303
    %v2945 = vunpack.c.h.b16 %v2303
    %v2946 = vunpack.c.l.b16 %v2304
    %v2947 = vunpack.c.h.b16 %v2304
    %v2948 = vunpack.c.l.b16 %v2305
    %v2949 = vunpack.c.h.b16 %v2305
    %v2950 = vunpack.c.l.b16 %v2306
    %v2951 = vunpack.c.h.b16 %v2306
    %v2952 = vunpack.c.l.b16 %v2307
    %v2953 = vunpack.c.h.b16 %v2307
    %v2954 = vunpack.c.l.b16 %v2308
    %v2955 = vunpack.c.h.b16 %v2308
    %v2956 = vunpack.c.l.b16 %v2309
    %v2957 = vunpack.c.h.b16 %v2309
    %v2958 = vunpack.c.l.b16 %v2310
    %v2959 = vunpack.c.h.b16 %v2310
    %v2960 = vunpack.c.l.b16 %v2311
    %v2961 = vunpack.c.h.b16 %v2311
    %v2962 = vunpack.c.l.b16 %v2312
    %v2963 = vunpack.c.h.b16 %v2312
    %v2964 = vunpack.c.l.b16 %v2313
    %v2965 = vunpack.c.h.b16 %v2313
    %v2966 = vunpack.c.l.b16 %v2314
    %v2967 = vunpack.c.h.b16 %v2314
    %v2968 = vunpack.c.l.b16 %v2315
    %v2969 = vunpack.c.h.b16 %v2315
    %v2970 = vunpack.c.l.b16 %v2316
    %v2971 = vunpack.c.h.b16 %v2316
    %v2972 = vunpack.c.l.b16 %v2317
    %v2973 = vunpack.c.h.b16 %v2317
    %v2974 = vunpack.c.l.b16 %v2318
    %v2975 = vunpack.c.h.b16 %v2318
    %v2976 = vunpack.c.l.b16 %v2319
    %v2977 = vunpack.c.h.b16 %v2319
    %v2978 = vunpack.c.l.b16 %v2320
    %v2979 = vunpack.c.h.b16 %v2320
    %v2980 = vunpack.c.l.b16 %v2321
    %v2981 = vunpack.c.h.b16 %v2321
    %v2982 = vunpack.c.l.b16 %v2322
    %v2983 = vunpack.c.h.b16 %v2322
    %v2984 = vunpack.c.l.b16 %v2323
    %v2985 = vunpack.c.h.b16 %v2323
    %v2986 = vunpack.c.l.b16 %v2324
    %v2987 = vunpack.c.h.b16 %v2324
    %v2988 = vunpack.c.l.b16 %v2325
    %v2989 = vunpack.c.h.b16 %v2325
    %v2990 = vunpack.c.l.b16 %v2326
    %v2991 = vunpack.c.h.b16 %v2326
    %v2992 = vunpack.c.l.b16 %v2327
    %v2993 = vunpack.c.h.b16 %v2327
    %v2994 = vunpack.c.l.b16 %v2328
    %v2995 = vunpack.c.h.b16 %v2328
    %v2996 = vunpack.c.l.b16 %v2329
    %v2997 = vunpack.c.h.b16 %v2329
    %v2998 = vunpack.c.l.b16 %v2330
    %v2999 = vunpack.c.h.b16 %v2330
    %v3000 = vunpack.c.l.b16 %v2331
    %v3001 = vunpack.c.h.b16 %v2331
    %v3002 = vunpack.c.l.b16 %v2332
    %v3003 = vunpack.c.h.b16 %v2332
    %v3004 = vunpack.c.l.b16 %v2333
    %v3005 = vunpack.c.h.b16 %v2333
    %v3006 = vunpack.c.l.b16 %v2334
    %v3007 = vunpack.c.h.b16 %v2334
    %v3008 = vunpack.c.l.b16 %v2335
    %v3009 = vunpack.c.h.b16 %v2335
    %v3010 = vunpack.c.l.b16 %v2336
    %v3011 = vunpack.c.h.b16 %v2336
    %v3012 = vunpack.c.l.b16 %v2337
    %v3013 = vunpack.c.h.b16 %v2337
    %v3014 = vunpack.c.l.b16 %v2338
    %v3015 = vunpack.c.h.b16 %v2338
    %v3016 = vunpack.c.l.b16 %v2339
    %v3017 = vunpack.c.h.b16 %v2339
    %v3018 = vunpack.c.l.b16 %v2340
    %v3019 = vunpack.c.h.b16 %v2340
    %v3020 = vunpack.c.l.b16 %v2341
    %v3021 = vunpack.c.h.b16 %v2341
    %v3022 = vunpack.c.l.b16 %v2342
    %v3023 = vunpack.c.h.b16 %v2342
    %v3024 = vunpack.c.l.b16 %v2343
    %v3025 = vunpack.c.h.b16 %v2343
    %v3026 = vunpack.c.l.b16 %v2344
    %v3027 = vunpack.c.h.b16 %v2344
    %v3028 = vunpack.c.l.b16 %v2345
    %v3029 = vunpack.c.h.b16 %v2345
    %v3030 = vunpack.c.l.b16 %v2346
    %v3031 = vunpack.c.h.b16 %v2346
    %v3032 = vunpack.c.l.b16 %v2347
    %v3033 = vunpack.c.h.b16 %v2347
    %v3034 = vunpack.c.l.b16 %v2348
    %v3035 = vunpack.c.h.b16 %v2348
    %v3036 = vunpack.c.l.b16 %v2349
    %v3037 = vunpack.c.h.b16 %v2349
    %v3038 = vunpack.c.l.b16 %v2350
    %v3039 = vunpack.c.h.b16 %v2350
    %v3040 = vunpack.c.l.b16 %v2351
    %v3041 = vunpack.c.h.b16 %v2351
    %v3042 = vunpack.c.l.b16 %v2352
    %v3043 = vunpack.c.h.b16 %v2352
    %v3044 = vunpack.c.l.b16 %v2353
    %v3045 = vunpack.c.h.b16 %v2353
    %v3046 = vunpack.c.l.b16 %v2354
    %v3047 = vunpack.c.h.b16 %v2354
    %v3048 = vunpack.c.l.b16 %v2355
    %v3049 = vunpack.c.h.b16 %v2355
    %v3050 = vunpack.c.l.b16 %v2356
    %v3051 = vunpack.c.h.b16 %v2356
    %v3052 = vunpack.c.l.b16 %v2357
    %v3053 = vunpack.c.h.b16 %v2357
    %v3054 = vunpack.c.l.b16 %v2358
    %v3055 = vunpack.c.h.b16 %v2358
    %v3056 = vunpack.c.l.b16 %v2359
    %v3057 = vunpack.c.h.b16 %v2359
    %v3058 = vunpack.c.l.b16 %v2360
    %v3059 = vunpack.c.h.b16 %v2360
    %v3060 = vunpack.c.l.b16 %v2361
    %v3061 = vunpack.c.h.b16 %v2361
    %v3062 = vunpack.c.l.b16 %v2362
    %v3063 = vunpack.c.h.b16 %v2362
    %v3064 = vunpack.c.l.b16 %v2363
    %v3065 = vunpack.c.h.b16 %v2363
    %v3066 = vunpack.c.l.b16 %v2364
    %v3067 = vunpack.c.h.b16 %v2364
    %v3068 = vunpack.c.l.b16 %v2365
    %v3069 = vunpack.c.h.b16 %v2365
    %v3070 = vunpack.c.l.b16 %v2366
    %v3071 = vunpack.c.h.b16 %v2366
    %v3072 = vunpack.c.l.b16 %v2367
    %v3073 = vunpack.c.h.b16 %v2367
    %v3074 = vunpack.c.l.b16 %v2368
    %v3075 = vunpack.c.h.b16 %v2368
    %v3076 = vunpack.c.l.b16 %v2369
    %v3077 = vunpack.c.h.b16 %v2369
    %v3078 = vunpack.c.l.b16 %v2370
    %v3079 = vunpack.c.h.b16 %v2370
    %v3080 = vunpack.c.l.b16 %v2371
    %v3081 = vunpack.c.h.b16 %v2371
    %v3082 = vunpack.c.l.b16 %v2372
    %v3083 = vunpack.c.h.b16 %v2372
    %v3084 = vunpack.c.l.b16 %v2373
    %v3085 = vunpack.c.h.b16 %v2373
    %v3086 = vunpack.c.l.b16 %v2374
    %v3087 = vunpack.c.h.b16 %v2374
    %v3088 = vunpack.c.l.b16 %v2375
    %v3089 = vunpack.c.h.b16 %v2375
    %v3090 = vunpack.c.l.b16 %v2376
    %v3091 = vunpack.c.h.b16 %v2376
    %v3092 = vunpack.c.l.b16 %v2377
    %v3093 = vunpack.c.h.b16 %v2377
    %v3094 = vunpack.c.l.b16 %v2378
    %v3095 = vunpack.c.h.b16 %v2378
    %v3096 = vunpack.c.l.b16 %v2379
    %v3097 = vunpack.c.h.b16 %v2379
    %v3098 = vunpack.c.l.b16 %v2380
    %v3099 = vunpack.c.h.b16 %v2380
    %v3100 = vunpack.c.l.b16 %v2381
    %v3101 = vunpack.c.h.b16 %v2381
    %v3102 = vunpack.c.l.b16 %v2382
    %v3103 = vunpack.c.h.b16 %v2382
    %v3104 = vunpack.c.l.b16 %v2383
    %v3105 = vunpack.c.h.b16 %v2383
    %v3106 = vunpack.c.l.b16 %v2384
    %v3107 = vunpack.c.h.b16 %v2384
    %v3108 = vunpack.c.l.b16 %v2385
    %v3109 = vunpack.c.h.b16 %v2385
    %v3110 = vunpack.c.l.b16 %v2386
    %v3111 = vunpack.c.h.b16 %v2386
    %v3112 = vunpack.c.l.b16 %v2387
    %v3113 = vunpack.c.h.b16 %v2387
    %v3114 = vunpack.c.l.b16 %v2388
    %v3115 = vunpack.c.h.b16 %v2388
    %v3116 = vunpack.c.l.b16 %v2389
    %v3117 = vunpack.c.h.b16 %v2389
    %v3118 = vunpack.c.l.b16 %v2390
    %v3119 = vunpack.c.h.b16 %v2390
    %v3120 = vunpack.c.l.b16 %v2391
    %v3121 = vunpack.c.h.b16 %v2391
    %v3122 = vunpack.c.l.b16 %v2392
    %v3123 = vunpack.c.h.b16 %v2392
    %v3124 = vunpack.c.l.b16 %v2393
    %v3125 = vunpack.c.h.b16 %v2393
    %v3126 = vunpack.c.l.b16 %v2394
    %v3127 = vunpack.c.h.b16 %v2394
    %v3128 = vunpack.c.l.b16 %v2395
    %v3129 = vunpack.c.h.b16 %v2395
    %v3130 = vunpack.c.l.b16 %v2396
    %v3131 = vunpack.c.h.b16 %v2396
    %v3132 = vunpack.c.l.b16 %v2397
    %v3133 = vunpack.c.h.b16 %v2397
    %v3134 = vunpack.c.l.b16 %v2398
    %v3135 = vunpack.c.h.b16 %v2398
    %v3136 = vunpack.c.l.b16 %v2399
    %v3137 = vunpack.c.h.b16 %v2399
    %v3138 = vunpack.c.l.b16 %v2400
    %v3139 = vunpack.c.h.b16 %v2400
    %v3140 = vunpack.c.l.b16 %v2401
    %v3141 = vunpack.c.h.b16 %v2401
    %v3142 = vunpack.c.l.b16 %v2402
    %v3143 = vunpack.c.h.b16 %v2402
    %v3144 = vunpack.c.l.b16 %v2403
    %v3145 = vunpack.c.h.b16 %v2403
    %v3146 = vunpack.c.l.b16 %v2404
    %v3147 = vunpack.c.h.b16 %v2404
    %v3148 = vunpack.c.l.b16 %v2405
    %v3149 = vunpack.c.h.b16 %v2405
    %v3150 = vunpack.c.l.b16 %v2406
    %v3151 = vunpack.c.h.b16 %v2406
    %v3152 = vunpack.c.l.b16 %v2407
    %v3153 = vunpack.c.h.b16 %v2407
    %v3154 = vunpack.c.l.b16 %v2408
    %v3155 = vunpack.c.h.b16 %v2408
    %v3156 = vunpack.c.l.b16 %v2409
    %v3157 = vunpack.c.h.b16 %v2409
    %v3158 = vunpack.c.l.b16 %v2410
    %v3159 = vunpack.c.h.b16 %v2410
    %v3160 = vunpack.c.l.b16 %v2411
    %v3161 = vunpack.c.h.b16 %v2411
    %v3162 = vunpack.c.l.b16 %v2412
    %v3163 = vunpack.c.h.b16 %v2412
    %v3164 = vunpack.c.l.b16 %v2413
    %v3165 = vunpack.c.h.b16 %v2413
    %v3166 = vunpack.c.l.b16 %v2414
    %v3167 = vunpack.c.h.b16 %v2414
    %v3168 = vunpack.c.l.b16 %v2415
    %v3169 = vunpack.c.h.b16 %v2415
    %v3170 = vunpack.c.l.b16 %v2416
    %v3171 = vunpack.c.h.b16 %v2416
    %v3172 = vunpack.c.l.b16 %v2417
    %v3173 = vunpack.c.h.b16 %v2417
    %v3174 = vunpack.c.l.b16 %v2418
    %v3175 = vunpack.c.h.b16 %v2418
    %v3176 = vunpack.c.l.b16 %v2419
    %v3177 = vunpack.c.h.b16 %v2419
    %v3178 = vunpack.c.l.b16 %v2420
    %v3179 = vunpack.c.h.b16 %v2420
    %v3180 = vunpack.c.l.b16 %v2421
    %v3181 = vunpack.c.h.b16 %v2421
    %v3182 = vunpack.c.l.b16 %v2422
    %v3183 = vunpack.c.h.b16 %v2422
    %v3184 = vunpack.c.l.b16 %v2423
    %v3185 = vunpack.c.h.b16 %v2423
    %v3186 = vunpack.c.l.b16 %v2424
    %v3187 = vunpack.c.h.b16 %v2424
    %v3188 = vunpack.c.l.b16 %v2425
    %v3189 = vunpack.c.h.b16 %v2425
    %v3190 = vunpack.c.l.b16 %v2426
    %v3191 = vunpack.c.h.b16 %v2426
    %v3192 = vunpack.c.l.b16 %v2427
    %v3193 = vunpack.c.h.b16 %v2427
    %v3194 = vunpack.c.l.b16 %v2428
    %v3195 = vunpack.c.h.b16 %v2428
    %v3196 = vunpack.c.l.b16 %v2429
    %v3197 = vunpack.c.h.b16 %v2429
    %v3198 = vunpack.c.l.b16 %v2430
    %v3199 = vunpack.c.h.b16 %v2430
    %v3200 = vunpack.c.l.b16 %v2431
    %v3201 = vunpack.c.h.b16 %v2431
    %v3202 = vunpack.c.l.b16 %v2432
    %v3203 = vunpack.c.h.b16 %v2432
    %v3204 = vunpack.c.l.b16 %v2433
    %v3205 = vunpack.c.h.b16 %v2433
    %v3206 = vunpack.c.l.b16 %v2434
    %v3207 = vunpack.c.h.b16 %v2434
    %v3208 = vunpack.c.l.b16 %v2435
    %v3209 = vunpack.c.h.b16 %v2435
    %v3210 = vunpack.c.l.b16 %v2436
    %v3211 = vunpack.c.h.b16 %v2436
    %v3212 = vunpack.c.l.b16 %v2437
    %v3213 = vunpack.c.h.b16 %v2437
    %v3214 = vunpack.c.l.b16 %v2438
    %v3215 = vunpack.c.h.b16 %v2438
    %v3216 = vunpack.c.l.b16 %v2439
    %v3217 = vunpack.c.h.b16 %v2439
    %v3218 = vunpack.c.l.b16 %v2440
    %v3219 = vunpack.c.h.b16 %v2440
    %v3220 = vunpack.c.l.b16 %v2441
    %v3221 = vunpack.c.h.b16 %v2441
    %v3222 = vunpack.c.l.b16 %v2442
    %v3223 = vunpack.c.h.b16 %v2442
    %v3224 = vunpack.c.l.b16 %v2443
    %v3225 = vunpack.c.h.b16 %v2443
    %v3226 = vunpack.c.l.b16 %v2444
    %v3227 = vunpack.c.h.b16 %v2444
    %v3228 = vunpack.c.l.b16 %v2445
    %v3229 = vunpack.c.h.b16 %v2445
    %v3230 = vunpack.c.l.b16 %v2446
    %v3231 = vunpack.c.h.b16 %v2446
    %v3232 = vunpack.c.l.b16 %v2447
    %v3233 = vunpack.c.h.b16 %v2447
    %v3234 = vunpack.c.l.b16 %v2448
    %v3235 = vunpack.c.h.b16 %v2448
    %v3236 = vunpack.c.l.b16 %v2449
    %v3237 = vunpack.c.h.b16 %v2449
    %v3238 = vunpack.c.l.b16 %v2450
    %v3239 = vunpack.c.h.b16 %v2450
    %v3240 = vunpack.c.l.b16 %v2451
    %v3241 = vunpack.c.h.b16 %v2451
    %v3242 = vunpack.c.l.b16 %v2452
    %v3243 = vunpack.c.h.b16 %v2452
    %v3244 = vunpack.c.l.b16 %v2453
    %v3245 = vunpack.c.h.b16 %v2453
    %v3246 = vunpack.c.l.b16 %v2454
    %v3247 = vunpack.c.h.b16 %v2454
    %v3248 = vunpack.c.l.b16 %v2455
    %v3249 = vunpack.c.h.b16 %v2455
    %v3250 = vunpack.c.l.b16 %v2456
    %v3251 = vunpack.c.h.b16 %v2456
    %v3252 = vunpack.c.l.b16 %v2457
    %v3253 = vunpack.c.h.b16 %v2457
    %v3254 = vunpack.c.l.b16 %v2458
    %v3255 = vunpack.c.h.b16 %v2458
    %v3256 = vunpack.c.l.b16 %v2459
    %v3257 = vunpack.c.h.b16 %v2459
    %v3258 = vunpack.c.l.b16 %v2460
    %v3259 = vunpack.c.h.b16 %v2460
    %v3260 = vunpack.c.l.b16 %v2461
    %v3261 = vunpack.c.h.b16 %v2461
    %v3262 = vunpack.c.l.b16 %v2462
    %v3263 = vunpack.c.h.b16 %v2462
    %v3264 = vunpack.c.l.b16 %v2463
    %v3265 = vunpack.c.h.b16 %v2463
    %v3266 = vunpack.c.l.b16 %v2464
    %v3267 = vunpack.c.h.b16 %v2464
    %v3268 = vunpack.c.l.b16 %v2465
    %v3269 = vunpack.c.h.b16 %v2465
    %v3270 = vunpack.c.l.b16 %v2466
    %v3271 = vunpack.c.h.b16 %v2466
    %v3272 = vunpack.c.l.b16 %v2467
    %v3273 = vunpack.c.h.b16 %v2467
    %v3274 = vunpack.c.l.b16 %v2468
    %v3275 = vunpack.c.h.b16 %v2468
    %v3276 = vunpack.c.l.b16 %v2469
    %v3277 = vunpack.c.h.b16 %v2469
    %v3278 = vunpack.c.l.b16 %v2470
    %v3279 = vunpack.c.h.b16 %v2470
    %v3280 = vunpack.c.l.b16 %v2471
    %v3281 = vunpack.c.h.b16 %v2471
    %v3282 = vpack.c.b16 %v2778, %v2770
    %v3283 = vpack.c.b16 %v2779, %v2771
    %v3284 = vpack.c.b16 %v2780, %v2772
    %v3285 = vpack.c.b16 %v2781, %v2773
    %v3286 = vpack.c.b16 %v2782, %v2774
    %v3287 = vpack.c.b16 %v2783, %v2775
    %v3288 = vpack.c.b16 %v2784, %v2776
    %v3289 = vpack.c.b16 %v2785, %v2777
    %v3290 = vpack.c.b16 %v2794, %v2786
    %v3291 = vpack.c.b16 %v2795, %v2787
    %v3292 = vpack.c.b16 %v2796, %v2788
    %v3293 = vpack.c.b16 %v2797, %v2789
    %v3294 = vpack.c.b16 %v2798, %v2790
    %v3295 = vpack.c.b16 %v2799, %v2791
    %v3296 = vpack.c.b16 %v2800, %v2792
    %v3297 = vpack.c.b16 %v2801, %v2793
    %v3298 = vpack.c.b16 %v2810, %v2802
    %v3299 = vpack.c.b16 %v2811, %v2803
    %v3300 = vpack.c.b16 %v2812, %v2804
    %v3301 = vpack.c.b16 %v2813, %v2805
    %v3302 = vpack.c.b16 %v2814, %v2806
    %v3303 = vpack.c.b16 %v2815, %v2807
    %v3304 = vpack.c.b16 %v2816, %v2808
    %v3305 = vpack.c.b16 %v2817, %v2809
    %v3306 = vpack.c.b16 %v2826, %v2818
    %v3307 = vpack.c.b16 %v2827, %v2819
    %v3308 = vpack.c.b16 %v2828, %v2820
    %v3309 = vpack.c.b16 %v2829, %v2821
    %v3310 = vpack.c.b16 %v2830, %v2822
    %v3311 = vpack.c.b16 %v2831, %v2823
    %v3312 = vpack.c.b16 %v2832, %v2824
    %v3313 = vpack.c.b16 %v2833, %v2825
    %v3314 = vpack.c.b16 %v2842, %v2834
    %v3315 = vpack.c.b16 %v2843, %v2835
    %v3316 = vpack.c.b16 %v2844, %v2836
    %v3317 = vpack.c.b16 %v2845, %v2837
    %v3318 = vpack.c.b16 %v2846, %v2838
    %v3319 = vpack.c.b16 %v2847, %v2839
    %v3320 = vpack.c.b16 %v2848, %v2840
    %v3321 = vpack.c.b16 %v2849, %v2841
    %v3322 = vpack.c.b16 %v2858, %v2850
    %v3323 = vpack.c.b16 %v2859, %v2851
    %v3324 = vpack.c.b16 %v2860, %v2852
    %v3325 = vpack.c.b16 %v2861, %v2853
    %v3326 = vpack.c.b16 %v2862, %v2854
    %v3327 = vpack.c.b16 %v2863, %v2855
    %v3328 = vpack.c.b16 %v2864, %v2856
    %v3329 = vpack.c.b16 %v2865, %v2857
    %v3330 = vpack.c.b16 %v2874, %v2866
    %v3331 = vpack.c.b16 %v2875, %v2867
    %v3332 = vpack.c.b16 %v2876, %v2868
    %v3333 = vpack.c.b16 %v2877, %v2869
    %v3334 = vpack.c.b16 %v2878, %v2870
    %v3335 = vpack.c.b16 %v2879, %v2871
    %v3336 = vpack.c.b16 %v2880, %v2872
    %v3337 = vpack.c.b16 %v2881, %v2873
    %v3338 = vpack.c.b16 %v2890, %v2882
    %v3339 = vpack.c.b16 %v2891, %v2883
    %v3340 = vpack.c.b16 %v2892, %v2884
    %v3341 = vpack.c.b16 %v2893, %v2885
    %v3342 = vpack.c.b16 %v2894, %v2886
    %v3343 = vpack.c.b16 %v2895, %v2887
    %v3344 = vpack.c.b16 %v2896, %v2888
    %v3345 = vpack.c.b16 %v2897, %v2889
    %v3346 = vpack.c.b16 %v2906, %v2898
    %v3347 = vpack.c.b16 %v2907, %v2899
    %v3348 = vpack.c.b16 %v2908, %v2900
    %v3349 = vpack.c.b16 %v2909, %v2901
    %v3350 = vpack.c.b16 %v2910, %v2902
    %v3351 = vpack.c.b16 %v2911, %v2903
    %v3352 = vpack.c.b16 %v2912, %v2904
    %v3353 = vpack.c.b16 %v2913, %v2905
    %v3354 = vpack.c.b16 %v2922, %v2914
    %v3355 = vpack.c.b16 %v2923, %v2915
    %v3356 = vpack.c.b16 %v2924, %v2916
    %v3357 = vpack.c.b16 %v2925, %v2917
    %v3358 = vpack.c.b16 %v2926, %v2918
    %v3359 = vpack.c.b16 %v2927, %v2919
    %v3360 = vpack.c.b16 %v2928, %v2920
    %v3361 = vpack.c.b16 %v2929, %v2921
    %v3362 = vpack.c.b16 %v2938, %v2930
    %v3363 = vpack.c.b16 %v2939, %v2931
    %v3364 = vpack.c.b16 %v2940, %v2932
    %v3365 = vpack.c.b16 %v2941, %v2933
    %v3366 = vpack.c.b16 %v2942, %v2934
    %v3367 = vpack.c.b16 %v2943, %v2935
    %v3368 = vpack.c.b16 %v2944, %v2936
    %v3369 = vpack.c.b16 %v2945, %v2937
    %v3370 = vpack.c.b16 %v2954, %v2946
    %v3371 = vpack.c.b16 %v2955, %v2947
    %v3372 = vpack.c.b16 %v2956, %v2948
    %v3373 = vpack.c.b16 %v2957, %v2949
    %v3374 = vpack.c.b16 %v2958, %v2950
    %v3375 = vpack.c.b16 %v2959, %v2951
    %v3376 = vpack.c.b16 %v2960, %v2952
    %v3377 = vpack.c.b16 %v2961, %v2953
    %v3378 = vpack.c.b16 %v2970, %v2962
    %v3379 = vpack.c.b16 %v2971, %v2963
    %v3380 = vpack.c.b16 %v2972, %v2964
    %v3381 = vpack.c.b16 %v2973, %v2965
    %v3382 = vpack.c.b16 %v2974, %v2966
    %v3383 = vpack.c.b16 %v2975, %v2967
    %v3384 = vpack.c.b16 %v2976, %v2968
    %v3385 = vpack.c.b16 %v2977, %v2969
    %v3386 = vpack.c.b16 %v2986, %v2978
    %v3387 = vpack.c.b16 %v2987, %v2979
    %v3388 = vpack.c.b16 %v2988, %v2980
    %v3389 = vpack.c.b16 %v2989, %v2981
    %v3390 = vpack.c.b16 %v2990, %v2982
    %v3391 = vpack.c.b16 %v2991, %v2983
    %v3392 = vpack.c.b16 %v2992, %v2984
    %v3393 = vpack.c.b16 %v2993, %v2985
    %v3394 = vpack.c.b16 %v3002, %v2994
    %v3395 = vpack.c.b16 %v3003, %v2995
    %v3396 = vpack.c.b16 %v3004, %v2996
    %v3397 = vpack.c.b16 %v3005, %v2997
    %v3398 = vpack.c.b16 %v3006, %v2998
    %v3399 = vpack.c.b16 %v3007, %v2999
    %v3400 = vpack.c.b16 %v3008, %v3000
    %v3401 = vpack.c.b16 %v3009, %v3001
    %v3402 = vpack.c.b16 %v3018, %v3010
    %v3403 = vpack.c.b16 %v3019, %v3011
    %v3404 = vpack.c.b16 %v3020, %v3012
    %v3405 = vpack.c.b16 %v3021, %v3013
    %v3406 = vpack.c.b16 %v3022, %v3014
    %v3407 = vpack.c.b16 %v3023, %v3015
    %v3408 = vpack.c.b16 %v3024, %v3016
    %v3409 = vpack.c.b16 %v3025, %v3017
    %v3410 = vpack.c.b16 %v3034, %v3026
    %v3411 = vpack.c.b16 %v3035, %v3027
    %v3412 = vpack.c.b16 %v3036, %v3028
    %v3413 = vpack.c.b16 %v3037, %v3029
    %v3414 = vpack.c.b16 %v3038, %v3030
    %v3415 = vpack.c.b16 %v3039, %v3031
    %v3416 = vpack.c.b16 %v3040, %v3032
    %v3417 = vpack.c.b16 %v3041, %v3033
    %v3418 = vpack.c.b16 %v3050, %v3042
    %v3419 = vpack.c.b16 %v3051, %v3043
    %v3420 = vpack.c.b16 %v3052, %v3044
    %v3421 = vpack.c.b16 %v3053, %v3045
    %v3422 = vpack.c.b16 %v3054, %v3046
    %v3423 = vpack.c.b16 %v3055, %v3047
    %v3424 = vpack.c.b16 %v3056, %v3048
    %v3425 = vpack.c.b16 %v3057, %v3049
    %v3426 = vpack.c.b16 %v3066, %v3058
    %v3427 = vpack.c.b16 %v3067, %v3059
    %v3428 = vpack.c.b16 %v3068, %v3060
    %v3429 = vpack.c.b16 %v3069, %v3061
    %v3430 = vpack.c.b16 %v3070, %v3062
    %v3431 = vpack.c.b16 %v3071, %v3063
    %v3432 = vpack.c.b16 %v3072, %v3064
    %v3433 = vpack.c.b16 %v3073, %v3065
    %v3434 = vpack.c.b16 %v3082, %v3074
    %v3435 = vpack.c.b16 %v3083, %v3075
    %v3436 = vpack.c.b16 %v3084, %v3076
    %v3437 = vpack.c.b16 %v3085, %v3077
    %v3438 = vpack.c.b16 %v3086, %v3078
    %v3439 = vpack.c.b16 %v3087, %v3079
    %v3440 = vpack.c.b16 %v3088, %v3080
    %v3441 = vpack.c.b16 %v3089, %v3081
    %v3442 = vpack.c.b16 %v3098, %v3090
    %v3443 = vpack.c.b16 %v3099, %v3091
    %v3444 = vpack.c.b16 %v3100, %v3092
    %v3445 = vpack.c.b16 %v3101, %v3093
    %v3446 = vpack.c.b16 %v3102, %v3094
    %v3447 = vpack.c.b16 %v3103, %v3095
    %v3448 = vpack.c.b16 %v3104, %v3096
    %v3449 = vpack.c.b16 %v3105, %v3097
    %v3450 = vpack.c.b16 %v3114, %v3106
    %v3451 = vpack.c.b16 %v3115, %v3107
    %v3452 = vpack.c.b16 %v3116, %v3108
    %v3453 = vpack.c.b16 %v3117, %v3109
    %v3454 = vpack.c.b16 %v3118, %v3110
    %v3455 = vpack.c.b16 %v3119, %v3111
    %v3456 = vpack.c.b16 %v3120, %v3112
    %v3457 = vpack.c.b16 %v3121, %v3113
    %v3458 = vpack.c.b16 %v3130, %v3122
    %v3459 = vpack.c.b16 %v3131, %v3123
    %v3460 = vpack.c.b16 %v3132, %v3124
    %v3461 = vpack.c.b16 %v3133, %v3125
    %v3462 = vpack.c.b16 %v3134, %v3126
    %v3463 = vpack.c.b16 %v3135, %v3127
    %v3464 = vpack.c.b16 %v3136, %v3128
    %v3465 = vpack.c.b16 %v3137, %v3129
    %v3466 = vpack.c.b16 %v3146, %v3138
    %v3467 = vpack.c.b16 %v3147, %v3139
    %v3468 = vpack.c.b16 %v3148, %v3140
    %v3469 = vpack.c.b16 %v3149, %v3141
    %v3470 = vpack.c.b16 %v3150, %v3142
    %v3471 = vpack.c.b16 %v3151, %v3143
    %v3472 = vpack.c.b16 %v3152, %v3144
    %v3473 = vpack.c.b16 %v3153, %v3145
    %v3474 = vpack.c.b16 %v3162, %v3154
    %v3475 = vpack.c.b16 %v3163, %v3155
    %v3476 = vpack.c.b16 %v3164, %v3156
    %v3477 = vpack.c.b16 %v3165, %v3157
    %v3478 = vpack.c.b16 %v3166, %v3158
    %v3479 = vpack.c.b16 %v3167, %v3159
    %v3480 = vpack.c.b16 %v3168, %v3160
    %v3481 = vpack.c.b16 %v3169, %v3161
    %v3482 = vpack.c.b16 %v3178, %v3170
    %v3483 = vpack.c.b16 %v3179, %v3171
    %v3484 = vpack.c.b16 %v3180, %v3172
    %v3485 = vpack.c.b16 %v3181, %v3173
    %v3486 = vpack.c.b16 %v3182, %v3174
    %v3487 = vpack.c.b16 %v3183, %v3175
    %v3488 = vpack.c.b16 %v3184, %v3176
    %v3489 = vpack.c.b16 %v3185, %v3177
    %v3490 = vpack.c.b16 %v3194, %v3186
    %v3491 = vpack.c.b16 %v3195, %v3187
    %v3492 = vpack.c.b16 %v3196, %v3188
    %v3493 = vpack.c.b16 %v3197, %v3189
    %v3494 = vpack.c.b16 %v3198, %v3190
    %v3495 = vpack.c.b16 %v3199, %v3191
    %v3496 = vpack.c.b16 %v3200, %v3192
    %v3497 = vpack.c.b16 %v3201, %v3193
    %v3498 = vpack.c.b16 %v3210, %v3202
    %v3499 = vpack.c.b16 %v3211, %v3203
    %v3500 = vpack.c.b16 %v3212, %v3204
    %v3501 = vpack.c.b16 %v3213, %v3205
    %v3502 = vpack.c.b16 %v3214, %v3206
    %v3503 = vpack.c.b16 %v3215, %v3207
    %v3504 = vpack.c.b16 %v3216, %v3208
    %v3505 = vpack.c.b16 %v3217, %v3209
    %v3506 = vpack.c.b16 %v3226, %v3218
    %v3507 = vpack.c.b16 %v3227, %v3219
    %v3508 = vpack.c.b16 %v3228, %v3220
    %v3509 = vpack.c.b16 %v3229, %v3221
    %v3510 = vpack.c.b16 %v3230, %v3222
    %v3511 = vpack.c.b16 %v3231, %v3223
    %v3512 = vpack.c.b16 %v3232, %v3224
    %v3513 = vpack.c.b16 %v3233, %v3225
    %v3514 = vpack.c.b16 %v3242, %v3234
    %v3515 = vpack.c.b16 %v3243, %v3235
    %v3516 = vpack.c.b16 %v3244, %v3236
    %v3517 = vpack.c.b16 %v3245, %v3237
    %v3518 = vpack.c.b16 %v3246, %v3238
    %v3519 = vpack.c.b16 %v3247, %v3239
    %v3520 = vpack.c.b16 %v3248, %v3240
    %v3521 = vpack.c.b16 %v3249, %v3241
    %v3522 = vpack.c.b16 %v3258, %v3250
    %v3523 = vpack.c.b16 %v3259, %v3251
    %v3524 = vpack.c.b16 %v3260, %v3252
    %v3525 = vpack.c.b16 %v3261, %v3253
    %v3526 = vpack.c.b16 %v3262, %v3254
    %v3527 = vpack.c.b16 %v3263, %v3255
    %v3528 = vpack.c.b16 %v3264, %v3256
    %v3529 = vpack.c.b16 %v3265, %v3257
    %v3530 = vpack.c.b16 %v3274, %v3266
    %v3531 = vpack.c.b16 %v3275, %v3267
    %v3532 = vpack.c.b16 %v3276, %v3268
    %v3533 = vpack.c.b16 %v3277, %v3269
    %v3534 = vpack.c.b16 %v3278, %v3270
    %v3535 = vpack.c.b16 %v3279, %v3271
    %v3536 = vpack.c.b16 %v3280, %v3272
    %v3537 = vpack.c.b16 %v3281, %v3273
    %3794 = vmatprep.subr.bf16.mxu0 %v3283
    %3795 = vmatpush1.bf16.msra.mxu0 %v3282
    %3796 = vmatprep.subr.bf16.mxu0 %v3291
    %3797 = vmatpush1.bf16.msra.mxu0 %v3290
    %3798 = vmatprep.subr.bf16.mxu0 %v3299
    %3799 = vmatpush1.bf16.msra.mxu0 %v3298
    %3800 = vmatprep.subr.bf16.mxu0 %v3307
    %3801 = vmatpush1.bf16.msra.mxu0 %v3306
    %3802 = vmatprep.subr.bf16.mxu0 %v3315
    %3803 = vmatpush1.bf16.msra.mxu0 %v3314
    %3804 = vmatprep.subr.bf16.mxu0 %v3323
    %3805 = vmatpush1.bf16.msra.mxu0 %v3322
    %3806 = vmatprep.subr.bf16.mxu0 %v3331
    %3807 = vmatpush1.bf16.msra.mxu0 %v3330
    %3808 = vmatprep.subr.bf16.mxu0 %v3339
    %3809 = vmatpush1.bf16.msra.mxu0 %v3338
    %3810 = vmatprep.subr.bf16.mxu0 %v3347
    %3811 = vmatpush1.bf16.msra.mxu0 %v3346
    %3812 = vmatprep.subr.bf16.mxu0 %v3355
    %3813 = vmatpush1.bf16.msra.mxu0 %v3354
    %3814 = vmatprep.subr.bf16.mxu0 %v3363
    %3815 = vmatpush1.bf16.msra.mxu0 %v3362
    %3816 = vmatprep.subr.bf16.mxu0 %v3371
    %3817 = vmatpush1.bf16.msra.mxu0 %v3370
    %3818 = vmatprep.subr.bf16.mxu0 %v3379
    %3819 = vmatpush1.bf16.msra.mxu0 %v3378
    %3820 = vmatprep.subr.bf16.mxu0 %v3387
    %3821 = vmatpush1.bf16.msra.mxu0 %v3386
    %3822 = vmatprep.subr.bf16.mxu0 %v3395
    %3823 = vmatpush1.bf16.msra.mxu0 %v3394
    %3824 = vmatprep.subr.bf16.mxu0 %v3403
    %3825 = vmatpush1.bf16.msra.mxu0 %v3402
    %3826 = vmatprep.mubr.bf16.mxu0 %v2213
    %3827 = vmatmul.mubr.bf16.gmra.mrb[0].mxu0 %v2212
    %v3828 = vpop.f32.mrb[0].mxu0
    %v3829 = vadd.f32 %v2477, %v3828
    %v3830 = vpop.f32.mrb[0].mxu0
    %v3831 = vadd.f32 %v2481, %v3830
    %v3832 = vpop.f32.mrb[0].mxu0
    %v3833 = vpop.f32.mrb[0].mxu0
    %3834 = vdwg.mxu0
    %3835 = vmatprep.subr.bf16.mxu0 %v3411
    %3836 = vmatpush1.bf16.msra.mxu0 %v3410
    %3837 = vmatprep.subr.bf16.mxu0 %v3419
    %3838 = vmatpush1.bf16.msra.mxu0 %v3418
    %3839 = vmatprep.subr.bf16.mxu0 %v3427
    %3840 = vmatpush1.bf16.msra.mxu0 %v3426
    %3841 = vmatprep.subr.bf16.mxu0 %v3435
    %3842 = vmatpush1.bf16.msra.mxu0 %v3434
    %3843 = vmatprep.subr.bf16.mxu0 %v3443
    %3844 = vmatpush1.bf16.msra.mxu0 %v3442
    %3845 = vmatprep.subr.bf16.mxu0 %v3451
    %3846 = vmatpush1.bf16.msra.mxu0 %v3450
    %3847 = vmatprep.subr.bf16.mxu0 %v3459
    %3848 = vmatpush1.bf16.msra.mxu0 %v3458
    %3849 = vmatprep.subr.bf16.mxu0 %v3467
    %3850 = vmatpush1.bf16.msra.mxu0 %v3466
    %3851 = vmatprep.subr.bf16.mxu0 %v3475
    %3852 = vmatpush1.bf16.msra.mxu0 %v3474
    %3853 = vmatprep.subr.bf16.mxu0 %v3483
    %3854 = vmatpush1.bf16.msra.mxu0 %v3482
    %3855 = vmatprep.subr.bf16.mxu0 %v3491
    %3856 = vmatpush1.bf16.msra.mxu0 %v3490
    %3857 = vmatprep.subr.bf16.mxu0 %v3499
    %3858 = vmatpush1.bf16.msra.mxu0 %v3498
    %3859 = vmatprep.subr.bf16.mxu0 %v3507
    %3860 = vmatpush1.bf16.msra.mxu0 %v3506
    %3861 = vmatprep.subr.bf16.mxu0 %v3515
    %3862 = vmatpush1.bf16.msra.mxu0 %v3514
    %3863 = vmatprep.subr.bf16.mxu0 %v3523
    %3864 = vmatpush1.bf16.msra.mxu0 %v3522
    %3865 = vmatprep.subr.bf16.mxu0 %v3531
    %3866 = vmatpush1.bf16.msra.mxu0 %v3530
    %3867 = vmatprep.mubr.bf16.mxu0 %v2215
    %3868 = vmatmul.mubr.bf16.gmra.mrb[0].mxu0 %v2214
    %v3869 = vpop.f32.mrb[0].mxu0
    %v3870 = vadd.f32 %v3829, %v3869
    %v3871 = vpop.f32.mrb[0].mxu0
    %v3872 = vadd.f32 %v3831, %v3871
    %v3873 = vpop.f32.mrb[0].mxu0
    %v3874 = vpop.f32.mrb[0].mxu0
    %3875 = vdwg.mxu0
    %3876 = vmatprep.subr.bf16.mxu0 %v3285
    %3877 = vmatpush1.bf16.msra.mxu0 %v3284
    %3878 = vmatprep.subr.bf16.mxu0 %v3293
    %3879 = vmatpush1.bf16.msra.mxu0 %v3292
    %3880 = vmatprep.subr.bf16.mxu0 %v3301
    %3881 = vmatpush1.bf16.msra.mxu0 %v3300
    %3882 = vmatprep.subr.bf16.mxu0 %v3309
    %3883 = vmatpush1.bf16.msra.mxu0 %v3308
    %3884 = vmatprep.subr.bf16.mxu0 %v3317
    %3885 = vmatpush1.bf16.msra.mxu0 %v3316
    %3886 = vmatprep.subr.bf16.mxu0 %v3325
    %3887 = vmatpush1.bf16.msra.mxu0 %v3324
    %3888 = vmatprep.subr.bf16.mxu0 %v3333
    %3889 = vmatpush1.bf16.msra.mxu0 %v3332
    %3890 = vmatprep.subr.bf16.mxu0 %v3341
    %3891 = vmatpush1.bf16.msra.mxu0 %v3340
    %3892 = vmatprep.subr.bf16.mxu0 %v3349
    %3893 = vmatpush1.bf16.msra.mxu0 %v3348
    %3894 = vmatprep.subr.bf16.mxu0 %v3357
    %3895 = vmatpush1.bf16.msra.mxu0 %v3356
    %3896 = vmatprep.subr.bf16.mxu0 %v3365
    %3897 = vmatpush1.bf16.msra.mxu0 %v3364
    %3898 = vmatprep.subr.bf16.mxu0 %v3373
    %3899 = vmatpush1.bf16.msra.mxu0 %v3372
    %3900 = vmatprep.subr.bf16.mxu0 %v3381
    %3901 = vmatpush1.bf16.msra.mxu0 %v3380
    %3902 = vmatprep.subr.bf16.mxu0 %v3389
    %3903 = vmatpush1.bf16.msra.mxu0 %v3388
    %3904 = vmatprep.subr.bf16.mxu0 %v3397
    %3905 = vmatpush1.bf16.msra.mxu0 %v3396
    %3906 = vmatprep.subr.bf16.mxu0 %v3405
    %3907 = vmatpush1.bf16.msra.mxu0 %v3404
    %3908 = vmatprep.mubr.bf16.mxu0 %v2213
    %3909 = vmatmul.mubr.bf16.gmra.mrb[0].mxu0 %v2212
    %v3910 = vpop.f32.mrb[0].mxu0
    %v3911 = vadd.f32 %v2485, %v3910
    %v3912 = vpop.f32.mrb[0].mxu0
    %v3913 = vadd.f32 %v2489, %v3912
    %v3914 = vpop.f32.mrb[0].mxu0
    %v3915 = vpop.f32.mrb[0].mxu0
    %3916 = vdwg.mxu0
    %3917 = vmatprep.subr.bf16.mxu0 %v3413
    %3918 = vmatpush1.bf16.msra.mxu0 %v3412
    %3919 = vmatprep.subr.bf16.mxu0 %v3421
    %3920 = vmatpush1.bf16.msra.mxu0 %v3420
    %3921 = vmatprep.subr.bf16.mxu0 %v3429
    %3922 = vmatpush1.bf16.msra.mxu0 %v3428
    %3923 = vmatprep.subr.bf16.mxu0 %v3437
    %3924 = vmatpush1.bf16.msra.mxu0 %v3436
    %3925 = vmatprep.subr.bf16.mxu0 %v3445
    %3926 = vmatpush1.bf16.msra.mxu0 %v3444
    %3927 = vmatprep.subr.bf16.mxu0 %v3453
    %3928 = vmatpush1.bf16.msra.mxu0 %v3452
    %3929 = vmatprep.subr.bf16.mxu0 %v3461
    %3930 = vmatpush1.bf16.msra.mxu0 %v3460
    %3931 = vmatprep.subr.bf16.mxu0 %v3469
    %3932 = vmatpush1.bf16.msra.mxu0 %v3468
    %3933 = vmatprep.subr.bf16.mxu0 %v3477
    %3934 = vmatpush1.bf16.msra.mxu0 %v3476
    %3935 = vmatprep.subr.bf16.mxu0 %v3485
    %3936 = vmatpush1.bf16.msra.mxu0 %v3484
    %3937 = vmatprep.subr.bf16.mxu0 %v3493
    %3938 = vmatpush1.bf16.msra.mxu0 %v3492
    %3939 = vmatprep.subr.bf16.mxu0 %v3501
    %3940 = vmatpush1.bf16.msra.mxu0 %v3500
    %3941 = vmatprep.subr.bf16.mxu0 %v3509
    %3942 = vmatpush1.bf16.msra.mxu0 %v3508
    %3943 = vmatprep.subr.bf16.mxu0 %v3517
    %3944 = vmatpush1.bf16.msra.mxu0 %v3516
    %3945 = vmatprep.subr.bf16.mxu0 %v3525
    %3946 = vmatpush1.bf16.msra.mxu0 %v3524
    %3947 = vmatprep.subr.bf16.mxu0 %v3533
    %3948 = vmatpush1.bf16.msra.mxu0 %v3532
    %3949 = vmatprep.mubr.bf16.mxu0 %v2215
    %3950 = vmatmul.mubr.bf16.gmra.mrb[0].mxu0 %v2214
    %v3951 = vpop.f32.mrb[0].mxu0
    %v3952 = vadd.f32 %v3911, %v3951
    %v3953 = vpop.f32.mrb[0].mxu0
    %v3954 = vadd.f32 %v3913, %v3953
    %v3955 = vpop.f32.mrb[0].mxu0
    %v3956 = vpop.f32.mrb[0].mxu0
    %3957 = vdwg.mxu0
    %3958 = vmatprep.subr.bf16.mxu0 %v3287
    %3959 = vmatpush1.bf16.msra.mxu0 %v3286
    %3960 = vmatprep.subr.bf16.mxu0 %v3295
    %3961 = vmatpush1.bf16.msra.mxu0 %v3294
    %3962 = vmatprep.subr.bf16.mxu0 %v3303
    %3963 = vmatpush1.bf16.msra.mxu0 %v3302
    %3964 = vmatprep.subr.bf16.mxu0 %v3311
    %3965 = vmatpush1.bf16.msra.mxu0 %v3310
    %3966 = vmatprep.subr.bf16.mxu0 %v3319
    %3967 = vmatpush1.bf16.msra.mxu0 %v3318
    %3968 = vmatprep.subr.bf16.mxu0 %v3327
    %3969 = vmatpush1.bf16.msra.mxu0 %v3326
    %3970 = vmatprep.subr.bf16.mxu0 %v3335
    %3971 = vmatpush1.bf16.msra.mxu0 %v3334
    %3972 = vmatprep.subr.bf16.mxu0 %v3343
    %3973 = vmatpush1.bf16.msra.mxu0 %v3342
    %3974 = vmatprep.subr.bf16.mxu0 %v3351
    %3975 = vmatpush1.bf16.msra.mxu0 %v3350
    %3976 = vmatprep.subr.bf16.mxu0 %v3359
    %3977 = vmatpush1.bf16.msra.mxu0 %v3358
    %3978 = vmatprep.subr.bf16.mxu0 %v3367
    %3979 = vmatpush1.bf16.msra.mxu0 %v3366
    %3980 = vmatprep.subr.bf16.mxu0 %v3375
    %3981 = vmatpush1.bf16.msra.mxu0 %v3374
    %3982 = vmatprep.subr.bf16.mxu0 %v3383
    %3983 = vmatpush1.bf16.msra.mxu0 %v3382
    %3984 = vmatprep.subr.bf16.mxu0 %v3391
    %3985 = vmatpush1.bf16.msra.mxu0 %v3390
    %3986 = vmatprep.subr.bf16.mxu0 %v3399
    %3987 = vmatpush1.bf16.msra.mxu0 %v3398
    %3988 = vmatprep.subr.bf16.mxu0 %v3407
    %3989 = vmatpush1.bf16.msra.mxu0 %v3406
    %3990 = vmatprep.mubr.bf16.mxu0 %v2213
    %3991 = vmatmul.mubr.bf16.gmra.mrb[0].mxu0 %v2212
    %v3992 = vpop.f32.mrb[0].mxu0
    %v3993 = vadd.f32 %v2493, %v3992
    %v3994 = vpop.f32.mrb[0].mxu0
    %v3995 = vadd.f32 %v2497, %v3994
    %v3996 = vpop.f32.mrb[0].mxu0
    %v3997 = vpop.f32.mrb[0].mxu0
    %3998 = vdwg.mxu0
    %3999 = vmatprep.subr.bf16.mxu0 %v3415
    %4000 = vmatpush1.bf16.msra.mxu0 %v3414
    %4001 = vmatprep.subr.bf16.mxu0 %v3423
    %4002 = vmatpush1.bf16.msra.mxu0 %v3422
    %4003 = vmatprep.subr.bf16.mxu0 %v3431
    %4004 = vmatpush1.bf16.msra.mxu0 %v3430
    %4005 = vmatprep.subr.bf16.mxu0 %v3439
    %4006 = vmatpush1.bf16.msra.mxu0 %v3438
    %4007 = vmatprep.subr.bf16.mxu0 %v3447
    %4008 = vmatpush1.bf16.msra.mxu0 %v3446
    %4009 = vmatprep.subr.bf16.mxu0 %v3455
    %4010 = vmatpush1.bf16.msra.mxu0 %v3454
    %4011 = vmatprep.subr.bf16.mxu0 %v3463
    %4012 = vmatpush1.bf16.msra.mxu0 %v3462
    %4013 = vmatprep.subr.bf16.mxu0 %v3471
    %4014 = vmatpush1.bf16.msra.mxu0 %v3470
    %4015 = vmatprep.subr.bf16.mxu0 %v3479
    %4016 = vmatpush1.bf16.msra.mxu0 %v3478
    %4017 = vmatprep.subr.bf16.mxu0 %v3487
    %4018 = vmatpush1.bf16.msra.mxu0 %v3486
    %4019 = vmatprep.subr.bf16.mxu0 %v3495
    %4020 = vmatpush1.bf16.msra.mxu0 %v3494
    %4021 = vmatprep.subr.bf16.mxu0 %v3503
    %4022 = vmatpush1.bf16.msra.mxu0 %v3502
    %4023 = vmatprep.subr.bf16.mxu0 %v3511
    %4024 = vmatpush1.bf16.msra.mxu0 %v3510
    %4025 = vmatprep.subr.bf16.mxu0 %v3519
    %4026 = vmatpush1.bf16.msra.mxu0 %v3518
    %4027 = vmatprep.subr.bf16.mxu0 %v3527
    %4028 = vmatpush1.bf16.msra.mxu0 %v3526
    %4029 = vmatprep.subr.bf16.mxu0 %v3535
    %4030 = vmatpush1.bf16.msra.mxu0 %v3534
    %4031 = vmatprep.mubr.bf16.mxu0 %v2215
    %4032 = vmatmul.mubr.bf16.gmra.mrb[0].mxu0 %v2214
    %v4033 = vpop.f32.mrb[0].mxu0
    %v4034 = vadd.f32 %v3993, %v4033
    %v4035 = vpop.f32.mrb[0].mxu0
    %v4036 = vadd.f32 %v3995, %v4035
    %v4037 = vpop.f32.mrb[0].mxu0
    %v4038 = vpop.f32.mrb[0].mxu0
    %4039 = vdwg.mxu0
    %4040 = vmatprep.subr.bf16.mxu0 %v3289
    %4041 = vmatpush1.bf16.msra.mxu0 %v3288
    %4042 = vmatprep.subr.bf16.mxu0 %v3297
    %4043 = vmatpush1.bf16.msra.mxu0 %v3296
    %4044 = vmatprep.subr.bf16.mxu0 %v3305
    %4045 = vmatpush1.bf16.msra.mxu0 %v3304
    %4046 = vmatprep.subr.bf16.mxu0 %v3313
    %4047 = vmatpush1.bf16.msra.mxu0 %v3312
    %4048 = vmatprep.subr.bf16.mxu0 %v3321
    %4049 = vmatpush1.bf16.msra.mxu0 %v3320
    %4050 = vmatprep.subr.bf16.mxu0 %v3329
    %4051 = vmatpush1.bf16.msra.mxu0 %v3328
    %4052 = vmatprep.subr.bf16.mxu0 %v3337
    %4053 = vmatpush1.bf16.msra.mxu0 %v3336
    %4054 = vmatprep.subr.bf16.mxu0 %v3345
    %4055 = vmatpush1.bf16.msra.mxu0 %v3344
    %4056 = vmatprep.subr.bf16.mxu0 %v3353
    %4057 = vmatpush1.bf16.msra.mxu0 %v3352
    %4058 = vmatprep.subr.bf16.mxu0 %v3361
    %4059 = vmatpush1.bf16.msra.mxu0 %v3360
    %4060 = vmatprep.subr.bf16.mxu0 %v3369
    %4061 = vmatpush1.bf16.msra.mxu0 %v3368
    %4062 = vmatprep.subr.bf16.mxu0 %v3377
    %4063 = vmatpush1.bf16.msra.mxu0 %v3376
    %4064 = vmatprep.subr.bf16.mxu0 %v3385
    %4065 = vmatpush1.bf16.msra.mxu0 %v3384
    %4066 = vmatprep.subr.bf16.mxu0 %v3393
    %4067 = vmatpush1.bf16.msra.mxu0 %v3392
    %4068 = vmatprep.subr.bf16.mxu0 %v3401
    %4069 = vmatpush1.bf16.msra.mxu0 %v3400
    %4070 = vmatprep.subr.bf16.mxu0 %v3409
    %4071 = vmatpush1.bf16.msra.mxu0 %v3408
    %4072 = vmatprep.mubr.bf16.mxu0 %v2213
    %4073 = vmatmul.mubr.bf16.gmra.mrb[0].mxu0 %v2212
    %v4074 = vpop.f32.mrb[0].mxu0
    %v4075 = vadd.f32 %v2501, %v4074
    %v4076 = vpop.f32.mrb[0].mxu0
    %v4077 = vadd.f32 %v2505, %v4076
    %v4078 = vpop.f32.mrb[0].mxu0
    %v4079 = vpop.f32.mrb[0].mxu0
    %4080 = vdwg.mxu0
    %4081 = vmatprep.subr.bf16.mxu0 %v3417
    %4082 = vmatpush1.bf16.msra.mxu0 %v3416
    %4083 = vmatprep.subr.bf16.mxu0 %v3425
    %4084 = vmatpush1.bf16.msra.mxu0 %v3424
    %4085 = vmatprep.subr.bf16.mxu0 %v3433
    %4086 = vmatpush1.bf16.msra.mxu0 %v3432
    %4087 = vmatprep.subr.bf16.mxu0 %v3441
    %4088 = vmatpush1.bf16.msra.mxu0 %v3440
    %4089 = vmatprep.subr.bf16.mxu0 %v3449
    %4090 = vmatpush1.bf16.msra.mxu0 %v3448
    %4091 = vmatprep.subr.bf16.mxu0 %v3457
    %4092 = vmatpush1.bf16.msra.mxu0 %v3456
    %4093 = vmatprep.subr.bf16.mxu0 %v3465
    %4094 = vmatpush1.bf16.msra.mxu0 %v3464
    %4095 = vmatprep.subr.bf16.mxu0 %v3473
    %4096 = vmatpush1.bf16.msra.mxu0 %v3472
    %4097 = vmatprep.subr.bf16.mxu0 %v3481
    %4098 = vmatpush1.bf16.msra.mxu0 %v3480
    %4099 = vmatprep.subr.bf16.mxu0 %v3489
    %4100 = vmatpush1.bf16.msra.mxu0 %v3488
    %4101 = vmatprep.subr.bf16.mxu0 %v3497
    %4102 = vmatpush1.bf16.msra.mxu0 %v3496
    %4103 = vmatprep.subr.bf16.mxu0 %v3505
    %4104 = vmatpush1.bf16.msra.mxu0 %v3504
    %4105 = vmatprep.subr.bf16.mxu0 %v3513
    %4106 = vmatpush1.bf16.msra.mxu0 %v3512
    %4107 = vmatprep.subr.bf16.mxu0 %v3521
    %4108 = vmatpush1.bf16.msra.mxu0 %v3520
    %4109 = vmatprep.subr.bf16.mxu0 %v3529
    %4110 = vmatpush1.bf16.msra.mxu0 %v3528
    %4111 = vmatprep.subr.bf16.mxu0 %v3537
    %4112 = vmatpush1.bf16.msra.mxu0 %v3536
    %4113 = vmatprep.mubr.bf16.mxu0 %v2215
    %4114 = vmatmul.mubr.bf16.gmra.mrb[0].mxu0 %v2214
    %v4115 = vpop.f32.mrb[0].mxu0
    %v4116 = vadd.f32 %v4075, %v4115
    %v4117 = vpop.f32.mrb[0].mxu0
    %v4118 = vadd.f32 %v4077, %v4117
    %v4119 = vpop.f32.mrb[0].mxu0
    %v4120 = vpop.f32.mrb[0].mxu0
    %4121 = vdwg.mxu0
    %v4122 = vmax.f32 %v3870, 0.0
    %v4123 = vmax.f32 %v3872, 0.0
    %v4124 = vmax.f32 %v3952, 0.0
    %v4125 = vmax.f32 %v3954, 0.0
    %v4126 = vmax.f32 %v4034, 0.0
    %v4127 = vmax.f32 %v4036, 0.0
    %v4128 = vmax.f32 %v4116, 0.0
    %v4129 = vmax.f32 %v4118, 0.0
    %v4130 = vpack.c.bf16 %v4122, %v4122
    %v4131 = vpack.c.bf16 %v4123, %v4123
    %v4132 = vpack.c.bf16 %v4124, %v4124
    %v4133 = vpack.c.bf16 %v4125, %v4125
    %v4134 = vpack.c.bf16 %v4126, %v4126
    %v4135 = vpack.c.bf16 %v4127, %v4127
    %v4136 = vpack.c.bf16 %v4128, %v4128
    %v4137 = vpack.c.bf16 %v4129, %v4129
    %v4138 = vld [vmem:[#allocation13] sm:$0xff]
    %v4139 = vld [vmem:[#allocation13 + $0x8] sm:$0xff]
    %v4140 = vld [vmem:[#allocation13 + $0x10] sm:$0xff]
    %v4141 = vld [vmem:[#allocation13 + $0x18] sm:$0xff]
    %v4142 = vld [vmem:[#allocation13 + $0x20] sm:$0xff]
    %v4143 = vld [vmem:[#allocation13 + $0x28] sm:$0xff]
    %v4144 = vld [vmem:[#allocation13 + $0x30] sm:$0xff]
    %v4145 = vld [vmem:[#allocation13 + $0x38] sm:$0xff]
    %v4146 = vld [vmem:[#allocation13 + $0x40] sm:$0xff]
    %v4147 = vld [vmem:[#allocation13 + $0x48] sm:$0xff]
    %v4148 = vld [vmem:[#allocation13 + $0x50] sm:$0xff]
    %v4149 = vld [vmem:[#allocation13 + $0x58] sm:$0xff]
    %v4150 = vld [vmem:[#allocation13 + $0x60] sm:$0xff]
    %v4151 = vld [vmem:[#allocation13 + $0x68] sm:$0xff]
    %v4152 = vld [vmem:[#allocation13 + $0x70] sm:$0xff]
    %v4153 = vld [vmem:[#allocation13 + $0x78] sm:$0xff]
    %v4154 = vld [vmem:[#allocation13 + $0x80] sm:$0xff]
    %v4155 = vld [vmem:[#allocation13 + $0x88] sm:$0xff]
    %v4156 = vld [vmem:[#allocation13 + $0x90] sm:$0xff]
    %v4157 = vld [vmem:[#allocation13 + $0x98] sm:$0xff]
    %v4158 = vld [vmem:[#allocation13 + $0xa0] sm:$0xff]
    %v4159 = vld [vmem:[#allocation13 + $0xa8] sm:$0xff]
    %v4160 = vld [vmem:[#allocation13 + $0xb0] sm:$0xff]
    %v4161 = vld [vmem:[#allocation13 + $0xb8] sm:$0xff]
    %v4162 = vld [vmem:[#allocation13 + $0xc0] sm:$0xff]
    %v4163 = vld [vmem:[#allocation13 + $0xc8] sm:$0xff]
    %v4164 = vld [vmem:[#allocation13 + $0xd0] sm:$0xff]
    %v4165 = vld [vmem:[#allocation13 + $0xd8] sm:$0xff]
    %v4166 = vld [vmem:[#allocation13 + $0xe0] sm:$0xff]
    %v4167 = vld [vmem:[#allocation13 + $0xe8] sm:$0xff]
    %v4168 = vld [vmem:[#allocation13 + $0xf0] sm:$0xff]
    %v4169 = vld [vmem:[#allocation13 + $0xf8] sm:$0xff]
    %v4170 = vld [vmem:[#allocation13 + $0x100] sm:$0xff]
    %v4171 = vld [vmem:[#allocation13 + $0x108] sm:$0xff]
    %v4172 = vld [vmem:[#allocation13 + $0x110] sm:$0xff]
    %v4173 = vld [vmem:[#allocation13 + $0x118] sm:$0xff]
    %v4174 = vld [vmem:[#allocation13 + $0x120] sm:$0xff]
    %v4175 = vld [vmem:[#allocation13 + $0x128] sm:$0xff]
    %v4176 = vld [vmem:[#allocation13 + $0x130] sm:$0xff]
    %v4177 = vld [vmem:[#allocation13 + $0x138] sm:$0xff]
    %v4178 = vld [vmem:[#allocation13 + $0x140] sm:$0xff]
    %v4179 = vld [vmem:[#allocation13 + $0x148] sm:$0xff]
    %v4180 = vld [vmem:[#allocation13 + $0x150] sm:$0xff]
    %v4181 = vld [vmem:[#allocation13 + $0x158] sm:$0xff]
    %v4182 = vld [vmem:[#allocation13 + $0x160] sm:$0xff]
    %v4183 = vld [vmem:[#allocation13 + $0x168] sm:$0xff]
    %v4184 = vld [vmem:[#allocation13 + $0x170] sm:$0xff]
    %v4185 = vld [vmem:[#allocation13 + $0x178] sm:$0xff]
    %v4186 = vld [vmem:[#allocation13 + $0x180] sm:$0xff]
    %v4187 = vld [vmem:[#allocation13 + $0x188] sm:$0xff]
    %v4188 = vld [vmem:[#allocation13 + $0x190] sm:$0xff]
    %v4189 = vld [vmem:[#allocation13 + $0x198] sm:$0xff]
    %v4190 = vld [vmem:[#allocation13 + $0x1a0] sm:$0xff]
    %v4191 = vld [vmem:[#allocation13 + $0x1a8] sm:$0xff]
    %v4192 = vld [vmem:[#allocation13 + $0x1b0] sm:$0xff]
    %v4193 = vld [vmem:[#allocation13 + $0x1b8] sm:$0xff]
    %v4194 = vld [vmem:[#allocation13 + $0x1c0] sm:$0xff]
    %v4195 = vld [vmem:[#allocation13 + $0x1c8] sm:$0xff]
    %v4196 = vld [vmem:[#allocation13 + $0x1d0] sm:$0xff]
    %v4197 = vld [vmem:[#allocation13 + $0x1d8] sm:$0xff]
    %v4198 = vld [vmem:[#allocation13 + $0x1e0] sm:$0xff]
    %v4199 = vld [vmem:[#allocation13 + $0x1e8] sm:$0xff]
    %v4200 = vld [vmem:[#allocation13 + $0x1f0] sm:$0xff]
    %v4201 = vld [vmem:[#allocation13 + $0x1f8] sm:$0xff]
    %v4202 = vld [vmem:[#allocation13 + $0x200] sm:$0xff]
    %v4203 = vld [vmem:[#allocation13 + $0x208] sm:$0xff]
    %v4204 = vld [vmem:[#allocation13 + $0x210] sm:$0xff]
    %v4205 = vld [vmem:[#allocation13 + $0x218] sm:$0xff]
    %v4206 = vld [vmem:[#allocation13 + $0x220] sm:$0xff]
    %v4207 = vld [vmem:[#allocation13 + $0x228] sm:$0xff]
    %v4208 = vld [vmem:[#allocation13 + $0x230] sm:$0xff]
    %v4209 = vld [vmem:[#allocation13 + $0x238] sm:$0xff]
    %v4210 = vld [vmem:[#allocation13 + $0x240] sm:$0xff]
    %v4211 = vld [vmem:[#allocation13 + $0x248] sm:$0xff]
    %v4212 = vld [vmem:[#allocation13 + $0x250] sm:$0xff]
    %v4213 = vld [vmem:[#allocation13 + $0x258] sm:$0xff]
    %v4214 = vld [vmem:[#allocation13 + $0x260] sm:$0xff]
    %v4215 = vld [vmem:[#allocation13 + $0x268] sm:$0xff]
    %v4216 = vld [vmem:[#allocation13 + $0x270] sm:$0xff]
    %v4217 = vld [vmem:[#allocation13 + $0x278] sm:$0xff]
    %v4218 = vld [vmem:[#allocation13 + $0x280] sm:$0xff]
    %v4219 = vld [vmem:[#allocation13 + $0x288] sm:$0xff]
    %v4220 = vld [vmem:[#allocation13 + $0x290] sm:$0xff]
    %v4221 = vld [vmem:[#allocation13 + $0x298] sm:$0xff]
    %v4222 = vld [vmem:[#allocation13 + $0x2a0] sm:$0xff]
    %v4223 = vld [vmem:[#allocation13 + $0x2a8] sm:$0xff]
    %v4224 = vld [vmem:[#allocation13 + $0x2b0] sm:$0xff]
    %v4225 = vld [vmem:[#allocation13 + $0x2b8] sm:$0xff]
    %v4226 = vld [vmem:[#allocation13 + $0x2c0] sm:$0xff]
    %v4227 = vld [vmem:[#allocation13 + $0x2c8] sm:$0xff]
    %v4228 = vld [vmem:[#allocation13 + $0x2d0] sm:$0xff]
    %v4229 = vld [vmem:[#allocation13 + $0x2d8] sm:$0xff]
    %v4230 = vld [vmem:[#allocation13 + $0x2e0] sm:$0xff]
    %v4231 = vld [vmem:[#allocation13 + $0x2e8] sm:$0xff]
    %v4232 = vld [vmem:[#allocation13 + $0x2f0] sm:$0xff]
    %v4233 = vld [vmem:[#allocation13 + $0x2f8] sm:$0xff]
    %v4234 = vld [vmem:[#allocation13 + $0x300] sm:$0xff]
    %v4235 = vld [vmem:[#allocation13 + $0x308] sm:$0xff]
    %v4236 = vld [vmem:[#allocation13 + $0x310] sm:$0xff]
    %v4237 = vld [vmem:[#allocation13 + $0x318] sm:$0xff]
    %v4238 = vld [vmem:[#allocation13 + $0x320] sm:$0xff]
    %v4239 = vld [vmem:[#allocation13 + $0x328] sm:$0xff]
    %v4240 = vld [vmem:[#allocation13 + $0x330] sm:$0xff]
    %v4241 = vld [vmem:[#allocation13 + $0x338] sm:$0xff]
    %v4242 = vld [vmem:[#allocation13 + $0x340] sm:$0xff]
    %v4243 = vld [vmem:[#allocation13 + $0x348] sm:$0xff]
    %v4244 = vld [vmem:[#allocation13 + $0x350] sm:$0xff]
    %v4245 = vld [vmem:[#allocation13 + $0x358] sm:$0xff]
    %v4246 = vld [vmem:[#allocation13 + $0x360] sm:$0xff]
    %v4247 = vld [vmem:[#allocation13 + $0x368] sm:$0xff]
    %v4248 = vld [vmem:[#allocation13 + $0x370] sm:$0xff]
    %v4249 = vld [vmem:[#allocation13 + $0x378] sm:$0xff]
    %v4250 = vld [vmem:[#allocation13 + $0x380] sm:$0xff]
    %v4251 = vld [vmem:[#allocation13 + $0x388] sm:$0xff]
    %v4252 = vld [vmem:[#allocation13 + $0x390] sm:$0xff]
    %v4253 = vld [vmem:[#allocation13 + $0x398] sm:$0xff]
    %v4254 = vld [vmem:[#allocation13 + $0x3a0] sm:$0xff]
    %v4255 = vld [vmem:[#allocation13 + $0x3a8] sm:$0xff]
    %v4256 = vld [vmem:[#allocation13 + $0x3b0] sm:$0xff]
    %v4257 = vld [vmem:[#allocation13 + $0x3b8] sm:$0xff]
    %v4258 = vld [vmem:[#allocation13 + $0x3c0] sm:$0xff]
    %v4259 = vld [vmem:[#allocation13 + $0x3c8] sm:$0xff]
    %v4260 = vld [vmem:[#allocation13 + $0x3d0] sm:$0xff]
    %v4261 = vld [vmem:[#allocation13 + $0x3d8] sm:$0xff]
    %v4262 = vld [vmem:[#allocation13 + $0x3e0] sm:$0xff]
    %v4263 = vld [vmem:[#allocation13 + $0x3e8] sm:$0xff]
    %v4264 = vld [vmem:[#allocation13 + $0x3f0] sm:$0xff]
    %v4265 = vld [vmem:[#allocation13 + $0x3f8] sm:$0xff]
    %v4266 = vld [vmem:[#allocation13 + $0x400] sm:$0xff]
    %v4267 = vld [vmem:[#allocation13 + $0x408] sm:$0xff]
    %v4268 = vld [vmem:[#allocation13 + $0x410] sm:$0xff]
    %v4269 = vld [vmem:[#allocation13 + $0x418] sm:$0xff]
    %v4270 = vld [vmem:[#allocation13 + $0x420] sm:$0xff]
    %v4271 = vld [vmem:[#allocation13 + $0x428] sm:$0xff]
    %v4272 = vld [vmem:[#allocation13 + $0x430] sm:$0xff]
    %v4273 = vld [vmem:[#allocation13 + $0x438] sm:$0xff]
    %v4274 = vld [vmem:[#allocation13 + $0x440] sm:$0xff]
    %v4275 = vld [vmem:[#allocation13 + $0x448] sm:$0xff]
    %v4276 = vld [vmem:[#allocation13 + $0x450] sm:$0xff]
    %v4277 = vld [vmem:[#allocation13 + $0x458] sm:$0xff]
    %v4278 = vld [vmem:[#allocation13 + $0x460] sm:$0xff]
    %v4279 = vld [vmem:[#allocation13 + $0x468] sm:$0xff]
    %v4280 = vld [vmem:[#allocation13 + $0x470] sm:$0xff]
    %v4281 = vld [vmem:[#allocation13 + $0x478] sm:$0xff]
    %v4282 = vld [vmem:[#allocation13 + $0x480] sm:$0xff]
    %v4283 = vld [vmem:[#allocation13 + $0x488] sm:$0xff]
    %v4284 = vld [vmem:[#allocation13 + $0x490] sm:$0xff]
    %v4285 = vld [vmem:[#allocation13 + $0x498] sm:$0xff]
    %v4286 = vld [vmem:[#allocation13 + $0x4a0] sm:$0xff]
    %v4287 = vld [vmem:[#allocation13 + $0x4a8] sm:$0xff]
    %v4288 = vld [vmem:[#allocation13 + $0x4b0] sm:$0xff]
    %v4289 = vld [vmem:[#allocation13 + $0x4b8] sm:$0xff]
    %v4290 = vld [vmem:[#allocation13 + $0x4c0] sm:$0xff]
    %v4291 = vld [vmem:[#allocation13 + $0x4c8] sm:$0xff]
    %v4292 = vld [vmem:[#allocation13 + $0x4d0] sm:$0xff]
    %v4293 = vld [vmem:[#allocation13 + $0x4d8] sm:$0xff]
    %v4294 = vld [vmem:[#allocation13 + $0x4e0] sm:$0xff]
    %v4295 = vld [vmem:[#allocation13 + $0x4e8] sm:$0xff]
    %v4296 = vld [vmem:[#allocation13 + $0x4f0] sm:$0xff]
    %v4297 = vld [vmem:[#allocation13 + $0x4f8] sm:$0xff]
    %v4298 = vld [vmem:[#allocation13 + $0x500] sm:$0xff]
    %v4299 = vld [vmem:[#allocation13 + $0x508] sm:$0xff]
    %v4300 = vld [vmem:[#allocation13 + $0x510] sm:$0xff]
    %v4301 = vld [vmem:[#allocation13 + $0x518] sm:$0xff]
    %v4302 = vld [vmem:[#allocation13 + $0x520] sm:$0xff]
    %v4303 = vld [vmem:[#allocation13 + $0x528] sm:$0xff]
    %v4304 = vld [vmem:[#allocation13 + $0x530] sm:$0xff]
    %v4305 = vld [vmem:[#allocation13 + $0x538] sm:$0xff]
    %v4306 = vld [vmem:[#allocation13 + $0x540] sm:$0xff]
    %v4307 = vld [vmem:[#allocation13 + $0x548] sm:$0xff]
    %v4308 = vld [vmem:[#allocation13 + $0x550] sm:$0xff]
    %v4309 = vld [vmem:[#allocation13 + $0x558] sm:$0xff]
    %v4310 = vld [vmem:[#allocation13 + $0x560] sm:$0xff]
    %v4311 = vld [vmem:[#allocation13 + $0x568] sm:$0xff]
    %v4312 = vld [vmem:[#allocation13 + $0x570] sm:$0xff]
    %v4313 = vld [vmem:[#allocation13 + $0x578] sm:$0xff]
    %v4314 = vld [vmem:[#allocation13 + $0x580] sm:$0xff]
    %v4315 = vld [vmem:[#allocation13 + $0x588] sm:$0xff]
    %v4316 = vld [vmem:[#allocation13 + $0x590] sm:$0xff]
    %v4317 = vld [vmem:[#allocation13 + $0x598] sm:$0xff]
    %v4318 = vld [vmem:[#allocation13 + $0x5a0] sm:$0xff]
    %v4319 = vld [vmem:[#allocation13 + $0x5a8] sm:$0xff]
    %v4320 = vld [vmem:[#allocation13 + $0x5b0] sm:$0xff]
    %v4321 = vld [vmem:[#allocation13 + $0x5b8] sm:$0xff]
    %v4322 = vld [vmem:[#allocation13 + $0x5c0] sm:$0xff]
    %v4323 = vld [vmem:[#allocation13 + $0x5c8] sm:$0xff]
    %v4324 = vld [vmem:[#allocation13 + $0x5d0] sm:$0xff]
    %v4325 = vld [vmem:[#allocation13 + $0x5d8] sm:$0xff]
    %v4326 = vld [vmem:[#allocation13 + $0x5e0] sm:$0xff]
    %v4327 = vld [vmem:[#allocation13 + $0x5e8] sm:$0xff]
    %v4328 = vld [vmem:[#allocation13 + $0x5f0] sm:$0xff]
    %v4329 = vld [vmem:[#allocation13 + $0x5f8] sm:$0xff]
    %v4330 = vld [vmem:[#allocation13 + $0x600] sm:$0xff]
    %v4331 = vld [vmem:[#allocation13 + $0x608] sm:$0xff]
    %v4332 = vld [vmem:[#allocation13 + $0x610] sm:$0xff]
    %v4333 = vld [vmem:[#allocation13 + $0x618] sm:$0xff]
    %v4334 = vld [vmem:[#allocation13 + $0x620] sm:$0xff]
    %v4335 = vld [vmem:[#allocation13 + $0x628] sm:$0xff]
    %v4336 = vld [vmem:[#allocation13 + $0x630] sm:$0xff]
    %v4337 = vld [vmem:[#allocation13 + $0x638] sm:$0xff]
    %v4338 = vld [vmem:[#allocation13 + $0x640] sm:$0xff]
    %v4339 = vld [vmem:[#allocation13 + $0x648] sm:$0xff]
    %v4340 = vld [vmem:[#allocation13 + $0x650] sm:$0xff]
    %v4341 = vld [vmem:[#allocation13 + $0x658] sm:$0xff]
    %v4342 = vld [vmem:[#allocation13 + $0x660] sm:$0xff]
    %v4343 = vld [vmem:[#allocation13 + $0x668] sm:$0xff]
    %v4344 = vld [vmem:[#allocation13 + $0x670] sm:$0xff]
    %v4345 = vld [vmem:[#allocation13 + $0x678] sm:$0xff]
    %v4346 = vld [vmem:[#allocation13 + $0x680] sm:$0xff]
    %v4347 = vld [vmem:[#allocation13 + $0x688] sm:$0xff]
    %v4348 = vld [vmem:[#allocation13 + $0x690] sm:$0xff]
    %v4349 = vld [vmem:[#allocation13 + $0x698] sm:$0xff]
    %v4350 = vld [vmem:[#allocation13 + $0x6a0] sm:$0xff]
    %v4351 = vld [vmem:[#allocation13 + $0x6a8] sm:$0xff]
    %v4352 = vld [vmem:[#allocation13 + $0x6b0] sm:$0xff]
    %v4353 = vld [vmem:[#allocation13 + $0x6b8] sm:$0xff]
    %v4354 = vld [vmem:[#allocation13 + $0x6c0] sm:$0xff]
    %v4355 = vld [vmem:[#allocation13 + $0x6c8] sm:$0xff]
    %v4356 = vld [vmem:[#allocation13 + $0x6d0] sm:$0xff]
    %v4357 = vld [vmem:[#allocation13 + $0x6d8] sm:$0xff]
    %v4358 = vld [vmem:[#allocation13 + $0x6e0] sm:$0xff]
    %v4359 = vld [vmem:[#allocation13 + $0x6e8] sm:$0xff]
    %v4360 = vld [vmem:[#allocation13 + $0x6f0] sm:$0xff]
    %v4361 = vld [vmem:[#allocation13 + $0x6f8] sm:$0xff]
    %v4362 = vld [vmem:[#allocation13 + $0x700] sm:$0xff]
    %v4363 = vld [vmem:[#allocation13 + $0x708] sm:$0xff]
    %v4364 = vld [vmem:[#allocation13 + $0x710] sm:$0xff]
    %v4365 = vld [vmem:[#allocation13 + $0x718] sm:$0xff]
    %v4366 = vld [vmem:[#allocation13 + $0x720] sm:$0xff]
    %v4367 = vld [vmem:[#allocation13 + $0x728] sm:$0xff]
    %v4368 = vld [vmem:[#allocation13 + $0x730] sm:$0xff]
    %v4369 = vld [vmem:[#allocation13 + $0x738] sm:$0xff]
    %v4370 = vld [vmem:[#allocation13 + $0x740] sm:$0xff]
    %v4371 = vld [vmem:[#allocation13 + $0x748] sm:$0xff]
    %v4372 = vld [vmem:[#allocation13 + $0x750] sm:$0xff]
    %v4373 = vld [vmem:[#allocation13 + $0x758] sm:$0xff]
    %v4374 = vld [vmem:[#allocation13 + $0x760] sm:$0xff]
    %v4375 = vld [vmem:[#allocation13 + $0x768] sm:$0xff]
    %v4376 = vld [vmem:[#allocation13 + $0x770] sm:$0xff]
    %v4377 = vld [vmem:[#allocation13 + $0x778] sm:$0xff]
    %v4378 = vld [vmem:[#allocation13 + $0x780] sm:$0xff]
    %v4379 = vld [vmem:[#allocation13 + $0x788] sm:$0xff]
    %v4380 = vld [vmem:[#allocation13 + $0x790] sm:$0xff]
    %v4381 = vld [vmem:[#allocation13 + $0x798] sm:$0xff]
    %v4382 = vld [vmem:[#allocation13 + $0x7a0] sm:$0xff]
    %v4383 = vld [vmem:[#allocation13 + $0x7a8] sm:$0xff]
    %v4384 = vld [vmem:[#allocation13 + $0x7b0] sm:$0xff]
    %v4385 = vld [vmem:[#allocation13 + $0x7b8] sm:$0xff]
    %v4386 = vld [vmem:[#allocation13 + $0x7c0] sm:$0xff]
    %v4387 = vld [vmem:[#allocation13 + $0x7c8] sm:$0xff]
    %v4388 = vld [vmem:[#allocation13 + $0x7d0] sm:$0xff]
    %v4389 = vld [vmem:[#allocation13 + $0x7d8] sm:$0xff]
    %v4390 = vld [vmem:[#allocation13 + $0x7e0] sm:$0xff]
    %v4391 = vld [vmem:[#allocation13 + $0x7e8] sm:$0xff]
    %v4392 = vld [vmem:[#allocation13 + $0x7f0] sm:$0xff]
    %v4393 = vld [vmem:[#allocation13 + $0x7f8] sm:$0xff]
    %v4394 = vld [vmem:[#allocation13 + $0x800] sm:$0xff]
    %v4395 = vld [vmem:[#allocation13 + $0x808] sm:$0xff]
    %v4396 = vld [vmem:[#allocation13 + $0x810] sm:$0xff]
    %v4397 = vld [vmem:[#allocation13 + $0x818] sm:$0xff]
    %v4398 = vld [vmem:[#allocation13 + $0x820] sm:$0xff]
    %v4399 = vld [vmem:[#allocation13 + $0x828] sm:$0xff]
    %v4400 = vld [vmem:[#allocation13 + $0x830] sm:$0xff]
    %v4401 = vld [vmem:[#allocation13 + $0x838] sm:$0xff]
    %v4402 = vld [vmem:[#allocation13 + $0x840] sm:$0xff]
    %v4403 = vld [vmem:[#allocation13 + $0x848] sm:$0xff]
    %v4404 = vld [vmem:[#allocation13 + $0x850] sm:$0xff]
    %v4405 = vld [vmem:[#allocation13 + $0x858] sm:$0xff]
    %v4406 = vld [vmem:[#allocation13 + $0x860] sm:$0xff]
    %v4407 = vld [vmem:[#allocation13 + $0x868] sm:$0xff]
    %v4408 = vld [vmem:[#allocation13 + $0x870] sm:$0xff]
    %v4409 = vld [vmem:[#allocation13 + $0x878] sm:$0xff]
    %v4410 = vld [vmem:[#allocation13 + $0x880] sm:$0xff]
    %v4411 = vld [vmem:[#allocation13 + $0x888] sm:$0xff]
    %v4412 = vld [vmem:[#allocation13 + $0x890] sm:$0xff]
    %v4413 = vld [vmem:[#allocation13 + $0x898] sm:$0xff]
    %v4414 = vld [vmem:[#allocation13 + $0x8a0] sm:$0xff]
    %v4415 = vld [vmem:[#allocation13 + $0x8a8] sm:$0xff]
    %v4416 = vld [vmem:[#allocation13 + $0x8b0] sm:$0xff]
    %v4417 = vld [vmem:[#allocation13 + $0x8b8] sm:$0xff]
    %v4418 = vld [vmem:[#allocation13 + $0x8c0] sm:$0xff]
    %v4419 = vld [vmem:[#allocation13 + $0x8c8] sm:$0xff]
    %v4420 = vld [vmem:[#allocation13 + $0x8d0] sm:$0xff]
    %v4421 = vld [vmem:[#allocation13 + $0x8d8] sm:$0xff]
    %v4422 = vld [vmem:[#allocation13 + $0x8e0] sm:$0xff]
    %v4423 = vld [vmem:[#allocation13 + $0x8e8] sm:$0xff]
    %v4424 = vld [vmem:[#allocation13 + $0x8f0] sm:$0xff]
    %v4425 = vld [vmem:[#allocation13 + $0x8f8] sm:$0xff]
    %v4426 = vld [vmem:[#allocation13 + $0x900] sm:$0xff]
    %v4427 = vld [vmem:[#allocation13 + $0x908] sm:$0xff]
    %v4428 = vld [vmem:[#allocation13 + $0x910] sm:$0xff]
    %v4429 = vld [vmem:[#allocation13 + $0x918] sm:$0xff]
    %v4430 = vld [vmem:[#allocation13 + $0x920] sm:$0xff]
    %v4431 = vld [vmem:[#allocation13 + $0x928] sm:$0xff]
    %v4432 = vld [vmem:[#allocation13 + $0x930] sm:$0xff]
    %v4433 = vld [vmem:[#allocation13 + $0x938] sm:$0xff]
    %v4434 = vld [vmem:[#allocation13 + $0x940] sm:$0xff]
    %v4435 = vld [vmem:[#allocation13 + $0x948] sm:$0xff]
    %v4436 = vld [vmem:[#allocation13 + $0x950] sm:$0xff]
    %v4437 = vld [vmem:[#allocation13 + $0x958] sm:$0xff]
    %v4438 = vld [vmem:[#allocation13 + $0x960] sm:$0xff]
    %v4439 = vld [vmem:[#allocation13 + $0x968] sm:$0xff]
    %v4440 = vld [vmem:[#allocation13 + $0x970] sm:$0xff]
    %v4441 = vld [vmem:[#allocation13 + $0x978] sm:$0xff]
    %v4442 = vld [vmem:[#allocation13 + $0x980] sm:$0xff]
    %v4443 = vld [vmem:[#allocation13 + $0x988] sm:$0xff]
    %v4444 = vld [vmem:[#allocation13 + $0x990] sm:$0xff]
    %v4445 = vld [vmem:[#allocation13 + $0x998] sm:$0xff]
    %v4446 = vld [vmem:[#allocation13 + $0x9a0] sm:$0xff]
    %v4447 = vld [vmem:[#allocation13 + $0x9a8] sm:$0xff]
    %v4448 = vld [vmem:[#allocation13 + $0x9b0] sm:$0xff]
    %v4449 = vld [vmem:[#allocation13 + $0x9b8] sm:$0xff]
    %v4450 = vld [vmem:[#allocation13 + $0x9c0] sm:$0xff]
    %v4451 = vld [vmem:[#allocation13 + $0x9c8] sm:$0xff]
    %v4452 = vld [vmem:[#allocation13 + $0x9d0] sm:$0xff]
    %v4453 = vld [vmem:[#allocation13 + $0x9d8] sm:$0xff]
    %v4454 = vld [vmem:[#allocation13 + $0x9e0] sm:$0xff]
    %v4455 = vld [vmem:[#allocation13 + $0x9e8] sm:$0xff]
    %v4456 = vld [vmem:[#allocation13 + $0x9f0] sm:$0xff]
    %v4457 = vld [vmem:[#allocation13 + $0x9f8] sm:$0xff]
    %v4458 = vld [vmem:[#allocation13 + $0xa00] sm:$0xff]
    %v4459 = vld [vmem:[#allocation13 + $0xa08] sm:$0xff]
    %v4460 = vld [vmem:[#allocation13 + $0xa10] sm:$0xff]
    %v4461 = vld [vmem:[#allocation13 + $0xa18] sm:$0xff]
    %v4462 = vld [vmem:[#allocation13 + $0xa20] sm:$0xff]
    %v4463 = vld [vmem:[#allocation13 + $0xa28] sm:$0xff]
    %v4464 = vld [vmem:[#allocation13 + $0xa30] sm:$0xff]
    %v4465 = vld [vmem:[#allocation13 + $0xa38] sm:$0xff]
    %v4466 = vld [vmem:[#allocation13 + $0xa40] sm:$0xff]
    %v4467 = vld [vmem:[#allocation13 + $0xa48] sm:$0xff]
    %v4468 = vld [vmem:[#allocation13 + $0xa50] sm:$0xff]
    %v4469 = vld [vmem:[#allocation13 + $0xa58] sm:$0xff]
    %v4470 = vld [vmem:[#allocation13 + $0xa60] sm:$0xff]
    %v4471 = vld [vmem:[#allocation13 + $0xa68] sm:$0xff]
    %v4472 = vld [vmem:[#allocation13 + $0xa70] sm:$0xff]
    %v4473 = vld [vmem:[#allocation13 + $0xa78] sm:$0xff]
    %v4474 = vld [vmem:[#allocation13 + $0xa80] sm:$0xff]
    %v4475 = vld [vmem:[#allocation13 + $0xa88] sm:$0xff]
    %v4476 = vld [vmem:[#allocation13 + $0xa90] sm:$0xff]
    %v4477 = vld [vmem:[#allocation13 + $0xa98] sm:$0xff]
    %v4478 = vld [vmem:[#allocation13 + $0xaa0] sm:$0xff]
    %v4479 = vld [vmem:[#allocation13 + $0xaa8] sm:$0xff]
    %v4480 = vld [vmem:[#allocation13 + $0xab0] sm:$0xff]
    %v4481 = vld [vmem:[#allocation13 + $0xab8] sm:$0xff]
    %v4482 = vld [vmem:[#allocation13 + $0xac0] sm:$0xff]
    %v4483 = vld [vmem:[#allocation13 + $0xac8] sm:$0xff]
    %v4484 = vld [vmem:[#allocation13 + $0xad0] sm:$0xff]
    %v4485 = vld [vmem:[#allocation13 + $0xad8] sm:$0xff]
    %v4486 = vld [vmem:[#allocation13 + $0xae0] sm:$0xff]
    %v4487 = vld [vmem:[#allocation13 + $0xae8] sm:$0xff]
    %v4488 = vld [vmem:[#allocation13 + $0xaf0] sm:$0xff]
    %v4489 = vld [vmem:[#allocation13 + $0xaf8] sm:$0xff]
    %v4490 = vld [vmem:[#allocation13 + $0xb00] sm:$0xff]
    %v4491 = vld [vmem:[#allocation13 + $0xb08] sm:$0xff]
    %v4492 = vld [vmem:[#allocation13 + $0xb10] sm:$0xff]
    %v4493 = vld [vmem:[#allocation13 + $0xb18] sm:$0xff]
    %v4494 = vld [vmem:[#allocation13 + $0xb20] sm:$0xff]
    %v4495 = vld [vmem:[#allocation13 + $0xb28] sm:$0xff]
    %v4496 = vld [vmem:[#allocation13 + $0xb30] sm:$0xff]
    %v4497 = vld [vmem:[#allocation13 + $0xb38] sm:$0xff]
    %v4498 = vld [vmem:[#allocation13 + $0xb40] sm:$0xff]
    %v4499 = vld [vmem:[#allocation13 + $0xb48] sm:$0xff]
    %v4500 = vld [vmem:[#allocation13 + $0xb50] sm:$0xff]
    %v4501 = vld [vmem:[#allocation13 + $0xb58] sm:$0xff]
    %v4502 = vld [vmem:[#allocation13 + $0xb60] sm:$0xff]
    %v4503 = vld [vmem:[#allocation13 + $0xb68] sm:$0xff]
    %v4504 = vld [vmem:[#allocation13 + $0xb70] sm:$0xff]
    %v4505 = vld [vmem:[#allocation13 + $0xb78] sm:$0xff]
    %v4506 = vld [vmem:[#allocation13 + $0xb80] sm:$0xff]
    %v4507 = vld [vmem:[#allocation13 + $0xb88] sm:$0xff]
    %v4508 = vld [vmem:[#allocation13 + $0xb90] sm:$0xff]
    %v4509 = vld [vmem:[#allocation13 + $0xb98] sm:$0xff]
    %v4510 = vld [vmem:[#allocation13 + $0xba0] sm:$0xff]
    %v4511 = vld [vmem:[#allocation13 + $0xba8] sm:$0xff]
    %v4512 = vld [vmem:[#allocation13 + $0xbb0] sm:$0xff]
    %v4513 = vld [vmem:[#allocation13 + $0xbb8] sm:$0xff]
    %v4514 = vld [vmem:[#allocation13 + $0xbc0] sm:$0xff]
    %v4515 = vld [vmem:[#allocation13 + $0xbc8] sm:$0xff]
    %v4516 = vld [vmem:[#allocation13 + $0xbd0] sm:$0xff]
    %v4517 = vld [vmem:[#allocation13 + $0xbd8] sm:$0xff]
    %v4518 = vld [vmem:[#allocation13 + $0xbe0] sm:$0xff]
    %v4519 = vld [vmem:[#allocation13 + $0xbe8] sm:$0xff]
    %v4520 = vld [vmem:[#allocation13 + $0xbf0] sm:$0xff]
    %v4521 = vld [vmem:[#allocation13 + $0xbf8] sm:$0xff]
    %v4522 = vld [vmem:[#allocation13 + $0xc00] sm:$0xff]
    %v4523 = vld [vmem:[#allocation13 + $0xc08] sm:$0xff]
    %v4524 = vld [vmem:[#allocation13 + $0xc10] sm:$0xff]
    %v4525 = vld [vmem:[#allocation13 + $0xc18] sm:$0xff]
    %v4526 = vld [vmem:[#allocation13 + $0xc20] sm:$0xff]
    %v4527 = vld [vmem:[#allocation13 + $0xc28] sm:$0xff]
    %v4528 = vld [vmem:[#allocation13 + $0xc30] sm:$0xff]
    %v4529 = vld [vmem:[#allocation13 + $0xc38] sm:$0xff]
    %v4530 = vld [vmem:[#allocation13 + $0xc40] sm:$0xff]
    %v4531 = vld [vmem:[#allocation13 + $0xc48] sm:$0xff]
    %v4532 = vld [vmem:[#allocation13 + $0xc50] sm:$0xff]
    %v4533 = vld [vmem:[#allocation13 + $0xc58] sm:$0xff]
    %v4534 = vld [vmem:[#allocation13 + $0xc60] sm:$0xff]
    %v4535 = vld [vmem:[#allocation13 + $0xc68] sm:$0xff]
    %v4536 = vld [vmem:[#allocation13 + $0xc70] sm:$0xff]
    %v4537 = vld [vmem:[#allocation13 + $0xc78] sm:$0xff]
    %v4538 = vld [vmem:[#allocation13 + $0xc80] sm:$0xff]
    %v4539 = vld [vmem:[#allocation13 + $0xc88] sm:$0xff]
    %v4540 = vld [vmem:[#allocation13 + $0xc90] sm:$0xff]
    %v4541 = vld [vmem:[#allocation13 + $0xc98] sm:$0xff]
    %v4542 = vld [vmem:[#allocation13 + $0xca0] sm:$0xff]
    %v4543 = vld [vmem:[#allocation13 + $0xca8] sm:$0xff]
    %v4544 = vld [vmem:[#allocation13 + $0xcb0] sm:$0xff]
    %v4545 = vld [vmem:[#allocation13 + $0xcb8] sm:$0xff]
    %v4546 = vld [vmem:[#allocation13 + $0xcc0] sm:$0xff]
    %v4547 = vld [vmem:[#allocation13 + $0xcc8] sm:$0xff]
    %v4548 = vld [vmem:[#allocation13 + $0xcd0] sm:$0xff]
    %v4549 = vld [vmem:[#allocation13 + $0xcd8] sm:$0xff]
    %v4550 = vld [vmem:[#allocation13 + $0xce0] sm:$0xff]
    %v4551 = vld [vmem:[#allocation13 + $0xce8] sm:$0xff]
    %v4552 = vld [vmem:[#allocation13 + $0xcf0] sm:$0xff]
    %v4553 = vld [vmem:[#allocation13 + $0xcf8] sm:$0xff]
    %v4554 = vld [vmem:[#allocation13 + $0xd00] sm:$0xff]
    %v4555 = vld [vmem:[#allocation13 + $0xd08] sm:$0xff]
    %v4556 = vld [vmem:[#allocation13 + $0xd10] sm:$0xff]
    %v4557 = vld [vmem:[#allocation13 + $0xd18] sm:$0xff]
    %v4558 = vld [vmem:[#allocation13 + $0xd20] sm:$0xff]
    %v4559 = vld [vmem:[#allocation13 + $0xd28] sm:$0xff]
    %v4560 = vld [vmem:[#allocation13 + $0xd30] sm:$0xff]
    %v4561 = vld [vmem:[#allocation13 + $0xd38] sm:$0xff]
    %v4562 = vld [vmem:[#allocation13 + $0xd40] sm:$0xff]
    %v4563 = vld [vmem:[#allocation13 + $0xd48] sm:$0xff]
    %v4564 = vld [vmem:[#allocation13 + $0xd50] sm:$0xff]
    %v4565 = vld [vmem:[#allocation13 + $0xd58] sm:$0xff]
    %v4566 = vld [vmem:[#allocation13 + $0xd60] sm:$0xff]
    %v4567 = vld [vmem:[#allocation13 + $0xd68] sm:$0xff]
    %v4568 = vld [vmem:[#allocation13 + $0xd70] sm:$0xff]
    %v4569 = vld [vmem:[#allocation13 + $0xd78] sm:$0xff]
    %v4570 = vld [vmem:[#allocation13 + $0xd80] sm:$0xff]
    %v4571 = vld [vmem:[#allocation13 + $0xd88] sm:$0xff]
    %v4572 = vld [vmem:[#allocation13 + $0xd90] sm:$0xff]
    %v4573 = vld [vmem:[#allocation13 + $0xd98] sm:$0xff]
    %v4574 = vld [vmem:[#allocation13 + $0xda0] sm:$0xff]
    %v4575 = vld [vmem:[#allocation13 + $0xda8] sm:$0xff]
    %v4576 = vld [vmem:[#allocation13 + $0xdb0] sm:$0xff]
    %v4577 = vld [vmem:[#allocation13 + $0xdb8] sm:$0xff]
    %v4578 = vld [vmem:[#allocation13 + $0xdc0] sm:$0xff]
    %v4579 = vld [vmem:[#allocation13 + $0xdc8] sm:$0xff]
    %v4580 = vld [vmem:[#allocation13 + $0xdd0] sm:$0xff]
    %v4581 = vld [vmem:[#allocation13 + $0xdd8] sm:$0xff]
    %v4582 = vld [vmem:[#allocation13 + $0xde0] sm:$0xff]
    %v4583 = vld [vmem:[#allocation13 + $0xde8] sm:$0xff]
    %v4584 = vld [vmem:[#allocation13 + $0xdf0] sm:$0xff]
    %v4585 = vld [vmem:[#allocation13 + $0xdf8] sm:$0xff]
    %v4586 = vld [vmem:[#allocation13 + $0xe00] sm:$0xff]
    %v4587 = vld [vmem:[#allocation13 + $0xe08] sm:$0xff]
    %v4588 = vld [vmem:[#allocation13 + $0xe10] sm:$0xff]
    %v4589 = vld [vmem:[#allocation13 + $0xe18] sm:$0xff]
    %v4590 = vld [vmem:[#allocation13 + $0xe20] sm:$0xff]
    %v4591 = vld [vmem:[#allocation13 + $0xe28] sm:$0xff]
    %v4592 = vld [vmem:[#allocation13 + $0xe30] sm:$0xff]
    %v4593 = vld [vmem:[#allocation13 + $0xe38] sm:$0xff]
    %v4594 = vld [vmem:[#allocation13 + $0xe40] sm:$0xff]
    %v4595 = vld [vmem:[#allocation13 + $0xe48] sm:$0xff]
    %v4596 = vld [vmem:[#allocation13 + $0xe50] sm:$0xff]
    %v4597 = vld [vmem:[#allocation13 + $0xe58] sm:$0xff]
    %v4598 = vld [vmem:[#allocation13 + $0xe60] sm:$0xff]
    %v4599 = vld [vmem:[#allocation13 + $0xe68] sm:$0xff]
    %v4600 = vld [vmem:[#allocation13 + $0xe70] sm:$0xff]
    %v4601 = vld [vmem:[#allocation13 + $0xe78] sm:$0xff]
    %v4602 = vld [vmem:[#allocation13 + $0xe80] sm:$0xff]
    %v4603 = vld [vmem:[#allocation13 + $0xe88] sm:$0xff]
    %v4604 = vld [vmem:[#allocation13 + $0xe90] sm:$0xff]
    %v4605 = vld [vmem:[#allocation13 + $0xe98] sm:$0xff]
    %v4606 = vld [vmem:[#allocation13 + $0xea0] sm:$0xff]
    %v4607 = vld [vmem:[#allocation13 + $0xea8] sm:$0xff]
    %v4608 = vld [vmem:[#allocation13 + $0xeb0] sm:$0xff]
    %v4609 = vld [vmem:[#allocation13 + $0xeb8] sm:$0xff]
    %v4610 = vld [vmem:[#allocation13 + $0xec0] sm:$0xff]
    %v4611 = vld [vmem:[#allocation13 + $0xec8] sm:$0xff]
    %v4612 = vld [vmem:[#allocation13 + $0xed0] sm:$0xff]
    %v4613 = vld [vmem:[#allocation13 + $0xed8] sm:$0xff]
    %v4614 = vld [vmem:[#allocation13 + $0xee0] sm:$0xff]
    %v4615 = vld [vmem:[#allocation13 + $0xee8] sm:$0xff]
    %v4616 = vld [vmem:[#allocation13 + $0xef0] sm:$0xff]
    %v4617 = vld [vmem:[#allocation13 + $0xef8] sm:$0xff]
    %v4618 = vld [vmem:[#allocation13 + $0xf00] sm:$0xff]
    %v4619 = vld [vmem:[#allocation13 + $0xf08] sm:$0xff]
    %v4620 = vld [vmem:[#allocation13 + $0xf10] sm:$0xff]
    %v4621 = vld [vmem:[#allocation13 + $0xf18] sm:$0xff]
    %v4622 = vld [vmem:[#allocation13 + $0xf20] sm:$0xff]
    %v4623 = vld [vmem:[#allocation13 + $0xf28] sm:$0xff]
    %v4624 = vld [vmem:[#allocation13 + $0xf30] sm:$0xff]
    %v4625 = vld [vmem:[#allocation13 + $0xf38] sm:$0xff]
    %v4626 = vld [vmem:[#allocation13 + $0xf40] sm:$0xff]
    %v4627 = vld [vmem:[#allocation13 + $0xf48] sm:$0xff]
    %v4628 = vld [vmem:[#allocation13 + $0xf50] sm:$0xff]
    %v4629 = vld [vmem:[#allocation13 + $0xf58] sm:$0xff]
    %v4630 = vld [vmem:[#allocation13 + $0xf60] sm:$0xff]
    %v4631 = vld [vmem:[#allocation13 + $0xf68] sm:$0xff]
    %v4632 = vld [vmem:[#allocation13 + $0xf70] sm:$0xff]
    %v4633 = vld [vmem:[#allocation13 + $0xf78] sm:$0xff]
    %v4634 = vld [vmem:[#allocation13 + $0xf80] sm:$0xff]
    %v4635 = vld [vmem:[#allocation13 + $0xf88] sm:$0xff]
    %v4636 = vld [vmem:[#allocation13 + $0xf90] sm:$0xff]
    %v4637 = vld [vmem:[#allocation13 + $0xf98] sm:$0xff]
    %v4638 = vld [vmem:[#allocation13 + $0xfa0] sm:$0xff]
    %v4639 = vld [vmem:[#allocation13 + $0xfa8] sm:$0xff]
    %v4640 = vld [vmem:[#allocation13 + $0xfb0] sm:$0xff]
    %v4641 = vld [vmem:[#allocation13 + $0xfb8] sm:$0xff]
    %v4642 = vld [vmem:[#allocation13 + $0xfc0] sm:$0xff]
    %v4643 = vld [vmem:[#allocation13 + $0xfc8] sm:$0xff]
    %v4644 = vld [vmem:[#allocation13 + $0xfd0] sm:$0xff]
    %v4645 = vld [vmem:[#allocation13 + $0xfd8] sm:$0xff]
    %v4646 = vld [vmem:[#allocation13 + $0xfe0] sm:$0xff]
    %v4647 = vld [vmem:[#allocation13 + $0xfe8] sm:$0xff]
    %v4648 = vld [vmem:[#allocation13 + $0xff0] sm:$0xff]
    %v4649 = vld [vmem:[#allocation13 + $0xff8] sm:$0xff]
    %v4650 = vld [vmem:[#allocation13 + $0x1000] sm:$0xff]
    %v4651 = vld [vmem:[#allocation13 + $0x1008] sm:$0xff]
    %v4652 = vld [vmem:[#allocation13 + $0x1010] sm:$0xff]
    %v4653 = vld [vmem:[#allocation13 + $0x1018] sm:$0xff]
    %v4654 = vld [vmem:[#allocation13 + $0x1020] sm:$0xff]
    %v4655 = vld [vmem:[#allocation13 + $0x1028] sm:$0xff]
    %v4656 = vld [vmem:[#allocation13 + $0x1030] sm:$0xff]
    %v4657 = vld [vmem:[#allocation13 + $0x1038] sm:$0xff]
    %v4658 = vld [vmem:[#allocation13 + $0x1040] sm:$0xff]
    %v4659 = vld [vmem:[#allocation13 + $0x1048] sm:$0xff]
    %v4660 = vld [vmem:[#allocation13 + $0x1050] sm:$0xff]
    %v4661 = vld [vmem:[#allocation13 + $0x1058] sm:$0xff]
    %v4662 = vld [vmem:[#allocation13 + $0x1060] sm:$0xff]
    %v4663 = vld [vmem:[#allocation13 + $0x1068] sm:$0xff]
    %v4664 = vld [vmem:[#allocation13 + $0x1070] sm:$0xff]
    %v4665 = vld [vmem:[#allocation13 + $0x1078] sm:$0xff]
    %v4666 = vld [vmem:[#allocation13 + $0x1080] sm:$0xff]
    %v4667 = vld [vmem:[#allocation13 + $0x1088] sm:$0xff]
    %v4668 = vld [vmem:[#allocation13 + $0x1090] sm:$0xff]
    %v4669 = vld [vmem:[#allocation13 + $0x1098] sm:$0xff]
    %v4670 = vld [vmem:[#allocation13 + $0x10a0] sm:$0xff]
    %v4671 = vld [vmem:[#allocation13 + $0x10a8] sm:$0xff]
    %v4672 = vld [vmem:[#allocation13 + $0x10b0] sm:$0xff]
    %v4673 = vld [vmem:[#allocation13 + $0x10b8] sm:$0xff]
    %v4674 = vld [vmem:[#allocation13 + $0x10c0] sm:$0xff]
    %v4675 = vld [vmem:[#allocation13 + $0x10c8] sm:$0xff]
    %v4676 = vld [vmem:[#allocation13 + $0x10d0] sm:$0xff]
    %v4677 = vld [vmem:[#allocation13 + $0x10d8] sm:$0xff]
    %v4678 = vld [vmem:[#allocation13 + $0x10e0] sm:$0xff]
    %v4679 = vld [vmem:[#allocation13 + $0x10e8] sm:$0xff]
    %v4680 = vld [vmem:[#allocation13 + $0x10f0] sm:$0xff]
    %v4681 = vld [vmem:[#allocation13 + $0x10f8] sm:$0xff]
    %v4682 = vld [vmem:[#allocation13 + $0x1100] sm:$0xff]
    %v4683 = vld [vmem:[#allocation13 + $0x1108] sm:$0xff]
    %v4684 = vld [vmem:[#allocation13 + $0x1110] sm:$0xff]
    %v4685 = vld [vmem:[#allocation13 + $0x1118] sm:$0xff]
    %v4686 = vld [vmem:[#allocation13 + $0x1120] sm:$0xff]
    %v4687 = vld [vmem:[#allocation13 + $0x1128] sm:$0xff]
    %v4688 = vld [vmem:[#allocation13 + $0x1130] sm:$0xff]
    %v4689 = vld [vmem:[#allocation13 + $0x1138] sm:$0xff]
    %v4690 = vld [vmem:[#allocation13 + $0x1140] sm:$0xff]
    %v4691 = vld [vmem:[#allocation13 + $0x1148] sm:$0xff]
    %v4692 = vld [vmem:[#allocation13 + $0x1150] sm:$0xff]
    %v4693 = vld [vmem:[#allocation13 + $0x1158] sm:$0xff]
    %v4694 = vld [vmem:[#allocation13 + $0x1160] sm:$0xff]
    %v4695 = vld [vmem:[#allocation13 + $0x1168] sm:$0xff]
    %v4696 = vld [vmem:[#allocation13 + $0x1170] sm:$0xff]
    %v4697 = vld [vmem:[#allocation13 + $0x1178] sm:$0xff]
    %v4698 = vld [vmem:[#allocation13 + $0x1180] sm:$0xff]
    %v4699 = vld [vmem:[#allocation13 + $0x1188] sm:$0xff]
    %v4700 = vld [vmem:[#allocation13 + $0x1190] sm:$0xff]
    %v4701 = vld [vmem:[#allocation13 + $0x1198] sm:$0xff]
    %v4702 = vld [vmem:[#allocation13 + $0x11a0] sm:$0xff]
    %v4703 = vld [vmem:[#allocation13 + $0x11a8] sm:$0xff]
    %v4704 = vld [vmem:[#allocation13 + $0x11b0] sm:$0xff]
    %v4705 = vld [vmem:[#allocation13 + $0x11b8] sm:$0xff]
    %v4706 = vld [vmem:[#allocation13 + $0x11c0] sm:$0xff]
    %v4707 = vld [vmem:[#allocation13 + $0x11c8] sm:$0xff]
    %v4708 = vld [vmem:[#allocation13 + $0x11d0] sm:$0xff]
    %v4709 = vld [vmem:[#allocation13 + $0x11d8] sm:$0xff]
    %v4710 = vld [vmem:[#allocation13 + $0x11e0] sm:$0xff]
    %v4711 = vld [vmem:[#allocation13 + $0x11e8] sm:$0xff]
    %v4712 = vld [vmem:[#allocation13 + $0x11f0] sm:$0xff]
    %v4713 = vld [vmem:[#allocation13 + $0x11f8] sm:$0xff]
    %v4714 = vld [vmem:[#allocation13 + $0x1200] sm:$0xff]
    %v4715 = vld [vmem:[#allocation13 + $0x1208] sm:$0xff]
    %v4716 = vld [vmem:[#allocation13 + $0x1210] sm:$0xff]
    %v4717 = vld [vmem:[#allocation13 + $0x1218] sm:$0xff]
    %v4718 = vld [vmem:[#allocation13 + $0x1220] sm:$0xff]
    %v4719 = vld [vmem:[#allocation13 + $0x1228] sm:$0xff]
    %v4720 = vld [vmem:[#allocation13 + $0x1230] sm:$0xff]
    %v4721 = vld [vmem:[#allocation13 + $0x1238] sm:$0xff]
    %v4722 = vld [vmem:[#allocation13 + $0x1240] sm:$0xff]
    %v4723 = vld [vmem:[#allocation13 + $0x1248] sm:$0xff]
    %v4724 = vld [vmem:[#allocation13 + $0x1250] sm:$0xff]
    %v4725 = vld [vmem:[#allocation13 + $0x1258] sm:$0xff]
    %v4726 = vld [vmem:[#allocation13 + $0x1260] sm:$0xff]
    %v4727 = vld [vmem:[#allocation13 + $0x1268] sm:$0xff]
    %v4728 = vld [vmem:[#allocation13 + $0x1270] sm:$0xff]
    %v4729 = vld [vmem:[#allocation13 + $0x1278] sm:$0xff]
    %v4730 = vld [vmem:[#allocation13 + $0x1280] sm:$0xff]
    %v4731 = vld [vmem:[#allocation13 + $0x1288] sm:$0xff]
    %v4732 = vld [vmem:[#allocation13 + $0x1290] sm:$0xff]
    %v4733 = vld [vmem:[#allocation13 + $0x1298] sm:$0xff]
    %v4734 = vld [vmem:[#allocation13 + $0x12a0] sm:$0xff]
    %v4735 = vld [vmem:[#allocation13 + $0x12a8] sm:$0xff]
    %v4736 = vld [vmem:[#allocation13 + $0x12b0] sm:$0xff]
    %v4737 = vld [vmem:[#allocation13 + $0x12b8] sm:$0xff]
    %v4738 = vld [vmem:[#allocation13 + $0x12c0] sm:$0xff]
    %v4739 = vld [vmem:[#allocation13 + $0x12c8] sm:$0xff]
    %v4740 = vld [vmem:[#allocation13 + $0x12d0] sm:$0xff]
    %v4741 = vld [vmem:[#allocation13 + $0x12d8] sm:$0xff]
    %v4742 = vld [vmem:[#allocation13 + $0x12e0] sm:$0xff]
    %v4743 = vld [vmem:[#allocation13 + $0x12e8] sm:$0xff]
    %v4744 = vld [vmem:[#allocation13 + $0x12f0] sm:$0xff]
    %v4745 = vld [vmem:[#allocation13 + $0x12f8] sm:$0xff]
    %v4746 = vld [vmem:[#allocation13 + $0x1300] sm:$0xff]
    %v4747 = vld [vmem:[#allocation13 + $0x1308] sm:$0xff]
    %v4748 = vld [vmem:[#allocation13 + $0x1310] sm:$0xff]
    %v4749 = vld [vmem:[#allocation13 + $0x1318] sm:$0xff]
    %v4750 = vld [vmem:[#allocation13 + $0x1320] sm:$0xff]
    %v4751 = vld [vmem:[#allocation13 + $0x1328] sm:$0xff]
    %v4752 = vld [vmem:[#allocation13 + $0x1330] sm:$0xff]
    %v4753 = vld [vmem:[#allocation13 + $0x1338] sm:$0xff]
    %v4754 = vld [vmem:[#allocation13 + $0x1340] sm:$0xff]
    %v4755 = vld [vmem:[#allocation13 + $0x1348] sm:$0xff]
    %v4756 = vld [vmem:[#allocation13 + $0x1350] sm:$0xff]
    %v4757 = vld [vmem:[#allocation13 + $0x1358] sm:$0xff]
    %v4758 = vld [vmem:[#allocation13 + $0x1360] sm:$0xff]
    %v4759 = vld [vmem:[#allocation13 + $0x1368] sm:$0xff]
    %v4760 = vld [vmem:[#allocation13 + $0x1370] sm:$0xff]
    %v4761 = vld [vmem:[#allocation13 + $0x1378] sm:$0xff]
    %v4762 = vld [vmem:[#allocation13 + $0x1380] sm:$0xff]
    %v4763 = vld [vmem:[#allocation13 + $0x1388] sm:$0xff]
    %v4764 = vld [vmem:[#allocation13 + $0x1390] sm:$0xff]
    %v4765 = vld [vmem:[#allocation13 + $0x1398] sm:$0xff]
    %v4766 = vld [vmem:[#allocation13 + $0x13a0] sm:$0xff]
    %v4767 = vld [vmem:[#allocation13 + $0x13a8] sm:$0xff]
    %v4768 = vld [vmem:[#allocation13 + $0x13b0] sm:$0xff]
    %v4769 = vld [vmem:[#allocation13 + $0x13b8] sm:$0xff]
    %v4770 = vld [vmem:[#allocation13 + $0x13c0] sm:$0xff]
    %v4771 = vld [vmem:[#allocation13 + $0x13c8] sm:$0xff]
    %v4772 = vld [vmem:[#allocation13 + $0x13d0] sm:$0xff]
    %v4773 = vld [vmem:[#allocation13 + $0x13d8] sm:$0xff]
    %v4774 = vld [vmem:[#allocation13 + $0x13e0] sm:$0xff]
    %v4775 = vld [vmem:[#allocation13 + $0x13e8] sm:$0xff]
    %v4776 = vld [vmem:[#allocation13 + $0x13f0] sm:$0xff]
    %v4777 = vld [vmem:[#allocation13 + $0x13f8] sm:$0xff]
    %v4778 = vld [vmem:[#allocation13 + $0x1400] sm:$0xff]
    %v4779 = vld [vmem:[#allocation13 + $0x1408] sm:$0xff]
    %v4780 = vld [vmem:[#allocation13 + $0x1410] sm:$0xff]
    %v4781 = vld [vmem:[#allocation13 + $0x1418] sm:$0xff]
    %v4782 = vld [vmem:[#allocation13 + $0x1420] sm:$0xff]
    %v4783 = vld [vmem:[#allocation13 + $0x1428] sm:$0xff]
    %v4784 = vld [vmem:[#allocation13 + $0x1430] sm:$0xff]
    %v4785 = vld [vmem:[#allocation13 + $0x1438] sm:$0xff]
    %v4786 = vld [vmem:[#allocation13 + $0x1440] sm:$0xff]
    %v4787 = vld [vmem:[#allocation13 + $0x1448] sm:$0xff]
    %v4788 = vld [vmem:[#allocation13 + $0x1450] sm:$0xff]
    %v4789 = vld [vmem:[#allocation13 + $0x1458] sm:$0xff]
    %v4790 = vld [vmem:[#allocation13 + $0x1460] sm:$0xff]
    %v4791 = vld [vmem:[#allocation13 + $0x1468] sm:$0xff]
    %v4792 = vld [vmem:[#allocation13 + $0x1470] sm:$0xff]
    %v4793 = vld [vmem:[#allocation13 + $0x1478] sm:$0xff]
    %v4794 = vld [vmem:[#allocation13 + $0x1480] sm:$0xff]
    %v4795 = vld [vmem:[#allocation13 + $0x1488] sm:$0xff]
    %v4796 = vld [vmem:[#allocation13 + $0x1490] sm:$0xff]
    %v4797 = vld [vmem:[#allocation13 + $0x1498] sm:$0xff]
    %v4798 = vld [vmem:[#allocation13 + $0x14a0] sm:$0xff]
    %v4799 = vld [vmem:[#allocation13 + $0x14a8] sm:$0xff]
    %v4800 = vld [vmem:[#allocation13 + $0x14b0] sm:$0xff]
    %v4801 = vld [vmem:[#allocation13 + $0x14b8] sm:$0xff]
    %v4802 = vld [vmem:[#allocation13 + $0x14c0] sm:$0xff]
    %v4803 = vld [vmem:[#allocation13 + $0x14c8] sm:$0xff]
    %v4804 = vld [vmem:[#allocation13 + $0x14d0] sm:$0xff]
    %v4805 = vld [vmem:[#allocation13 + $0x14d8] sm:$0xff]
    %v4806 = vld [vmem:[#allocation13 + $0x14e0] sm:$0xff]
    %v4807 = vld [vmem:[#allocation13 + $0x14e8] sm:$0xff]
    %v4808 = vld [vmem:[#allocation13 + $0x14f0] sm:$0xff]
    %v4809 = vld [vmem:[#allocation13 + $0x14f8] sm:$0xff]
    %v4810 = vld [vmem:[#allocation13 + $0x1500] sm:$0xff]
    %v4811 = vld [vmem:[#allocation13 + $0x1508] sm:$0xff]
    %v4812 = vld [vmem:[#allocation13 + $0x1510] sm:$0xff]
    %v4813 = vld [vmem:[#allocation13 + $0x1518] sm:$0xff]
    %v4814 = vld [vmem:[#allocation13 + $0x1520] sm:$0xff]
    %v4815 = vld [vmem:[#allocation13 + $0x1528] sm:$0xff]
    %v4816 = vld [vmem:[#allocation13 + $0x1530] sm:$0xff]
    %v4817 = vld [vmem:[#allocation13 + $0x1538] sm:$0xff]
    %v4818 = vld [vmem:[#allocation13 + $0x1540] sm:$0xff]
    %v4819 = vld [vmem:[#allocation13 + $0x1548] sm:$0xff]
    %v4820 = vld [vmem:[#allocation13 + $0x1550] sm:$0xff]
    %v4821 = vld [vmem:[#allocation13 + $0x1558] sm:$0xff]
    %v4822 = vld [vmem:[#allocation13 + $0x1560] sm:$0xff]
    %v4823 = vld [vmem:[#allocation13 + $0x1568] sm:$0xff]
    %v4824 = vld [vmem:[#allocation13 + $0x1570] sm:$0xff]
    %v4825 = vld [vmem:[#allocation13 + $0x1578] sm:$0xff]
    %v4826 = vld [vmem:[#allocation13 + $0x1580] sm:$0xff]
    %v4827 = vld [vmem:[#allocation13 + $0x1588] sm:$0xff]
    %v4828 = vld [vmem:[#allocation13 + $0x1590] sm:$0xff]
    %v4829 = vld [vmem:[#allocation13 + $0x1598] sm:$0xff]
    %v4830 = vld [vmem:[#allocation13 + $0x15a0] sm:$0xff]
    %v4831 = vld [vmem:[#allocation13 + $0x15a8] sm:$0xff]
    %v4832 = vld [vmem:[#allocation13 + $0x15b0] sm:$0xff]
    %v4833 = vld [vmem:[#allocation13 + $0x15b8] sm:$0xff]
    %v4834 = vld [vmem:[#allocation13 + $0x15c0] sm:$0xff]
    %v4835 = vld [vmem:[#allocation13 + $0x15c8] sm:$0xff]
    %v4836 = vld [vmem:[#allocation13 + $0x15d0] sm:$0xff]
    %v4837 = vld [vmem:[#allocation13 + $0x15d8] sm:$0xff]
    %v4838 = vld [vmem:[#allocation13 + $0x15e0] sm:$0xff]
    %v4839 = vld [vmem:[#allocation13 + $0x15e8] sm:$0xff]
    %v4840 = vld [vmem:[#allocation13 + $0x15f0] sm:$0xff]
    %v4841 = vld [vmem:[#allocation13 + $0x15f8] sm:$0xff]
    %v4842 = vld [vmem:[#allocation13 + $0x1600] sm:$0xff]
    %v4843 = vld [vmem:[#allocation13 + $0x1608] sm:$0xff]
    %v4844 = vld [vmem:[#allocation13 + $0x1610] sm:$0xff]
    %v4845 = vld [vmem:[#allocation13 + $0x1618] sm:$0xff]
    %v4846 = vld [vmem:[#allocation13 + $0x1620] sm:$0xff]
    %v4847 = vld [vmem:[#allocation13 + $0x1628] sm:$0xff]
    %v4848 = vld [vmem:[#allocation13 + $0x1630] sm:$0xff]
    %v4849 = vld [vmem:[#allocation13 + $0x1638] sm:$0xff]
    %v4850 = vld [vmem:[#allocation13 + $0x1640] sm:$0xff]
    %v4851 = vld [vmem:[#allocation13 + $0x1648] sm:$0xff]
    %v4852 = vld [vmem:[#allocation13 + $0x1650] sm:$0xff]
    %v4853 = vld [vmem:[#allocation13 + $0x1658] sm:$0xff]
    %v4854 = vld [vmem:[#allocation13 + $0x1660] sm:$0xff]
    %v4855 = vld [vmem:[#allocation13 + $0x1668] sm:$0xff]
    %v4856 = vld [vmem:[#allocation13 + $0x1670] sm:$0xff]
    %v4857 = vld [vmem:[#allocation13 + $0x1678] sm:$0xff]
    %v4858 = vld [vmem:[#allocation13 + $0x1680] sm:$0xff]
    %v4859 = vld [vmem:[#allocation13 + $0x1688] sm:$0xff]
    %v4860 = vld [vmem:[#allocation13 + $0x1690] sm:$0xff]
    %v4861 = vld [vmem:[#allocation13 + $0x1698] sm:$0xff]
    %v4862 = vld [vmem:[#allocation13 + $0x16a0] sm:$0xff]
    %v4863 = vld [vmem:[#allocation13 + $0x16a8] sm:$0xff]
    %v4864 = vld [vmem:[#allocation13 + $0x16b0] sm:$0xff]
    %v4865 = vld [vmem:[#allocation13 + $0x16b8] sm:$0xff]
    %v4866 = vld [vmem:[#allocation13 + $0x16c0] sm:$0xff]
    %v4867 = vld [vmem:[#allocation13 + $0x16c8] sm:$0xff]
    %v4868 = vld [vmem:[#allocation13 + $0x16d0] sm:$0xff]
    %v4869 = vld [vmem:[#allocation13 + $0x16d8] sm:$0xff]
    %v4870 = vld [vmem:[#allocation13 + $0x16e0] sm:$0xff]
    %v4871 = vld [vmem:[#allocation13 + $0x16e8] sm:$0xff]
    %v4872 = vld [vmem:[#allocation13 + $0x16f0] sm:$0xff]
    %v4873 = vld [vmem:[#allocation13 + $0x16f8] sm:$0xff]
    %v4874 = vld [vmem:[#allocation13 + $0x1700] sm:$0xff]
    %v4875 = vld [vmem:[#allocation13 + $0x1708] sm:$0xff]
    %v4876 = vld [vmem:[#allocation13 + $0x1710] sm:$0xff]
    %v4877 = vld [vmem:[#allocation13 + $0x1718] sm:$0xff]
    %v4878 = vld [vmem:[#allocation13 + $0x1720] sm:$0xff]
    %v4879 = vld [vmem:[#allocation13 + $0x1728] sm:$0xff]
    %v4880 = vld [vmem:[#allocation13 + $0x1730] sm:$0xff]
    %v4881 = vld [vmem:[#allocation13 + $0x1738] sm:$0xff]
    %v4882 = vld [vmem:[#allocation13 + $0x1740] sm:$0xff]
    %v4883 = vld [vmem:[#allocation13 + $0x1748] sm:$0xff]
    %v4884 = vld [vmem:[#allocation13 + $0x1750] sm:$0xff]
    %v4885 = vld [vmem:[#allocation13 + $0x1758] sm:$0xff]
    %v4886 = vld [vmem:[#allocation13 + $0x1760] sm:$0xff]
    %v4887 = vld [vmem:[#allocation13 + $0x1768] sm:$0xff]
    %v4888 = vld [vmem:[#allocation13 + $0x1770] sm:$0xff]
    %v4889 = vld [vmem:[#allocation13 + $0x1778] sm:$0xff]
    %v4890 = vld [vmem:[#allocation13 + $0x1780] sm:$0xff]
    %v4891 = vld [vmem:[#allocation13 + $0x1788] sm:$0xff]
    %v4892 = vld [vmem:[#allocation13 + $0x1790] sm:$0xff]
    %v4893 = vld [vmem:[#allocation13 + $0x1798] sm:$0xff]
    %v4894 = vld [vmem:[#allocation13 + $0x17a0] sm:$0xff]
    %v4895 = vld [vmem:[#allocation13 + $0x17a8] sm:$0xff]
    %v4896 = vld [vmem:[#allocation13 + $0x17b0] sm:$0xff]
    %v4897 = vld [vmem:[#allocation13 + $0x17b8] sm:$0xff]
    %v4898 = vld [vmem:[#allocation13 + $0x17c0] sm:$0xff]
    %v4899 = vld [vmem:[#allocation13 + $0x17c8] sm:$0xff]
    %v4900 = vld [vmem:[#allocation13 + $0x17d0] sm:$0xff]
    %v4901 = vld [vmem:[#allocation13 + $0x17d8] sm:$0xff]
    %v4902 = vld [vmem:[#allocation13 + $0x17e0] sm:$0xff]
    %v4903 = vld [vmem:[#allocation13 + $0x17e8] sm:$0xff]
    %v4904 = vld [vmem:[#allocation13 + $0x17f0] sm:$0xff]
    %v4905 = vld [vmem:[#allocation13 + $0x17f8] sm:$0xff]
    %v4906 = vld [vmem:[#allocation13 + $0x1800] sm:$0xff]
    %v4907 = vld [vmem:[#allocation13 + $0x1808] sm:$0xff]
    %v4908 = vld [vmem:[#allocation13 + $0x1810] sm:$0xff]
    %v4909 = vld [vmem:[#allocation13 + $0x1818] sm:$0xff]
    %v4910 = vld [vmem:[#allocation13 + $0x1820] sm:$0xff]
    %v4911 = vld [vmem:[#allocation13 + $0x1828] sm:$0xff]
    %v4912 = vld [vmem:[#allocation13 + $0x1830] sm:$0xff]
    %v4913 = vld [vmem:[#allocation13 + $0x1838] sm:$0xff]
    %v4914 = vld [vmem:[#allocation13 + $0x1840] sm:$0xff]
    %v4915 = vld [vmem:[#allocation13 + $0x1848] sm:$0xff]
    %v4916 = vld [vmem:[#allocation13 + $0x1850] sm:$0xff]
    %v4917 = vld [vmem:[#allocation13 + $0x1858] sm:$0xff]
    %v4918 = vld [vmem:[#allocation13 + $0x1860] sm:$0xff]
    %v4919 = vld [vmem:[#allocation13 + $0x1868] sm:$0xff]
    %v4920 = vld [vmem:[#allocation13 + $0x1870] sm:$0xff]
    %v4921 = vld [vmem:[#allocation13 + $0x1878] sm:$0xff]
    %v4922 = vld [vmem:[#allocation13 + $0x1880] sm:$0xff]
    %v4923 = vld [vmem:[#allocation13 + $0x1888] sm:$0xff]
    %v4924 = vld [vmem:[#allocation13 + $0x1890] sm:$0xff]
    %v4925 = vld [vmem:[#allocation13 + $0x1898] sm:$0xff]
    %v4926 = vld [vmem:[#allocation13 + $0x18a0] sm:$0xff]
    %v4927 = vld [vmem:[#allocation13 + $0x18a8] sm:$0xff]
    %v4928 = vld [vmem:[#allocation13 + $0x18b0] sm:$0xff]
    %v4929 = vld [vmem:[#allocation13 + $0x18b8] sm:$0xff]
    %v4930 = vld [vmem:[#allocation13 + $0x18c0] sm:$0xff]
    %v4931 = vld [vmem:[#allocation13 + $0x18c8] sm:$0xff]
    %v4932 = vld [vmem:[#allocation13 + $0x18d0] sm:$0xff]
    %v4933 = vld [vmem:[#allocation13 + $0x18d8] sm:$0xff]
    %v4934 = vld [vmem:[#allocation13 + $0x18e0] sm:$0xff]
    %v4935 = vld [vmem:[#allocation13 + $0x18e8] sm:$0xff]
    %v4936 = vld [vmem:[#allocation13 + $0x18f0] sm:$0xff]
    %v4937 = vld [vmem:[#allocation13 + $0x18f8] sm:$0xff]
    %v4938 = vld [vmem:[#allocation13 + $0x1900] sm:$0xff]
    %v4939 = vld [vmem:[#allocation13 + $0x1908] sm:$0xff]
    %v4940 = vld [vmem:[#allocation13 + $0x1910] sm:$0xff]
    %v4941 = vld [vmem:[#allocation13 + $0x1918] sm:$0xff]
    %v4942 = vld [vmem:[#allocation13 + $0x1920] sm:$0xff]
    %v4943 = vld [vmem:[#allocation13 + $0x1928] sm:$0xff]
    %v4944 = vld [vmem:[#allocation13 + $0x1930] sm:$0xff]
    %v4945 = vld [vmem:[#allocation13 + $0x1938] sm:$0xff]
    %v4946 = vld [vmem:[#allocation13 + $0x1940] sm:$0xff]
    %v4947 = vld [vmem:[#allocation13 + $0x1948] sm:$0xff]
    %v4948 = vld [vmem:[#allocation13 + $0x1950] sm:$0xff]
    %v4949 = vld [vmem:[#allocation13 + $0x1958] sm:$0xff]
    %v4950 = vld [vmem:[#allocation13 + $0x1960] sm:$0xff]
    %v4951 = vld [vmem:[#allocation13 + $0x1968] sm:$0xff]
    %v4952 = vld [vmem:[#allocation13 + $0x1970] sm:$0xff]
    %v4953 = vld [vmem:[#allocation13 + $0x1978] sm:$0xff]
    %v4954 = vld [vmem:[#allocation13 + $0x1980] sm:$0xff]
    %v4955 = vld [vmem:[#allocation13 + $0x1988] sm:$0xff]
    %v4956 = vld [vmem:[#allocation13 + $0x1990] sm:$0xff]
    %v4957 = vld [vmem:[#allocation13 + $0x1998] sm:$0xff]
    %v4958 = vld [vmem:[#allocation13 + $0x19a0] sm:$0xff]
    %v4959 = vld [vmem:[#allocation13 + $0x19a8] sm:$0xff]
    %v4960 = vld [vmem:[#allocation13 + $0x19b0] sm:$0xff]
    %v4961 = vld [vmem:[#allocation13 + $0x19b8] sm:$0xff]
    %v4962 = vld [vmem:[#allocation13 + $0x19c0] sm:$0xff]
    %v4963 = vld [vmem:[#allocation13 + $0x19c8] sm:$0xff]
    %v4964 = vld [vmem:[#allocation13 + $0x19d0] sm:$0xff]
    %v4965 = vld [vmem:[#allocation13 + $0x19d8] sm:$0xff]
    %v4966 = vld [vmem:[#allocation13 + $0x19e0] sm:$0xff]
    %v4967 = vld [vmem:[#allocation13 + $0x19e8] sm:$0xff]
    %v4968 = vld [vmem:[#allocation13 + $0x19f0] sm:$0xff]
    %v4969 = vld [vmem:[#allocation13 + $0x19f8] sm:$0xff]
    %v4970 = vld [vmem:[#allocation13 + $0x1a00] sm:$0xff]
    %v4971 = vld [vmem:[#allocation13 + $0x1a08] sm:$0xff]
    %v4972 = vld [vmem:[#allocation13 + $0x1a10] sm:$0xff]
    %v4973 = vld [vmem:[#allocation13 + $0x1a18] sm:$0xff]
    %v4974 = vld [vmem:[#allocation13 + $0x1a20] sm:$0xff]
    %v4975 = vld [vmem:[#allocation13 + $0x1a28] sm:$0xff]
    %v4976 = vld [vmem:[#allocation13 + $0x1a30] sm:$0xff]
    %v4977 = vld [vmem:[#allocation13 + $0x1a38] sm:$0xff]
    %v4978 = vld [vmem:[#allocation13 + $0x1a40] sm:$0xff]
    %v4979 = vld [vmem:[#allocation13 + $0x1a48] sm:$0xff]
    %v4980 = vld [vmem:[#allocation13 + $0x1a50] sm:$0xff]
    %v4981 = vld [vmem:[#allocation13 + $0x1a58] sm:$0xff]
    %v4982 = vld [vmem:[#allocation13 + $0x1a60] sm:$0xff]
    %v4983 = vld [vmem:[#allocation13 + $0x1a68] sm:$0xff]
    %v4984 = vld [vmem:[#allocation13 + $0x1a70] sm:$0xff]
    %v4985 = vld [vmem:[#allocation13 + $0x1a78] sm:$0xff]
    %v4986 = vld [vmem:[#allocation13 + $0x1a80] sm:$0xff]
    %v4987 = vld [vmem:[#allocation13 + $0x1a88] sm:$0xff]
    %v4988 = vld [vmem:[#allocation13 + $0x1a90] sm:$0xff]
    %v4989 = vld [vmem:[#allocation13 + $0x1a98] sm:$0xff]
    %v4990 = vld [vmem:[#allocation13 + $0x1aa0] sm:$0xff]
    %v4991 = vld [vmem:[#allocation13 + $0x1aa8] sm:$0xff]
    %v4992 = vld [vmem:[#allocation13 + $0x1ab0] sm:$0xff]
    %v4993 = vld [vmem:[#allocation13 + $0x1ab8] sm:$0xff]
    %v4994 = vld [vmem:[#allocation13 + $0x1ac0] sm:$0xff]
    %v4995 = vld [vmem:[#allocation13 + $0x1ac8] sm:$0xff]
    %v4996 = vld [vmem:[#allocation13 + $0x1ad0] sm:$0xff]
    %v4997 = vld [vmem:[#allocation13 + $0x1ad8] sm:$0xff]
    %v4998 = vld [vmem:[#allocation13 + $0x1ae0] sm:$0xff]
    %v4999 = vld [vmem:[#allocation13 + $0x1ae8] sm:$0xff]
    %v5000 = vld [vmem:[#allocation13 + $0x1af0] sm:$0xff]
    %v5001 = vld [vmem:[#allocation13 + $0x1af8] sm:$0xff]
    %v5002 = vld [vmem:[#allocation13 + $0x1b00] sm:$0xff]
    %v5003 = vld [vmem:[#allocation13 + $0x1b08] sm:$0xff]
    %v5004 = vld [vmem:[#allocation13 + $0x1b10] sm:$0xff]
    %v5005 = vld [vmem:[#allocation13 + $0x1b18] sm:$0xff]
    %v5006 = vld [vmem:[#allocation13 + $0x1b20] sm:$0xff]
    %v5007 = vld [vmem:[#allocation13 + $0x1b28] sm:$0xff]
    %v5008 = vld [vmem:[#allocation13 + $0x1b30] sm:$0xff]
    %v5009 = vld [vmem:[#allocation13 + $0x1b38] sm:$0xff]
    %v5010 = vld [vmem:[#allocation13 + $0x1b40] sm:$0xff]
    %v5011 = vld [vmem:[#allocation13 + $0x1b48] sm:$0xff]
    %v5012 = vld [vmem:[#allocation13 + $0x1b50] sm:$0xff]
    %v5013 = vld [vmem:[#allocation13 + $0x1b58] sm:$0xff]
    %v5014 = vld [vmem:[#allocation13 + $0x1b60] sm:$0xff]
    %v5015 = vld [vmem:[#allocation13 + $0x1b68] sm:$0xff]
    %v5016 = vld [vmem:[#allocation13 + $0x1b70] sm:$0xff]
    %v5017 = vld [vmem:[#allocation13 + $0x1b78] sm:$0xff]
    %v5018 = vld [vmem:[#allocation13 + $0x1b80] sm:$0xff]
    %v5019 = vld [vmem:[#allocation13 + $0x1b88] sm:$0xff]
    %v5020 = vld [vmem:[#allocation13 + $0x1b90] sm:$0xff]
    %v5021 = vld [vmem:[#allocation13 + $0x1b98] sm:$0xff]
    %v5022 = vld [vmem:[#allocation13 + $0x1ba0] sm:$0xff]
    %v5023 = vld [vmem:[#allocation13 + $0x1ba8] sm:$0xff]
    %v5024 = vld [vmem:[#allocation13 + $0x1bb0] sm:$0xff]
    %v5025 = vld [vmem:[#allocation13 + $0x1bb8] sm:$0xff]
    %v5026 = vld [vmem:[#allocation13 + $0x1bc0] sm:$0xff]
    %v5027 = vld [vmem:[#allocation13 + $0x1bc8] sm:$0xff]
    %v5028 = vld [vmem:[#allocation13 + $0x1bd0] sm:$0xff]
    %v5029 = vld [vmem:[#allocation13 + $0x1bd8] sm:$0xff]
    %v5030 = vld [vmem:[#allocation13 + $0x1be0] sm:$0xff]
    %v5031 = vld [vmem:[#allocation13 + $0x1be8] sm:$0xff]
    %v5032 = vld [vmem:[#allocation13 + $0x1bf0] sm:$0xff]
    %v5033 = vld [vmem:[#allocation13 + $0x1bf8] sm:$0xff]
    %v5034 = vld [vmem:[#allocation13 + $0x1c00] sm:$0xff]
    %v5035 = vld [vmem:[#allocation13 + $0x1c08] sm:$0xff]
    %v5036 = vld [vmem:[#allocation13 + $0x1c10] sm:$0xff]
    %v5037 = vld [vmem:[#allocation13 + $0x1c18] sm:$0xff]
    %v5038 = vld [vmem:[#allocation13 + $0x1c20] sm:$0xff]
    %v5039 = vld [vmem:[#allocation13 + $0x1c28] sm:$0xff]
    %v5040 = vld [vmem:[#allocation13 + $0x1c30] sm:$0xff]
    %v5041 = vld [vmem:[#allocation13 + $0x1c38] sm:$0xff]
    %v5042 = vld [vmem:[#allocation13 + $0x1c40] sm:$0xff]
    %v5043 = vld [vmem:[#allocation13 + $0x1c48] sm:$0xff]
    %v5044 = vld [vmem:[#allocation13 + $0x1c50] sm:$0xff]
    %v5045 = vld [vmem:[#allocation13 + $0x1c58] sm:$0xff]
    %v5046 = vld [vmem:[#allocation13 + $0x1c60] sm:$0xff]
    %v5047 = vld [vmem:[#allocation13 + $0x1c68] sm:$0xff]
    %v5048 = vld [vmem:[#allocation13 + $0x1c70] sm:$0xff]
    %v5049 = vld [vmem:[#allocation13 + $0x1c78] sm:$0xff]
    %v5050 = vld [vmem:[#allocation13 + $0x1c80] sm:$0xff]
    %v5051 = vld [vmem:[#allocation13 + $0x1c88] sm:$0xff]
    %v5052 = vld [vmem:[#allocation13 + $0x1c90] sm:$0xff]
    %v5053 = vld [vmem:[#allocation13 + $0x1c98] sm:$0xff]
    %v5054 = vld [vmem:[#allocation13 + $0x1ca0] sm:$0xff]
    %v5055 = vld [vmem:[#allocation13 + $0x1ca8] sm:$0xff]
    %v5056 = vld [vmem:[#allocation13 + $0x1cb0] sm:$0xff]
    %v5057 = vld [vmem:[#allocation13 + $0x1cb8] sm:$0xff]
    %v5058 = vld [vmem:[#allocation13 + $0x1cc0] sm:$0xff]
    %v5059 = vld [vmem:[#allocation13 + $0x1cc8] sm:$0xff]
    %v5060 = vld [vmem:[#allocation13 + $0x1cd0] sm:$0xff]
    %v5061 = vld [vmem:[#allocation13 + $0x1cd8] sm:$0xff]
    %v5062 = vld [vmem:[#allocation13 + $0x1ce0] sm:$0xff]
    %v5063 = vld [vmem:[#allocation13 + $0x1ce8] sm:$0xff]
    %v5064 = vld [vmem:[#allocation13 + $0x1cf0] sm:$0xff]
    %v5065 = vld [vmem:[#allocation13 + $0x1cf8] sm:$0xff]
    %v5066 = vld [vmem:[#allocation13 + $0x1d00] sm:$0xff]
    %v5067 = vld [vmem:[#allocation13 + $0x1d08] sm:$0xff]
    %v5068 = vld [vmem:[#allocation13 + $0x1d10] sm:$0xff]
    %v5069 = vld [vmem:[#allocation13 + $0x1d18] sm:$0xff]
    %v5070 = vld [vmem:[#allocation13 + $0x1d20] sm:$0xff]
    %v5071 = vld [vmem:[#allocation13 + $0x1d28] sm:$0xff]
    %v5072 = vld [vmem:[#allocation13 + $0x1d30] sm:$0xff]
    %v5073 = vld [vmem:[#allocation13 + $0x1d38] sm:$0xff]
    %v5074 = vld [vmem:[#allocation13 + $0x1d40] sm:$0xff]
    %v5075 = vld [vmem:[#allocation13 + $0x1d48] sm:$0xff]
    %v5076 = vld [vmem:[#allocation13 + $0x1d50] sm:$0xff]
    %v5077 = vld [vmem:[#allocation13 + $0x1d58] sm:$0xff]
    %v5078 = vld [vmem:[#allocation13 + $0x1d60] sm:$0xff]
    %v5079 = vld [vmem:[#allocation13 + $0x1d68] sm:$0xff]
    %v5080 = vld [vmem:[#allocation13 + $0x1d70] sm:$0xff]
    %v5081 = vld [vmem:[#allocation13 + $0x1d78] sm:$0xff]
    %v5082 = vld [vmem:[#allocation13 + $0x1d80] sm:$0xff]
    %v5083 = vld [vmem:[#allocation13 + $0x1d88] sm:$0xff]
    %v5084 = vld [vmem:[#allocation13 + $0x1d90] sm:$0xff]
    %v5085 = vld [vmem:[#allocation13 + $0x1d98] sm:$0xff]
    %v5086 = vld [vmem:[#allocation13 + $0x1da0] sm:$0xff]
    %v5087 = vld [vmem:[#allocation13 + $0x1da8] sm:$0xff]
    %v5088 = vld [vmem:[#allocation13 + $0x1db0] sm:$0xff]
    %v5089 = vld [vmem:[#allocation13 + $0x1db8] sm:$0xff]
    %v5090 = vld [vmem:[#allocation13 + $0x1dc0] sm:$0xff]
    %v5091 = vld [vmem:[#allocation13 + $0x1dc8] sm:$0xff]
    %v5092 = vld [vmem:[#allocation13 + $0x1dd0] sm:$0xff]
    %v5093 = vld [vmem:[#allocation13 + $0x1dd8] sm:$0xff]
    %v5094 = vld [vmem:[#allocation13 + $0x1de0] sm:$0xff]
    %v5095 = vld [vmem:[#allocation13 + $0x1de8] sm:$0xff]
    %v5096 = vld [vmem:[#allocation13 + $0x1df0] sm:$0xff]
    %v5097 = vld [vmem:[#allocation13 + $0x1df8] sm:$0xff]
    %v5098 = vld [vmem:[#allocation13 + $0x1e00] sm:$0xff]
    %v5099 = vld [vmem:[#allocation13 + $0x1e08] sm:$0xff]
    %v5100 = vld [vmem:[#allocation13 + $0x1e10] sm:$0xff]
    %v5101 = vld [vmem:[#allocation13 + $0x1e18] sm:$0xff]
    %v5102 = vld [vmem:[#allocation13 + $0x1e20] sm:$0xff]
    %v5103 = vld [vmem:[#allocation13 + $0x1e28] sm:$0xff]
    %v5104 = vld [vmem:[#allocation13 + $0x1e30] sm:$0xff]
    %v5105 = vld [vmem:[#allocation13 + $0x1e38] sm:$0xff]
    %v5106 = vld [vmem:[#allocation13 + $0x1e40] sm:$0xff]
    %v5107 = vld [vmem:[#allocation13 + $0x1e48] sm:$0xff]
    %v5108 = vld [vmem:[#allocation13 + $0x1e50] sm:$0xff]
    %v5109 = vld [vmem:[#allocation13 + $0x1e58] sm:$0xff]
    %v5110 = vld [vmem:[#allocation13 + $0x1e60] sm:$0xff]
    %v5111 = vld [vmem:[#allocation13 + $0x1e68] sm:$0xff]
    %v5112 = vld [vmem:[#allocation13 + $0x1e70] sm:$0xff]
    %v5113 = vld [vmem:[#allocation13 + $0x1e78] sm:$0xff]
    %v5114 = vld [vmem:[#allocation13 + $0x1e80] sm:$0xff]
    %v5115 = vld [vmem:[#allocation13 + $0x1e88] sm:$0xff]
    %v5116 = vld [vmem:[#allocation13 + $0x1e90] sm:$0xff]
    %v5117 = vld [vmem:[#allocation13 + $0x1e98] sm:$0xff]
    %v5118 = vld [vmem:[#allocation13 + $0x1ea0] sm:$0xff]
    %v5119 = vld [vmem:[#allocation13 + $0x1ea8] sm:$0xff]
    %v5120 = vld [vmem:[#allocation13 + $0x1eb0] sm:$0xff]
    %v5121 = vld [vmem:[#allocation13 + $0x1eb8] sm:$0xff]
    %v5122 = vld [vmem:[#allocation13 + $0x1ec0] sm:$0xff]
    %v5123 = vld [vmem:[#allocation13 + $0x1ec8] sm:$0xff]
    %v5124 = vld [vmem:[#allocation13 + $0x1ed0] sm:$0xff]
    %v5125 = vld [vmem:[#allocation13 + $0x1ed8] sm:$0xff]
    %v5126 = vld [vmem:[#allocation13 + $0x1ee0] sm:$0xff]
    %v5127 = vld [vmem:[#allocation13 + $0x1ee8] sm:$0xff]
    %v5128 = vld [vmem:[#allocation13 + $0x1ef0] sm:$0xff]
    %v5129 = vld [vmem:[#allocation13 + $0x1ef8] sm:$0xff]
    %v5130 = vld [vmem:[#allocation13 + $0x1f00] sm:$0xff]
    %v5131 = vld [vmem:[#allocation13 + $0x1f08] sm:$0xff]
    %v5132 = vld [vmem:[#allocation13 + $0x1f10] sm:$0xff]
    %v5133 = vld [vmem:[#allocation13 + $0x1f18] sm:$0xff]
    %v5134 = vld [vmem:[#allocation13 + $0x1f20] sm:$0xff]
    %v5135 = vld [vmem:[#allocation13 + $0x1f28] sm:$0xff]
    %v5136 = vld [vmem:[#allocation13 + $0x1f30] sm:$0xff]
    %v5137 = vld [vmem:[#allocation13 + $0x1f38] sm:$0xff]
    %v5138 = vld [vmem:[#allocation13 + $0x1f40] sm:$0xff]
    %v5139 = vld [vmem:[#allocation13 + $0x1f48] sm:$0xff]
    %v5140 = vld [vmem:[#allocation13 + $0x1f50] sm:$0xff]
    %v5141 = vld [vmem:[#allocation13 + $0x1f58] sm:$0xff]
    %v5142 = vld [vmem:[#allocation13 + $0x1f60] sm:$0xff]
    %v5143 = vld [vmem:[#allocation13 + $0x1f68] sm:$0xff]
    %v5144 = vld [vmem:[#allocation13 + $0x1f70] sm:$0xff]
    %v5145 = vld [vmem:[#allocation13 + $0x1f78] sm:$0xff]
    %v5146 = vld [vmem:[#allocation13 + $0x1f80] sm:$0xff]
    %v5147 = vld [vmem:[#allocation13 + $0x1f88] sm:$0xff]
    %v5148 = vld [vmem:[#allocation13 + $0x1f90] sm:$0xff]
    %v5149 = vld [vmem:[#allocation13 + $0x1f98] sm:$0xff]
    %v5150 = vld [vmem:[#allocation13 + $0x1fa0] sm:$0xff]
    %v5151 = vld [vmem:[#allocation13 + $0x1fa8] sm:$0xff]
    %v5152 = vld [vmem:[#allocation13 + $0x1fb0] sm:$0xff]
    %v5153 = vld [vmem:[#allocation13 + $0x1fb8] sm:$0xff]
    %v5154 = vld [vmem:[#allocation13 + $0x1fc0] sm:$0xff]
    %v5155 = vld [vmem:[#allocation13 + $0x1fc8] sm:$0xff]
    %v5156 = vld [vmem:[#allocation13 + $0x1fd0] sm:$0xff]
    %v5157 = vld [vmem:[#allocation13 + $0x1fd8] sm:$0xff]
    %v5158 = vld [vmem:[#allocation13 + $0x1fe0] sm:$0xff]
    %v5159 = vld [vmem:[#allocation13 + $0x1fe8] sm:$0xff]
    %v5160 = vld [vmem:[#allocation13 + $0x1ff0] sm:$0xff]
    %v5161 = vld [vmem:[#allocation13 + $0x1ff8] sm:$0xff]
    %v5162 = vld [vmem:[#allocation14] sm:$0xff]
    %v5163 = vld [vmem:[#allocation14 + $0x8] sm:$0xff]
    %v5166 = vlaneseq
    %v5167 = vshrl.u32 %v5166, 7
    %v5168 = vsub.s32 0, %v5167
    %v5169 = vrot.slane %v5162, %v5168
    %v5170 = vlaneseq
    %v5171 = vshrl.u32 %v5170, 7
    %v5172 = vsub.s32 1, %v5171
    %v5173 = vrot.slane %v5162, %v5172
    %v5174 = vlaneseq
    %v5175 = vshrl.u32 %v5174, 7
    %v5176 = vsub.s32 2, %v5175
    %v5177 = vrot.slane %v5162, %v5176
    %v5178 = vlaneseq
    %v5179 = vshrl.u32 %v5178, 7
    %v5180 = vsub.s32 3, %v5179
    %v5181 = vrot.slane %v5162, %v5180
    %v5182 = vlaneseq
    %v5183 = vshrl.u32 %v5182, 7
    %v5184 = vsub.s32 4, %v5183
    %v5185 = vrot.slane %v5162, %v5184
    %v5186 = vlaneseq
    %v5187 = vshrl.u32 %v5186, 7
    %v5188 = vsub.s32 5, %v5187
    %v5189 = vrot.slane %v5162, %v5188
    %v5190 = vlaneseq
    %v5191 = vshrl.u32 %v5190, 7
    %v5192 = vsub.s32 6, %v5191
    %v5193 = vrot.slane %v5162, %v5192
    %v5194 = vlaneseq
    %v5195 = vshrl.u32 %v5194, 7
    %v5196 = vsub.s32 7, %v5195
    %v5197 = vrot.slane %v5162, %v5196
    %v5198 = vlaneseq
    %v5199 = vshrl.u32 %v5198, 7
    %v5200 = vsub.s32 0, %v5199
    %v5201 = vrot.slane %v5163, %v5200
    %v5202 = vlaneseq
    %v5203 = vshrl.u32 %v5202, 7
    %v5204 = vsub.s32 1, %v5203
    %v5205 = vrot.slane %v5163, %v5204
    %v5206 = vlaneseq
    %v5207 = vshrl.u32 %v5206, 7
    %v5208 = vsub.s32 2, %v5207
    %v5209 = vrot.slane %v5163, %v5208
    %v5210 = vlaneseq
    %v5211 = vshrl.u32 %v5210, 7
    %v5212 = vsub.s32 3, %v5211
    %v5213 = vrot.slane %v5163, %v5212
    %v5214 = vlaneseq
    %v5215 = vshrl.u32 %v5214, 7
    %v5216 = vsub.s32 4, %v5215
    %v5217 = vrot.slane %v5163, %v5216
    %v5218 = vlaneseq
    %v5219 = vshrl.u32 %v5218, 7
    %v5220 = vsub.s32 5, %v5219
    %v5221 = vrot.slane %v5163, %v5220
    %v5222 = vlaneseq
    %v5223 = vshrl.u32 %v5222, 7
    %v5224 = vsub.s32 6, %v5223
    %v5225 = vrot.slane %v5163, %v5224
    %v5226 = vlaneseq
    %v5227 = vshrl.u32 %v5226, 7
    %v5228 = vsub.s32 7, %v5227
    %v5229 = vrot.slane %v5163, %v5228
    %v6270 = vunpack.c.l.b16 %v4138
    %v6271 = vunpack.c.h.b16 %v4138
    %v6272 = vunpack.c.l.b16 %v4139
    %v6273 = vunpack.c.h.b16 %v4139
    %v6274 = vunpack.c.l.b16 %v4140
    %v6275 = vunpack.c.h.b16 %v4140
    %v6276 = vunpack.c.l.b16 %v4141
    %v6277 = vunpack.c.h.b16 %v4141
    %v6278 = vunpack.c.l.b16 %v4142
    %v6279 = vunpack.c.h.b16 %v4142
    %v6280 = vunpack.c.l.b16 %v4143
    %v6281 = vunpack.c.h.b16 %v4143
    %v6282 = vunpack.c.l.b16 %v4144
    %v6283 = vunpack.c.h.b16 %v4144
    %v6284 = vunpack.c.l.b16 %v4145
    %v6285 = vunpack.c.h.b16 %v4145
    %v6286 = vunpack.c.l.b16 %v4146
    %v6287 = vunpack.c.h.b16 %v4146
    %v6288 = vunpack.c.l.b16 %v4147
    %v6289 = vunpack.c.h.b16 %v4147
    %v6290 = vunpack.c.l.b16 %v4148
    %v6291 = vunpack.c.h.b16 %v4148
    %v6292 = vunpack.c.l.b16 %v4149
    %v6293 = vunpack.c.h.b16 %v4149
    %v6294 = vunpack.c.l.b16 %v4150
    %v6295 = vunpack.c.h.b16 %v4150
    %v6296 = vunpack.c.l.b16 %v4151
    %v6297 = vunpack.c.h.b16 %v4151
    %v6298 = vunpack.c.l.b16 %v4152
    %v6299 = vunpack.c.h.b16 %v4152
    %v6300 = vunpack.c.l.b16 %v4153
    %v6301 = vunpack.c.h.b16 %v4153
    %v6302 = vunpack.c.l.b16 %v4154
    %v6303 = vunpack.c.h.b16 %v4154
    %v6304 = vunpack.c.l.b16 %v4155
    %v6305 = vunpack.c.h.b16 %v4155
    %v6306 = vunpack.c.l.b16 %v4156
    %v6307 = vunpack.c.h.b16 %v4156
    %v6308 = vunpack.c.l.b16 %v4157
    %v6309 = vunpack.c.h.b16 %v4157
    %v6310 = vunpack.c.l.b16 %v4158
    %v6311 = vunpack.c.h.b16 %v4158
    %v6312 = vunpack.c.l.b16 %v4159
    %v6313 = vunpack.c.h.b16 %v4159
    %v6314 = vunpack.c.l.b16 %v4160
    %v6315 = vunpack.c.h.b16 %v4160
    %v6316 = vunpack.c.l.b16 %v4161
    %v6317 = vunpack.c.h.b16 %v4161
    %v6318 = vunpack.c.l.b16 %v4162
    %v6319 = vunpack.c.h.b16 %v4162
    %v6320 = vunpack.c.l.b16 %v4163
    %v6321 = vunpack.c.h.b16 %v4163
    %v6322 = vunpack.c.l.b16 %v4164
    %v6323 = vunpack.c.h.b16 %v4164
    %v6324 = vunpack.c.l.b16 %v4165
    %v6325 = vunpack.c.h.b16 %v4165
    %v6326 = vunpack.c.l.b16 %v4166
    %v6327 = vunpack.c.h.b16 %v4166
    %v6328 = vunpack.c.l.b16 %v4167
    %v6329 = vunpack.c.h.b16 %v4167
    %v6330 = vunpack.c.l.b16 %v4168
    %v6331 = vunpack.c.h.b16 %v4168
    %v6332 = vunpack.c.l.b16 %v4169
    %v6333 = vunpack.c.h.b16 %v4169
    %v6334 = vunpack.c.l.b16 %v4170
    %v6335 = vunpack.c.h.b16 %v4170
    %v6336 = vunpack.c.l.b16 %v4171
    %v6337 = vunpack.c.h.b16 %v4171
    %v6338 = vunpack.c.l.b16 %v4172
    %v6339 = vunpack.c.h.b16 %v4172
    %v6340 = vunpack.c.l.b16 %v4173
    %v6341 = vunpack.c.h.b16 %v4173
    %v6342 = vunpack.c.l.b16 %v4174
    %v6343 = vunpack.c.h.b16 %v4174
    %v6344 = vunpack.c.l.b16 %v4175
    %v6345 = vunpack.c.h.b16 %v4175
    %v6346 = vunpack.c.l.b16 %v4176
    %v6347 = vunpack.c.h.b16 %v4176
    %v6348 = vunpack.c.l.b16 %v4177
    %v6349 = vunpack.c.h.b16 %v4177
    %v6350 = vunpack.c.l.b16 %v4178
    %v6351 = vunpack.c.h.b16 %v4178
    %v6352 = vunpack.c.l.b16 %v4179
    %v6353 = vunpack.c.h.b16 %v4179
    %v6354 = vunpack.c.l.b16 %v4180
    %v6355 = vunpack.c.h.b16 %v4180
    %v6356 = vunpack.c.l.b16 %v4181
    %v6357 = vunpack.c.h.b16 %v4181
    %v6358 = vunpack.c.l.b16 %v4182
    %v6359 = vunpack.c.h.b16 %v4182
    %v6360 = vunpack.c.l.b16 %v4183
    %v6361 = vunpack.c.h.b16 %v4183
    %v6362 = vunpack.c.l.b16 %v4184
    %v6363 = vunpack.c.h.b16 %v4184
    %v6364 = vunpack.c.l.b16 %v4185
    %v6365 = vunpack.c.h.b16 %v4185
    %v6366 = vunpack.c.l.b16 %v4186
    %v6367 = vunpack.c.h.b16 %v4186
    %v6368 = vunpack.c.l.b16 %v4187
    %v6369 = vunpack.c.h.b16 %v4187
    %v6370 = vunpack.c.l.b16 %v4188
    %v6371 = vunpack.c.h.b16 %v4188
    %v6372 = vunpack.c.l.b16 %v4189
    %v6373 = vunpack.c.h.b16 %v4189
    %v6374 = vunpack.c.l.b16 %v4190
    %v6375 = vunpack.c.h.b16 %v4190
    %v6376 = vunpack.c.l.b16 %v4191
    %v6377 = vunpack.c.h.b16 %v4191
    %v6378 = vunpack.c.l.b16 %v4192
    %v6379 = vunpack.c.h.b16 %v4192
    %v6380 = vunpack.c.l.b16 %v4193
    %v6381 = vunpack.c.h.b16 %v4193
    %v6382 = vunpack.c.l.b16 %v4194
    %v6383 = vunpack.c.h.b16 %v4194
    %v6384 = vunpack.c.l.b16 %v4195
    %v6385 = vunpack.c.h.b16 %v4195
    %v6386 = vunpack.c.l.b16 %v4196
    %v6387 = vunpack.c.h.b16 %v4196
    %v6388 = vunpack.c.l.b16 %v4197
    %v6389 = vunpack.c.h.b16 %v4197
    %v6390 = vunpack.c.l.b16 %v4198
    %v6391 = vunpack.c.h.b16 %v4198
    %v6392 = vunpack.c.l.b16 %v4199
    %v6393 = vunpack.c.h.b16 %v4199
    %v6394 = vunpack.c.l.b16 %v4200
    %v6395 = vunpack.c.h.b16 %v4200
    %v6396 = vunpack.c.l.b16 %v4201
    %v6397 = vunpack.c.h.b16 %v4201
    %v6398 = vunpack.c.l.b16 %v4202
    %v6399 = vunpack.c.h.b16 %v4202
    %v6400 = vunpack.c.l.b16 %v4203
    %v6401 = vunpack.c.h.b16 %v4203
    %v6402 = vunpack.c.l.b16 %v4204
    %v6403 = vunpack.c.h.b16 %v4204
    %v6404 = vunpack.c.l.b16 %v4205
    %v6405 = vunpack.c.h.b16 %v4205
    %v6406 = vunpack.c.l.b16 %v4206
    %v6407 = vunpack.c.h.b16 %v4206
    %v6408 = vunpack.c.l.b16 %v4207
    %v6409 = vunpack.c.h.b16 %v4207
    %v6410 = vunpack.c.l.b16 %v4208
    %v6411 = vunpack.c.h.b16 %v4208
    %v6412 = vunpack.c.l.b16 %v4209
    %v6413 = vunpack.c.h.b16 %v4209
    %v6414 = vunpack.c.l.b16 %v4210
    %v6415 = vunpack.c.h.b16 %v4210
    %v6416 = vunpack.c.l.b16 %v4211
    %v6417 = vunpack.c.h.b16 %v4211
    %v6418 = vunpack.c.l.b16 %v4212
    %v6419 = vunpack.c.h.b16 %v4212
    %v6420 = vunpack.c.l.b16 %v4213
    %v6421 = vunpack.c.h.b16 %v4213
    %v6422 = vunpack.c.l.b16 %v4214
    %v6423 = vunpack.c.h.b16 %v4214
    %v6424 = vunpack.c.l.b16 %v4215
    %v6425 = vunpack.c.h.b16 %v4215
    %v6426 = vunpack.c.l.b16 %v4216
    %v6427 = vunpack.c.h.b16 %v4216
    %v6428 = vunpack.c.l.b16 %v4217
    %v6429 = vunpack.c.h.b16 %v4217
    %v6430 = vunpack.c.l.b16 %v4218
    %v6431 = vunpack.c.h.b16 %v4218
    %v6432 = vunpack.c.l.b16 %v4219
    %v6433 = vunpack.c.h.b16 %v4219
    %v6434 = vunpack.c.l.b16 %v4220
    %v6435 = vunpack.c.h.b16 %v4220
    %v6436 = vunpack.c.l.b16 %v4221
    %v6437 = vunpack.c.h.b16 %v4221
    %v6438 = vunpack.c.l.b16 %v4222
    %v6439 = vunpack.c.h.b16 %v4222
    %v6440 = vunpack.c.l.b16 %v4223
    %v6441 = vunpack.c.h.b16 %v4223
    %v6442 = vunpack.c.l.b16 %v4224
    %v6443 = vunpack.c.h.b16 %v4224
    %v6444 = vunpack.c.l.b16 %v4225
    %v6445 = vunpack.c.h.b16 %v4225
    %v6446 = vunpack.c.l.b16 %v4226
    %v6447 = vunpack.c.h.b16 %v4226
    %v6448 = vunpack.c.l.b16 %v4227
    %v6449 = vunpack.c.h.b16 %v4227
    %v6450 = vunpack.c.l.b16 %v4228
    %v6451 = vunpack.c.h.b16 %v4228
    %v6452 = vunpack.c.l.b16 %v4229
    %v6453 = vunpack.c.h.b16 %v4229
    %v6454 = vunpack.c.l.b16 %v4230
    %v6455 = vunpack.c.h.b16 %v4230
    %v6456 = vunpack.c.l.b16 %v4231
    %v6457 = vunpack.c.h.b16 %v4231
    %v6458 = vunpack.c.l.b16 %v4232
    %v6459 = vunpack.c.h.b16 %v4232
    %v6460 = vunpack.c.l.b16 %v4233
    %v6461 = vunpack.c.h.b16 %v4233
    %v6462 = vunpack.c.l.b16 %v4234
    %v6463 = vunpack.c.h.b16 %v4234
    %v6464 = vunpack.c.l.b16 %v4235
    %v6465 = vunpack.c.h.b16 %v4235
    %v6466 = vunpack.c.l.b16 %v4236
    %v6467 = vunpack.c.h.b16 %v4236
    %v6468 = vunpack.c.l.b16 %v4237
    %v6469 = vunpack.c.h.b16 %v4237
    %v6470 = vunpack.c.l.b16 %v4238
    %v6471 = vunpack.c.h.b16 %v4238
    %v6472 = vunpack.c.l.b16 %v4239
    %v6473 = vunpack.c.h.b16 %v4239
    %v6474 = vunpack.c.l.b16 %v4240
    %v6475 = vunpack.c.h.b16 %v4240
    %v6476 = vunpack.c.l.b16 %v4241
    %v6477 = vunpack.c.h.b16 %v4241
    %v6478 = vunpack.c.l.b16 %v4242
    %v6479 = vunpack.c.h.b16 %v4242
    %v6480 = vunpack.c.l.b16 %v4243
    %v6481 = vunpack.c.h.b16 %v4243
    %v6482 = vunpack.c.l.b16 %v4244
    %v6483 = vunpack.c.h.b16 %v4244
    %v6484 = vunpack.c.l.b16 %v4245
    %v6485 = vunpack.c.h.b16 %v4245
    %v6486 = vunpack.c.l.b16 %v4246
    %v6487 = vunpack.c.h.b16 %v4246
    %v6488 = vunpack.c.l.b16 %v4247
    %v6489 = vunpack.c.h.b16 %v4247
    %v6490 = vunpack.c.l.b16 %v4248
    %v6491 = vunpack.c.h.b16 %v4248
    %v6492 = vunpack.c.l.b16 %v4249
    %v6493 = vunpack.c.h.b16 %v4249
    %v6494 = vunpack.c.l.b16 %v4250
    %v6495 = vunpack.c.h.b16 %v4250
    %v6496 = vunpack.c.l.b16 %v4251
    %v6497 = vunpack.c.h.b16 %v4251
    %v6498 = vunpack.c.l.b16 %v4252
    %v6499 = vunpack.c.h.b16 %v4252
    %v6500 = vunpack.c.l.b16 %v4253
    %v6501 = vunpack.c.h.b16 %v4253
    %v6502 = vunpack.c.l.b16 %v4254
    %v6503 = vunpack.c.h.b16 %v4254
    %v6504 = vunpack.c.l.b16 %v4255
    %v6505 = vunpack.c.h.b16 %v4255
    %v6506 = vunpack.c.l.b16 %v4256
    %v6507 = vunpack.c.h.b16 %v4256
    %v6508 = vunpack.c.l.b16 %v4257
    %v6509 = vunpack.c.h.b16 %v4257
    %v6510 = vunpack.c.l.b16 %v4258
    %v6511 = vunpack.c.h.b16 %v4258
    %v6512 = vunpack.c.l.b16 %v4259
    %v6513 = vunpack.c.h.b16 %v4259
    %v6514 = vunpack.c.l.b16 %v4260
    %v6515 = vunpack.c.h.b16 %v4260
    %v6516 = vunpack.c.l.b16 %v4261
    %v6517 = vunpack.c.h.b16 %v4261
    %v6518 = vunpack.c.l.b16 %v4262
    %v6519 = vunpack.c.h.b16 %v4262
    %v6520 = vunpack.c.l.b16 %v4263
    %v6521 = vunpack.c.h.b16 %v4263
    %v6522 = vunpack.c.l.b16 %v4264
    %v6523 = vunpack.c.h.b16 %v4264
    %v6524 = vunpack.c.l.b16 %v4265
    %v6525 = vunpack.c.h.b16 %v4265
    %v6526 = vunpack.c.l.b16 %v4266
    %v6527 = vunpack.c.h.b16 %v4266
    %v6528 = vunpack.c.l.b16 %v4267
    %v6529 = vunpack.c.h.b16 %v4267
    %v6530 = vunpack.c.l.b16 %v4268
    %v6531 = vunpack.c.h.b16 %v4268
    %v6532 = vunpack.c.l.b16 %v4269
    %v6533 = vunpack.c.h.b16 %v4269
    %v6534 = vunpack.c.l.b16 %v4270
    %v6535 = vunpack.c.h.b16 %v4270
    %v6536 = vunpack.c.l.b16 %v4271
    %v6537 = vunpack.c.h.b16 %v4271
    %v6538 = vunpack.c.l.b16 %v4272
    %v6539 = vunpack.c.h.b16 %v4272
    %v6540 = vunpack.c.l.b16 %v4273
    %v6541 = vunpack.c.h.b16 %v4273
    %v6542 = vunpack.c.l.b16 %v4274
    %v6543 = vunpack.c.h.b16 %v4274
    %v6544 = vunpack.c.l.b16 %v4275
    %v6545 = vunpack.c.h.b16 %v4275
    %v6546 = vunpack.c.l.b16 %v4276
    %v6547 = vunpack.c.h.b16 %v4276
    %v6548 = vunpack.c.l.b16 %v4277
    %v6549 = vunpack.c.h.b16 %v4277
    %v6550 = vunpack.c.l.b16 %v4278
    %v6551 = vunpack.c.h.b16 %v4278
    %v6552 = vunpack.c.l.b16 %v4279
    %v6553 = vunpack.c.h.b16 %v4279
    %v6554 = vunpack.c.l.b16 %v4280
    %v6555 = vunpack.c.h.b16 %v4280
    %v6556 = vunpack.c.l.b16 %v4281
    %v6557 = vunpack.c.h.b16 %v4281
    %v6558 = vunpack.c.l.b16 %v4282
    %v6559 = vunpack.c.h.b16 %v4282
    %v6560 = vunpack.c.l.b16 %v4283
    %v6561 = vunpack.c.h.b16 %v4283
    %v6562 = vunpack.c.l.b16 %v4284
    %v6563 = vunpack.c.h.b16 %v4284
    %v6564 = vunpack.c.l.b16 %v4285
    %v6565 = vunpack.c.h.b16 %v4285
    %v6566 = vunpack.c.l.b16 %v4286
    %v6567 = vunpack.c.h.b16 %v4286
    %v6568 = vunpack.c.l.b16 %v4287
    %v6569 = vunpack.c.h.b16 %v4287
    %v6570 = vunpack.c.l.b16 %v4288
    %v6571 = vunpack.c.h.b16 %v4288
    %v6572 = vunpack.c.l.b16 %v4289
    %v6573 = vunpack.c.h.b16 %v4289
    %v6574 = vunpack.c.l.b16 %v4290
    %v6575 = vunpack.c.h.b16 %v4290
    %v6576 = vunpack.c.l.b16 %v4291
    %v6577 = vunpack.c.h.b16 %v4291
    %v6578 = vunpack.c.l.b16 %v4292
    %v6579 = vunpack.c.h.b16 %v4292
    %v6580 = vunpack.c.l.b16 %v4293
    %v6581 = vunpack.c.h.b16 %v4293
    %v6582 = vunpack.c.l.b16 %v4294
    %v6583 = vunpack.c.h.b16 %v4294
    %v6584 = vunpack.c.l.b16 %v4295
    %v6585 = vunpack.c.h.b16 %v4295
    %v6586 = vunpack.c.l.b16 %v4296
    %v6587 = vunpack.c.h.b16 %v4296
    %v6588 = vunpack.c.l.b16 %v4297
    %v6589 = vunpack.c.h.b16 %v4297
    %v6590 = vunpack.c.l.b16 %v4298
    %v6591 = vunpack.c.h.b16 %v4298
    %v6592 = vunpack.c.l.b16 %v4299
    %v6593 = vunpack.c.h.b16 %v4299
    %v6594 = vunpack.c.l.b16 %v4300
    %v6595 = vunpack.c.h.b16 %v4300
    %v6596 = vunpack.c.l.b16 %v4301
    %v6597 = vunpack.c.h.b16 %v4301
    %v6598 = vunpack.c.l.b16 %v4302
    %v6599 = vunpack.c.h.b16 %v4302
    %v6600 = vunpack.c.l.b16 %v4303
    %v6601 = vunpack.c.h.b16 %v4303
    %v6602 = vunpack.c.l.b16 %v4304
    %v6603 = vunpack.c.h.b16 %v4304
    %v6604 = vunpack.c.l.b16 %v4305
    %v6605 = vunpack.c.h.b16 %v4305
    %v6606 = vunpack.c.l.b16 %v4306
    %v6607 = vunpack.c.h.b16 %v4306
    %v6608 = vunpack.c.l.b16 %v4307
    %v6609 = vunpack.c.h.b16 %v4307
    %v6610 = vunpack.c.l.b16 %v4308
    %v6611 = vunpack.c.h.b16 %v4308
    %v6612 = vunpack.c.l.b16 %v4309
    %v6613 = vunpack.c.h.b16 %v4309
    %v6614 = vunpack.c.l.b16 %v4310
    %v6615 = vunpack.c.h.b16 %v4310
    %v6616 = vunpack.c.l.b16 %v4311
    %v6617 = vunpack.c.h.b16 %v4311
    %v6618 = vunpack.c.l.b16 %v4312
    %v6619 = vunpack.c.h.b16 %v4312
    %v6620 = vunpack.c.l.b16 %v4313
    %v6621 = vunpack.c.h.b16 %v4313
    %v6622 = vunpack.c.l.b16 %v4314
    %v6623 = vunpack.c.h.b16 %v4314
    %v6624 = vunpack.c.l.b16 %v4315
    %v6625 = vunpack.c.h.b16 %v4315
    %v6626 = vunpack.c.l.b16 %v4316
    %v6627 = vunpack.c.h.b16 %v4316
    %v6628 = vunpack.c.l.b16 %v4317
    %v6629 = vunpack.c.h.b16 %v4317
    %v6630 = vunpack.c.l.b16 %v4318
    %v6631 = vunpack.c.h.b16 %v4318
    %v6632 = vunpack.c.l.b16 %v4319
    %v6633 = vunpack.c.h.b16 %v4319
    %v6634 = vunpack.c.l.b16 %v4320
    %v6635 = vunpack.c.h.b16 %v4320
    %v6636 = vunpack.c.l.b16 %v4321
    %v6637 = vunpack.c.h.b16 %v4321
    %v6638 = vunpack.c.l.b16 %v4322
    %v6639 = vunpack.c.h.b16 %v4322
    %v6640 = vunpack.c.l.b16 %v4323
    %v6641 = vunpack.c.h.b16 %v4323
    %v6642 = vunpack.c.l.b16 %v4324
    %v6643 = vunpack.c.h.b16 %v4324
    %v6644 = vunpack.c.l.b16 %v4325
    %v6645 = vunpack.c.h.b16 %v4325
    %v6646 = vunpack.c.l.b16 %v4326
    %v6647 = vunpack.c.h.b16 %v4326
    %v6648 = vunpack.c.l.b16 %v4327
    %v6649 = vunpack.c.h.b16 %v4327
    %v6650 = vunpack.c.l.b16 %v4328
    %v6651 = vunpack.c.h.b16 %v4328
    %v6652 = vunpack.c.l.b16 %v4329
    %v6653 = vunpack.c.h.b16 %v4329
    %v6654 = vunpack.c.l.b16 %v4330
    %v6655 = vunpack.c.h.b16 %v4330
    %v6656 = vunpack.c.l.b16 %v4331
    %v6657 = vunpack.c.h.b16 %v4331
    %v6658 = vunpack.c.l.b16 %v4332
    %v6659 = vunpack.c.h.b16 %v4332
    %v6660 = vunpack.c.l.b16 %v4333
    %v6661 = vunpack.c.h.b16 %v4333
    %v6662 = vunpack.c.l.b16 %v4334
    %v6663 = vunpack.c.h.b16 %v4334
    %v6664 = vunpack.c.l.b16 %v4335
    %v6665 = vunpack.c.h.b16 %v4335
    %v6666 = vunpack.c.l.b16 %v4336
    %v6667 = vunpack.c.h.b16 %v4336
    %v6668 = vunpack.c.l.b16 %v4337
    %v6669 = vunpack.c.h.b16 %v4337
    %v6670 = vunpack.c.l.b16 %v4338
    %v6671 = vunpack.c.h.b16 %v4338
    %v6672 = vunpack.c.l.b16 %v4339
    %v6673 = vunpack.c.h.b16 %v4339
    %v6674 = vunpack.c.l.b16 %v4340
    %v6675 = vunpack.c.h.b16 %v4340
    %v6676 = vunpack.c.l.b16 %v4341
    %v6677 = vunpack.c.h.b16 %v4341
    %v6678 = vunpack.c.l.b16 %v4342
    %v6679 = vunpack.c.h.b16 %v4342
    %v6680 = vunpack.c.l.b16 %v4343
    %v6681 = vunpack.c.h.b16 %v4343
    %v6682 = vunpack.c.l.b16 %v4344
    %v6683 = vunpack.c.h.b16 %v4344
    %v6684 = vunpack.c.l.b16 %v4345
    %v6685 = vunpack.c.h.b16 %v4345
    %v6686 = vunpack.c.l.b16 %v4346
    %v6687 = vunpack.c.h.b16 %v4346
    %v6688 = vunpack.c.l.b16 %v4347
    %v6689 = vunpack.c.h.b16 %v4347
    %v6690 = vunpack.c.l.b16 %v4348
    %v6691 = vunpack.c.h.b16 %v4348
    %v6692 = vunpack.c.l.b16 %v4349
    %v6693 = vunpack.c.h.b16 %v4349
    %v6694 = vunpack.c.l.b16 %v4350
    %v6695 = vunpack.c.h.b16 %v4350
    %v6696 = vunpack.c.l.b16 %v4351
    %v6697 = vunpack.c.h.b16 %v4351
    %v6698 = vunpack.c.l.b16 %v4352
    %v6699 = vunpack.c.h.b16 %v4352
    %v6700 = vunpack.c.l.b16 %v4353
    %v6701 = vunpack.c.h.b16 %v4353
    %v6702 = vunpack.c.l.b16 %v4354
    %v6703 = vunpack.c.h.b16 %v4354
    %v6704 = vunpack.c.l.b16 %v4355
    %v6705 = vunpack.c.h.b16 %v4355
    %v6706 = vunpack.c.l.b16 %v4356
    %v6707 = vunpack.c.h.b16 %v4356
    %v6708 = vunpack.c.l.b16 %v4357
    %v6709 = vunpack.c.h.b16 %v4357
    %v6710 = vunpack.c.l.b16 %v4358
    %v6711 = vunpack.c.h.b16 %v4358
    %v6712 = vunpack.c.l.b16 %v4359
    %v6713 = vunpack.c.h.b16 %v4359
    %v6714 = vunpack.c.l.b16 %v4360
    %v6715 = vunpack.c.h.b16 %v4360
    %v6716 = vunpack.c.l.b16 %v4361
    %v6717 = vunpack.c.h.b16 %v4361
    %v6718 = vunpack.c.l.b16 %v4362
    %v6719 = vunpack.c.h.b16 %v4362
    %v6720 = vunpack.c.l.b16 %v4363
    %v6721 = vunpack.c.h.b16 %v4363
    %v6722 = vunpack.c.l.b16 %v4364
    %v6723 = vunpack.c.h.b16 %v4364
    %v6724 = vunpack.c.l.b16 %v4365
    %v6725 = vunpack.c.h.b16 %v4365
    %v6726 = vunpack.c.l.b16 %v4366
    %v6727 = vunpack.c.h.b16 %v4366
    %v6728 = vunpack.c.l.b16 %v4367
    %v6729 = vunpack.c.h.b16 %v4367
    %v6730 = vunpack.c.l.b16 %v4368
    %v6731 = vunpack.c.h.b16 %v4368
    %v6732 = vunpack.c.l.b16 %v4369
    %v6733 = vunpack.c.h.b16 %v4369
    %v6734 = vunpack.c.l.b16 %v4370
    %v6735 = vunpack.c.h.b16 %v4370
    %v6736 = vunpack.c.l.b16 %v4371
    %v6737 = vunpack.c.h.b16 %v4371
    %v6738 = vunpack.c.l.b16 %v4372
    %v6739 = vunpack.c.h.b16 %v4372
    %v6740 = vunpack.c.l.b16 %v4373
    %v6741 = vunpack.c.h.b16 %v4373
    %v6742 = vunpack.c.l.b16 %v4374
    %v6743 = vunpack.c.h.b16 %v4374
    %v6744 = vunpack.c.l.b16 %v4375
    %v6745 = vunpack.c.h.b16 %v4375
    %v6746 = vunpack.c.l.b16 %v4376
    %v6747 = vunpack.c.h.b16 %v4376
    %v6748 = vunpack.c.l.b16 %v4377
    %v6749 = vunpack.c.h.b16 %v4377
    %v6750 = vunpack.c.l.b16 %v4378
    %v6751 = vunpack.c.h.b16 %v4378
    %v6752 = vunpack.c.l.b16 %v4379
    %v6753 = vunpack.c.h.b16 %v4379
    %v6754 = vunpack.c.l.b16 %v4380
    %v6755 = vunpack.c.h.b16 %v4380
    %v6756 = vunpack.c.l.b16 %v4381
    %v6757 = vunpack.c.h.b16 %v4381
    %v6758 = vunpack.c.l.b16 %v4382
    %v6759 = vunpack.c.h.b16 %v4382
    %v6760 = vunpack.c.l.b16 %v4383
    %v6761 = vunpack.c.h.b16 %v4383
    %v6762 = vunpack.c.l.b16 %v4384
    %v6763 = vunpack.c.h.b16 %v4384
    %v6764 = vunpack.c.l.b16 %v4385
    %v6765 = vunpack.c.h.b16 %v4385
    %v6766 = vunpack.c.l.b16 %v4386
    %v6767 = vunpack.c.h.b16 %v4386
    %v6768 = vunpack.c.l.b16 %v4387
    %v6769 = vunpack.c.h.b16 %v4387
    %v6770 = vunpack.c.l.b16 %v4388
    %v6771 = vunpack.c.h.b16 %v4388
    %v6772 = vunpack.c.l.b16 %v4389
    %v6773 = vunpack.c.h.b16 %v4389
    %v6774 = vunpack.c.l.b16 %v4390
    %v6775 = vunpack.c.h.b16 %v4390
    %v6776 = vunpack.c.l.b16 %v4391
    %v6777 = vunpack.c.h.b16 %v4391
    %v6778 = vunpack.c.l.b16 %v4392
    %v6779 = vunpack.c.h.b16 %v4392
    %v6780 = vunpack.c.l.b16 %v4393
    %v6781 = vunpack.c.h.b16 %v4393
    %v6782 = vunpack.c.l.b16 %v4394
    %v6783 = vunpack.c.h.b16 %v4394
    %v6784 = vunpack.c.l.b16 %v4395
    %v6785 = vunpack.c.h.b16 %v4395
    %v6786 = vunpack.c.l.b16 %v4396
    %v6787 = vunpack.c.h.b16 %v4396
    %v6788 = vunpack.c.l.b16 %v4397
    %v6789 = vunpack.c.h.b16 %v4397
    %v6790 = vunpack.c.l.b16 %v4398
    %v6791 = vunpack.c.h.b16 %v4398
    %v6792 = vunpack.c.l.b16 %v4399
    %v6793 = vunpack.c.h.b16 %v4399
    %v6794 = vunpack.c.l.b16 %v4400
    %v6795 = vunpack.c.h.b16 %v4400
    %v6796 = vunpack.c.l.b16 %v4401
    %v6797 = vunpack.c.h.b16 %v4401
    %v6798 = vunpack.c.l.b16 %v4402
    %v6799 = vunpack.c.h.b16 %v4402
    %v6800 = vunpack.c.l.b16 %v4403
    %v6801 = vunpack.c.h.b16 %v4403
    %v6802 = vunpack.c.l.b16 %v4404
    %v6803 = vunpack.c.h.b16 %v4404
    %v6804 = vunpack.c.l.b16 %v4405
    %v6805 = vunpack.c.h.b16 %v4405
    %v6806 = vunpack.c.l.b16 %v4406
    %v6807 = vunpack.c.h.b16 %v4406
    %v6808 = vunpack.c.l.b16 %v4407
    %v6809 = vunpack.c.h.b16 %v4407
    %v6810 = vunpack.c.l.b16 %v4408
    %v6811 = vunpack.c.h.b16 %v4408
    %v6812 = vunpack.c.l.b16 %v4409
    %v6813 = vunpack.c.h.b16 %v4409
    %v6814 = vunpack.c.l.b16 %v4410
    %v6815 = vunpack.c.h.b16 %v4410
    %v6816 = vunpack.c.l.b16 %v4411
    %v6817 = vunpack.c.h.b16 %v4411
    %v6818 = vunpack.c.l.b16 %v4412
    %v6819 = vunpack.c.h.b16 %v4412
    %v6820 = vunpack.c.l.b16 %v4413
    %v6821 = vunpack.c.h.b16 %v4413
    %v6822 = vunpack.c.l.b16 %v4414
    %v6823 = vunpack.c.h.b16 %v4414
    %v6824 = vunpack.c.l.b16 %v4415
    %v6825 = vunpack.c.h.b16 %v4415
    %v6826 = vunpack.c.l.b16 %v4416
    %v6827 = vunpack.c.h.b16 %v4416
    %v6828 = vunpack.c.l.b16 %v4417
    %v6829 = vunpack.c.h.b16 %v4417
    %v6830 = vunpack.c.l.b16 %v4418
    %v6831 = vunpack.c.h.b16 %v4418
    %v6832 = vunpack.c.l.b16 %v4419
    %v6833 = vunpack.c.h.b16 %v4419
    %v6834 = vunpack.c.l.b16 %v4420
    %v6835 = vunpack.c.h.b16 %v4420
    %v6836 = vunpack.c.l.b16 %v4421
    %v6837 = vunpack.c.h.b16 %v4421
    %v6838 = vunpack.c.l.b16 %v4422
    %v6839 = vunpack.c.h.b16 %v4422
    %v6840 = vunpack.c.l.b16 %v4423
    %v6841 = vunpack.c.h.b16 %v4423
    %v6842 = vunpack.c.l.b16 %v4424
    %v6843 = vunpack.c.h.b16 %v4424
    %v6844 = vunpack.c.l.b16 %v4425
    %v6845 = vunpack.c.h.b16 %v4425
    %v6846 = vunpack.c.l.b16 %v4426
    %v6847 = vunpack.c.h.b16 %v4426
    %v6848 = vunpack.c.l.b16 %v4427
    %v6849 = vunpack.c.h.b16 %v4427
    %v6850 = vunpack.c.l.b16 %v4428
    %v6851 = vunpack.c.h.b16 %v4428
    %v6852 = vunpack.c.l.b16 %v4429
    %v6853 = vunpack.c.h.b16 %v4429
    %v6854 = vunpack.c.l.b16 %v4430
    %v6855 = vunpack.c.h.b16 %v4430
    %v6856 = vunpack.c.l.b16 %v4431
    %v6857 = vunpack.c.h.b16 %v4431
    %v6858 = vunpack.c.l.b16 %v4432
    %v6859 = vunpack.c.h.b16 %v4432
    %v6860 = vunpack.c.l.b16 %v4433
    %v6861 = vunpack.c.h.b16 %v4433
    %v6862 = vunpack.c.l.b16 %v4434
    %v6863 = vunpack.c.h.b16 %v4434
    %v6864 = vunpack.c.l.b16 %v4435
    %v6865 = vunpack.c.h.b16 %v4435
    %v6866 = vunpack.c.l.b16 %v4436
    %v6867 = vunpack.c.h.b16 %v4436
    %v6868 = vunpack.c.l.b16 %v4437
    %v6869 = vunpack.c.h.b16 %v4437
    %v6870 = vunpack.c.l.b16 %v4438
    %v6871 = vunpack.c.h.b16 %v4438
    %v6872 = vunpack.c.l.b16 %v4439
    %v6873 = vunpack.c.h.b16 %v4439
    %v6874 = vunpack.c.l.b16 %v4440
    %v6875 = vunpack.c.h.b16 %v4440
    %v6876 = vunpack.c.l.b16 %v4441
    %v6877 = vunpack.c.h.b16 %v4441
    %v6878 = vunpack.c.l.b16 %v4442
    %v6879 = vunpack.c.h.b16 %v4442
    %v6880 = vunpack.c.l.b16 %v4443
    %v6881 = vunpack.c.h.b16 %v4443
    %v6882 = vunpack.c.l.b16 %v4444
    %v6883 = vunpack.c.h.b16 %v4444
    %v6884 = vunpack.c.l.b16 %v4445
    %v6885 = vunpack.c.h.b16 %v4445
    %v6886 = vunpack.c.l.b16 %v4446
    %v6887 = vunpack.c.h.b16 %v4446
    %v6888 = vunpack.c.l.b16 %v4447
    %v6889 = vunpack.c.h.b16 %v4447
    %v6890 = vunpack.c.l.b16 %v4448
    %v6891 = vunpack.c.h.b16 %v4448
    %v6892 = vunpack.c.l.b16 %v4449
    %v6893 = vunpack.c.h.b16 %v4449
    %v6894 = vunpack.c.l.b16 %v4450
    %v6895 = vunpack.c.h.b16 %v4450
    %v6896 = vunpack.c.l.b16 %v4451
    %v6897 = vunpack.c.h.b16 %v4451
    %v6898 = vunpack.c.l.b16 %v4452
    %v6899 = vunpack.c.h.b16 %v4452
    %v6900 = vunpack.c.l.b16 %v4453
    %v6901 = vunpack.c.h.b16 %v4453
    %v6902 = vunpack.c.l.b16 %v4454
    %v6903 = vunpack.c.h.b16 %v4454
    %v6904 = vunpack.c.l.b16 %v4455
    %v6905 = vunpack.c.h.b16 %v4455
    %v6906 = vunpack.c.l.b16 %v4456
    %v6907 = vunpack.c.h.b16 %v4456
    %v6908 = vunpack.c.l.b16 %v4457
    %v6909 = vunpack.c.h.b16 %v4457
    %v6910 = vunpack.c.l.b16 %v4458
    %v6911 = vunpack.c.h.b16 %v4458
    %v6912 = vunpack.c.l.b16 %v4459
    %v6913 = vunpack.c.h.b16 %v4459
    %v6914 = vunpack.c.l.b16 %v4460
    %v6915 = vunpack.c.h.b16 %v4460
    %v6916 = vunpack.c.l.b16 %v4461
    %v6917 = vunpack.c.h.b16 %v4461
    %v6918 = vunpack.c.l.b16 %v4462
    %v6919 = vunpack.c.h.b16 %v4462
    %v6920 = vunpack.c.l.b16 %v4463
    %v6921 = vunpack.c.h.b16 %v4463
    %v6922 = vunpack.c.l.b16 %v4464
    %v6923 = vunpack.c.h.b16 %v4464
    %v6924 = vunpack.c.l.b16 %v4465
    %v6925 = vunpack.c.h.b16 %v4465
    %v6926 = vunpack.c.l.b16 %v4466
    %v6927 = vunpack.c.h.b16 %v4466
    %v6928 = vunpack.c.l.b16 %v4467
    %v6929 = vunpack.c.h.b16 %v4467
    %v6930 = vunpack.c.l.b16 %v4468
    %v6931 = vunpack.c.h.b16 %v4468
    %v6932 = vunpack.c.l.b16 %v4469
    %v6933 = vunpack.c.h.b16 %v4469
    %v6934 = vunpack.c.l.b16 %v4470
    %v6935 = vunpack.c.h.b16 %v4470
    %v6936 = vunpack.c.l.b16 %v4471
    %v6937 = vunpack.c.h.b16 %v4471
    %v6938 = vunpack.c.l.b16 %v4472
    %v6939 = vunpack.c.h.b16 %v4472
    %v6940 = vunpack.c.l.b16 %v4473
    %v6941 = vunpack.c.h.b16 %v4473
    %v6942 = vunpack.c.l.b16 %v4474
    %v6943 = vunpack.c.h.b16 %v4474
    %v6944 = vunpack.c.l.b16 %v4475
    %v6945 = vunpack.c.h.b16 %v4475
    %v6946 = vunpack.c.l.b16 %v4476
    %v6947 = vunpack.c.h.b16 %v4476
    %v6948 = vunpack.c.l.b16 %v4477
    %v6949 = vunpack.c.h.b16 %v4477
    %v6950 = vunpack.c.l.b16 %v4478
    %v6951 = vunpack.c.h.b16 %v4478
    %v6952 = vunpack.c.l.b16 %v4479
    %v6953 = vunpack.c.h.b16 %v4479
    %v6954 = vunpack.c.l.b16 %v4480
    %v6955 = vunpack.c.h.b16 %v4480
    %v6956 = vunpack.c.l.b16 %v4481
    %v6957 = vunpack.c.h.b16 %v4481
    %v6958 = vunpack.c.l.b16 %v4482
    %v6959 = vunpack.c.h.b16 %v4482
    %v6960 = vunpack.c.l.b16 %v4483
    %v6961 = vunpack.c.h.b16 %v4483
    %v6962 = vunpack.c.l.b16 %v4484
    %v6963 = vunpack.c.h.b16 %v4484
    %v6964 = vunpack.c.l.b16 %v4485
    %v6965 = vunpack.c.h.b16 %v4485
    %v6966 = vunpack.c.l.b16 %v4486
    %v6967 = vunpack.c.h.b16 %v4486
    %v6968 = vunpack.c.l.b16 %v4487
    %v6969 = vunpack.c.h.b16 %v4487
    %v6970 = vunpack.c.l.b16 %v4488
    %v6971 = vunpack.c.h.b16 %v4488
    %v6972 = vunpack.c.l.b16 %v4489
    %v6973 = vunpack.c.h.b16 %v4489
    %v6974 = vunpack.c.l.b16 %v4490
    %v6975 = vunpack.c.h.b16 %v4490
    %v6976 = vunpack.c.l.b16 %v4491
    %v6977 = vunpack.c.h.b16 %v4491
    %v6978 = vunpack.c.l.b16 %v4492
    %v6979 = vunpack.c.h.b16 %v4492
    %v6980 = vunpack.c.l.b16 %v4493
    %v6981 = vunpack.c.h.b16 %v4493
    %v6982 = vunpack.c.l.b16 %v4494
    %v6983 = vunpack.c.h.b16 %v4494
    %v6984 = vunpack.c.l.b16 %v4495
    %v6985 = vunpack.c.h.b16 %v4495
    %v6986 = vunpack.c.l.b16 %v4496
    %v6987 = vunpack.c.h.b16 %v4496
    %v6988 = vunpack.c.l.b16 %v4497
    %v6989 = vunpack.c.h.b16 %v4497
    %v6990 = vunpack.c.l.b16 %v4498
    %v6991 = vunpack.c.h.b16 %v4498
    %v6992 = vunpack.c.l.b16 %v4499
    %v6993 = vunpack.c.h.b16 %v4499
    %v6994 = vunpack.c.l.b16 %v4500
    %v6995 = vunpack.c.h.b16 %v4500
    %v6996 = vunpack.c.l.b16 %v4501
    %v6997 = vunpack.c.h.b16 %v4501
    %v6998 = vunpack.c.l.b16 %v4502
    %v6999 = vunpack.c.h.b16 %v4502
    %v7000 = vunpack.c.l.b16 %v4503
    %v7001 = vunpack.c.h.b16 %v4503
    %v7002 = vunpack.c.l.b16 %v4504
    %v7003 = vunpack.c.h.b16 %v4504
    %v7004 = vunpack.c.l.b16 %v4505
    %v7005 = vunpack.c.h.b16 %v4505
    %v7006 = vunpack.c.l.b16 %v4506
    %v7007 = vunpack.c.h.b16 %v4506
    %v7008 = vunpack.c.l.b16 %v4507
    %v7009 = vunpack.c.h.b16 %v4507
    %v7010 = vunpack.c.l.b16 %v4508
    %v7011 = vunpack.c.h.b16 %v4508
    %v7012 = vunpack.c.l.b16 %v4509
    %v7013 = vunpack.c.h.b16 %v4509
    %v7014 = vunpack.c.l.b16 %v4510
    %v7015 = vunpack.c.h.b16 %v4510
    %v7016 = vunpack.c.l.b16 %v4511
    %v7017 = vunpack.c.h.b16 %v4511
    %v7018 = vunpack.c.l.b16 %v4512
    %v7019 = vunpack.c.h.b16 %v4512
    %v7020 = vunpack.c.l.b16 %v4513
    %v7021 = vunpack.c.h.b16 %v4513
    %v7022 = vunpack.c.l.b16 %v4514
    %v7023 = vunpack.c.h.b16 %v4514
    %v7024 = vunpack.c.l.b16 %v4515
    %v7025 = vunpack.c.h.b16 %v4515
    %v7026 = vunpack.c.l.b16 %v4516
    %v7027 = vunpack.c.h.b16 %v4516
    %v7028 = vunpack.c.l.b16 %v4517
    %v7029 = vunpack.c.h.b16 %v4517
    %v7030 = vunpack.c.l.b16 %v4518
    %v7031 = vunpack.c.h.b16 %v4518
    %v7032 = vunpack.c.l.b16 %v4519
    %v7033 = vunpack.c.h.b16 %v4519
    %v7034 = vunpack.c.l.b16 %v4520
    %v7035 = vunpack.c.h.b16 %v4520
    %v7036 = vunpack.c.l.b16 %v4521
    %v7037 = vunpack.c.h.b16 %v4521
    %v7038 = vunpack.c.l.b16 %v4522
    %v7039 = vunpack.c.h.b16 %v4522
    %v7040 = vunpack.c.l.b16 %v4523
    %v7041 = vunpack.c.h.b16 %v4523
    %v7042 = vunpack.c.l.b16 %v4524
    %v7043 = vunpack.c.h.b16 %v4524
    %v7044 = vunpack.c.l.b16 %v4525
    %v7045 = vunpack.c.h.b16 %v4525
    %v7046 = vunpack.c.l.b16 %v4526
    %v7047 = vunpack.c.h.b16 %v4526
    %v7048 = vunpack.c.l.b16 %v4527
    %v7049 = vunpack.c.h.b16 %v4527
    %v7050 = vunpack.c.l.b16 %v4528
    %v7051 = vunpack.c.h.b16 %v4528
    %v7052 = vunpack.c.l.b16 %v4529
    %v7053 = vunpack.c.h.b16 %v4529
    %v7054 = vunpack.c.l.b16 %v4530
    %v7055 = vunpack.c.h.b16 %v4530
    %v7056 = vunpack.c.l.b16 %v4531
    %v7057 = vunpack.c.h.b16 %v4531
    %v7058 = vunpack.c.l.b16 %v4532
    %v7059 = vunpack.c.h.b16 %v4532
    %v7060 = vunpack.c.l.b16 %v4533
    %v7061 = vunpack.c.h.b16 %v4533
    %v7062 = vunpack.c.l.b16 %v4534
    %v7063 = vunpack.c.h.b16 %v4534
    %v7064 = vunpack.c.l.b16 %v4535
    %v7065 = vunpack.c.h.b16 %v4535
    %v7066 = vunpack.c.l.b16 %v4536
    %v7067 = vunpack.c.h.b16 %v4536
    %v7068 = vunpack.c.l.b16 %v4537
    %v7069 = vunpack.c.h.b16 %v4537
    %v7070 = vunpack.c.l.b16 %v4538
    %v7071 = vunpack.c.h.b16 %v4538
    %v7072 = vunpack.c.l.b16 %v4539
    %v7073 = vunpack.c.h.b16 %v4539
    %v7074 = vunpack.c.l.b16 %v4540
    %v7075 = vunpack.c.h.b16 %v4540
    %v7076 = vunpack.c.l.b16 %v4541
    %v7077 = vunpack.c.h.b16 %v4541
    %v7078 = vunpack.c.l.b16 %v4542
    %v7079 = vunpack.c.h.b16 %v4542
    %v7080 = vunpack.c.l.b16 %v4543
    %v7081 = vunpack.c.h.b16 %v4543
    %v7082 = vunpack.c.l.b16 %v4544
    %v7083 = vunpack.c.h.b16 %v4544
    %v7084 = vunpack.c.l.b16 %v4545
    %v7085 = vunpack.c.h.b16 %v4545
    %v7086 = vunpack.c.l.b16 %v4546
    %v7087 = vunpack.c.h.b16 %v4546
    %v7088 = vunpack.c.l.b16 %v4547
    %v7089 = vunpack.c.h.b16 %v4547
    %v7090 = vunpack.c.l.b16 %v4548
    %v7091 = vunpack.c.h.b16 %v4548
    %v7092 = vunpack.c.l.b16 %v4549
    %v7093 = vunpack.c.h.b16 %v4549
    %v7094 = vunpack.c.l.b16 %v4550
    %v7095 = vunpack.c.h.b16 %v4550
    %v7096 = vunpack.c.l.b16 %v4551
    %v7097 = vunpack.c.h.b16 %v4551
    %v7098 = vunpack.c.l.b16 %v4552
    %v7099 = vunpack.c.h.b16 %v4552
    %v7100 = vunpack.c.l.b16 %v4553
    %v7101 = vunpack.c.h.b16 %v4553
    %v7102 = vunpack.c.l.b16 %v4554
    %v7103 = vunpack.c.h.b16 %v4554
    %v7104 = vunpack.c.l.b16 %v4555
    %v7105 = vunpack.c.h.b16 %v4555
    %v7106 = vunpack.c.l.b16 %v4556
    %v7107 = vunpack.c.h.b16 %v4556
    %v7108 = vunpack.c.l.b16 %v4557
    %v7109 = vunpack.c.h.b16 %v4557
    %v7110 = vunpack.c.l.b16 %v4558
    %v7111 = vunpack.c.h.b16 %v4558
    %v7112 = vunpack.c.l.b16 %v4559
    %v7113 = vunpack.c.h.b16 %v4559
    %v7114 = vunpack.c.l.b16 %v4560
    %v7115 = vunpack.c.h.b16 %v4560
    %v7116 = vunpack.c.l.b16 %v4561
    %v7117 = vunpack.c.h.b16 %v4561
    %v7118 = vunpack.c.l.b16 %v4562
    %v7119 = vunpack.c.h.b16 %v4562
    %v7120 = vunpack.c.l.b16 %v4563
    %v7121 = vunpack.c.h.b16 %v4563
    %v7122 = vunpack.c.l.b16 %v4564
    %v7123 = vunpack.c.h.b16 %v4564
    %v7124 = vunpack.c.l.b16 %v4565
    %v7125 = vunpack.c.h.b16 %v4565
    %v7126 = vunpack.c.l.b16 %v4566
    %v7127 = vunpack.c.h.b16 %v4566
    %v7128 = vunpack.c.l.b16 %v4567
    %v7129 = vunpack.c.h.b16 %v4567
    %v7130 = vunpack.c.l.b16 %v4568
    %v7131 = vunpack.c.h.b16 %v4568
    %v7132 = vunpack.c.l.b16 %v4569
    %v7133 = vunpack.c.h.b16 %v4569
    %v7134 = vunpack.c.l.b16 %v4570
    %v7135 = vunpack.c.h.b16 %v4570
    %v7136 = vunpack.c.l.b16 %v4571
    %v7137 = vunpack.c.h.b16 %v4571
    %v7138 = vunpack.c.l.b16 %v4572
    %v7139 = vunpack.c.h.b16 %v4572
    %v7140 = vunpack.c.l.b16 %v4573
    %v7141 = vunpack.c.h.b16 %v4573
    %v7142 = vunpack.c.l.b16 %v4574
    %v7143 = vunpack.c.h.b16 %v4574
    %v7144 = vunpack.c.l.b16 %v4575
    %v7145 = vunpack.c.h.b16 %v4575
    %v7146 = vunpack.c.l.b16 %v4576
    %v7147 = vunpack.c.h.b16 %v4576
    %v7148 = vunpack.c.l.b16 %v4577
    %v7149 = vunpack.c.h.b16 %v4577
    %v7150 = vunpack.c.l.b16 %v4578
    %v7151 = vunpack.c.h.b16 %v4578
    %v7152 = vunpack.c.l.b16 %v4579
    %v7153 = vunpack.c.h.b16 %v4579
    %v7154 = vunpack.c.l.b16 %v4580
    %v7155 = vunpack.c.h.b16 %v4580
    %v7156 = vunpack.c.l.b16 %v4581
    %v7157 = vunpack.c.h.b16 %v4581
    %v7158 = vunpack.c.l.b16 %v4582
    %v7159 = vunpack.c.h.b16 %v4582
    %v7160 = vunpack.c.l.b16 %v4583
    %v7161 = vunpack.c.h.b16 %v4583
    %v7162 = vunpack.c.l.b16 %v4584
    %v7163 = vunpack.c.h.b16 %v4584
    %v7164 = vunpack.c.l.b16 %v4585
    %v7165 = vunpack.c.h.b16 %v4585
    %v7166 = vunpack.c.l.b16 %v4586
    %v7167 = vunpack.c.h.b16 %v4586
    %v7168 = vunpack.c.l.b16 %v4587
    %v7169 = vunpack.c.h.b16 %v4587
    %v7170 = vunpack.c.l.b16 %v4588
    %v7171 = vunpack.c.h.b16 %v4588
    %v7172 = vunpack.c.l.b16 %v4589
    %v7173 = vunpack.c.h.b16 %v4589
    %v7174 = vunpack.c.l.b16 %v4590
    %v7175 = vunpack.c.h.b16 %v4590
    %v7176 = vunpack.c.l.b16 %v4591
    %v7177 = vunpack.c.h.b16 %v4591
    %v7178 = vunpack.c.l.b16 %v4592
    %v7179 = vunpack.c.h.b16 %v4592
    %v7180 = vunpack.c.l.b16 %v4593
    %v7181 = vunpack.c.h.b16 %v4593
    %v7182 = vunpack.c.l.b16 %v4594
    %v7183 = vunpack.c.h.b16 %v4594
    %v7184 = vunpack.c.l.b16 %v4595
    %v7185 = vunpack.c.h.b16 %v4595
    %v7186 = vunpack.c.l.b16 %v4596
    %v7187 = vunpack.c.h.b16 %v4596
    %v7188 = vunpack.c.l.b16 %v4597
    %v7189 = vunpack.c.h.b16 %v4597
    %v7190 = vunpack.c.l.b16 %v4598
    %v7191 = vunpack.c.h.b16 %v4598
    %v7192 = vunpack.c.l.b16 %v4599
    %v7193 = vunpack.c.h.b16 %v4599
    %v7194 = vunpack.c.l.b16 %v4600
    %v7195 = vunpack.c.h.b16 %v4600
    %v7196 = vunpack.c.l.b16 %v4601
    %v7197 = vunpack.c.h.b16 %v4601
    %v7198 = vunpack.c.l.b16 %v4602
    %v7199 = vunpack.c.h.b16 %v4602
    %v7200 = vunpack.c.l.b16 %v4603
    %v7201 = vunpack.c.h.b16 %v4603
    %v7202 = vunpack.c.l.b16 %v4604
    %v7203 = vunpack.c.h.b16 %v4604
    %v7204 = vunpack.c.l.b16 %v4605
    %v7205 = vunpack.c.h.b16 %v4605
    %v7206 = vunpack.c.l.b16 %v4606
    %v7207 = vunpack.c.h.b16 %v4606
    %v7208 = vunpack.c.l.b16 %v4607
    %v7209 = vunpack.c.h.b16 %v4607
    %v7210 = vunpack.c.l.b16 %v4608
    %v7211 = vunpack.c.h.b16 %v4608
    %v7212 = vunpack.c.l.b16 %v4609
    %v7213 = vunpack.c.h.b16 %v4609
    %v7214 = vunpack.c.l.b16 %v4610
    %v7215 = vunpack.c.h.b16 %v4610
    %v7216 = vunpack.c.l.b16 %v4611
    %v7217 = vunpack.c.h.b16 %v4611
    %v7218 = vunpack.c.l.b16 %v4612
    %v7219 = vunpack.c.h.b16 %v4612
    %v7220 = vunpack.c.l.b16 %v4613
    %v7221 = vunpack.c.h.b16 %v4613
    %v7222 = vunpack.c.l.b16 %v4614
    %v7223 = vunpack.c.h.b16 %v4614
    %v7224 = vunpack.c.l.b16 %v4615
    %v7225 = vunpack.c.h.b16 %v4615
    %v7226 = vunpack.c.l.b16 %v4616
    %v7227 = vunpack.c.h.b16 %v4616
    %v7228 = vunpack.c.l.b16 %v4617
    %v7229 = vunpack.c.h.b16 %v4617
    %v7230 = vunpack.c.l.b16 %v4618
    %v7231 = vunpack.c.h.b16 %v4618
    %v7232 = vunpack.c.l.b16 %v4619
    %v7233 = vunpack.c.h.b16 %v4619
    %v7234 = vunpack.c.l.b16 %v4620
    %v7235 = vunpack.c.h.b16 %v4620
    %v7236 = vunpack.c.l.b16 %v4621
    %v7237 = vunpack.c.h.b16 %v4621
    %v7238 = vunpack.c.l.b16 %v4622
    %v7239 = vunpack.c.h.b16 %v4622
    %v7240 = vunpack.c.l.b16 %v4623
    %v7241 = vunpack.c.h.b16 %v4623
    %v7242 = vunpack.c.l.b16 %v4624
    %v7243 = vunpack.c.h.b16 %v4624
    %v7244 = vunpack.c.l.b16 %v4625
    %v7245 = vunpack.c.h.b16 %v4625
    %v7246 = vunpack.c.l.b16 %v4626
    %v7247 = vunpack.c.h.b16 %v4626
    %v7248 = vunpack.c.l.b16 %v4627
    %v7249 = vunpack.c.h.b16 %v4627
    %v7250 = vunpack.c.l.b16 %v4628
    %v7251 = vunpack.c.h.b16 %v4628
    %v7252 = vunpack.c.l.b16 %v4629
    %v7253 = vunpack.c.h.b16 %v4629
    %v7254 = vunpack.c.l.b16 %v4630
    %v7255 = vunpack.c.h.b16 %v4630
    %v7256 = vunpack.c.l.b16 %v4631
    %v7257 = vunpack.c.h.b16 %v4631
    %v7258 = vunpack.c.l.b16 %v4632
    %v7259 = vunpack.c.h.b16 %v4632
    %v7260 = vunpack.c.l.b16 %v4633
    %v7261 = vunpack.c.h.b16 %v4633
    %v7262 = vunpack.c.l.b16 %v4634
    %v7263 = vunpack.c.h.b16 %v4634
    %v7264 = vunpack.c.l.b16 %v4635
    %v7265 = vunpack.c.h.b16 %v4635
    %v7266 = vunpack.c.l.b16 %v4636
    %v7267 = vunpack.c.h.b16 %v4636
    %v7268 = vunpack.c.l.b16 %v4637
    %v7269 = vunpack.c.h.b16 %v4637
    %v7270 = vunpack.c.l.b16 %v4638
    %v7271 = vunpack.c.h.b16 %v4638
    %v7272 = vunpack.c.l.b16 %v4639
    %v7273 = vunpack.c.h.b16 %v4639
    %v7274 = vunpack.c.l.b16 %v4640
    %v7275 = vunpack.c.h.b16 %v4640
    %v7276 = vunpack.c.l.b16 %v4641
    %v7277 = vunpack.c.h.b16 %v4641
    %v7278 = vunpack.c.l.b16 %v4642
    %v7279 = vunpack.c.h.b16 %v4642
    %v7280 = vunpack.c.l.b16 %v4643
    %v7281 = vunpack.c.h.b16 %v4643
    %v7282 = vunpack.c.l.b16 %v4644
    %v7283 = vunpack.c.h.b16 %v4644
    %v7284 = vunpack.c.l.b16 %v4645
    %v7285 = vunpack.c.h.b16 %v4645
    %v7286 = vunpack.c.l.b16 %v4646
    %v7287 = vunpack.c.h.b16 %v4646
    %v7288 = vunpack.c.l.b16 %v4647
    %v7289 = vunpack.c.h.b16 %v4647
    %v7290 = vunpack.c.l.b16 %v4648
    %v7291 = vunpack.c.h.b16 %v4648
    %v7292 = vunpack.c.l.b16 %v4649
    %v7293 = vunpack.c.h.b16 %v4649
    %v7294 = vunpack.c.l.b16 %v4650
    %v7295 = vunpack.c.h.b16 %v4650
    %v7296 = vunpack.c.l.b16 %v4651
    %v7297 = vunpack.c.h.b16 %v4651
    %v7298 = vunpack.c.l.b16 %v4652
    %v7299 = vunpack.c.h.b16 %v4652
    %v7300 = vunpack.c.l.b16 %v4653
    %v7301 = vunpack.c.h.b16 %v4653
    %v7302 = vunpack.c.l.b16 %v4654
    %v7303 = vunpack.c.h.b16 %v4654
    %v7304 = vunpack.c.l.b16 %v4655
    %v7305 = vunpack.c.h.b16 %v4655
    %v7306 = vunpack.c.l.b16 %v4656
    %v7307 = vunpack.c.h.b16 %v4656
    %v7308 = vunpack.c.l.b16 %v4657
    %v7309 = vunpack.c.h.b16 %v4657
    %v7310 = vunpack.c.l.b16 %v4658
    %v7311 = vunpack.c.h.b16 %v4658
    %v7312 = vunpack.c.l.b16 %v4659
    %v7313 = vunpack.c.h.b16 %v4659
    %v7314 = vunpack.c.l.b16 %v4660
    %v7315 = vunpack.c.h.b16 %v4660
    %v7316 = vunpack.c.l.b16 %v4661
    %v7317 = vunpack.c.h.b16 %v4661
    %v7318 = vunpack.c.l.b16 %v4662
    %v7319 = vunpack.c.h.b16 %v4662
    %v7320 = vunpack.c.l.b16 %v4663
    %v7321 = vunpack.c.h.b16 %v4663
    %v7322 = vunpack.c.l.b16 %v4664
    %v7323 = vunpack.c.h.b16 %v4664
    %v7324 = vunpack.c.l.b16 %v4665
    %v7325 = vunpack.c.h.b16 %v4665
    %v7326 = vunpack.c.l.b16 %v4666
    %v7327 = vunpack.c.h.b16 %v4666
    %v7328 = vunpack.c.l.b16 %v4667
    %v7329 = vunpack.c.h.b16 %v4667
    %v7330 = vunpack.c.l.b16 %v4668
    %v7331 = vunpack.c.h.b16 %v4668
    %v7332 = vunpack.c.l.b16 %v4669
    %v7333 = vunpack.c.h.b16 %v4669
    %v7334 = vunpack.c.l.b16 %v4670
    %v7335 = vunpack.c.h.b16 %v4670
    %v7336 = vunpack.c.l.b16 %v4671
    %v7337 = vunpack.c.h.b16 %v4671
    %v7338 = vunpack.c.l.b16 %v4672
    %v7339 = vunpack.c.h.b16 %v4672
    %v7340 = vunpack.c.l.b16 %v4673
    %v7341 = vunpack.c.h.b16 %v4673
    %v7342 = vunpack.c.l.b16 %v4674
    %v7343 = vunpack.c.h.b16 %v4674
    %v7344 = vunpack.c.l.b16 %v4675
    %v7345 = vunpack.c.h.b16 %v4675
    %v7346 = vunpack.c.l.b16 %v4676
    %v7347 = vunpack.c.h.b16 %v4676
    %v7348 = vunpack.c.l.b16 %v4677
    %v7349 = vunpack.c.h.b16 %v4677
    %v7350 = vunpack.c.l.b16 %v4678
    %v7351 = vunpack.c.h.b16 %v4678
    %v7352 = vunpack.c.l.b16 %v4679
    %v7353 = vunpack.c.h.b16 %v4679
    %v7354 = vunpack.c.l.b16 %v4680
    %v7355 = vunpack.c.h.b16 %v4680
    %v7356 = vunpack.c.l.b16 %v4681
    %v7357 = vunpack.c.h.b16 %v4681
    %v7358 = vunpack.c.l.b16 %v4682
    %v7359 = vunpack.c.h.b16 %v4682
    %v7360 = vunpack.c.l.b16 %v4683
    %v7361 = vunpack.c.h.b16 %v4683
    %v7362 = vunpack.c.l.b16 %v4684
    %v7363 = vunpack.c.h.b16 %v4684
    %v7364 = vunpack.c.l.b16 %v4685
    %v7365 = vunpack.c.h.b16 %v4685
    %v7366 = vunpack.c.l.b16 %v4686
    %v7367 = vunpack.c.h.b16 %v4686
    %v7368 = vunpack.c.l.b16 %v4687
    %v7369 = vunpack.c.h.b16 %v4687
    %v7370 = vunpack.c.l.b16 %v4688
    %v7371 = vunpack.c.h.b16 %v4688
    %v7372 = vunpack.c.l.b16 %v4689
    %v7373 = vunpack.c.h.b16 %v4689
    %v7374 = vunpack.c.l.b16 %v4690
    %v7375 = vunpack.c.h.b16 %v4690
    %v7376 = vunpack.c.l.b16 %v4691
    %v7377 = vunpack.c.h.b16 %v4691
    %v7378 = vunpack.c.l.b16 %v4692
    %v7379 = vunpack.c.h.b16 %v4692
    %v7380 = vunpack.c.l.b16 %v4693
    %v7381 = vunpack.c.h.b16 %v4693
    %v7382 = vunpack.c.l.b16 %v4694
    %v7383 = vunpack.c.h.b16 %v4694
    %v7384 = vunpack.c.l.b16 %v4695
    %v7385 = vunpack.c.h.b16 %v4695
    %v7386 = vunpack.c.l.b16 %v4696
    %v7387 = vunpack.c.h.b16 %v4696
    %v7388 = vunpack.c.l.b16 %v4697
    %v7389 = vunpack.c.h.b16 %v4697
    %v7390 = vunpack.c.l.b16 %v4698
    %v7391 = vunpack.c.h.b16 %v4698
    %v7392 = vunpack.c.l.b16 %v4699
    %v7393 = vunpack.c.h.b16 %v4699
    %v7394 = vunpack.c.l.b16 %v4700
    %v7395 = vunpack.c.h.b16 %v4700
    %v7396 = vunpack.c.l.b16 %v4701
    %v7397 = vunpack.c.h.b16 %v4701
    %v7398 = vunpack.c.l.b16 %v4702
    %v7399 = vunpack.c.h.b16 %v4702
    %v7400 = vunpack.c.l.b16 %v4703
    %v7401 = vunpack.c.h.b16 %v4703
    %v7402 = vunpack.c.l.b16 %v4704
    %v7403 = vunpack.c.h.b16 %v4704
    %v7404 = vunpack.c.l.b16 %v4705
    %v7405 = vunpack.c.h.b16 %v4705
    %v7406 = vunpack.c.l.b16 %v4706
    %v7407 = vunpack.c.h.b16 %v4706
    %v7408 = vunpack.c.l.b16 %v4707
    %v7409 = vunpack.c.h.b16 %v4707
    %v7410 = vunpack.c.l.b16 %v4708
    %v7411 = vunpack.c.h.b16 %v4708
    %v7412 = vunpack.c.l.b16 %v4709
    %v7413 = vunpack.c.h.b16 %v4709
    %v7414 = vunpack.c.l.b16 %v4710
    %v7415 = vunpack.c.h.b16 %v4710
    %v7416 = vunpack.c.l.b16 %v4711
    %v7417 = vunpack.c.h.b16 %v4711
    %v7418 = vunpack.c.l.b16 %v4712
    %v7419 = vunpack.c.h.b16 %v4712
    %v7420 = vunpack.c.l.b16 %v4713
    %v7421 = vunpack.c.h.b16 %v4713
    %v7422 = vunpack.c.l.b16 %v4714
    %v7423 = vunpack.c.h.b16 %v4714
    %v7424 = vunpack.c.l.b16 %v4715
    %v7425 = vunpack.c.h.b16 %v4715
    %v7426 = vunpack.c.l.b16 %v4716
    %v7427 = vunpack.c.h.b16 %v4716
    %v7428 = vunpack.c.l.b16 %v4717
    %v7429 = vunpack.c.h.b16 %v4717
    %v7430 = vunpack.c.l.b16 %v4718
    %v7431 = vunpack.c.h.b16 %v4718
    %v7432 = vunpack.c.l.b16 %v4719
    %v7433 = vunpack.c.h.b16 %v4719
    %v7434 = vunpack.c.l.b16 %v4720
    %v7435 = vunpack.c.h.b16 %v4720
    %v7436 = vunpack.c.l.b16 %v4721
    %v7437 = vunpack.c.h.b16 %v4721
    %v7438 = vunpack.c.l.b16 %v4722
    %v7439 = vunpack.c.h.b16 %v4722
    %v7440 = vunpack.c.l.b16 %v4723
    %v7441 = vunpack.c.h.b16 %v4723
    %v7442 = vunpack.c.l.b16 %v4724
    %v7443 = vunpack.c.h.b16 %v4724
    %v7444 = vunpack.c.l.b16 %v4725
    %v7445 = vunpack.c.h.b16 %v4725
    %v7446 = vunpack.c.l.b16 %v4726
    %v7447 = vunpack.c.h.b16 %v4726
    %v7448 = vunpack.c.l.b16 %v4727
    %v7449 = vunpack.c.h.b16 %v4727
    %v7450 = vunpack.c.l.b16 %v4728
    %v7451 = vunpack.c.h.b16 %v4728
    %v7452 = vunpack.c.l.b16 %v4729
    %v7453 = vunpack.c.h.b16 %v4729
    %v7454 = vunpack.c.l.b16 %v4730
    %v7455 = vunpack.c.h.b16 %v4730
    %v7456 = vunpack.c.l.b16 %v4731
    %v7457 = vunpack.c.h.b16 %v4731
    %v7458 = vunpack.c.l.b16 %v4732
    %v7459 = vunpack.c.h.b16 %v4732
    %v7460 = vunpack.c.l.b16 %v4733
    %v7461 = vunpack.c.h.b16 %v4733
    %v7462 = vunpack.c.l.b16 %v4734
    %v7463 = vunpack.c.h.b16 %v4734
    %v7464 = vunpack.c.l.b16 %v4735
    %v7465 = vunpack.c.h.b16 %v4735
    %v7466 = vunpack.c.l.b16 %v4736
    %v7467 = vunpack.c.h.b16 %v4736
    %v7468 = vunpack.c.l.b16 %v4737
    %v7469 = vunpack.c.h.b16 %v4737
    %v7470 = vunpack.c.l.b16 %v4738
    %v7471 = vunpack.c.h.b16 %v4738
    %v7472 = vunpack.c.l.b16 %v4739
    %v7473 = vunpack.c.h.b16 %v4739
    %v7474 = vunpack.c.l.b16 %v4740
    %v7475 = vunpack.c.h.b16 %v4740
    %v7476 = vunpack.c.l.b16 %v4741
    %v7477 = vunpack.c.h.b16 %v4741
    %v7478 = vunpack.c.l.b16 %v4742
    %v7479 = vunpack.c.h.b16 %v4742
    %v7480 = vunpack.c.l.b16 %v4743
    %v7481 = vunpack.c.h.b16 %v4743
    %v7482 = vunpack.c.l.b16 %v4744
    %v7483 = vunpack.c.h.b16 %v4744
    %v7484 = vunpack.c.l.b16 %v4745
    %v7485 = vunpack.c.h.b16 %v4745
    %v7486 = vunpack.c.l.b16 %v4746
    %v7487 = vunpack.c.h.b16 %v4746
    %v7488 = vunpack.c.l.b16 %v4747
    %v7489 = vunpack.c.h.b16 %v4747
    %v7490 = vunpack.c.l.b16 %v4748
    %v7491 = vunpack.c.h.b16 %v4748
    %v7492 = vunpack.c.l.b16 %v4749
    %v7493 = vunpack.c.h.b16 %v4749
    %v7494 = vunpack.c.l.b16 %v4750
    %v7495 = vunpack.c.h.b16 %v4750
    %v7496 = vunpack.c.l.b16 %v4751
    %v7497 = vunpack.c.h.b16 %v4751
    %v7498 = vunpack.c.l.b16 %v4752
    %v7499 = vunpack.c.h.b16 %v4752
    %v7500 = vunpack.c.l.b16 %v4753
    %v7501 = vunpack.c.h.b16 %v4753
    %v7502 = vunpack.c.l.b16 %v4754
    %v7503 = vunpack.c.h.b16 %v4754
    %v7504 = vunpack.c.l.b16 %v4755
    %v7505 = vunpack.c.h.b16 %v4755
    %v7506 = vunpack.c.l.b16 %v4756
    %v7507 = vunpack.c.h.b16 %v4756
    %v7508 = vunpack.c.l.b16 %v4757
    %v7509 = vunpack.c.h.b16 %v4757
    %v7510 = vunpack.c.l.b16 %v4758
    %v7511 = vunpack.c.h.b16 %v4758
    %v7512 = vunpack.c.l.b16 %v4759
    %v7513 = vunpack.c.h.b16 %v4759
    %v7514 = vunpack.c.l.b16 %v4760
    %v7515 = vunpack.c.h.b16 %v4760
    %v7516 = vunpack.c.l.b16 %v4761
    %v7517 = vunpack.c.h.b16 %v4761
    %v7518 = vunpack.c.l.b16 %v4762
    %v7519 = vunpack.c.h.b16 %v4762
    %v7520 = vunpack.c.l.b16 %v4763
    %v7521 = vunpack.c.h.b16 %v4763
    %v7522 = vunpack.c.l.b16 %v4764
    %v7523 = vunpack.c.h.b16 %v4764
    %v7524 = vunpack.c.l.b16 %v4765
    %v7525 = vunpack.c.h.b16 %v4765
    %v7526 = vunpack.c.l.b16 %v4766
    %v7527 = vunpack.c.h.b16 %v4766
    %v7528 = vunpack.c.l.b16 %v4767
    %v7529 = vunpack.c.h.b16 %v4767
    %v7530 = vunpack.c.l.b16 %v4768
    %v7531 = vunpack.c.h.b16 %v4768
    %v7532 = vunpack.c.l.b16 %v4769
    %v7533 = vunpack.c.h.b16 %v4769
    %v7534 = vunpack.c.l.b16 %v4770
    %v7535 = vunpack.c.h.b16 %v4770
    %v7536 = vunpack.c.l.b16 %v4771
    %v7537 = vunpack.c.h.b16 %v4771
    %v7538 = vunpack.c.l.b16 %v4772
    %v7539 = vunpack.c.h.b16 %v4772
    %v7540 = vunpack.c.l.b16 %v4773
    %v7541 = vunpack.c.h.b16 %v4773
    %v7542 = vunpack.c.l.b16 %v4774
    %v7543 = vunpack.c.h.b16 %v4774
    %v7544 = vunpack.c.l.b16 %v4775
    %v7545 = vunpack.c.h.b16 %v4775
    %v7546 = vunpack.c.l.b16 %v4776
    %v7547 = vunpack.c.h.b16 %v4776
    %v7548 = vunpack.c.l.b16 %v4777
    %v7549 = vunpack.c.h.b16 %v4777
    %v7550 = vunpack.c.l.b16 %v4778
    %v7551 = vunpack.c.h.b16 %v4778
    %v7552 = vunpack.c.l.b16 %v4779
    %v7553 = vunpack.c.h.b16 %v4779
    %v7554 = vunpack.c.l.b16 %v4780
    %v7555 = vunpack.c.h.b16 %v4780
    %v7556 = vunpack.c.l.b16 %v4781
    %v7557 = vunpack.c.h.b16 %v4781
    %v7558 = vunpack.c.l.b16 %v4782
    %v7559 = vunpack.c.h.b16 %v4782
    %v7560 = vunpack.c.l.b16 %v4783
    %v7561 = vunpack.c.h.b16 %v4783
    %v7562 = vunpack.c.l.b16 %v4784
    %v7563 = vunpack.c.h.b16 %v4784
    %v7564 = vunpack.c.l.b16 %v4785
    %v7565 = vunpack.c.h.b16 %v4785
    %v7566 = vunpack.c.l.b16 %v4786
    %v7567 = vunpack.c.h.b16 %v4786
    %v7568 = vunpack.c.l.b16 %v4787
    %v7569 = vunpack.c.h.b16 %v4787
    %v7570 = vunpack.c.l.b16 %v4788
    %v7571 = vunpack.c.h.b16 %v4788
    %v7572 = vunpack.c.l.b16 %v4789
    %v7573 = vunpack.c.h.b16 %v4789
    %v7574 = vunpack.c.l.b16 %v4790
    %v7575 = vunpack.c.h.b16 %v4790
    %v7576 = vunpack.c.l.b16 %v4791
    %v7577 = vunpack.c.h.b16 %v4791
    %v7578 = vunpack.c.l.b16 %v4792
    %v7579 = vunpack.c.h.b16 %v4792
    %v7580 = vunpack.c.l.b16 %v4793
    %v7581 = vunpack.c.h.b16 %v4793
    %v7582 = vunpack.c.l.b16 %v4794
    %v7583 = vunpack.c.h.b16 %v4794
    %v7584 = vunpack.c.l.b16 %v4795
    %v7585 = vunpack.c.h.b16 %v4795
    %v7586 = vunpack.c.l.b16 %v4796
    %v7587 = vunpack.c.h.b16 %v4796
    %v7588 = vunpack.c.l.b16 %v4797
    %v7589 = vunpack.c.h.b16 %v4797
    %v7590 = vunpack.c.l.b16 %v4798
    %v7591 = vunpack.c.h.b16 %v4798
    %v7592 = vunpack.c.l.b16 %v4799
    %v7593 = vunpack.c.h.b16 %v4799
    %v7594 = vunpack.c.l.b16 %v4800
    %v7595 = vunpack.c.h.b16 %v4800
    %v7596 = vunpack.c.l.b16 %v4801
    %v7597 = vunpack.c.h.b16 %v4801
    %v7598 = vunpack.c.l.b16 %v4802
    %v7599 = vunpack.c.h.b16 %v4802
    %v7600 = vunpack.c.l.b16 %v4803
    %v7601 = vunpack.c.h.b16 %v4803
    %v7602 = vunpack.c.l.b16 %v4804
    %v7603 = vunpack.c.h.b16 %v4804
    %v7604 = vunpack.c.l.b16 %v4805
    %v7605 = vunpack.c.h.b16 %v4805
    %v7606 = vunpack.c.l.b16 %v4806
    %v7607 = vunpack.c.h.b16 %v4806
    %v7608 = vunpack.c.l.b16 %v4807
    %v7609 = vunpack.c.h.b16 %v4807
    %v7610 = vunpack.c.l.b16 %v4808
    %v7611 = vunpack.c.h.b16 %v4808
    %v7612 = vunpack.c.l.b16 %v4809
    %v7613 = vunpack.c.h.b16 %v4809
    %v7614 = vunpack.c.l.b16 %v4810
    %v7615 = vunpack.c.h.b16 %v4810
    %v7616 = vunpack.c.l.b16 %v4811
    %v7617 = vunpack.c.h.b16 %v4811
    %v7618 = vunpack.c.l.b16 %v4812
    %v7619 = vunpack.c.h.b16 %v4812
    %v7620 = vunpack.c.l.b16 %v4813
    %v7621 = vunpack.c.h.b16 %v4813
    %v7622 = vunpack.c.l.b16 %v4814
    %v7623 = vunpack.c.h.b16 %v4814
    %v7624 = vunpack.c.l.b16 %v4815
    %v7625 = vunpack.c.h.b16 %v4815
    %v7626 = vunpack.c.l.b16 %v4816
    %v7627 = vunpack.c.h.b16 %v4816
    %v7628 = vunpack.c.l.b16 %v4817
    %v7629 = vunpack.c.h.b16 %v4817
    %v7630 = vunpack.c.l.b16 %v4818
    %v7631 = vunpack.c.h.b16 %v4818
    %v7632 = vunpack.c.l.b16 %v4819
    %v7633 = vunpack.c.h.b16 %v4819
    %v7634 = vunpack.c.l.b16 %v4820
    %v7635 = vunpack.c.h.b16 %v4820
    %v7636 = vunpack.c.l.b16 %v4821
    %v7637 = vunpack.c.h.b16 %v4821
    %v7638 = vunpack.c.l.b16 %v4822
    %v7639 = vunpack.c.h.b16 %v4822
    %v7640 = vunpack.c.l.b16 %v4823
    %v7641 = vunpack.c.h.b16 %v4823
    %v7642 = vunpack.c.l.b16 %v4824
    %v7643 = vunpack.c.h.b16 %v4824
    %v7644 = vunpack.c.l.b16 %v4825
    %v7645 = vunpack.c.h.b16 %v4825
    %v7646 = vunpack.c.l.b16 %v4826
    %v7647 = vunpack.c.h.b16 %v4826
    %v7648 = vunpack.c.l.b16 %v4827
    %v7649 = vunpack.c.h.b16 %v4827
    %v7650 = vunpack.c.l.b16 %v4828
    %v7651 = vunpack.c.h.b16 %v4828
    %v7652 = vunpack.c.l.b16 %v4829
    %v7653 = vunpack.c.h.b16 %v4829
    %v7654 = vunpack.c.l.b16 %v4830
    %v7655 = vunpack.c.h.b16 %v4830
    %v7656 = vunpack.c.l.b16 %v4831
    %v7657 = vunpack.c.h.b16 %v4831
    %v7658 = vunpack.c.l.b16 %v4832
    %v7659 = vunpack.c.h.b16 %v4832
    %v7660 = vunpack.c.l.b16 %v4833
    %v7661 = vunpack.c.h.b16 %v4833
    %v7662 = vunpack.c.l.b16 %v4834
    %v7663 = vunpack.c.h.b16 %v4834
    %v7664 = vunpack.c.l.b16 %v4835
    %v7665 = vunpack.c.h.b16 %v4835
    %v7666 = vunpack.c.l.b16 %v4836
    %v7667 = vunpack.c.h.b16 %v4836
    %v7668 = vunpack.c.l.b16 %v4837
    %v7669 = vunpack.c.h.b16 %v4837
    %v7670 = vunpack.c.l.b16 %v4838
    %v7671 = vunpack.c.h.b16 %v4838
    %v7672 = vunpack.c.l.b16 %v4839
    %v7673 = vunpack.c.h.b16 %v4839
    %v7674 = vunpack.c.l.b16 %v4840
    %v7675 = vunpack.c.h.b16 %v4840
    %v7676 = vunpack.c.l.b16 %v4841
    %v7677 = vunpack.c.h.b16 %v4841
    %v7678 = vunpack.c.l.b16 %v4842
    %v7679 = vunpack.c.h.b16 %v4842
    %v7680 = vunpack.c.l.b16 %v4843
    %v7681 = vunpack.c.h.b16 %v4843
    %v7682 = vunpack.c.l.b16 %v4844
    %v7683 = vunpack.c.h.b16 %v4844
    %v7684 = vunpack.c.l.b16 %v4845
    %v7685 = vunpack.c.h.b16 %v4845
    %v7686 = vunpack.c.l.b16 %v4846
    %v7687 = vunpack.c.h.b16 %v4846
    %v7688 = vunpack.c.l.b16 %v4847
    %v7689 = vunpack.c.h.b16 %v4847
    %v7690 = vunpack.c.l.b16 %v4848
    %v7691 = vunpack.c.h.b16 %v4848
    %v7692 = vunpack.c.l.b16 %v4849
    %v7693 = vunpack.c.h.b16 %v4849
    %v7694 = vunpack.c.l.b16 %v4850
    %v7695 = vunpack.c.h.b16 %v4850
    %v7696 = vunpack.c.l.b16 %v4851
    %v7697 = vunpack.c.h.b16 %v4851
    %v7698 = vunpack.c.l.b16 %v4852
    %v7699 = vunpack.c.h.b16 %v4852
    %v7700 = vunpack.c.l.b16 %v4853
    %v7701 = vunpack.c.h.b16 %v4853
    %v7702 = vunpack.c.l.b16 %v4854
    %v7703 = vunpack.c.h.b16 %v4854
    %v7704 = vunpack.c.l.b16 %v4855
    %v7705 = vunpack.c.h.b16 %v4855
    %v7706 = vunpack.c.l.b16 %v4856
    %v7707 = vunpack.c.h.b16 %v4856
    %v7708 = vunpack.c.l.b16 %v4857
    %v7709 = vunpack.c.h.b16 %v4857
    %v7710 = vunpack.c.l.b16 %v4858
    %v7711 = vunpack.c.h.b16 %v4858
    %v7712 = vunpack.c.l.b16 %v4859
    %v7713 = vunpack.c.h.b16 %v4859
    %v7714 = vunpack.c.l.b16 %v4860
    %v7715 = vunpack.c.h.b16 %v4860
    %v7716 = vunpack.c.l.b16 %v4861
    %v7717 = vunpack.c.h.b16 %v4861
    %v7718 = vunpack.c.l.b16 %v4862
    %v7719 = vunpack.c.h.b16 %v4862
    %v7720 = vunpack.c.l.b16 %v4863
    %v7721 = vunpack.c.h.b16 %v4863
    %v7722 = vunpack.c.l.b16 %v4864
    %v7723 = vunpack.c.h.b16 %v4864
    %v7724 = vunpack.c.l.b16 %v4865
    %v7725 = vunpack.c.h.b16 %v4865
    %v7726 = vunpack.c.l.b16 %v4866
    %v7727 = vunpack.c.h.b16 %v4866
    %v7728 = vunpack.c.l.b16 %v4867
    %v7729 = vunpack.c.h.b16 %v4867
    %v7730 = vunpack.c.l.b16 %v4868
    %v7731 = vunpack.c.h.b16 %v4868
    %v7732 = vunpack.c.l.b16 %v4869
    %v7733 = vunpack.c.h.b16 %v4869
    %v7734 = vunpack.c.l.b16 %v4870
    %v7735 = vunpack.c.h.b16 %v4870
    %v7736 = vunpack.c.l.b16 %v4871
    %v7737 = vunpack.c.h.b16 %v4871
    %v7738 = vunpack.c.l.b16 %v4872
    %v7739 = vunpack.c.h.b16 %v4872
    %v7740 = vunpack.c.l.b16 %v4873
    %v7741 = vunpack.c.h.b16 %v4873
    %v7742 = vunpack.c.l.b16 %v4874
    %v7743 = vunpack.c.h.b16 %v4874
    %v7744 = vunpack.c.l.b16 %v4875
    %v7745 = vunpack.c.h.b16 %v4875
    %v7746 = vunpack.c.l.b16 %v4876
    %v7747 = vunpack.c.h.b16 %v4876
    %v7748 = vunpack.c.l.b16 %v4877
    %v7749 = vunpack.c.h.b16 %v4877
    %v7750 = vunpack.c.l.b16 %v4878
    %v7751 = vunpack.c.h.b16 %v4878
    %v7752 = vunpack.c.l.b16 %v4879
    %v7753 = vunpack.c.h.b16 %v4879
    %v7754 = vunpack.c.l.b16 %v4880
    %v7755 = vunpack.c.h.b16 %v4880
    %v7756 = vunpack.c.l.b16 %v4881
    %v7757 = vunpack.c.h.b16 %v4881
    %v7758 = vunpack.c.l.b16 %v4882
    %v7759 = vunpack.c.h.b16 %v4882
    %v7760 = vunpack.c.l.b16 %v4883
    %v7761 = vunpack.c.h.b16 %v4883
    %v7762 = vunpack.c.l.b16 %v4884
    %v7763 = vunpack.c.h.b16 %v4884
    %v7764 = vunpack.c.l.b16 %v4885
    %v7765 = vunpack.c.h.b16 %v4885
    %v7766 = vunpack.c.l.b16 %v4886
    %v7767 = vunpack.c.h.b16 %v4886
    %v7768 = vunpack.c.l.b16 %v4887
    %v7769 = vunpack.c.h.b16 %v4887
    %v7770 = vunpack.c.l.b16 %v4888
    %v7771 = vunpack.c.h.b16 %v4888
    %v7772 = vunpack.c.l.b16 %v4889
    %v7773 = vunpack.c.h.b16 %v4889
    %v7774 = vunpack.c.l.b16 %v4890
    %v7775 = vunpack.c.h.b16 %v4890
    %v7776 = vunpack.c.l.b16 %v4891
    %v7777 = vunpack.c.h.b16 %v4891
    %v7778 = vunpack.c.l.b16 %v4892
    %v7779 = vunpack.c.h.b16 %v4892
    %v7780 = vunpack.c.l.b16 %v4893
    %v7781 = vunpack.c.h.b16 %v4893
    %v7782 = vunpack.c.l.b16 %v4894
    %v7783 = vunpack.c.h.b16 %v4894
    %v7784 = vunpack.c.l.b16 %v4895
    %v7785 = vunpack.c.h.b16 %v4895
    %v7786 = vunpack.c.l.b16 %v4896
    %v7787 = vunpack.c.h.b16 %v4896
    %v7788 = vunpack.c.l.b16 %v4897
    %v7789 = vunpack.c.h.b16 %v4897
    %v7790 = vunpack.c.l.b16 %v4898
    %v7791 = vunpack.c.h.b16 %v4898
    %v7792 = vunpack.c.l.b16 %v4899
    %v7793 = vunpack.c.h.b16 %v4899
    %v7794 = vunpack.c.l.b16 %v4900
    %v7795 = vunpack.c.h.b16 %v4900
    %v7796 = vunpack.c.l.b16 %v4901
    %v7797 = vunpack.c.h.b16 %v4901
    %v7798 = vunpack.c.l.b16 %v4902
    %v7799 = vunpack.c.h.b16 %v4902
    %v7800 = vunpack.c.l.b16 %v4903
    %v7801 = vunpack.c.h.b16 %v4903
    %v7802 = vunpack.c.l.b16 %v4904
    %v7803 = vunpack.c.h.b16 %v4904
    %v7804 = vunpack.c.l.b16 %v4905
    %v7805 = vunpack.c.h.b16 %v4905
    %v7806 = vunpack.c.l.b16 %v4906
    %v7807 = vunpack.c.h.b16 %v4906
    %v7808 = vunpack.c.l.b16 %v4907
    %v7809 = vunpack.c.h.b16 %v4907
    %v7810 = vunpack.c.l.b16 %v4908
    %v7811 = vunpack.c.h.b16 %v4908
    %v7812 = vunpack.c.l.b16 %v4909
    %v7813 = vunpack.c.h.b16 %v4909
    %v7814 = vunpack.c.l.b16 %v4910
    %v7815 = vunpack.c.h.b16 %v4910
    %v7816 = vunpack.c.l.b16 %v4911
    %v7817 = vunpack.c.h.b16 %v4911
    %v7818 = vunpack.c.l.b16 %v4912
    %v7819 = vunpack.c.h.b16 %v4912
    %v7820 = vunpack.c.l.b16 %v4913
    %v7821 = vunpack.c.h.b16 %v4913
    %v7822 = vunpack.c.l.b16 %v4914
    %v7823 = vunpack.c.h.b16 %v4914
    %v7824 = vunpack.c.l.b16 %v4915
    %v7825 = vunpack.c.h.b16 %v4915
    %v7826 = vunpack.c.l.b16 %v4916
    %v7827 = vunpack.c.h.b16 %v4916
    %v7828 = vunpack.c.l.b16 %v4917
    %v7829 = vunpack.c.h.b16 %v4917
    %v7830 = vunpack.c.l.b16 %v4918
    %v7831 = vunpack.c.h.b16 %v4918
    %v7832 = vunpack.c.l.b16 %v4919
    %v7833 = vunpack.c.h.b16 %v4919
    %v7834 = vunpack.c.l.b16 %v4920
    %v7835 = vunpack.c.h.b16 %v4920
    %v7836 = vunpack.c.l.b16 %v4921
    %v7837 = vunpack.c.h.b16 %v4921
    %v7838 = vunpack.c.l.b16 %v4922
    %v7839 = vunpack.c.h.b16 %v4922
    %v7840 = vunpack.c.l.b16 %v4923
    %v7841 = vunpack.c.h.b16 %v4923
    %v7842 = vunpack.c.l.b16 %v4924
    %v7843 = vunpack.c.h.b16 %v4924
    %v7844 = vunpack.c.l.b16 %v4925
    %v7845 = vunpack.c.h.b16 %v4925
    %v7846 = vunpack.c.l.b16 %v4926
    %v7847 = vunpack.c.h.b16 %v4926
    %v7848 = vunpack.c.l.b16 %v4927
    %v7849 = vunpack.c.h.b16 %v4927
    %v7850 = vunpack.c.l.b16 %v4928
    %v7851 = vunpack.c.h.b16 %v4928
    %v7852 = vunpack.c.l.b16 %v4929
    %v7853 = vunpack.c.h.b16 %v4929
    %v7854 = vunpack.c.l.b16 %v4930
    %v7855 = vunpack.c.h.b16 %v4930
    %v7856 = vunpack.c.l.b16 %v4931
    %v7857 = vunpack.c.h.b16 %v4931
    %v7858 = vunpack.c.l.b16 %v4932
    %v7859 = vunpack.c.h.b16 %v4932
    %v7860 = vunpack.c.l.b16 %v4933
    %v7861 = vunpack.c.h.b16 %v4933
    %v7862 = vunpack.c.l.b16 %v4934
    %v7863 = vunpack.c.h.b16 %v4934
    %v7864 = vunpack.c.l.b16 %v4935
    %v7865 = vunpack.c.h.b16 %v4935
    %v7866 = vunpack.c.l.b16 %v4936
    %v7867 = vunpack.c.h.b16 %v4936
    %v7868 = vunpack.c.l.b16 %v4937
    %v7869 = vunpack.c.h.b16 %v4937
    %v7870 = vunpack.c.l.b16 %v4938
    %v7871 = vunpack.c.h.b16 %v4938
    %v7872 = vunpack.c.l.b16 %v4939
    %v7873 = vunpack.c.h.b16 %v4939
    %v7874 = vunpack.c.l.b16 %v4940
    %v7875 = vunpack.c.h.b16 %v4940
    %v7876 = vunpack.c.l.b16 %v4941
    %v7877 = vunpack.c.h.b16 %v4941
    %v7878 = vunpack.c.l.b16 %v4942
    %v7879 = vunpack.c.h.b16 %v4942
    %v7880 = vunpack.c.l.b16 %v4943
    %v7881 = vunpack.c.h.b16 %v4943
    %v7882 = vunpack.c.l.b16 %v4944
    %v7883 = vunpack.c.h.b16 %v4944
    %v7884 = vunpack.c.l.b16 %v4945
    %v7885 = vunpack.c.h.b16 %v4945
    %v7886 = vunpack.c.l.b16 %v4946
    %v7887 = vunpack.c.h.b16 %v4946
    %v7888 = vunpack.c.l.b16 %v4947
    %v7889 = vunpack.c.h.b16 %v4947
    %v7890 = vunpack.c.l.b16 %v4948
    %v7891 = vunpack.c.h.b16 %v4948
    %v7892 = vunpack.c.l.b16 %v4949
    %v7893 = vunpack.c.h.b16 %v4949
    %v7894 = vunpack.c.l.b16 %v4950
    %v7895 = vunpack.c.h.b16 %v4950
    %v7896 = vunpack.c.l.b16 %v4951
    %v7897 = vunpack.c.h.b16 %v4951
    %v7898 = vunpack.c.l.b16 %v4952
    %v7899 = vunpack.c.h.b16 %v4952
    %v7900 = vunpack.c.l.b16 %v4953
    %v7901 = vunpack.c.h.b16 %v4953
    %v7902 = vunpack.c.l.b16 %v4954
    %v7903 = vunpack.c.h.b16 %v4954
    %v7904 = vunpack.c.l.b16 %v4955
    %v7905 = vunpack.c.h.b16 %v4955
    %v7906 = vunpack.c.l.b16 %v4956
    %v7907 = vunpack.c.h.b16 %v4956
    %v7908 = vunpack.c.l.b16 %v4957
    %v7909 = vunpack.c.h.b16 %v4957
    %v7910 = vunpack.c.l.b16 %v4958
    %v7911 = vunpack.c.h.b16 %v4958
    %v7912 = vunpack.c.l.b16 %v4959
    %v7913 = vunpack.c.h.b16 %v4959
    %v7914 = vunpack.c.l.b16 %v4960
    %v7915 = vunpack.c.h.b16 %v4960
    %v7916 = vunpack.c.l.b16 %v4961
    %v7917 = vunpack.c.h.b16 %v4961
    %v7918 = vunpack.c.l.b16 %v4962
    %v7919 = vunpack.c.h.b16 %v4962
    %v7920 = vunpack.c.l.b16 %v4963
    %v7921 = vunpack.c.h.b16 %v4963
    %v7922 = vunpack.c.l.b16 %v4964
    %v7923 = vunpack.c.h.b16 %v4964
    %v7924 = vunpack.c.l.b16 %v4965
    %v7925 = vunpack.c.h.b16 %v4965
    %v7926 = vunpack.c.l.b16 %v4966
    %v7927 = vunpack.c.h.b16 %v4966
    %v7928 = vunpack.c.l.b16 %v4967
    %v7929 = vunpack.c.h.b16 %v4967
    %v7930 = vunpack.c.l.b16 %v4968
    %v7931 = vunpack.c.h.b16 %v4968
    %v7932 = vunpack.c.l.b16 %v4969
    %v7933 = vunpack.c.h.b16 %v4969
    %v7934 = vunpack.c.l.b16 %v4970
    %v7935 = vunpack.c.h.b16 %v4970
    %v7936 = vunpack.c.l.b16 %v4971
    %v7937 = vunpack.c.h.b16 %v4971
    %v7938 = vunpack.c.l.b16 %v4972
    %v7939 = vunpack.c.h.b16 %v4972
    %v7940 = vunpack.c.l.b16 %v4973
    %v7941 = vunpack.c.h.b16 %v4973
    %v7942 = vunpack.c.l.b16 %v4974
    %v7943 = vunpack.c.h.b16 %v4974
    %v7944 = vunpack.c.l.b16 %v4975
    %v7945 = vunpack.c.h.b16 %v4975
    %v7946 = vunpack.c.l.b16 %v4976
    %v7947 = vunpack.c.h.b16 %v4976
    %v7948 = vunpack.c.l.b16 %v4977
    %v7949 = vunpack.c.h.b16 %v4977
    %v7950 = vunpack.c.l.b16 %v4978
    %v7951 = vunpack.c.h.b16 %v4978
    %v7952 = vunpack.c.l.b16 %v4979
    %v7953 = vunpack.c.h.b16 %v4979
    %v7954 = vunpack.c.l.b16 %v4980
    %v7955 = vunpack.c.h.b16 %v4980
    %v7956 = vunpack.c.l.b16 %v4981
    %v7957 = vunpack.c.h.b16 %v4981
    %v7958 = vunpack.c.l.b16 %v4982
    %v7959 = vunpack.c.h.b16 %v4982
    %v7960 = vunpack.c.l.b16 %v4983
    %v7961 = vunpack.c.h.b16 %v4983
    %v7962 = vunpack.c.l.b16 %v4984
    %v7963 = vunpack.c.h.b16 %v4984
    %v7964 = vunpack.c.l.b16 %v4985
    %v7965 = vunpack.c.h.b16 %v4985
    %v7966 = vunpack.c.l.b16 %v4986
    %v7967 = vunpack.c.h.b16 %v4986
    %v7968 = vunpack.c.l.b16 %v4987
    %v7969 = vunpack.c.h.b16 %v4987
    %v7970 = vunpack.c.l.b16 %v4988
    %v7971 = vunpack.c.h.b16 %v4988
    %v7972 = vunpack.c.l.b16 %v4989
    %v7973 = vunpack.c.h.b16 %v4989
    %v7974 = vunpack.c.l.b16 %v4990
    %v7975 = vunpack.c.h.b16 %v4990
    %v7976 = vunpack.c.l.b16 %v4991
    %v7977 = vunpack.c.h.b16 %v4991
    %v7978 = vunpack.c.l.b16 %v4992
    %v7979 = vunpack.c.h.b16 %v4992
    %v7980 = vunpack.c.l.b16 %v4993
    %v7981 = vunpack.c.h.b16 %v4993
    %v7982 = vunpack.c.l.b16 %v4994
    %v7983 = vunpack.c.h.b16 %v4994
    %v7984 = vunpack.c.l.b16 %v4995
    %v7985 = vunpack.c.h.b16 %v4995
    %v7986 = vunpack.c.l.b16 %v4996
    %v7987 = vunpack.c.h.b16 %v4996
    %v7988 = vunpack.c.l.b16 %v4997
    %v7989 = vunpack.c.h.b16 %v4997
    %v7990 = vunpack.c.l.b16 %v4998
    %v7991 = vunpack.c.h.b16 %v4998
    %v7992 = vunpack.c.l.b16 %v4999
    %v7993 = vunpack.c.h.b16 %v4999
    %v7994 = vunpack.c.l.b16 %v5000
    %v7995 = vunpack.c.h.b16 %v5000
    %v7996 = vunpack.c.l.b16 %v5001
    %v7997 = vunpack.c.h.b16 %v5001
    %v7998 = vunpack.c.l.b16 %v5002
    %v7999 = vunpack.c.h.b16 %v5002
    %v8000 = vunpack.c.l.b16 %v5003
    %v8001 = vunpack.c.h.b16 %v5003
    %v8002 = vunpack.c.l.b16 %v5004
    %v8003 = vunpack.c.h.b16 %v5004
    %v8004 = vunpack.c.l.b16 %v5005
    %v8005 = vunpack.c.h.b16 %v5005
    %v8006 = vunpack.c.l.b16 %v5006
    %v8007 = vunpack.c.h.b16 %v5006
    %v8008 = vunpack.c.l.b16 %v5007
    %v8009 = vunpack.c.h.b16 %v5007
    %v8010 = vunpack.c.l.b16 %v5008
    %v8011 = vunpack.c.h.b16 %v5008
    %v8012 = vunpack.c.l.b16 %v5009
    %v8013 = vunpack.c.h.b16 %v5009
    %v8014 = vunpack.c.l.b16 %v5010
    %v8015 = vunpack.c.h.b16 %v5010
    %v8016 = vunpack.c.l.b16 %v5011
    %v8017 = vunpack.c.h.b16 %v5011
    %v8018 = vunpack.c.l.b16 %v5012
    %v8019 = vunpack.c.h.b16 %v5012
    %v8020 = vunpack.c.l.b16 %v5013
    %v8021 = vunpack.c.h.b16 %v5013
    %v8022 = vunpack.c.l.b16 %v5014
    %v8023 = vunpack.c.h.b16 %v5014
    %v8024 = vunpack.c.l.b16 %v5015
    %v8025 = vunpack.c.h.b16 %v5015
    %v8026 = vunpack.c.l.b16 %v5016
    %v8027 = vunpack.c.h.b16 %v5016
    %v8028 = vunpack.c.l.b16 %v5017
    %v8029 = vunpack.c.h.b16 %v5017
    %v8030 = vunpack.c.l.b16 %v5018
    %v8031 = vunpack.c.h.b16 %v5018
    %v8032 = vunpack.c.l.b16 %v5019
    %v8033 = vunpack.c.h.b16 %v5019
    %v8034 = vunpack.c.l.b16 %v5020
    %v8035 = vunpack.c.h.b16 %v5020
    %v8036 = vunpack.c.l.b16 %v5021
    %v8037 = vunpack.c.h.b16 %v5021
    %v8038 = vunpack.c.l.b16 %v5022
    %v8039 = vunpack.c.h.b16 %v5022
    %v8040 = vunpack.c.l.b16 %v5023
    %v8041 = vunpack.c.h.b16 %v5023
    %v8042 = vunpack.c.l.b16 %v5024
    %v8043 = vunpack.c.h.b16 %v5024
    %v8044 = vunpack.c.l.b16 %v5025
    %v8045 = vunpack.c.h.b16 %v5025
    %v8046 = vunpack.c.l.b16 %v5026
    %v8047 = vunpack.c.h.b16 %v5026
    %v8048 = vunpack.c.l.b16 %v5027
    %v8049 = vunpack.c.h.b16 %v5027
    %v8050 = vunpack.c.l.b16 %v5028
    %v8051 = vunpack.c.h.b16 %v5028
    %v8052 = vunpack.c.l.b16 %v5029
    %v8053 = vunpack.c.h.b16 %v5029
    %v8054 = vunpack.c.l.b16 %v5030
    %v8055 = vunpack.c.h.b16 %v5030
    %v8056 = vunpack.c.l.b16 %v5031
    %v8057 = vunpack.c.h.b16 %v5031
    %v8058 = vunpack.c.l.b16 %v5032
    %v8059 = vunpack.c.h.b16 %v5032
    %v8060 = vunpack.c.l.b16 %v5033
    %v8061 = vunpack.c.h.b16 %v5033
    %v8062 = vunpack.c.l.b16 %v5034
    %v8063 = vunpack.c.h.b16 %v5034
    %v8064 = vunpack.c.l.b16 %v5035
    %v8065 = vunpack.c.h.b16 %v5035
    %v8066 = vunpack.c.l.b16 %v5036
    %v8067 = vunpack.c.h.b16 %v5036
    %v8068 = vunpack.c.l.b16 %v5037
    %v8069 = vunpack.c.h.b16 %v5037
    %v8070 = vunpack.c.l.b16 %v5038
    %v8071 = vunpack.c.h.b16 %v5038
    %v8072 = vunpack.c.l.b16 %v5039
    %v8073 = vunpack.c.h.b16 %v5039
    %v8074 = vunpack.c.l.b16 %v5040
    %v8075 = vunpack.c.h.b16 %v5040
    %v8076 = vunpack.c.l.b16 %v5041
    %v8077 = vunpack.c.h.b16 %v5041
    %v8078 = vunpack.c.l.b16 %v5042
    %v8079 = vunpack.c.h.b16 %v5042
    %v8080 = vunpack.c.l.b16 %v5043
    %v8081 = vunpack.c.h.b16 %v5043
    %v8082 = vunpack.c.l.b16 %v5044
    %v8083 = vunpack.c.h.b16 %v5044
    %v8084 = vunpack.c.l.b16 %v5045
    %v8085 = vunpack.c.h.b16 %v5045
    %v8086 = vunpack.c.l.b16 %v5046
    %v8087 = vunpack.c.h.b16 %v5046
    %v8088 = vunpack.c.l.b16 %v5047
    %v8089 = vunpack.c.h.b16 %v5047
    %v8090 = vunpack.c.l.b16 %v5048
    %v8091 = vunpack.c.h.b16 %v5048
    %v8092 = vunpack.c.l.b16 %v5049
    %v8093 = vunpack.c.h.b16 %v5049
    %v8094 = vunpack.c.l.b16 %v5050
    %v8095 = vunpack.c.h.b16 %v5050
    %v8096 = vunpack.c.l.b16 %v5051
    %v8097 = vunpack.c.h.b16 %v5051
    %v8098 = vunpack.c.l.b16 %v5052
    %v8099 = vunpack.c.h.b16 %v5052
    %v8100 = vunpack.c.l.b16 %v5053
    %v8101 = vunpack.c.h.b16 %v5053
    %v8102 = vunpack.c.l.b16 %v5054
    %v8103 = vunpack.c.h.b16 %v5054
    %v8104 = vunpack.c.l.b16 %v5055
    %v8105 = vunpack.c.h.b16 %v5055
    %v8106 = vunpack.c.l.b16 %v5056
    %v8107 = vunpack.c.h.b16 %v5056
    %v8108 = vunpack.c.l.b16 %v5057
    %v8109 = vunpack.c.h.b16 %v5057
    %v8110 = vunpack.c.l.b16 %v5058
    %v8111 = vunpack.c.h.b16 %v5058
    %v8112 = vunpack.c.l.b16 %v5059
    %v8113 = vunpack.c.h.b16 %v5059
    %v8114 = vunpack.c.l.b16 %v5060
    %v8115 = vunpack.c.h.b16 %v5060
    %v8116 = vunpack.c.l.b16 %v5061
    %v8117 = vunpack.c.h.b16 %v5061
    %v8118 = vunpack.c.l.b16 %v5062
    %v8119 = vunpack.c.h.b16 %v5062
    %v8120 = vunpack.c.l.b16 %v5063
    %v8121 = vunpack.c.h.b16 %v5063
    %v8122 = vunpack.c.l.b16 %v5064
    %v8123 = vunpack.c.h.b16 %v5064
    %v8124 = vunpack.c.l.b16 %v5065
    %v8125 = vunpack.c.h.b16 %v5065
    %v8126 = vunpack.c.l.b16 %v5066
    %v8127 = vunpack.c.h.b16 %v5066
    %v8128 = vunpack.c.l.b16 %v5067
    %v8129 = vunpack.c.h.b16 %v5067
    %v8130 = vunpack.c.l.b16 %v5068
    %v8131 = vunpack.c.h.b16 %v5068
    %v8132 = vunpack.c.l.b16 %v5069
    %v8133 = vunpack.c.h.b16 %v5069
    %v8134 = vunpack.c.l.b16 %v5070
    %v8135 = vunpack.c.h.b16 %v5070
    %v8136 = vunpack.c.l.b16 %v5071
    %v8137 = vunpack.c.h.b16 %v5071
    %v8138 = vunpack.c.l.b16 %v5072
    %v8139 = vunpack.c.h.b16 %v5072
    %v8140 = vunpack.c.l.b16 %v5073
    %v8141 = vunpack.c.h.b16 %v5073
    %v8142 = vunpack.c.l.b16 %v5074
    %v8143 = vunpack.c.h.b16 %v5074
    %v8144 = vunpack.c.l.b16 %v5075
    %v8145 = vunpack.c.h.b16 %v5075
    %v8146 = vunpack.c.l.b16 %v5076
    %v8147 = vunpack.c.h.b16 %v5076
    %v8148 = vunpack.c.l.b16 %v5077
    %v8149 = vunpack.c.h.b16 %v5077
    %v8150 = vunpack.c.l.b16 %v5078
    %v8151 = vunpack.c.h.b16 %v5078
    %v8152 = vunpack.c.l.b16 %v5079
    %v8153 = vunpack.c.h.b16 %v5079
    %v8154 = vunpack.c.l.b16 %v5080
    %v8155 = vunpack.c.h.b16 %v5080
    %v8156 = vunpack.c.l.b16 %v5081
    %v8157 = vunpack.c.h.b16 %v5081
    %v8158 = vunpack.c.l.b16 %v5082
    %v8159 = vunpack.c.h.b16 %v5082
    %v8160 = vunpack.c.l.b16 %v5083
    %v8161 = vunpack.c.h.b16 %v5083
    %v8162 = vunpack.c.l.b16 %v5084
    %v8163 = vunpack.c.h.b16 %v5084
    %v8164 = vunpack.c.l.b16 %v5085
    %v8165 = vunpack.c.h.b16 %v5085
    %v8166 = vunpack.c.l.b16 %v5086
    %v8167 = vunpack.c.h.b16 %v5086
    %v8168 = vunpack.c.l.b16 %v5087
    %v8169 = vunpack.c.h.b16 %v5087
    %v8170 = vunpack.c.l.b16 %v5088
    %v8171 = vunpack.c.h.b16 %v5088
    %v8172 = vunpack.c.l.b16 %v5089
    %v8173 = vunpack.c.h.b16 %v5089
    %v8174 = vunpack.c.l.b16 %v5090
    %v8175 = vunpack.c.h.b16 %v5090
    %v8176 = vunpack.c.l.b16 %v5091
    %v8177 = vunpack.c.h.b16 %v5091
    %v8178 = vunpack.c.l.b16 %v5092
    %v8179 = vunpack.c.h.b16 %v5092
    %v8180 = vunpack.c.l.b16 %v5093
    %v8181 = vunpack.c.h.b16 %v5093
    %v8182 = vunpack.c.l.b16 %v5094
    %v8183 = vunpack.c.h.b16 %v5094
    %v8184 = vunpack.c.l.b16 %v5095
    %v8185 = vunpack.c.h.b16 %v5095
    %v8186 = vunpack.c.l.b16 %v5096
    %v8187 = vunpack.c.h.b16 %v5096
    %v8188 = vunpack.c.l.b16 %v5097
    %v8189 = vunpack.c.h.b16 %v5097
    %v8190 = vunpack.c.l.b16 %v5098
    %v8191 = vunpack.c.h.b16 %v5098
    %v8192 = vunpack.c.l.b16 %v5099
    %v8193 = vunpack.c.h.b16 %v5099
    %v8194 = vunpack.c.l.b16 %v5100
    %v8195 = vunpack.c.h.b16 %v5100
    %v8196 = vunpack.c.l.b16 %v5101
    %v8197 = vunpack.c.h.b16 %v5101
    %v8198 = vunpack.c.l.b16 %v5102
    %v8199 = vunpack.c.h.b16 %v5102
    %v8200 = vunpack.c.l.b16 %v5103
    %v8201 = vunpack.c.h.b16 %v5103
    %v8202 = vunpack.c.l.b16 %v5104
    %v8203 = vunpack.c.h.b16 %v5104
    %v8204 = vunpack.c.l.b16 %v5105
    %v8205 = vunpack.c.h.b16 %v5105
    %v8206 = vunpack.c.l.b16 %v5106
    %v8207 = vunpack.c.h.b16 %v5106
    %v8208 = vunpack.c.l.b16 %v5107
    %v8209 = vunpack.c.h.b16 %v5107
    %v8210 = vunpack.c.l.b16 %v5108
    %v8211 = vunpack.c.h.b16 %v5108
    %v8212 = vunpack.c.l.b16 %v5109
    %v8213 = vunpack.c.h.b16 %v5109
    %v8214 = vunpack.c.l.b16 %v5110
    %v8215 = vunpack.c.h.b16 %v5110
    %v8216 = vunpack.c.l.b16 %v5111
    %v8217 = vunpack.c.h.b16 %v5111
    %v8218 = vunpack.c.l.b16 %v5112
    %v8219 = vunpack.c.h.b16 %v5112
    %v8220 = vunpack.c.l.b16 %v5113
    %v8221 = vunpack.c.h.b16 %v5113
    %v8222 = vunpack.c.l.b16 %v5114
    %v8223 = vunpack.c.h.b16 %v5114
    %v8224 = vunpack.c.l.b16 %v5115
    %v8225 = vunpack.c.h.b16 %v5115
    %v8226 = vunpack.c.l.b16 %v5116
    %v8227 = vunpack.c.h.b16 %v5116
    %v8228 = vunpack.c.l.b16 %v5117
    %v8229 = vunpack.c.h.b16 %v5117
    %v8230 = vunpack.c.l.b16 %v5118
    %v8231 = vunpack.c.h.b16 %v5118
    %v8232 = vunpack.c.l.b16 %v5119
    %v8233 = vunpack.c.h.b16 %v5119
    %v8234 = vunpack.c.l.b16 %v5120
    %v8235 = vunpack.c.h.b16 %v5120
    %v8236 = vunpack.c.l.b16 %v5121
    %v8237 = vunpack.c.h.b16 %v5121
    %v8238 = vunpack.c.l.b16 %v5122
    %v8239 = vunpack.c.h.b16 %v5122
    %v8240 = vunpack.c.l.b16 %v5123
    %v8241 = vunpack.c.h.b16 %v5123
    %v8242 = vunpack.c.l.b16 %v5124
    %v8243 = vunpack.c.h.b16 %v5124
    %v8244 = vunpack.c.l.b16 %v5125
    %v8245 = vunpack.c.h.b16 %v5125
    %v8246 = vunpack.c.l.b16 %v5126
    %v8247 = vunpack.c.h.b16 %v5126
    %v8248 = vunpack.c.l.b16 %v5127
    %v8249 = vunpack.c.h.b16 %v5127
    %v8250 = vunpack.c.l.b16 %v5128
    %v8251 = vunpack.c.h.b16 %v5128
    %v8252 = vunpack.c.l.b16 %v5129
    %v8253 = vunpack.c.h.b16 %v5129
    %v8254 = vunpack.c.l.b16 %v5130
    %v8255 = vunpack.c.h.b16 %v5130
    %v8256 = vunpack.c.l.b16 %v5131
    %v8257 = vunpack.c.h.b16 %v5131
    %v8258 = vunpack.c.l.b16 %v5132
    %v8259 = vunpack.c.h.b16 %v5132
    %v8260 = vunpack.c.l.b16 %v5133
    %v8261 = vunpack.c.h.b16 %v5133
    %v8262 = vunpack.c.l.b16 %v5134
    %v8263 = vunpack.c.h.b16 %v5134
    %v8264 = vunpack.c.l.b16 %v5135
    %v8265 = vunpack.c.h.b16 %v5135
    %v8266 = vunpack.c.l.b16 %v5136
    %v8267 = vunpack.c.h.b16 %v5136
    %v8268 = vunpack.c.l.b16 %v5137
    %v8269 = vunpack.c.h.b16 %v5137
    %v8270 = vunpack.c.l.b16 %v5138
    %v8271 = vunpack.c.h.b16 %v5138
    %v8272 = vunpack.c.l.b16 %v5139
    %v8273 = vunpack.c.h.b16 %v5139
    %v8274 = vunpack.c.l.b16 %v5140
    %v8275 = vunpack.c.h.b16 %v5140
    %v8276 = vunpack.c.l.b16 %v5141
    %v8277 = vunpack.c.h.b16 %v5141
    %v8278 = vunpack.c.l.b16 %v5142
    %v8279 = vunpack.c.h.b16 %v5142
    %v8280 = vunpack.c.l.b16 %v5143
    %v8281 = vunpack.c.h.b16 %v5143
    %v8282 = vunpack.c.l.b16 %v5144
    %v8283 = vunpack.c.h.b16 %v5144
    %v8284 = vunpack.c.l.b16 %v5145
    %v8285 = vunpack.c.h.b16 %v5145
    %v8286 = vunpack.c.l.b16 %v5146
    %v8287 = vunpack.c.h.b16 %v5146
    %v8288 = vunpack.c.l.b16 %v5147
    %v8289 = vunpack.c.h.b16 %v5147
    %v8290 = vunpack.c.l.b16 %v5148
    %v8291 = vunpack.c.h.b16 %v5148
    %v8292 = vunpack.c.l.b16 %v5149
    %v8293 = vunpack.c.h.b16 %v5149
    %v8294 = vunpack.c.l.b16 %v5150
    %v8295 = vunpack.c.h.b16 %v5150
    %v8296 = vunpack.c.l.b16 %v5151
    %v8297 = vunpack.c.h.b16 %v5151
    %v8298 = vunpack.c.l.b16 %v5152
    %v8299 = vunpack.c.h.b16 %v5152
    %v8300 = vunpack.c.l.b16 %v5153
    %v8301 = vunpack.c.h.b16 %v5153
    %v8302 = vunpack.c.l.b16 %v5154
    %v8303 = vunpack.c.h.b16 %v5154
    %v8304 = vunpack.c.l.b16 %v5155
    %v8305 = vunpack.c.h.b16 %v5155
    %v8306 = vunpack.c.l.b16 %v5156
    %v8307 = vunpack.c.h.b16 %v5156
    %v8308 = vunpack.c.l.b16 %v5157
    %v8309 = vunpack.c.h.b16 %v5157
    %v8310 = vunpack.c.l.b16 %v5158
    %v8311 = vunpack.c.h.b16 %v5158
    %v8312 = vunpack.c.l.b16 %v5159
    %v8313 = vunpack.c.h.b16 %v5159
    %v8314 = vunpack.c.l.b16 %v5160
    %v8315 = vunpack.c.h.b16 %v5160
    %v8316 = vunpack.c.l.b16 %v5161
    %v8317 = vunpack.c.h.b16 %v5161
    %v8318 = vpack.c.b16 %v6286, %v6270
    %v8319 = vpack.c.b16 %v6287, %v6271
    %v8320 = vpack.c.b16 %v6288, %v6272
    %v8321 = vpack.c.b16 %v6289, %v6273
    %v8322 = vpack.c.b16 %v6290, %v6274
    %v8323 = vpack.c.b16 %v6291, %v6275
    %v8324 = vpack.c.b16 %v6292, %v6276
    %v8325 = vpack.c.b16 %v6293, %v6277
    %v8326 = vpack.c.b16 %v6294, %v6278
    %v8327 = vpack.c.b16 %v6295, %v6279
    %v8328 = vpack.c.b16 %v6296, %v6280
    %v8329 = vpack.c.b16 %v6297, %v6281
    %v8330 = vpack.c.b16 %v6298, %v6282
    %v8331 = vpack.c.b16 %v6299, %v6283
    %v8332 = vpack.c.b16 %v6300, %v6284
    %v8333 = vpack.c.b16 %v6301, %v6285
    %v8334 = vpack.c.b16 %v6318, %v6302
    %v8335 = vpack.c.b16 %v6319, %v6303
    %v8336 = vpack.c.b16 %v6320, %v6304
    %v8337 = vpack.c.b16 %v6321, %v6305
    %v8338 = vpack.c.b16 %v6322, %v6306
    %v8339 = vpack.c.b16 %v6323, %v6307
    %v8340 = vpack.c.b16 %v6324, %v6308
    %v8341 = vpack.c.b16 %v6325, %v6309
    %v8342 = vpack.c.b16 %v6326, %v6310
    %v8343 = vpack.c.b16 %v6327, %v6311
    %v8344 = vpack.c.b16 %v6328, %v6312
    %v8345 = vpack.c.b16 %v6329, %v6313
    %v8346 = vpack.c.b16 %v6330, %v6314
    %v8347 = vpack.c.b16 %v6331, %v6315
    %v8348 = vpack.c.b16 %v6332, %v6316
    %v8349 = vpack.c.b16 %v6333, %v6317
    %v8350 = vpack.c.b16 %v6350, %v6334
    %v8351 = vpack.c.b16 %v6351, %v6335
    %v8352 = vpack.c.b16 %v6352, %v6336
    %v8353 = vpack.c.b16 %v6353, %v6337
    %v8354 = vpack.c.b16 %v6354, %v6338
    %v8355 = vpack.c.b16 %v6355, %v6339
    %v8356 = vpack.c.b16 %v6356, %v6340
    %v8357 = vpack.c.b16 %v6357, %v6341
    %v8358 = vpack.c.b16 %v6358, %v6342
    %v8359 = vpack.c.b16 %v6359, %v6343
    %v8360 = vpack.c.b16 %v6360, %v6344
    %v8361 = vpack.c.b16 %v6361, %v6345
    %v8362 = vpack.c.b16 %v6362, %v6346
    %v8363 = vpack.c.b16 %v6363, %v6347
    %v8364 = vpack.c.b16 %v6364, %v6348
    %v8365 = vpack.c.b16 %v6365, %v6349
    %v8366 = vpack.c.b16 %v6382, %v6366
    %v8367 = vpack.c.b16 %v6383, %v6367
    %v8368 = vpack.c.b16 %v6384, %v6368
    %v8369 = vpack.c.b16 %v6385, %v6369
    %v8370 = vpack.c.b16 %v6386, %v6370
    %v8371 = vpack.c.b16 %v6387, %v6371
    %v8372 = vpack.c.b16 %v6388, %v6372
    %v8373 = vpack.c.b16 %v6389, %v6373
    %v8374 = vpack.c.b16 %v6390, %v6374
    %v8375 = vpack.c.b16 %v6391, %v6375
    %v8376 = vpack.c.b16 %v6392, %v6376
    %v8377 = vpack.c.b16 %v6393, %v6377
    %v8378 = vpack.c.b16 %v6394, %v6378
    %v8379 = vpack.c.b16 %v6395, %v6379
    %v8380 = vpack.c.b16 %v6396, %v6380
    %v8381 = vpack.c.b16 %v6397, %v6381
    %v8382 = vpack.c.b16 %v6414, %v6398
    %v8383 = vpack.c.b16 %v6415, %v6399
    %v8384 = vpack.c.b16 %v6416, %v6400
    %v8385 = vpack.c.b16 %v6417, %v6401
    %v8386 = vpack.c.b16 %v6418, %v6402
    %v8387 = vpack.c.b16 %v6419, %v6403
    %v8388 = vpack.c.b16 %v6420, %v6404
    %v8389 = vpack.c.b16 %v6421, %v6405
    %v8390 = vpack.c.b16 %v6422, %v6406
    %v8391 = vpack.c.b16 %v6423, %v6407
    %v8392 = vpack.c.b16 %v6424, %v6408
    %v8393 = vpack.c.b16 %v6425, %v6409
    %v8394 = vpack.c.b16 %v6426, %v6410
    %v8395 = vpack.c.b16 %v6427, %v6411
    %v8396 = vpack.c.b16 %v6428, %v6412
    %v8397 = vpack.c.b16 %v6429, %v6413
    %v8398 = vpack.c.b16 %v6446, %v6430
    %v8399 = vpack.c.b16 %v6447, %v6431
    %v8400 = vpack.c.b16 %v6448, %v6432
    %v8401 = vpack.c.b16 %v6449, %v6433
    %v8402 = vpack.c.b16 %v6450, %v6434
    %v8403 = vpack.c.b16 %v6451, %v6435
    %v8404 = vpack.c.b16 %v6452, %v6436
    %v8405 = vpack.c.b16 %v6453, %v6437
    %v8406 = vpack.c.b16 %v6454, %v6438
    %v8407 = vpack.c.b16 %v6455, %v6439
    %v8408 = vpack.c.b16 %v6456, %v6440
    %v8409 = vpack.c.b16 %v6457, %v6441
    %v8410 = vpack.c.b16 %v6458, %v6442
    %v8411 = vpack.c.b16 %v6459, %v6443
    %v8412 = vpack.c.b16 %v6460, %v6444
    %v8413 = vpack.c.b16 %v6461, %v6445
    %v8414 = vpack.c.b16 %v6478, %v6462
    %v8415 = vpack.c.b16 %v6479, %v6463
    %v8416 = vpack.c.b16 %v6480, %v6464
    %v8417 = vpack.c.b16 %v6481, %v6465
    %v8418 = vpack.c.b16 %v6482, %v6466
    %v8419 = vpack.c.b16 %v6483, %v6467
    %v8420 = vpack.c.b16 %v6484, %v6468
    %v8421 = vpack.c.b16 %v6485, %v6469
    %v8422 = vpack.c.b16 %v6486, %v6470
    %v8423 = vpack.c.b16 %v6487, %v6471
    %v8424 = vpack.c.b16 %v6488, %v6472
    %v8425 = vpack.c.b16 %v6489, %v6473
    %v8426 = vpack.c.b16 %v6490, %v6474
    %v8427 = vpack.c.b16 %v6491, %v6475
    %v8428 = vpack.c.b16 %v6492, %v6476
    %v8429 = vpack.c.b16 %v6493, %v6477
    %v8430 = vpack.c.b16 %v6510, %v6494
    %v8431 = vpack.c.b16 %v6511, %v6495
    %v8432 = vpack.c.b16 %v6512, %v6496
    %v8433 = vpack.c.b16 %v6513, %v6497
    %v8434 = vpack.c.b16 %v6514, %v6498
    %v8435 = vpack.c.b16 %v6515, %v6499
    %v8436 = vpack.c.b16 %v6516, %v6500
    %v8437 = vpack.c.b16 %v6517, %v6501
    %v8438 = vpack.c.b16 %v6518, %v6502
    %v8439 = vpack.c.b16 %v6519, %v6503
    %v8440 = vpack.c.b16 %v6520, %v6504
    %v8441 = vpack.c.b16 %v6521, %v6505
    %v8442 = vpack.c.b16 %v6522, %v6506
    %v8443 = vpack.c.b16 %v6523, %v6507
    %v8444 = vpack.c.b16 %v6524, %v6508
    %v8445 = vpack.c.b16 %v6525, %v6509
    %v8446 = vpack.c.b16 %v6542, %v6526
    %v8447 = vpack.c.b16 %v6543, %v6527
    %v8448 = vpack.c.b16 %v6544, %v6528
    %v8449 = vpack.c.b16 %v6545, %v6529
    %v8450 = vpack.c.b16 %v6546, %v6530
    %v8451 = vpack.c.b16 %v6547, %v6531
    %v8452 = vpack.c.b16 %v6548, %v6532
    %v8453 = vpack.c.b16 %v6549, %v6533
    %v8454 = vpack.c.b16 %v6550, %v6534
    %v8455 = vpack.c.b16 %v6551, %v6535
    %v8456 = vpack.c.b16 %v6552, %v6536
    %v8457 = vpack.c.b16 %v6553, %v6537
    %v8458 = vpack.c.b16 %v6554, %v6538
    %v8459 = vpack.c.b16 %v6555, %v6539
    %v8460 = vpack.c.b16 %v6556, %v6540
    %v8461 = vpack.c.b16 %v6557, %v6541
    %v8462 = vpack.c.b16 %v6574, %v6558
    %v8463 = vpack.c.b16 %v6575, %v6559
    %v8464 = vpack.c.b16 %v6576, %v6560
    %v8465 = vpack.c.b16 %v6577, %v6561
    %v8466 = vpack.c.b16 %v6578, %v6562
    %v8467 = vpack.c.b16 %v6579, %v6563
    %v8468 = vpack.c.b16 %v6580, %v6564
    %v8469 = vpack.c.b16 %v6581, %v6565
    %v8470 = vpack.c.b16 %v6582, %v6566
    %v8471 = vpack.c.b16 %v6583, %v6567
    %v8472 = vpack.c.b16 %v6584, %v6568
    %v8473 = vpack.c.b16 %v6585, %v6569
    %v8474 = vpack.c.b16 %v6586, %v6570
    %v8475 = vpack.c.b16 %v6587, %v6571
    %v8476 = vpack.c.b16 %v6588, %v6572
    %v8477 = vpack.c.b16 %v6589, %v6573
    %v8478 = vpack.c.b16 %v6606, %v6590
    %v8479 = vpack.c.b16 %v6607, %v6591
    %v8480 = vpack.c.b16 %v6608, %v6592
    %v8481 = vpack.c.b16 %v6609, %v6593
    %v8482 = vpack.c.b16 %v6610, %v6594
    %v8483 = vpack.c.b16 %v6611, %v6595
    %v8484 = vpack.c.b16 %v6612, %v6596
    %v8485 = vpack.c.b16 %v6613, %v6597
    %v8486 = vpack.c.b16 %v6614, %v6598
    %v8487 = vpack.c.b16 %v6615, %v6599
    %v8488 = vpack.c.b16 %v6616, %v6600
    %v8489 = vpack.c.b16 %v6617, %v6601
    %v8490 = vpack.c.b16 %v6618, %v6602
    %v8491 = vpack.c.b16 %v6619, %v6603
    %v8492 = vpack.c.b16 %v6620, %v6604
    %v8493 = vpack.c.b16 %v6621, %v6605
    %v8494 = vpack.c.b16 %v6638, %v6622
    %v8495 = vpack.c.b16 %v6639, %v6623
    %v8496 = vpack.c.b16 %v6640, %v6624
    %v8497 = vpack.c.b16 %v6641, %v6625
    %v8498 = vpack.c.b16 %v6642, %v6626
    %v8499 = vpack.c.b16 %v6643, %v6627
    %v8500 = vpack.c.b16 %v6644, %v6628
    %v8501 = vpack.c.b16 %v6645, %v6629
    %v8502 = vpack.c.b16 %v6646, %v6630
    %v8503 = vpack.c.b16 %v6647, %v6631
    %v8504 = vpack.c.b16 %v6648, %v6632
    %v8505 = vpack.c.b16 %v6649, %v6633
    %v8506 = vpack.c.b16 %v6650, %v6634
    %v8507 = vpack.c.b16 %v6651, %v6635
    %v8508 = vpack.c.b16 %v6652, %v6636
    %v8509 = vpack.c.b16 %v6653, %v6637
    %v8510 = vpack.c.b16 %v6670, %v6654
    %v8511 = vpack.c.b16 %v6671, %v6655
    %v8512 = vpack.c.b16 %v6672, %v6656
    %v8513 = vpack.c.b16 %v6673, %v6657
    %v8514 = vpack.c.b16 %v6674, %v6658
    %v8515 = vpack.c.b16 %v6675, %v6659
    %v8516 = vpack.c.b16 %v6676, %v6660
    %v8517 = vpack.c.b16 %v6677, %v6661
    %v8518 = vpack.c.b16 %v6678, %v6662
    %v8519 = vpack.c.b16 %v6679, %v6663
    %v8520 = vpack.c.b16 %v6680, %v6664
    %v8521 = vpack.c.b16 %v6681, %v6665
    %v8522 = vpack.c.b16 %v6682, %v6666
    %v8523 = vpack.c.b16 %v6683, %v6667
    %v8524 = vpack.c.b16 %v6684, %v6668
    %v8525 = vpack.c.b16 %v6685, %v6669
    %v8526 = vpack.c.b16 %v6702, %v6686
    %v8527 = vpack.c.b16 %v6703, %v6687
    %v8528 = vpack.c.b16 %v6704, %v6688
    %v8529 = vpack.c.b16 %v6705, %v6689
    %v8530 = vpack.c.b16 %v6706, %v6690
    %v8531 = vpack.c.b16 %v6707, %v6691
    %v8532 = vpack.c.b16 %v6708, %v6692
    %v8533 = vpack.c.b16 %v6709, %v6693
    %v8534 = vpack.c.b16 %v6710, %v6694
    %v8535 = vpack.c.b16 %v6711, %v6695
    %v8536 = vpack.c.b16 %v6712, %v6696
    %v8537 = vpack.c.b16 %v6713, %v6697
    %v8538 = vpack.c.b16 %v6714, %v6698
    %v8539 = vpack.c.b16 %v6715, %v6699
    %v8540 = vpack.c.b16 %v6716, %v6700
    %v8541 = vpack.c.b16 %v6717, %v6701
    %v8542 = vpack.c.b16 %v6734, %v6718
    %v8543 = vpack.c.b16 %v6735, %v6719
    %v8544 = vpack.c.b16 %v6736, %v6720
    %v8545 = vpack.c.b16 %v6737, %v6721
    %v8546 = vpack.c.b16 %v6738, %v6722
    %v8547 = vpack.c.b16 %v6739, %v6723
    %v8548 = vpack.c.b16 %v6740, %v6724
    %v8549 = vpack.c.b16 %v6741, %v6725
    %v8550 = vpack.c.b16 %v6742, %v6726
    %v8551 = vpack.c.b16 %v6743, %v6727
    %v8552 = vpack.c.b16 %v6744, %v6728
    %v8553 = vpack.c.b16 %v6745, %v6729
    %v8554 = vpack.c.b16 %v6746, %v6730
    %v8555 = vpack.c.b16 %v6747, %v6731
    %v8556 = vpack.c.b16 %v6748, %v6732
    %v8557 = vpack.c.b16 %v6749, %v6733
    %v8558 = vpack.c.b16 %v6766, %v6750
    %v8559 = vpack.c.b16 %v6767, %v6751
    %v8560 = vpack.c.b16 %v6768, %v6752
    %v8561 = vpack.c.b16 %v6769, %v6753
    %v8562 = vpack.c.b16 %v6770, %v6754
    %v8563 = vpack.c.b16 %v6771, %v6755
    %v8564 = vpack.c.b16 %v6772, %v6756
    %v8565 = vpack.c.b16 %v6773, %v6757
    %v8566 = vpack.c.b16 %v6774, %v6758
    %v8567 = vpack.c.b16 %v6775, %v6759
    %v8568 = vpack.c.b16 %v6776, %v6760
    %v8569 = vpack.c.b16 %v6777, %v6761
    %v8570 = vpack.c.b16 %v6778, %v6762
    %v8571 = vpack.c.b16 %v6779, %v6763
    %v8572 = vpack.c.b16 %v6780, %v6764
    %v8573 = vpack.c.b16 %v6781, %v6765
    %v8574 = vpack.c.b16 %v6798, %v6782
    %v8575 = vpack.c.b16 %v6799, %v6783
    %v8576 = vpack.c.b16 %v6800, %v6784
    %v8577 = vpack.c.b16 %v6801, %v6785
    %v8578 = vpack.c.b16 %v6802, %v6786
    %v8579 = vpack.c.b16 %v6803, %v6787
    %v8580 = vpack.c.b16 %v6804, %v6788
    %v8581 = vpack.c.b16 %v6805, %v6789
    %v8582 = vpack.c.b16 %v6806, %v6790
    %v8583 = vpack.c.b16 %v6807, %v6791
    %v8584 = vpack.c.b16 %v6808, %v6792
    %v8585 = vpack.c.b16 %v6809, %v6793
    %v8586 = vpack.c.b16 %v6810, %v6794
    %v8587 = vpack.c.b16 %v6811, %v6795
    %v8588 = vpack.c.b16 %v6812, %v6796
    %v8589 = vpack.c.b16 %v6813, %v6797
    %v8590 = vpack.c.b16 %v6830, %v6814
    %v8591 = vpack.c.b16 %v6831, %v6815
    %v8592 = vpack.c.b16 %v6832, %v6816
    %v8593 = vpack.c.b16 %v6833, %v6817
    %v8594 = vpack.c.b16 %v6834, %v6818
    %v8595 = vpack.c.b16 %v6835, %v6819
    %v8596 = vpack.c.b16 %v6836, %v6820
    %v8597 = vpack.c.b16 %v6837, %v6821
    %v8598 = vpack.c.b16 %v6838, %v6822
    %v8599 = vpack.c.b16 %v6839, %v6823
    %v8600 = vpack.c.b16 %v6840, %v6824
    %v8601 = vpack.c.b16 %v6841, %v6825
    %v8602 = vpack.c.b16 %v6842, %v6826
    %v8603 = vpack.c.b16 %v6843, %v6827
    %v8604 = vpack.c.b16 %v6844, %v6828
    %v8605 = vpack.c.b16 %v6845, %v6829
    %v8606 = vpack.c.b16 %v6862, %v6846
    %v8607 = vpack.c.b16 %v6863, %v6847
    %v8608 = vpack.c.b16 %v6864, %v6848
    %v8609 = vpack.c.b16 %v6865, %v6849
    %v8610 = vpack.c.b16 %v6866, %v6850
    %v8611 = vpack.c.b16 %v6867, %v6851
    %v8612 = vpack.c.b16 %v6868, %v6852
    %v8613 = vpack.c.b16 %v6869, %v6853
    %v8614 = vpack.c.b16 %v6870, %v6854
    %v8615 = vpack.c.b16 %v6871, %v6855
    %v8616 = vpack.c.b16 %v6872, %v6856
    %v8617 = vpack.c.b16 %v6873, %v6857
    %v8618 = vpack.c.b16 %v6874, %v6858
    %v8619 = vpack.c.b16 %v6875, %v6859
    %v8620 = vpack.c.b16 %v6876, %v6860
    %v8621 = vpack.c.b16 %v6877, %v6861
    %v8622 = vpack.c.b16 %v6894, %v6878
    %v8623 = vpack.c.b16 %v6895, %v6879
    %v8624 = vpack.c.b16 %v6896, %v6880
    %v8625 = vpack.c.b16 %v6897, %v6881
    %v8626 = vpack.c.b16 %v6898, %v6882
    %v8627 = vpack.c.b16 %v6899, %v6883
    %v8628 = vpack.c.b16 %v6900, %v6884
    %v8629 = vpack.c.b16 %v6901, %v6885
    %v8630 = vpack.c.b16 %v6902, %v6886
    %v8631 = vpack.c.b16 %v6903, %v6887
    %v8632 = vpack.c.b16 %v6904, %v6888
    %v8633 = vpack.c.b16 %v6905, %v6889
    %v8634 = vpack.c.b16 %v6906, %v6890
    %v8635 = vpack.c.b16 %v6907, %v6891
    %v8636 = vpack.c.b16 %v6908, %v6892
    %v8637 = vpack.c.b16 %v6909, %v6893
    %v8638 = vpack.c.b16 %v6926, %v6910
    %v8639 = vpack.c.b16 %v6927, %v6911
    %v8640 = vpack.c.b16 %v6928, %v6912
    %v8641 = vpack.c.b16 %v6929, %v6913
    %v8642 = vpack.c.b16 %v6930, %v6914
    %v8643 = vpack.c.b16 %v6931, %v6915
    %v8644 = vpack.c.b16 %v6932, %v6916
    %v8645 = vpack.c.b16 %v6933, %v6917
    %v8646 = vpack.c.b16 %v6934, %v6918
    %v8647 = vpack.c.b16 %v6935, %v6919
    %v8648 = vpack.c.b16 %v6936, %v6920
    %v8649 = vpack.c.b16 %v6937, %v6921
    %v8650 = vpack.c.b16 %v6938, %v6922
    %v8651 = vpack.c.b16 %v6939, %v6923
    %v8652 = vpack.c.b16 %v6940, %v6924
    %v8653 = vpack.c.b16 %v6941, %v6925
    %v8654 = vpack.c.b16 %v6958, %v6942
    %v8655 = vpack.c.b16 %v6959, %v6943
    %v8656 = vpack.c.b16 %v6960, %v6944
    %v8657 = vpack.c.b16 %v6961, %v6945
    %v8658 = vpack.c.b16 %v6962, %v6946
    %v8659 = vpack.c.b16 %v6963, %v6947
    %v8660 = vpack.c.b16 %v6964, %v6948
    %v8661 = vpack.c.b16 %v6965, %v6949
    %v8662 = vpack.c.b16 %v6966, %v6950
    %v8663 = vpack.c.b16 %v6967, %v6951
    %v8664 = vpack.c.b16 %v6968, %v6952
    %v8665 = vpack.c.b16 %v6969, %v6953
    %v8666 = vpack.c.b16 %v6970, %v6954
    %v8667 = vpack.c.b16 %v6971, %v6955
    %v8668 = vpack.c.b16 %v6972, %v6956
    %v8669 = vpack.c.b16 %v6973, %v6957
    %v8670 = vpack.c.b16 %v6990, %v6974
    %v8671 = vpack.c.b16 %v6991, %v6975
    %v8672 = vpack.c.b16 %v6992, %v6976
    %v8673 = vpack.c.b16 %v6993, %v6977
    %v8674 = vpack.c.b16 %v6994, %v6978
    %v8675 = vpack.c.b16 %v6995, %v6979
    %v8676 = vpack.c.b16 %v6996, %v6980
    %v8677 = vpack.c.b16 %v6997, %v6981
    %v8678 = vpack.c.b16 %v6998, %v6982
    %v8679 = vpack.c.b16 %v6999, %v6983
    %v8680 = vpack.c.b16 %v7000, %v6984
    %v8681 = vpack.c.b16 %v7001, %v6985
    %v8682 = vpack.c.b16 %v7002, %v6986
    %v8683 = vpack.c.b16 %v7003, %v6987
    %v8684 = vpack.c.b16 %v7004, %v6988
    %v8685 = vpack.c.b16 %v7005, %v6989
    %v8686 = vpack.c.b16 %v7022, %v7006
    %v8687 = vpack.c.b16 %v7023, %v7007
    %v8688 = vpack.c.b16 %v7024, %v7008
    %v8689 = vpack.c.b16 %v7025, %v7009
    %v8690 = vpack.c.b16 %v7026, %v7010
    %v8691 = vpack.c.b16 %v7027, %v7011
    %v8692 = vpack.c.b16 %v7028, %v7012
    %v8693 = vpack.c.b16 %v7029, %v7013
    %v8694 = vpack.c.b16 %v7030, %v7014
    %v8695 = vpack.c.b16 %v7031, %v7015
    %v8696 = vpack.c.b16 %v7032, %v7016
    %v8697 = vpack.c.b16 %v7033, %v7017
    %v8698 = vpack.c.b16 %v7034, %v7018
    %v8699 = vpack.c.b16 %v7035, %v7019
    %v8700 = vpack.c.b16 %v7036, %v7020
    %v8701 = vpack.c.b16 %v7037, %v7021
    %v8702 = vpack.c.b16 %v7054, %v7038
    %v8703 = vpack.c.b16 %v7055, %v7039
    %v8704 = vpack.c.b16 %v7056, %v7040
    %v8705 = vpack.c.b16 %v7057, %v7041
    %v8706 = vpack.c.b16 %v7058, %v7042
    %v8707 = vpack.c.b16 %v7059, %v7043
    %v8708 = vpack.c.b16 %v7060, %v7044
    %v8709 = vpack.c.b16 %v7061, %v7045
    %v8710 = vpack.c.b16 %v7062, %v7046
    %v8711 = vpack.c.b16 %v7063, %v7047
    %v8712 = vpack.c.b16 %v7064, %v7048
    %v8713 = vpack.c.b16 %v7065, %v7049
    %v8714 = vpack.c.b16 %v7066, %v7050
    %v8715 = vpack.c.b16 %v7067, %v7051
    %v8716 = vpack.c.b16 %v7068, %v7052
    %v8717 = vpack.c.b16 %v7069, %v7053
    %v8718 = vpack.c.b16 %v7086, %v7070
    %v8719 = vpack.c.b16 %v7087, %v7071
    %v8720 = vpack.c.b16 %v7088, %v7072
    %v8721 = vpack.c.b16 %v7089, %v7073
    %v8722 = vpack.c.b16 %v7090, %v7074
    %v8723 = vpack.c.b16 %v7091, %v7075
    %v8724 = vpack.c.b16 %v7092, %v7076
    %v8725 = vpack.c.b16 %v7093, %v7077
    %v8726 = vpack.c.b16 %v7094, %v7078
    %v8727 = vpack.c.b16 %v7095, %v7079
    %v8728 = vpack.c.b16 %v7096, %v7080
    %v8729 = vpack.c.b16 %v7097, %v7081
    %v8730 = vpack.c.b16 %v7098, %v7082
    %v8731 = vpack.c.b16 %v7099, %v7083
    %v8732 = vpack.c.b16 %v7100, %v7084
    %v8733 = vpack.c.b16 %v7101, %v7085
    %v8734 = vpack.c.b16 %v7118, %v7102
    %v8735 = vpack.c.b16 %v7119, %v7103
    %v8736 = vpack.c.b16 %v7120, %v7104
    %v8737 = vpack.c.b16 %v7121, %v7105
    %v8738 = vpack.c.b16 %v7122, %v7106
    %v8739 = vpack.c.b16 %v7123, %v7107
    %v8740 = vpack.c.b16 %v7124, %v7108
    %v8741 = vpack.c.b16 %v7125, %v7109
    %v8742 = vpack.c.b16 %v7126, %v7110
    %v8743 = vpack.c.b16 %v7127, %v7111
    %v8744 = vpack.c.b16 %v7128, %v7112
    %v8745 = vpack.c.b16 %v7129, %v7113
    %v8746 = vpack.c.b16 %v7130, %v7114
    %v8747 = vpack.c.b16 %v7131, %v7115
    %v8748 = vpack.c.b16 %v7132, %v7116
    %v8749 = vpack.c.b16 %v7133, %v7117
    %v8750 = vpack.c.b16 %v7150, %v7134
    %v8751 = vpack.c.b16 %v7151, %v7135
    %v8752 = vpack.c.b16 %v7152, %v7136
    %v8753 = vpack.c.b16 %v7153, %v7137
    %v8754 = vpack.c.b16 %v7154, %v7138
    %v8755 = vpack.c.b16 %v7155, %v7139
    %v8756 = vpack.c.b16 %v7156, %v7140
    %v8757 = vpack.c.b16 %v7157, %v7141
    %v8758 = vpack.c.b16 %v7158, %v7142
    %v8759 = vpack.c.b16 %v7159, %v7143
    %v8760 = vpack.c.b16 %v7160, %v7144
    %v8761 = vpack.c.b16 %v7161, %v7145
    %v8762 = vpack.c.b16 %v7162, %v7146
    %v8763 = vpack.c.b16 %v7163, %v7147
    %v8764 = vpack.c.b16 %v7164, %v7148
    %v8765 = vpack.c.b16 %v7165, %v7149
    %v8766 = vpack.c.b16 %v7182, %v7166
    %v8767 = vpack.c.b16 %v7183, %v7167
    %v8768 = vpack.c.b16 %v7184, %v7168
    %v8769 = vpack.c.b16 %v7185, %v7169
    %v8770 = vpack.c.b16 %v7186, %v7170
    %v8771 = vpack.c.b16 %v7187, %v7171
    %v8772 = vpack.c.b16 %v7188, %v7172
    %v8773 = vpack.c.b16 %v7189, %v7173
    %v8774 = vpack.c.b16 %v7190, %v7174
    %v8775 = vpack.c.b16 %v7191, %v7175
    %v8776 = vpack.c.b16 %v7192, %v7176
    %v8777 = vpack.c.b16 %v7193, %v7177
    %v8778 = vpack.c.b16 %v7194, %v7178
    %v8779 = vpack.c.b16 %v7195, %v7179
    %v8780 = vpack.c.b16 %v7196, %v7180
    %v8781 = vpack.c.b16 %v7197, %v7181
    %v8782 = vpack.c.b16 %v7214, %v7198
    %v8783 = vpack.c.b16 %v7215, %v7199
    %v8784 = vpack.c.b16 %v7216, %v7200
    %v8785 = vpack.c.b16 %v7217, %v7201
    %v8786 = vpack.c.b16 %v7218, %v7202
    %v8787 = vpack.c.b16 %v7219, %v7203
    %v8788 = vpack.c.b16 %v7220, %v7204
    %v8789 = vpack.c.b16 %v7221, %v7205
    %v8790 = vpack.c.b16 %v7222, %v7206
    %v8791 = vpack.c.b16 %v7223, %v7207
    %v8792 = vpack.c.b16 %v7224, %v7208
    %v8793 = vpack.c.b16 %v7225, %v7209
    %v8794 = vpack.c.b16 %v7226, %v7210
    %v8795 = vpack.c.b16 %v7227, %v7211
    %v8796 = vpack.c.b16 %v7228, %v7212
    %v8797 = vpack.c.b16 %v7229, %v7213
    %v8798 = vpack.c.b16 %v7246, %v7230
    %v8799 = vpack.c.b16 %v7247, %v7231
    %v8800 = vpack.c.b16 %v7248, %v7232
    %v8801 = vpack.c.b16 %v7249, %v7233
    %v8802 = vpack.c.b16 %v7250, %v7234
    %v8803 = vpack.c.b16 %v7251, %v7235
    %v8804 = vpack.c.b16 %v7252, %v7236
    %v8805 = vpack.c.b16 %v7253, %v7237
    %v8806 = vpack.c.b16 %v7254, %v7238
    %v8807 = vpack.c.b16 %v7255, %v7239
    %v8808 = vpack.c.b16 %v7256, %v7240
    %v8809 = vpack.c.b16 %v7257, %v7241
    %v8810 = vpack.c.b16 %v7258, %v7242
    %v8811 = vpack.c.b16 %v7259, %v7243
    %v8812 = vpack.c.b16 %v7260, %v7244
    %v8813 = vpack.c.b16 %v7261, %v7245
    %v8814 = vpack.c.b16 %v7278, %v7262
    %v8815 = vpack.c.b16 %v7279, %v7263
    %v8816 = vpack.c.b16 %v7280, %v7264
    %v8817 = vpack.c.b16 %v7281, %v7265
    %v8818 = vpack.c.b16 %v7282, %v7266
    %v8819 = vpack.c.b16 %v7283, %v7267
    %v8820 = vpack.c.b16 %v7284, %v7268
    %v8821 = vpack.c.b16 %v7285, %v7269
    %v8822 = vpack.c.b16 %v7286, %v7270
    %v8823 = vpack.c.b16 %v7287, %v7271
    %v8824 = vpack.c.b16 %v7288, %v7272
    %v8825 = vpack.c.b16 %v7289, %v7273
    %v8826 = vpack.c.b16 %v7290, %v7274
    %v8827 = vpack.c.b16 %v7291, %v7275
    %v8828 = vpack.c.b16 %v7292, %v7276
    %v8829 = vpack.c.b16 %v7293, %v7277
    %v8830 = vpack.c.b16 %v7310, %v7294
    %v8831 = vpack.c.b16 %v7311, %v7295
    %v8832 = vpack.c.b16 %v7312, %v7296
    %v8833 = vpack.c.b16 %v7313, %v7297
    %v8834 = vpack.c.b16 %v7314, %v7298
    %v8835 = vpack.c.b16 %v7315, %v7299
    %v8836 = vpack.c.b16 %v7316, %v7300
    %v8837 = vpack.c.b16 %v7317, %v7301
    %v8838 = vpack.c.b16 %v7318, %v7302
    %v8839 = vpack.c.b16 %v7319, %v7303
    %v8840 = vpack.c.b16 %v7320, %v7304
    %v8841 = vpack.c.b16 %v7321, %v7305
    %v8842 = vpack.c.b16 %v7322, %v7306
    %v8843 = vpack.c.b16 %v7323, %v7307
    %v8844 = vpack.c.b16 %v7324, %v7308
    %v8845 = vpack.c.b16 %v7325, %v7309
    %v8846 = vpack.c.b16 %v7342, %v7326
    %v8847 = vpack.c.b16 %v7343, %v7327
    %v8848 = vpack.c.b16 %v7344, %v7328
    %v8849 = vpack.c.b16 %v7345, %v7329
    %v8850 = vpack.c.b16 %v7346, %v7330
    %v8851 = vpack.c.b16 %v7347, %v7331
    %v8852 = vpack.c.b16 %v7348, %v7332
    %v8853 = vpack.c.b16 %v7349, %v7333
    %v8854 = vpack.c.b16 %v7350, %v7334
    %v8855 = vpack.c.b16 %v7351, %v7335
    %v8856 = vpack.c.b16 %v7352, %v7336
    %v8857 = vpack.c.b16 %v7353, %v7337
    %v8858 = vpack.c.b16 %v7354, %v7338
    %v8859 = vpack.c.b16 %v7355, %v7339
    %v8860 = vpack.c.b16 %v7356, %v7340
    %v8861 = vpack.c.b16 %v7357, %v7341
    %v8862 = vpack.c.b16 %v7374, %v7358
    %v8863 = vpack.c.b16 %v7375, %v7359
    %v8864 = vpack.c.b16 %v7376, %v7360
    %v8865 = vpack.c.b16 %v7377, %v7361
    %v8866 = vpack.c.b16 %v7378, %v7362
    %v8867 = vpack.c.b16 %v7379, %v7363
    %v8868 = vpack.c.b16 %v7380, %v7364
    %v8869 = vpack.c.b16 %v7381, %v7365
    %v8870 = vpack.c.b16 %v7382, %v7366
    %v8871 = vpack.c.b16 %v7383, %v7367
    %v8872 = vpack.c.b16 %v7384, %v7368
    %v8873 = vpack.c.b16 %v7385, %v7369
    %v8874 = vpack.c.b16 %v7386, %v7370
    %v8875 = vpack.c.b16 %v7387, %v7371
    %v8876 = vpack.c.b16 %v7388, %v7372
    %v8877 = vpack.c.b16 %v7389, %v7373
    %v8878 = vpack.c.b16 %v7406, %v7390
    %v8879 = vpack.c.b16 %v7407, %v7391
    %v8880 = vpack.c.b16 %v7408, %v7392
    %v8881 = vpack.c.b16 %v7409, %v7393
    %v8882 = vpack.c.b16 %v7410, %v7394
    %v8883 = vpack.c.b16 %v7411, %v7395
    %v8884 = vpack.c.b16 %v7412, %v7396
    %v8885 = vpack.c.b16 %v7413, %v7397
    %v8886 = vpack.c.b16 %v7414, %v7398
    %v8887 = vpack.c.b16 %v7415, %v7399
    %v8888 = vpack.c.b16 %v7416, %v7400
    %v8889 = vpack.c.b16 %v7417, %v7401
    %v8890 = vpack.c.b16 %v7418, %v7402
    %v8891 = vpack.c.b16 %v7419, %v7403
    %v8892 = vpack.c.b16 %v7420, %v7404
    %v8893 = vpack.c.b16 %v7421, %v7405
    %v8894 = vpack.c.b16 %v7438, %v7422
    %v8895 = vpack.c.b16 %v7439, %v7423
    %v8896 = vpack.c.b16 %v7440, %v7424
    %v8897 = vpack.c.b16 %v7441, %v7425
    %v8898 = vpack.c.b16 %v7442, %v7426
    %v8899 = vpack.c.b16 %v7443, %v7427
    %v8900 = vpack.c.b16 %v7444, %v7428
    %v8901 = vpack.c.b16 %v7445, %v7429
    %v8902 = vpack.c.b16 %v7446, %v7430
    %v8903 = vpack.c.b16 %v7447, %v7431
    %v8904 = vpack.c.b16 %v7448, %v7432
    %v8905 = vpack.c.b16 %v7449, %v7433
    %v8906 = vpack.c.b16 %v7450, %v7434
    %v8907 = vpack.c.b16 %v7451, %v7435
    %v8908 = vpack.c.b16 %v7452, %v7436
    %v8909 = vpack.c.b16 %v7453, %v7437
    %v8910 = vpack.c.b16 %v7470, %v7454
    %v8911 = vpack.c.b16 %v7471, %v7455
    %v8912 = vpack.c.b16 %v7472, %v7456
    %v8913 = vpack.c.b16 %v7473, %v7457
    %v8914 = vpack.c.b16 %v7474, %v7458
    %v8915 = vpack.c.b16 %v7475, %v7459
    %v8916 = vpack.c.b16 %v7476, %v7460
    %v8917 = vpack.c.b16 %v7477, %v7461
    %v8918 = vpack.c.b16 %v7478, %v7462
    %v8919 = vpack.c.b16 %v7479, %v7463
    %v8920 = vpack.c.b16 %v7480, %v7464
    %v8921 = vpack.c.b16 %v7481, %v7465
    %v8922 = vpack.c.b16 %v7482, %v7466
    %v8923 = vpack.c.b16 %v7483, %v7467
    %v8924 = vpack.c.b16 %v7484, %v7468
    %v8925 = vpack.c.b16 %v7485, %v7469
    %v8926 = vpack.c.b16 %v7502, %v7486
    %v8927 = vpack.c.b16 %v7503, %v7487
    %v8928 = vpack.c.b16 %v7504, %v7488
    %v8929 = vpack.c.b16 %v7505, %v7489
    %v8930 = vpack.c.b16 %v7506, %v7490
    %v8931 = vpack.c.b16 %v7507, %v7491
    %v8932 = vpack.c.b16 %v7508, %v7492
    %v8933 = vpack.c.b16 %v7509, %v7493
    %v8934 = vpack.c.b16 %v7510, %v7494
    %v8935 = vpack.c.b16 %v7511, %v7495
    %v8936 = vpack.c.b16 %v7512, %v7496
    %v8937 = vpack.c.b16 %v7513, %v7497
    %v8938 = vpack.c.b16 %v7514, %v7498
    %v8939 = vpack.c.b16 %v7515, %v7499
    %v8940 = vpack.c.b16 %v7516, %v7500
    %v8941 = vpack.c.b16 %v7517, %v7501
    %v8942 = vpack.c.b16 %v7534, %v7518
    %v8943 = vpack.c.b16 %v7535, %v7519
    %v8944 = vpack.c.b16 %v7536, %v7520
    %v8945 = vpack.c.b16 %v7537, %v7521
    %v8946 = vpack.c.b16 %v7538, %v7522
    %v8947 = vpack.c.b16 %v7539, %v7523
    %v8948 = vpack.c.b16 %v7540, %v7524
    %v8949 = vpack.c.b16 %v7541, %v7525
    %v8950 = vpack.c.b16 %v7542, %v7526
    %v8951 = vpack.c.b16 %v7543, %v7527
    %v8952 = vpack.c.b16 %v7544, %v7528
    %v8953 = vpack.c.b16 %v7545, %v7529
    %v8954 = vpack.c.b16 %v7546, %v7530
    %v8955 = vpack.c.b16 %v7547, %v7531
    %v8956 = vpack.c.b16 %v7548, %v7532
    %v8957 = vpack.c.b16 %v7549, %v7533
    %v8958 = vpack.c.b16 %v7566, %v7550
    %v8959 = vpack.c.b16 %v7567, %v7551
    %v8960 = vpack.c.b16 %v7568, %v7552
    %v8961 = vpack.c.b16 %v7569, %v7553
    %v8962 = vpack.c.b16 %v7570, %v7554
    %v8963 = vpack.c.b16 %v7571, %v7555
    %v8964 = vpack.c.b16 %v7572, %v7556
    %v8965 = vpack.c.b16 %v7573, %v7557
    %v8966 = vpack.c.b16 %v7574, %v7558
    %v8967 = vpack.c.b16 %v7575, %v7559
    %v8968 = vpack.c.b16 %v7576, %v7560
    %v8969 = vpack.c.b16 %v7577, %v7561
    %v8970 = vpack.c.b16 %v7578, %v7562
    %v8971 = vpack.c.b16 %v7579, %v7563
    %v8972 = vpack.c.b16 %v7580, %v7564
    %v8973 = vpack.c.b16 %v7581, %v7565
    %v8974 = vpack.c.b16 %v7598, %v7582
    %v8975 = vpack.c.b16 %v7599, %v7583
    %v8976 = vpack.c.b16 %v7600, %v7584
    %v8977 = vpack.c.b16 %v7601, %v7585
    %v8978 = vpack.c.b16 %v7602, %v7586
    %v8979 = vpack.c.b16 %v7603, %v7587
    %v8980 = vpack.c.b16 %v7604, %v7588
    %v8981 = vpack.c.b16 %v7605, %v7589
    %v8982 = vpack.c.b16 %v7606, %v7590
    %v8983 = vpack.c.b16 %v7607, %v7591
    %v8984 = vpack.c.b16 %v7608, %v7592
    %v8985 = vpack.c.b16 %v7609, %v7593
    %v8986 = vpack.c.b16 %v7610, %v7594
    %v8987 = vpack.c.b16 %v7611, %v7595
    %v8988 = vpack.c.b16 %v7612, %v7596
    %v8989 = vpack.c.b16 %v7613, %v7597
    %v8990 = vpack.c.b16 %v7630, %v7614
    %v8991 = vpack.c.b16 %v7631, %v7615
    %v8992 = vpack.c.b16 %v7632, %v7616
    %v8993 = vpack.c.b16 %v7633, %v7617
    %v8994 = vpack.c.b16 %v7634, %v7618
    %v8995 = vpack.c.b16 %v7635, %v7619
    %v8996 = vpack.c.b16 %v7636, %v7620
    %v8997 = vpack.c.b16 %v7637, %v7621
    %v8998 = vpack.c.b16 %v7638, %v7622
    %v8999 = vpack.c.b16 %v7639, %v7623
    %v9000 = vpack.c.b16 %v7640, %v7624
    %v9001 = vpack.c.b16 %v7641, %v7625
    %v9002 = vpack.c.b16 %v7642, %v7626
    %v9003 = vpack.c.b16 %v7643, %v7627
    %v9004 = vpack.c.b16 %v7644, %v7628
    %v9005 = vpack.c.b16 %v7645, %v7629
    %v9006 = vpack.c.b16 %v7662, %v7646
    %v9007 = vpack.c.b16 %v7663, %v7647
    %v9008 = vpack.c.b16 %v7664, %v7648
    %v9009 = vpack.c.b16 %v7665, %v7649
    %v9010 = vpack.c.b16 %v7666, %v7650
    %v9011 = vpack.c.b16 %v7667, %v7651
    %v9012 = vpack.c.b16 %v7668, %v7652
    %v9013 = vpack.c.b16 %v7669, %v7653
    %v9014 = vpack.c.b16 %v7670, %v7654
    %v9015 = vpack.c.b16 %v7671, %v7655
    %v9016 = vpack.c.b16 %v7672, %v7656
    %v9017 = vpack.c.b16 %v7673, %v7657
    %v9018 = vpack.c.b16 %v7674, %v7658
    %v9019 = vpack.c.b16 %v7675, %v7659
    %v9020 = vpack.c.b16 %v7676, %v7660
    %v9021 = vpack.c.b16 %v7677, %v7661
    %v9022 = vpack.c.b16 %v7694, %v7678
    %v9023 = vpack.c.b16 %v7695, %v7679
    %v9024 = vpack.c.b16 %v7696, %v7680
    %v9025 = vpack.c.b16 %v7697, %v7681
    %v9026 = vpack.c.b16 %v7698, %v7682
    %v9027 = vpack.c.b16 %v7699, %v7683
    %v9028 = vpack.c.b16 %v7700, %v7684
    %v9029 = vpack.c.b16 %v7701, %v7685
    %v9030 = vpack.c.b16 %v7702, %v7686
    %v9031 = vpack.c.b16 %v7703, %v7687
    %v9032 = vpack.c.b16 %v7704, %v7688
    %v9033 = vpack.c.b16 %v7705, %v7689
    %v9034 = vpack.c.b16 %v7706, %v7690
    %v9035 = vpack.c.b16 %v7707, %v7691
    %v9036 = vpack.c.b16 %v7708, %v7692
    %v9037 = vpack.c.b16 %v7709, %v7693
    %v9038 = vpack.c.b16 %v7726, %v7710
    %v9039 = vpack.c.b16 %v7727, %v7711
    %v9040 = vpack.c.b16 %v7728, %v7712
    %v9041 = vpack.c.b16 %v7729, %v7713
    %v9042 = vpack.c.b16 %v7730, %v7714
    %v9043 = vpack.c.b16 %v7731, %v7715
    %v9044 = vpack.c.b16 %v7732, %v7716
    %v9045 = vpack.c.b16 %v7733, %v7717
    %v9046 = vpack.c.b16 %v7734, %v7718
    %v9047 = vpack.c.b16 %v7735, %v7719
    %v9048 = vpack.c.b16 %v7736, %v7720
    %v9049 = vpack.c.b16 %v7737, %v7721
    %v9050 = vpack.c.b16 %v7738, %v7722
    %v9051 = vpack.c.b16 %v7739, %v7723
    %v9052 = vpack.c.b16 %v7740, %v7724
    %v9053 = vpack.c.b16 %v7741, %v7725
    %v9054 = vpack.c.b16 %v7758, %v7742
    %v9055 = vpack.c.b16 %v7759, %v7743
    %v9056 = vpack.c.b16 %v7760, %v7744
    %v9057 = vpack.c.b16 %v7761, %v7745
    %v9058 = vpack.c.b16 %v7762, %v7746
    %v9059 = vpack.c.b16 %v7763, %v7747
    %v9060 = vpack.c.b16 %v7764, %v7748
    %v9061 = vpack.c.b16 %v7765, %v7749
    %v9062 = vpack.c.b16 %v7766, %v7750
    %v9063 = vpack.c.b16 %v7767, %v7751
    %v9064 = vpack.c.b16 %v7768, %v7752
    %v9065 = vpack.c.b16 %v7769, %v7753
    %v9066 = vpack.c.b16 %v7770, %v7754
    %v9067 = vpack.c.b16 %v7771, %v7755
    %v9068 = vpack.c.b16 %v7772, %v7756
    %v9069 = vpack.c.b16 %v7773, %v7757
    %v9070 = vpack.c.b16 %v7790, %v7774
    %v9071 = vpack.c.b16 %v7791, %v7775
    %v9072 = vpack.c.b16 %v7792, %v7776
    %v9073 = vpack.c.b16 %v7793, %v7777
    %v9074 = vpack.c.b16 %v7794, %v7778
    %v9075 = vpack.c.b16 %v7795, %v7779
    %v9076 = vpack.c.b16 %v7796, %v7780
    %v9077 = vpack.c.b16 %v7797, %v7781
    %v9078 = vpack.c.b16 %v7798, %v7782
    %v9079 = vpack.c.b16 %v7799, %v7783
    %v9080 = vpack.c.b16 %v7800, %v7784
    %v9081 = vpack.c.b16 %v7801, %v7785
    %v9082 = vpack.c.b16 %v7802, %v7786
    %v9083 = vpack.c.b16 %v7803, %v7787
    %v9084 = vpack.c.b16 %v7804, %v7788
    %v9085 = vpack.c.b16 %v7805, %v7789
    %v9086 = vpack.c.b16 %v7822, %v7806
    %v9087 = vpack.c.b16 %v7823, %v7807
    %v9088 = vpack.c.b16 %v7824, %v7808
    %v9089 = vpack.c.b16 %v7825, %v7809
    %v9090 = vpack.c.b16 %v7826, %v7810
    %v9091 = vpack.c.b16 %v7827, %v7811
    %v9092 = vpack.c.b16 %v7828, %v7812
    %v9093 = vpack.c.b16 %v7829, %v7813
    %v9094 = vpack.c.b16 %v7830, %v7814
    %v9095 = vpack.c.b16 %v7831, %v7815
    %v9096 = vpack.c.b16 %v7832, %v7816
    %v9097 = vpack.c.b16 %v7833, %v7817
    %v9098 = vpack.c.b16 %v7834, %v7818
    %v9099 = vpack.c.b16 %v7835, %v7819
    %v9100 = vpack.c.b16 %v7836, %v7820
    %v9101 = vpack.c.b16 %v7837, %v7821
    %v9102 = vpack.c.b16 %v7854, %v7838
    %v9103 = vpack.c.b16 %v7855, %v7839
    %v9104 = vpack.c.b16 %v7856, %v7840
    %v9105 = vpack.c.b16 %v7857, %v7841
    %v9106 = vpack.c.b16 %v7858, %v7842
    %v9107 = vpack.c.b16 %v7859, %v7843
    %v9108 = vpack.c.b16 %v7860, %v7844
    %v9109 = vpack.c.b16 %v7861, %v7845
    %v9110 = vpack.c.b16 %v7862, %v7846
    %v9111 = vpack.c.b16 %v7863, %v7847
    %v9112 = vpack.c.b16 %v7864, %v7848
    %v9113 = vpack.c.b16 %v7865, %v7849
    %v9114 = vpack.c.b16 %v7866, %v7850
    %v9115 = vpack.c.b16 %v7867, %v7851
    %v9116 = vpack.c.b16 %v7868, %v7852
    %v9117 = vpack.c.b16 %v7869, %v7853
    %v9118 = vpack.c.b16 %v7886, %v7870
    %v9119 = vpack.c.b16 %v7887, %v7871
    %v9120 = vpack.c.b16 %v7888, %v7872
    %v9121 = vpack.c.b16 %v7889, %v7873
    %v9122 = vpack.c.b16 %v7890, %v7874
    %v9123 = vpack.c.b16 %v7891, %v7875
    %v9124 = vpack.c.b16 %v7892, %v7876
    %v9125 = vpack.c.b16 %v7893, %v7877
    %v9126 = vpack.c.b16 %v7894, %v7878
    %v9127 = vpack.c.b16 %v7895, %v7879
    %v9128 = vpack.c.b16 %v7896, %v7880
    %v9129 = vpack.c.b16 %v7897, %v7881
    %v9130 = vpack.c.b16 %v7898, %v7882
    %v9131 = vpack.c.b16 %v7899, %v7883
    %v9132 = vpack.c.b16 %v7900, %v7884
    %v9133 = vpack.c.b16 %v7901, %v7885
    %v9134 = vpack.c.b16 %v7918, %v7902
    %v9135 = vpack.c.b16 %v7919, %v7903
    %v9136 = vpack.c.b16 %v7920, %v7904
    %v9137 = vpack.c.b16 %v7921, %v7905
    %v9138 = vpack.c.b16 %v7922, %v7906
    %v9139 = vpack.c.b16 %v7923, %v7907
    %v9140 = vpack.c.b16 %v7924, %v7908
    %v9141 = vpack.c.b16 %v7925, %v7909
    %v9142 = vpack.c.b16 %v7926, %v7910
    %v9143 = vpack.c.b16 %v7927, %v7911
    %v9144 = vpack.c.b16 %v7928, %v7912
    %v9145 = vpack.c.b16 %v7929, %v7913
    %v9146 = vpack.c.b16 %v7930, %v7914
    %v9147 = vpack.c.b16 %v7931, %v7915
    %v9148 = vpack.c.b16 %v7932, %v7916
    %v9149 = vpack.c.b16 %v7933, %v7917
    %v9150 = vpack.c.b16 %v7950, %v7934
    %v9151 = vpack.c.b16 %v7951, %v7935
    %v9152 = vpack.c.b16 %v7952, %v7936
    %v9153 = vpack.c.b16 %v7953, %v7937
    %v9154 = vpack.c.b16 %v7954, %v7938
    %v9155 = vpack.c.b16 %v7955, %v7939
    %v9156 = vpack.c.b16 %v7956, %v7940
    %v9157 = vpack.c.b16 %v7957, %v7941
    %v9158 = vpack.c.b16 %v7958, %v7942
    %v9159 = vpack.c.b16 %v7959, %v7943
    %v9160 = vpack.c.b16 %v7960, %v7944
    %v9161 = vpack.c.b16 %v7961, %v7945
    %v9162 = vpack.c.b16 %v7962, %v7946
    %v9163 = vpack.c.b16 %v7963, %v7947
    %v9164 = vpack.c.b16 %v7964, %v7948
    %v9165 = vpack.c.b16 %v7965, %v7949
    %v9166 = vpack.c.b16 %v7982, %v7966
    %v9167 = vpack.c.b16 %v7983, %v7967
    %v9168 = vpack.c.b16 %v7984, %v7968
    %v9169 = vpack.c.b16 %v7985, %v7969
    %v9170 = vpack.c.b16 %v7986, %v7970
    %v9171 = vpack.c.b16 %v7987, %v7971
    %v9172 = vpack.c.b16 %v7988, %v7972
    %v9173 = vpack.c.b16 %v7989, %v7973
    %v9174 = vpack.c.b16 %v7990, %v7974
    %v9175 = vpack.c.b16 %v7991, %v7975
    %v9176 = vpack.c.b16 %v7992, %v7976
    %v9177 = vpack.c.b16 %v7993, %v7977
    %v9178 = vpack.c.b16 %v7994, %v7978
    %v9179 = vpack.c.b16 %v7995, %v7979
    %v9180 = vpack.c.b16 %v7996, %v7980
    %v9181 = vpack.c.b16 %v7997, %v7981
    %v9182 = vpack.c.b16 %v8014, %v7998
    %v9183 = vpack.c.b16 %v8015, %v7999
    %v9184 = vpack.c.b16 %v8016, %v8000
    %v9185 = vpack.c.b16 %v8017, %v8001
    %v9186 = vpack.c.b16 %v8018, %v8002
    %v9187 = vpack.c.b16 %v8019, %v8003
    %v9188 = vpack.c.b16 %v8020, %v8004
    %v9189 = vpack.c.b16 %v8021, %v8005
    %v9190 = vpack.c.b16 %v8022, %v8006
    %v9191 = vpack.c.b16 %v8023, %v8007
    %v9192 = vpack.c.b16 %v8024, %v8008
    %v9193 = vpack.c.b16 %v8025, %v8009
    %v9194 = vpack.c.b16 %v8026, %v8010
    %v9195 = vpack.c.b16 %v8027, %v8011
    %v9196 = vpack.c.b16 %v8028, %v8012
    %v9197 = vpack.c.b16 %v8029, %v8013
    %v9198 = vpack.c.b16 %v8046, %v8030
    %v9199 = vpack.c.b16 %v8047, %v8031
    %v9200 = vpack.c.b16 %v8048, %v8032
    %v9201 = vpack.c.b16 %v8049, %v8033
    %v9202 = vpack.c.b16 %v8050, %v8034
    %v9203 = vpack.c.b16 %v8051, %v8035
    %v9204 = vpack.c.b16 %v8052, %v8036
    %v9205 = vpack.c.b16 %v8053, %v8037
    %v9206 = vpack.c.b16 %v8054, %v8038
    %v9207 = vpack.c.b16 %v8055, %v8039
    %v9208 = vpack.c.b16 %v8056, %v8040
    %v9209 = vpack.c.b16 %v8057, %v8041
    %v9210 = vpack.c.b16 %v8058, %v8042
    %v9211 = vpack.c.b16 %v8059, %v8043
    %v9212 = vpack.c.b16 %v8060, %v8044
    %v9213 = vpack.c.b16 %v8061, %v8045
    %v9214 = vpack.c.b16 %v8078, %v8062
    %v9215 = vpack.c.b16 %v8079, %v8063
    %v9216 = vpack.c.b16 %v8080, %v8064
    %v9217 = vpack.c.b16 %v8081, %v8065
    %v9218 = vpack.c.b16 %v8082, %v8066
    %v9219 = vpack.c.b16 %v8083, %v8067
    %v9220 = vpack.c.b16 %v8084, %v8068
    %v9221 = vpack.c.b16 %v8085, %v8069
    %v9222 = vpack.c.b16 %v8086, %v8070
    %v9223 = vpack.c.b16 %v8087, %v8071
    %v9224 = vpack.c.b16 %v8088, %v8072
    %v9225 = vpack.c.b16 %v8089, %v8073
    %v9226 = vpack.c.b16 %v8090, %v8074
    %v9227 = vpack.c.b16 %v8091, %v8075
    %v9228 = vpack.c.b16 %v8092, %v8076
    %v9229 = vpack.c.b16 %v8093, %v8077
    %v9230 = vpack.c.b16 %v8110, %v8094
    %v9231 = vpack.c.b16 %v8111, %v8095
    %v9232 = vpack.c.b16 %v8112, %v8096
    %v9233 = vpack.c.b16 %v8113, %v8097
    %v9234 = vpack.c.b16 %v8114, %v8098
    %v9235 = vpack.c.b16 %v8115, %v8099
    %v9236 = vpack.c.b16 %v8116, %v8100
    %v9237 = vpack.c.b16 %v8117, %v8101
    %v9238 = vpack.c.b16 %v8118, %v8102
    %v9239 = vpack.c.b16 %v8119, %v8103
    %v9240 = vpack.c.b16 %v8120, %v8104
    %v9241 = vpack.c.b16 %v8121, %v8105
    %v9242 = vpack.c.b16 %v8122, %v8106
    %v9243 = vpack.c.b16 %v8123, %v8107
    %v9244 = vpack.c.b16 %v8124, %v8108
    %v9245 = vpack.c.b16 %v8125, %v8109
    %v9246 = vpack.c.b16 %v8142, %v8126
    %v9247 = vpack.c.b16 %v8143, %v8127
    %v9248 = vpack.c.b16 %v8144, %v8128
    %v9249 = vpack.c.b16 %v8145, %v8129
    %v9250 = vpack.c.b16 %v8146, %v8130
    %v9251 = vpack.c.b16 %v8147, %v8131
    %v9252 = vpack.c.b16 %v8148, %v8132
    %v9253 = vpack.c.b16 %v8149, %v8133
    %v9254 = vpack.c.b16 %v8150, %v8134
    %v9255 = vpack.c.b16 %v8151, %v8135
    %v9256 = vpack.c.b16 %v8152, %v8136
    %v9257 = vpack.c.b16 %v8153, %v8137
    %v9258 = vpack.c.b16 %v8154, %v8138
    %v9259 = vpack.c.b16 %v8155, %v8139
    %v9260 = vpack.c.b16 %v8156, %v8140
    %v9261 = vpack.c.b16 %v8157, %v8141
    %v9262 = vpack.c.b16 %v8174, %v8158
    %v9263 = vpack.c.b16 %v8175, %v8159
    %v9264 = vpack.c.b16 %v8176, %v8160
    %v9265 = vpack.c.b16 %v8177, %v8161
    %v9266 = vpack.c.b16 %v8178, %v8162
    %v9267 = vpack.c.b16 %v8179, %v8163
    %v9268 = vpack.c.b16 %v8180, %v8164
    %v9269 = vpack.c.b16 %v8181, %v8165
    %v9270 = vpack.c.b16 %v8182, %v8166
    %v9271 = vpack.c.b16 %v8183, %v8167
    %v9272 = vpack.c.b16 %v8184, %v8168
    %v9273 = vpack.c.b16 %v8185, %v8169
    %v9274 = vpack.c.b16 %v8186, %v8170
    %v9275 = vpack.c.b16 %v8187, %v8171
    %v9276 = vpack.c.b16 %v8188, %v8172
    %v9277 = vpack.c.b16 %v8189, %v8173
    %v9278 = vpack.c.b16 %v8206, %v8190
    %v9279 = vpack.c.b16 %v8207, %v8191
    %v9280 = vpack.c.b16 %v8208, %v8192
    %v9281 = vpack.c.b16 %v8209, %v8193
    %v9282 = vpack.c.b16 %v8210, %v8194
    %v9283 = vpack.c.b16 %v8211, %v8195
    %v9284 = vpack.c.b16 %v8212, %v8196
    %v9285 = vpack.c.b16 %v8213, %v8197
    %v9286 = vpack.c.b16 %v8214, %v8198
    %v9287 = vpack.c.b16 %v8215, %v8199
    %v9288 = vpack.c.b16 %v8216, %v8200
    %v9289 = vpack.c.b16 %v8217, %v8201
    %v9290 = vpack.c.b16 %v8218, %v8202
    %v9291 = vpack.c.b16 %v8219, %v8203
    %v9292 = vpack.c.b16 %v8220, %v8204
    %v9293 = vpack.c.b16 %v8221, %v8205
    %v9294 = vpack.c.b16 %v8238, %v8222
    %v9295 = vpack.c.b16 %v8239, %v8223
    %v9296 = vpack.c.b16 %v8240, %v8224
    %v9297 = vpack.c.b16 %v8241, %v8225
    %v9298 = vpack.c.b16 %v8242, %v8226
    %v9299 = vpack.c.b16 %v8243, %v8227
    %v9300 = vpack.c.b16 %v8244, %v8228
    %v9301 = vpack.c.b16 %v8245, %v8229
    %v9302 = vpack.c.b16 %v8246, %v8230
    %v9303 = vpack.c.b16 %v8247, %v8231
    %v9304 = vpack.c.b16 %v8248, %v8232
    %v9305 = vpack.c.b16 %v8249, %v8233
    %v9306 = vpack.c.b16 %v8250, %v8234
    %v9307 = vpack.c.b16 %v8251, %v8235
    %v9308 = vpack.c.b16 %v8252, %v8236
    %v9309 = vpack.c.b16 %v8253, %v8237
    %v9310 = vpack.c.b16 %v8270, %v8254
    %v9311 = vpack.c.b16 %v8271, %v8255
    %v9312 = vpack.c.b16 %v8272, %v8256
    %v9313 = vpack.c.b16 %v8273, %v8257
    %v9314 = vpack.c.b16 %v8274, %v8258
    %v9315 = vpack.c.b16 %v8275, %v8259
    %v9316 = vpack.c.b16 %v8276, %v8260
    %v9317 = vpack.c.b16 %v8277, %v8261
    %v9318 = vpack.c.b16 %v8278, %v8262
    %v9319 = vpack.c.b16 %v8279, %v8263
    %v9320 = vpack.c.b16 %v8280, %v8264
    %v9321 = vpack.c.b16 %v8281, %v8265
    %v9322 = vpack.c.b16 %v8282, %v8266
    %v9323 = vpack.c.b16 %v8283, %v8267
    %v9324 = vpack.c.b16 %v8284, %v8268
    %v9325 = vpack.c.b16 %v8285, %v8269
    %v9326 = vpack.c.b16 %v8302, %v8286
    %v9327 = vpack.c.b16 %v8303, %v8287
    %v9328 = vpack.c.b16 %v8304, %v8288
    %v9329 = vpack.c.b16 %v8305, %v8289
    %v9330 = vpack.c.b16 %v8306, %v8290
    %v9331 = vpack.c.b16 %v8307, %v8291
    %v9332 = vpack.c.b16 %v8308, %v8292
    %v9333 = vpack.c.b16 %v8309, %v8293
    %v9334 = vpack.c.b16 %v8310, %v8294
    %v9335 = vpack.c.b16 %v8311, %v8295
    %v9336 = vpack.c.b16 %v8312, %v8296
    %v9337 = vpack.c.b16 %v8313, %v8297
    %v9338 = vpack.c.b16 %v8314, %v8298
    %v9339 = vpack.c.b16 %v8315, %v8299
    %v9340 = vpack.c.b16 %v8316, %v8300
    %v9341 = vpack.c.b16 %v8317, %v8301
    %10366 = vmatprep.subr.bf16.mxu0 %v8319
    %10367 = vmatpush1.bf16.msra.mxu0 %v8318
    %10368 = vmatprep.subr.bf16.mxu0 %v8335
    %10369 = vmatpush1.bf16.msra.mxu0 %v8334
    %10370 = vmatprep.subr.bf16.mxu0 %v8351
    %10371 = vmatpush1.bf16.msra.mxu0 %v8350
    %10372 = vmatprep.subr.bf16.mxu0 %v8367
    %10373 = vmatpush1.bf16.msra.mxu0 %v8366
    %10374 = vmatprep.subr.bf16.mxu0 %v8383
    %10375 = vmatpush1.bf16.msra.mxu0 %v8382
    %10376 = vmatprep.subr.bf16.mxu0 %v8399
    %10377 = vmatpush1.bf16.msra.mxu0 %v8398
    %10378 = vmatprep.subr.bf16.mxu0 %v8415
    %10379 = vmatpush1.bf16.msra.mxu0 %v8414
    %10380 = vmatprep.subr.bf16.mxu0 %v8431
    %10381 = vmatpush1.bf16.msra.mxu0 %v8430
    %10382 = vmatprep.subr.bf16.mxu0 %v8447
    %10383 = vmatpush1.bf16.msra.mxu0 %v8446
    %10384 = vmatprep.subr.bf16.mxu0 %v8463
    %10385 = vmatpush1.bf16.msra.mxu0 %v8462
    %10386 = vmatprep.subr.bf16.mxu0 %v8479
    %10387 = vmatpush1.bf16.msra.mxu0 %v8478
    %10388 = vmatprep.subr.bf16.mxu0 %v8495
    %10389 = vmatpush1.bf16.msra.mxu0 %v8494
    %10390 = vmatprep.subr.bf16.mxu0 %v8511
    %10391 = vmatpush1.bf16.msra.mxu0 %v8510
    %10392 = vmatprep.subr.bf16.mxu0 %v8527
    %10393 = vmatpush1.bf16.msra.mxu0 %v8526
    %10394 = vmatprep.subr.bf16.mxu0 %v8543
    %10395 = vmatpush1.bf16.msra.mxu0 %v8542
    %10396 = vmatprep.subr.bf16.mxu0 %v8559
    %10397 = vmatpush1.bf16.msra.mxu0 %v8558
    %10398 = vmatprep.mubr.bf16.mxu0 %v4131
    %10399 = vmatmul.mubr.bf16.gmra.mrb[0].mxu0 %v4130
    %v10400 = vpop.f32.mrb[0].mxu0
    %v10401 = vadd.f32 %v5169, %v10400
    %v10402 = vpop.f32.mrb[0].mxu0
    %v10403 = vadd.f32 %v5173, %v10402
    %v10404 = vpop.f32.mrb[0].mxu0
    %v10405 = vpop.f32.mrb[0].mxu0
    %10406 = vdwg.mxu0
    %10407 = vmatprep.subr.bf16.mxu0 %v8575
    %10408 = vmatpush1.bf16.msra.mxu0 %v8574
    %10409 = vmatprep.subr.bf16.mxu0 %v8591
    %10410 = vmatpush1.bf16.msra.mxu0 %v8590
    %10411 = vmatprep.subr.bf16.mxu0 %v8607
    %10412 = vmatpush1.bf16.msra.mxu0 %v8606
    %10413 = vmatprep.subr.bf16.mxu0 %v8623
    %10414 = vmatpush1.bf16.msra.mxu0 %v8622
    %10415 = vmatprep.subr.bf16.mxu0 %v8639
    %10416 = vmatpush1.bf16.msra.mxu0 %v8638
    %10417 = vmatprep.subr.bf16.mxu0 %v8655
    %10418 = vmatpush1.bf16.msra.mxu0 %v8654
    %10419 = vmatprep.subr.bf16.mxu0 %v8671
    %10420 = vmatpush1.bf16.msra.mxu0 %v8670
    %10421 = vmatprep.subr.bf16.mxu0 %v8687
    %10422 = vmatpush1.bf16.msra.mxu0 %v8686
    %10423 = vmatprep.subr.bf16.mxu0 %v8703
    %10424 = vmatpush1.bf16.msra.mxu0 %v8702
    %10425 = vmatprep.subr.bf16.mxu0 %v8719
    %10426 = vmatpush1.bf16.msra.mxu0 %v8718
    %10427 = vmatprep.subr.bf16.mxu0 %v8735
    %10428 = vmatpush1.bf16.msra.mxu0 %v8734
    %10429 = vmatprep.subr.bf16.mxu0 %v8751
    %10430 = vmatpush1.bf16.msra.mxu0 %v8750
    %10431 = vmatprep.subr.bf16.mxu0 %v8767
    %10432 = vmatpush1.bf16.msra.mxu0 %v8766
    %10433 = vmatprep.subr.bf16.mxu0 %v8783
    %10434 = vmatpush1.bf16.msra.mxu0 %v8782
    %10435 = vmatprep.subr.bf16.mxu0 %v8799
    %10436 = vmatpush1.bf16.msra.mxu0 %v8798
    %10437 = vmatprep.subr.bf16.mxu0 %v8815
    %10438 = vmatpush1.bf16.msra.mxu0 %v8814
    %10439 = vmatprep.mubr.bf16.mxu0 %v4133
    %10440 = vmatmul.mubr.bf16.gmra.mrb[0].mxu0 %v4132
    %v10441 = vpop.f32.mrb[0].mxu0
    %v10442 = vadd.f32 %v10401, %v10441
    %v10443 = vpop.f32.mrb[0].mxu0
    %v10444 = vadd.f32 %v10403, %v10443
    %v10445 = vpop.f32.mrb[0].mxu0
    %v10446 = vpop.f32.mrb[0].mxu0
    %10447 = vdwg.mxu0
    %10448 = vmatprep.subr.bf16.mxu0 %v8831
    %10449 = vmatpush1.bf16.msra.mxu0 %v8830
    %10450 = vmatprep.subr.bf16.mxu0 %v8847
    %10451 = vmatpush1.bf16.msra.mxu0 %v8846
    %10452 = vmatprep.subr.bf16.mxu0 %v8863
    %10453 = vmatpush1.bf16.msra.mxu0 %v8862
    %10454 = vmatprep.subr.bf16.mxu0 %v8879
    %10455 = vmatpush1.bf16.msra.mxu0 %v8878
    %10456 = vmatprep.subr.bf16.mxu0 %v8895
    %10457 = vmatpush1.bf16.msra.mxu0 %v8894
    %10458 = vmatprep.subr.bf16.mxu0 %v8911
    %10459 = vmatpush1.bf16.msra.mxu0 %v8910
    %10460 = vmatprep.subr.bf16.mxu0 %v8927
    %10461 = vmatpush1.bf16.msra.mxu0 %v8926
    %10462 = vmatprep.subr.bf16.mxu0 %v8943
    %10463 = vmatpush1.bf16.msra.mxu0 %v8942
    %10464 = vmatprep.subr.bf16.mxu0 %v8959
    %10465 = vmatpush1.bf16.msra.mxu0 %v8958
    %10466 = vmatprep.subr.bf16.mxu0 %v8975
    %10467 = vmatpush1.bf16.msra.mxu0 %v8974
    %10468 = vmatprep.subr.bf16.mxu0 %v8991
    %10469 = vmatpush1.bf16.msra.mxu0 %v8990
    %10470 = vmatprep.subr.bf16.mxu0 %v9007
    %10471 = vmatpush1.bf16.msra.mxu0 %v9006
    %10472 = vmatprep.subr.bf16.mxu0 %v9023
    %10473 = vmatpush1.bf16.msra.mxu0 %v9022
    %10474 = vmatprep.subr.bf16.mxu0 %v9039
    %10475 = vmatpush1.bf16.msra.mxu0 %v9038
    %10476 = vmatprep.subr.bf16.mxu0 %v9055
    %10477 = vmatpush1.bf16.msra.mxu0 %v9054
    %10478 = vmatprep.subr.bf16.mxu0 %v9071
    %10479 = vmatpush1.bf16.msra.mxu0 %v9070
    %10480 = vmatprep.mubr.bf16.mxu0 %v4135
    %10481 = vmatmul.mubr.bf16.gmra.mrb[0].mxu0 %v4134
    %v10482 = vpop.f32.mrb[0].mxu0
    %v10483 = vadd.f32 %v10442, %v10482
    %v10484 = vpop.f32.mrb[0].mxu0
    %v10485 = vadd.f32 %v10444, %v10484
    %v10486 = vpop.f32.mrb[0].mxu0
    %v10487 = vpop.f32.mrb[0].mxu0
    %10488 = vdwg.mxu0
    %10489 = vmatprep.subr.bf16.mxu0 %v9087
    %10490 = vmatpush1.bf16.msra.mxu0 %v9086
    %10491 = vmatprep.subr.bf16.mxu0 %v9103
    %10492 = vmatpush1.bf16.msra.mxu0 %v9102
    %10493 = vmatprep.subr.bf16.mxu0 %v9119
    %10494 = vmatpush1.bf16.msra.mxu0 %v9118
    %10495 = vmatprep.subr.bf16.mxu0 %v9135
    %10496 = vmatpush1.bf16.msra.mxu0 %v9134
    %10497 = vmatprep.subr.bf16.mxu0 %v9151
    %10498 = vmatpush1.bf16.msra.mxu0 %v9150
    %10499 = vmatprep.subr.bf16.mxu0 %v9167
    %10500 = vmatpush1.bf16.msra.mxu0 %v9166
    %10501 = vmatprep.subr.bf16.mxu0 %v9183
    %10502 = vmatpush1.bf16.msra.mxu0 %v9182
    %10503 = vmatprep.subr.bf16.mxu0 %v9199
    %10504 = vmatpush1.bf16.msra.mxu0 %v9198
    %10505 = vmatprep.subr.bf16.mxu0 %v9215
    %10506 = vmatpush1.bf16.msra.mxu0 %v9214
    %10507 = vmatprep.subr.bf16.mxu0 %v9231
    %10508 = vmatpush1.bf16.msra.mxu0 %v9230
    %10509 = vmatprep.subr.bf16.mxu0 %v9247
    %10510 = vmatpush1.bf16.msra.mxu0 %v9246
    %10511 = vmatprep.subr.bf16.mxu0 %v9263
    %10512 = vmatpush1.bf16.msra.mxu0 %v9262
    %10513 = vmatprep.subr.bf16.mxu0 %v9279
    %10514 = vmatpush1.bf16.msra.mxu0 %v9278
    %10515 = vmatprep.subr.bf16.mxu0 %v9295
    %10516 = vmatpush1.bf16.msra.mxu0 %v9294
    %10517 = vmatprep.subr.bf16.mxu0 %v9311
    %10518 = vmatpush1.bf16.msra.mxu0 %v9310
    %10519 = vmatprep.subr.bf16.mxu0 %v9327
    %10520 = vmatpush1.bf16.msra.mxu0 %v9326
    %10521 = vmatprep.mubr.bf16.mxu0 %v4137
    %10522 = vmatmul.mubr.bf16.gmra.mrb[0].mxu0 %v4136
    %v10523 = vpop.f32.mrb[0].mxu0
    %v10524 = vadd.f32 %v10483, %v10523
    %v10525 = vpop.f32.mrb[0].mxu0
    %v10526 = vadd.f32 %v10485, %v10525
    %v10527 = vpop.f32.mrb[0].mxu0
    %v10528 = vpop.f32.mrb[0].mxu0
    %10529 = vdwg.mxu0
    %10530 = vmatprep.subr.bf16.mxu0 %v8321
    %10531 = vmatpush1.bf16.msra.mxu0 %v8320
    %10532 = vmatprep.subr.bf16.mxu0 %v8337
    %10533 = vmatpush1.bf16.msra.mxu0 %v8336
    %10534 = vmatprep.subr.bf16.mxu0 %v8353
    %10535 = vmatpush1.bf16.msra.mxu0 %v8352
    %10536 = vmatprep.subr.bf16.mxu0 %v8369
    %10537 = vmatpush1.bf16.msra.mxu0 %v8368
    %10538 = vmatprep.subr.bf16.mxu0 %v8385
    %10539 = vmatpush1.bf16.msra.mxu0 %v8384
    %10540 = vmatprep.subr.bf16.mxu0 %v8401
    %10541 = vmatpush1.bf16.msra.mxu0 %v8400
    %10542 = vmatprep.subr.bf16.mxu0 %v8417
    %10543 = vmatpush1.bf16.msra.mxu0 %v8416
    %10544 = vmatprep.subr.bf16.mxu0 %v8433
    %10545 = vmatpush1.bf16.msra.mxu0 %v8432
    %10546 = vmatprep.subr.bf16.mxu0 %v8449
    %10547 = vmatpush1.bf16.msra.mxu0 %v8448
    %10548 = vmatprep.subr.bf16.mxu0 %v8465
    %10549 = vmatpush1.bf16.msra.mxu0 %v8464
    %10550 = vmatprep.subr.bf16.mxu0 %v8481
    %10551 = vmatpush1.bf16.msra.mxu0 %v8480
    %10552 = vmatprep.subr.bf16.mxu0 %v8497
    %10553 = vmatpush1.bf16.msra.mxu0 %v8496
    %10554 = vmatprep.subr.bf16.mxu0 %v8513
    %10555 = vmatpush1.bf16.msra.mxu0 %v8512
    %10556 = vmatprep.subr.bf16.mxu0 %v8529
    %10557 = vmatpush1.bf16.msra.mxu0 %v8528
    %10558 = vmatprep.subr.bf16.mxu0 %v8545
    %10559 = vmatpush1.bf16.msra.mxu0 %v8544
    %10560 = vmatprep.subr.bf16.mxu0 %v8561
    %10561 = vmatpush1.bf16.msra.mxu0 %v8560
    %10562 = vmatprep.mubr.bf16.mxu0 %v4131
    %10563 = vmatmul.mubr.bf16.gmra.mrb[0].mxu0 %v4130
    %v10564 = vpop.f32.mrb[0].mxu0
    %v10565 = vadd.f32 %v5177, %v10564
    %v10566 = vpop.f32.mrb[0].mxu0
    %v10567 = vadd.f32 %v5181, %v10566
    %v10568 = vpop.f32.mrb[0].mxu0
    %v10569 = vpop.f32.mrb[0].mxu0
    %10570 = vdwg.mxu0
    %10571 = vmatprep.subr.bf16.mxu0 %v8577
    %10572 = vmatpush1.bf16.msra.mxu0 %v8576
    %10573 = vmatprep.subr.bf16.mxu0 %v8593
    %10574 = vmatpush1.bf16.msra.mxu0 %v8592
    %10575 = vmatprep.subr.bf16.mxu0 %v8609
    %10576 = vmatpush1.bf16.msra.mxu0 %v8608
    %10577 = vmatprep.subr.bf16.mxu0 %v8625
    %10578 = vmatpush1.bf16.msra.mxu0 %v8624
    %10579 = vmatprep.subr.bf16.mxu0 %v8641
    %10580 = vmatpush1.bf16.msra.mxu0 %v8640
    %10581 = vmatprep.subr.bf16.mxu0 %v8657
    %10582 = vmatpush1.bf16.msra.mxu0 %v8656
    %10583 = vmatprep.subr.bf16.mxu0 %v8673
    %10584 = vmatpush1.bf16.msra.mxu0 %v8672
    %10585 = vmatprep.subr.bf16.mxu0 %v8689
    %10586 = vmatpush1.bf16.msra.mxu0 %v8688
    %10587 = vmatprep.subr.bf16.mxu0 %v8705
    %10588 = vmatpush1.bf16.msra.mxu0 %v8704
    %10589 = vmatprep.subr.bf16.mxu0 %v8721
    %10590 = vmatpush1.bf16.msra.mxu0 %v8720
    %10591 = vmatprep.subr.bf16.mxu0 %v8737
    %10592 = vmatpush1.bf16.msra.mxu0 %v8736
    %10593 = vmatprep.subr.bf16.mxu0 %v8753
    %10594 = vmatpush1.bf16.msra.mxu0 %v8752
    %10595 = vmatprep.subr.bf16.mxu0 %v8769
    %10596 = vmatpush1.bf16.msra.mxu0 %v8768
    %10597 = vmatprep.subr.bf16.mxu0 %v8785
    %10598 = vmatpush1.bf16.msra.mxu0 %v8784
    %10599 = vmatprep.subr.bf16.mxu0 %v8801
    %10600 = vmatpush1.bf16.msra.mxu0 %v8800
    %10601 = vmatprep.subr.bf16.mxu0 %v8817
    %10602 = vmatpush1.bf16.msra.mxu0 %v8816
    %10603 = vmatprep.mubr.bf16.mxu0 %v4133
    %10604 = vmatmul.mubr.bf16.gmra.mrb[0].mxu0 %v4132
    %v10605 = vpop.f32.mrb[0].mxu0
    %v10606 = vadd.f32 %v10565, %v10605
    %v10607 = vpop.f32.mrb[0].mxu0
    %v10608 = vadd.f32 %v10567, %v10607
    %v10609 = vpop.f32.mrb[0].mxu0
    %v10610 = vpop.f32.mrb[0].mxu0
    %10611 = vdwg.mxu0
    %10612 = vmatprep.subr.bf16.mxu0 %v8833
    %10613 = vmatpush1.bf16.msra.mxu0 %v8832
    %10614 = vmatprep.subr.bf16.mxu0 %v8849
    %10615 = vmatpush1.bf16.msra.mxu0 %v8848
    %10616 = vmatprep.subr.bf16.mxu0 %v8865
    %10617 = vmatpush1.bf16.msra.mxu0 %v8864
    %10618 = vmatprep.subr.bf16.mxu0 %v8881
    %10619 = vmatpush1.bf16.msra.mxu0 %v8880
    %10620 = vmatprep.subr.bf16.mxu0 %v8897
    %10621 = vmatpush1.bf16.msra.mxu0 %v8896
    %10622 = vmatprep.subr.bf16.mxu0 %v8913
    %10623 = vmatpush1.bf16.msra.mxu0 %v8912
    %10624 = vmatprep.subr.bf16.mxu0 %v8929
    %10625 = vmatpush1.bf16.msra.mxu0 %v8928
    %10626 = vmatprep.subr.bf16.mxu0 %v8945
    %10627 = vmatpush1.bf16.msra.mxu0 %v8944
    %10628 = vmatprep.subr.bf16.mxu0 %v8961
    %10629 = vmatpush1.bf16.msra.mxu0 %v8960
    %10630 = vmatprep.subr.bf16.mxu0 %v8977
    %10631 = vmatpush1.bf16.msra.mxu0 %v8976
    %10632 = vmatprep.subr.bf16.mxu0 %v8993
    %10633 = vmatpush1.bf16.msra.mxu0 %v8992
    %10634 = vmatprep.subr.bf16.mxu0 %v9009
    %10635 = vmatpush1.bf16.msra.mxu0 %v9008
    %10636 = vmatprep.subr.bf16.mxu0 %v9025
    %10637 = vmatpush1.bf16.msra.mxu0 %v9024
    %10638 = vmatprep.subr.bf16.mxu0 %v9041
    %10639 = vmatpush1.bf16.msra.mxu0 %v9040
    %10640 = vmatprep.subr.bf16.mxu0 %v9057
    %10641 = vmatpush1.bf16.msra.mxu0 %v9056
    %10642 = vmatprep.subr.bf16.mxu0 %v9073
    %10643 = vmatpush1.bf16.msra.mxu0 %v9072
    %10644 = vmatprep.mubr.bf16.mxu0 %v4135
    %10645 = vmatmul.mubr.bf16.gmra.mrb[0].mxu0 %v4134
    %v10646 = vpop.f32.mrb[0].mxu0
    %v10647 = vadd.f32 %v10606, %v10646
    %v10648 = vpop.f32.mrb[0].mxu0
    %v10649 = vadd.f32 %v10608, %v10648
    %v10650 = vpop.f32.mrb[0].mxu0
    %v10651 = vpop.f32.mrb[0].mxu0
    %10652 = vdwg.mxu0
    %10653 = vmatprep.subr.bf16.mxu0 %v9089
    %10654 = vmatpush1.bf16.msra.mxu0 %v9088
    %10655 = vmatprep.subr.bf16.mxu0 %v9105
    %10656 = vmatpush1.bf16.msra.mxu0 %v9104
    %10657 = vmatprep.subr.bf16.mxu0 %v9121
    %10658 = vmatpush1.bf16.msra.mxu0 %v9120
    %10659 = vmatprep.subr.bf16.mxu0 %v9137
    %10660 = vmatpush1.bf16.msra.mxu0 %v9136
    %10661 = vmatprep.subr.bf16.mxu0 %v9153
    %10662 = vmatpush1.bf16.msra.mxu0 %v9152
    %10663 = vmatprep.subr.bf16.mxu0 %v9169
    %10664 = vmatpush1.bf16.msra.mxu0 %v9168
    %10665 = vmatprep.subr.bf16.mxu0 %v9185
    %10666 = vmatpush1.bf16.msra.mxu0 %v9184
    %10667 = vmatprep.subr.bf16.mxu0 %v9201
    %10668 = vmatpush1.bf16.msra.mxu0 %v9200
    %10669 = vmatprep.subr.bf16.mxu0 %v9217
    %10670 = vmatpush1.bf16.msra.mxu0 %v9216
    %10671 = vmatprep.subr.bf16.mxu0 %v9233
    %10672 = vmatpush1.bf16.msra.mxu0 %v9232
    %10673 = vmatprep.subr.bf16.mxu0 %v9249
    %10674 = vmatpush1.bf16.msra.mxu0 %v9248
    %10675 = vmatprep.subr.bf16.mxu0 %v9265
    %10676 = vmatpush1.bf16.msra.mxu0 %v9264
    %10677 = vmatprep.subr.bf16.mxu0 %v9281
    %10678 = vmatpush1.bf16.msra.mxu0 %v9280
    %10679 = vmatprep.subr.bf16.mxu0 %v9297
    %10680 = vmatpush1.bf16.msra.mxu0 %v9296
    %10681 = vmatprep.subr.bf16.mxu0 %v9313
    %10682 = vmatpush1.bf16.msra.mxu0 %v9312
    %10683 = vmatprep.subr.bf16.mxu0 %v9329
    %10684 = vmatpush1.bf16.msra.mxu0 %v9328
    %10685 = vmatprep.mubr.bf16.mxu0 %v4137
    %10686 = vmatmul.mubr.bf16.gmra.mrb[0].mxu0 %v4136
    %v10687 = vpop.f32.mrb[0].mxu0
    %v10688 = vadd.f32 %v10647, %v10687
    %v10689 = vpop.f32.mrb[0].mxu0
    %v10690 = vadd.f32 %v10649, %v10689
    %v10691 = vpop.f32.mrb[0].mxu0
    %v10692 = vpop.f32.mrb[0].mxu0
    %10693 = vdwg.mxu0
    %10694 = vmatprep.subr.bf16.mxu0 %v8323
    %10695 = vmatpush1.bf16.msra.mxu0 %v8322
    %10696 = vmatprep.subr.bf16.mxu0 %v8339
    %10697 = vmatpush1.bf16.msra.mxu0 %v8338
    %10698 = vmatprep.subr.bf16.mxu0 %v8355
    %10699 = vmatpush1.bf16.msra.mxu0 %v8354
    %10700 = vmatprep.subr.bf16.mxu0 %v8371
    %10701 = vmatpush1.bf16.msra.mxu0 %v8370
    %10702 = vmatprep.subr.bf16.mxu0 %v8387
    %10703 = vmatpush1.bf16.msra.mxu0 %v8386
    %10704 = vmatprep.subr.bf16.mxu0 %v8403
    %10705 = vmatpush1.bf16.msra.mxu0 %v8402
    %10706 = vmatprep.subr.bf16.mxu0 %v8419
    %10707 = vmatpush1.bf16.msra.mxu0 %v8418
    %10708 = vmatprep.subr.bf16.mxu0 %v8435
    %10709 = vmatpush1.bf16.msra.mxu0 %v8434
    %10710 = vmatprep.subr.bf16.mxu0 %v8451
    %10711 = vmatpush1.bf16.msra.mxu0 %v8450
    %10712 = vmatprep.subr.bf16.mxu0 %v8467
    %10713 = vmatpush1.bf16.msra.mxu0 %v8466
    %10714 = vmatprep.subr.bf16.mxu0 %v8483
    %10715 = vmatpush1.bf16.msra.mxu0 %v8482
    %10716 = vmatprep.subr.bf16.mxu0 %v8499
    %10717 = vmatpush1.bf16.msra.mxu0 %v8498
    %10718 = vmatprep.subr.bf16.mxu0 %v8515
    %10719 = vmatpush1.bf16.msra.mxu0 %v8514
    %10720 = vmatprep.subr.bf16.mxu0 %v8531
    %10721 = vmatpush1.bf16.msra.mxu0 %v8530
    %10722 = vmatprep.subr.bf16.mxu0 %v8547
    %10723 = vmatpush1.bf16.msra.mxu0 %v8546
    %10724 = vmatprep.subr.bf16.mxu0 %v8563
    %10725 = vmatpush1.bf16.msra.mxu0 %v8562
    %10726 = vmatprep.mubr.bf16.mxu0 %v4131
    %10727 = vmatmul.mubr.bf16.gmra.mrb[0].mxu0 %v4130
    %v10728 = vpop.f32.mrb[0].mxu0
    %v10729 = vadd.f32 %v5185, %v10728
    %v10730 = vpop.f32.mrb[0].mxu0
    %v10731 = vadd.f32 %v5189, %v10730
    %v10732 = vpop.f32.mrb[0].mxu0
    %v10733 = vpop.f32.mrb[0].mxu0
    %10734 = vdwg.mxu0
    %10735 = vmatprep.subr.bf16.mxu0 %v8579
    %10736 = vmatpush1.bf16.msra.mxu0 %v8578
    %10737 = vmatprep.subr.bf16.mxu0 %v8595
    %10738 = vmatpush1.bf16.msra.mxu0 %v8594
    %10739 = vmatprep.subr.bf16.mxu0 %v8611
    %10740 = vmatpush1.bf16.msra.mxu0 %v8610
    %10741 = vmatprep.subr.bf16.mxu0 %v8627
    %10742 = vmatpush1.bf16.msra.mxu0 %v8626
    %10743 = vmatprep.subr.bf16.mxu0 %v8643
    %10744 = vmatpush1.bf16.msra.mxu0 %v8642
    %10745 = vmatprep.subr.bf16.mxu0 %v8659
    %10746 = vmatpush1.bf16.msra.mxu0 %v8658
    %10747 = vmatprep.subr.bf16.mxu0 %v8675
    %10748 = vmatpush1.bf16.msra.mxu0 %v8674
    %10749 = vmatprep.subr.bf16.mxu0 %v8691
    %10750 = vmatpush1.bf16.msra.mxu0 %v8690
    %10751 = vmatprep.subr.bf16.mxu0 %v8707
    %10752 = vmatpush1.bf16.msra.mxu0 %v8706
    %10753 = vmatprep.subr.bf16.mxu0 %v8723
    %10754 = vmatpush1.bf16.msra.mxu0 %v8722
    %10755 = vmatprep.subr.bf16.mxu0 %v8739
    %10756 = vmatpush1.bf16.msra.mxu0 %v8738
    %10757 = vmatprep.subr.bf16.mxu0 %v8755
    %10758 = vmatpush1.bf16.msra.mxu0 %v8754
    %10759 = vmatprep.subr.bf16.mxu0 %v8771
    %10760 = vmatpush1.bf16.msra.mxu0 %v8770
    %10761 = vmatprep.subr.bf16.mxu0 %v8787
    %10762 = vmatpush1.bf16.msra.mxu0 %v8786
    %10763 = vmatprep.subr.bf16.mxu0 %v8803
    %10764 = vmatpush1.bf16.msra.mxu0 %v8802
    %10765 = vmatprep.subr.bf16.mxu0 %v8819
    %10766 = vmatpush1.bf16.msra.mxu0 %v8818
    %10767 = vmatprep.mubr.bf16.mxu0 %v4133
    %10768 = vmatmul.mubr.bf16.gmra.mrb[0].mxu0 %v4132
    %v10769 = vpop.f32.mrb[0].mxu0
    %v10770 = vadd.f32 %v10729, %v10769
    %v10771 = vpop.f32.mrb[0].mxu0
    %v10772 = vadd.f32 %v10731, %v10771
    %v10773 = vpop.f32.mrb[0].mxu0
    %v10774 = vpop.f32.mrb[0].mxu0
    %10775 = vdwg.mxu0
    %10776 = vmatprep.subr.bf16.mxu0 %v8835
    %10777 = vmatpush1.bf16.msra.mxu0 %v8834
    %10778 = vmatprep.subr.bf16.mxu0 %v8851
    %10779 = vmatpush1.bf16.msra.mxu0 %v8850
    %10780 = vmatprep.subr.bf16.mxu0 %v8867
    %10781 = vmatpush1.bf16.msra.mxu0 %v8866
    %10782 = vmatprep.subr.bf16.mxu0 %v8883
    %10783 = vmatpush1.bf16.msra.mxu0 %v8882
    %10784 = vmatprep.subr.bf16.mxu0 %v8899
    %10785 = vmatpush1.bf16.msra.mxu0 %v8898
    %10786 = vmatprep.subr.bf16.mxu0 %v8915
    %10787 = vmatpush1.bf16.msra.mxu0 %v8914
    %10788 = vmatprep.subr.bf16.mxu0 %v8931
    %10789 = vmatpush1.bf16.msra.mxu0 %v8930
    %10790 = vmatprep.subr.bf16.mxu0 %v8947
    %10791 = vmatpush1.bf16.msra.mxu0 %v8946
    %10792 = vmatprep.subr.bf16.mxu0 %v8963
    %10793 = vmatpush1.bf16.msra.mxu0 %v8962
    %10794 = vmatprep.subr.bf16.mxu0 %v8979
    %10795 = vmatpush1.bf16.msra.mxu0 %v8978
    %10796 = vmatprep.subr.bf16.mxu0 %v8995
    %10797 = vmatpush1.bf16.msra.mxu0 %v8994
    %10798 = vmatprep.subr.bf16.mxu0 %v9011
    %10799 = vmatpush1.bf16.msra.mxu0 %v9010
    %10800 = vmatprep.subr.bf16.mxu0 %v9027
    %10801 = vmatpush1.bf16.msra.mxu0 %v9026
    %10802 = vmatprep.subr.bf16.mxu0 %v9043
    %10803 = vmatpush1.bf16.msra.mxu0 %v9042
    %10804 = vmatprep.subr.bf16.mxu0 %v9059
    %10805 = vmatpush1.bf16.msra.mxu0 %v9058
    %10806 = vmatprep.subr.bf16.mxu0 %v9075
    %10807 = vmatpush1.bf16.msra.mxu0 %v9074
    %10808 = vmatprep.mubr.bf16.mxu0 %v4135
    %10809 = vmatmul.mubr.bf16.gmra.mrb[0].mxu0 %v4134
    %v10810 = vpop.f32.mrb[0].mxu0
    %v10811 = vadd.f32 %v10770, %v10810
    %v10812 = vpop.f32.mrb[0].mxu0
    %v10813 = vadd.f32 %v10772, %v10812
    %v10814 = vpop.f32.mrb[0].mxu0
    %v10815 = vpop.f32.mrb[0].mxu0
    %10816 = vdwg.mxu0
    %10817 = vmatprep.subr.bf16.mxu0 %v9091
    %10818 = vmatpush1.bf16.msra.mxu0 %v9090
    %10819 = vmatprep.subr.bf16.mxu0 %v9107
    %10820 = vmatpush1.bf16.msra.mxu0 %v9106
    %10821 = vmatprep.subr.bf16.mxu0 %v9123
    %10822 = vmatpush1.bf16.msra.mxu0 %v9122
    %10823 = vmatprep.subr.bf16.mxu0 %v9139
    %10824 = vmatpush1.bf16.msra.mxu0 %v9138
    %10825 = vmatprep.subr.bf16.mxu0 %v9155
    %10826 = vmatpush1.bf16.msra.mxu0 %v9154
    %10827 = vmatprep.subr.bf16.mxu0 %v9171
    %10828 = vmatpush1.bf16.msra.mxu0 %v9170
    %10829 = vmatprep.subr.bf16.mxu0 %v9187
    %10830 = vmatpush1.bf16.msra.mxu0 %v9186
    %10831 = vmatprep.subr.bf16.mxu0 %v9203
    %10832 = vmatpush1.bf16.msra.mxu0 %v9202
    %10833 = vmatprep.subr.bf16.mxu0 %v9219
    %10834 = vmatpush1.bf16.msra.mxu0 %v9218
    %10835 = vmatprep.subr.bf16.mxu0 %v9235
    %10836 = vmatpush1.bf16.msra.mxu0 %v9234
    %10837 = vmatprep.subr.bf16.mxu0 %v9251
    %10838 = vmatpush1.bf16.msra.mxu0 %v9250
    %10839 = vmatprep.subr.bf16.mxu0 %v9267
    %10840 = vmatpush1.bf16.msra.mxu0 %v9266
    %10841 = vmatprep.subr.bf16.mxu0 %v9283
    %10842 = vmatpush1.bf16.msra.mxu0 %v9282
    %10843 = vmatprep.subr.bf16.mxu0 %v9299
    %10844 = vmatpush1.bf16.msra.mxu0 %v9298
    %10845 = vmatprep.subr.bf16.mxu0 %v9315
    %10846 = vmatpush1.bf16.msra.mxu0 %v9314
    %10847 = vmatprep.subr.bf16.mxu0 %v9331
    %10848 = vmatpush1.bf16.msra.mxu0 %v9330
    %10849 = vmatprep.mubr.bf16.mxu0 %v4137
    %10850 = vmatmul.mubr.bf16.gmra.mrb[0].mxu0 %v4136
    %v10851 = vpop.f32.mrb[0].mxu0
    %v10852 = vadd.f32 %v10811, %v10851
    %v10853 = vpop.f32.mrb[0].mxu0
    %v10854 = vadd.f32 %v10813, %v10853
    %v10855 = vpop.f32.mrb[0].mxu0
    %v10856 = vpop.f32.mrb[0].mxu0
    %10857 = vdwg.mxu0
    %10858 = vmatprep.subr.bf16.mxu0 %v8325
    %10859 = vmatpush1.bf16.msra.mxu0 %v8324
    %10860 = vmatprep.subr.bf16.mxu0 %v8341
    %10861 = vmatpush1.bf16.msra.mxu0 %v8340
    %10862 = vmatprep.subr.bf16.mxu0 %v8357
    %10863 = vmatpush1.bf16.msra.mxu0 %v8356
    %10864 = vmatprep.subr.bf16.mxu0 %v8373
    %10865 = vmatpush1.bf16.msra.mxu0 %v8372
    %10866 = vmatprep.subr.bf16.mxu0 %v8389
    %10867 = vmatpush1.bf16.msra.mxu0 %v8388
    %10868 = vmatprep.subr.bf16.mxu0 %v8405
    %10869 = vmatpush1.bf16.msra.mxu0 %v8404
    %10870 = vmatprep.subr.bf16.mxu0 %v8421
    %10871 = vmatpush1.bf16.msra.mxu0 %v8420
    %10872 = vmatprep.subr.bf16.mxu0 %v8437
    %10873 = vmatpush1.bf16.msra.mxu0 %v8436
    %10874 = vmatprep.subr.bf16.mxu0 %v8453
    %10875 = vmatpush1.bf16.msra.mxu0 %v8452
    %10876 = vmatprep.subr.bf16.mxu0 %v8469
    %10877 = vmatpush1.bf16.msra.mxu0 %v8468
    %10878 = vmatprep.subr.bf16.mxu0 %v8485
    %10879 = vmatpush1.bf16.msra.mxu0 %v8484
    %10880 = vmatprep.subr.bf16.mxu0 %v8501
    %10881 = vmatpush1.bf16.msra.mxu0 %v8500
    %10882 = vmatprep.subr.bf16.mxu0 %v8517
    %10883 = vmatpush1.bf16.msra.mxu0 %v8516
    %10884 = vmatprep.subr.bf16.mxu0 %v8533
    %10885 = vmatpush1.bf16.msra.mxu0 %v8532
    %10886 = vmatprep.subr.bf16.mxu0 %v8549
    %10887 = vmatpush1.bf16.msra.mxu0 %v8548
    %10888 = vmatprep.subr.bf16.mxu0 %v8565
    %10889 = vmatpush1.bf16.msra.mxu0 %v8564
    %10890 = vmatprep.mubr.bf16.mxu0 %v4131
    %10891 = vmatmul.mubr.bf16.gmra.mrb[0].mxu0 %v4130
    %v10892 = vpop.f32.mrb[0].mxu0
    %v10893 = vadd.f32 %v5193, %v10892
    %v10894 = vpop.f32.mrb[0].mxu0
    %v10895 = vadd.f32 %v5197, %v10894
    %v10896 = vpop.f32.mrb[0].mxu0
    %v10897 = vpop.f32.mrb[0].mxu0
    %10898 = vdwg.mxu0
    %10899 = vmatprep.subr.bf16.mxu0 %v8581
    %10900 = vmatpush1.bf16.msra.mxu0 %v8580
    %10901 = vmatprep.subr.bf16.mxu0 %v8597
    %10902 = vmatpush1.bf16.msra.mxu0 %v8596
    %10903 = vmatprep.subr.bf16.mxu0 %v8613
    %10904 = vmatpush1.bf16.msra.mxu0 %v8612
    %10905 = vmatprep.subr.bf16.mxu0 %v8629
    %10906 = vmatpush1.bf16.msra.mxu0 %v8628
    %10907 = vmatprep.subr.bf16.mxu0 %v8645
    %10908 = vmatpush1.bf16.msra.mxu0 %v8644
    %10909 = vmatprep.subr.bf16.mxu0 %v8661
    %10910 = vmatpush1.bf16.msra.mxu0 %v8660
    %10911 = vmatprep.subr.bf16.mxu0 %v8677
    %10912 = vmatpush1.bf16.msra.mxu0 %v8676
    %10913 = vmatprep.subr.bf16.mxu0 %v8693
    %10914 = vmatpush1.bf16.msra.mxu0 %v8692
    %10915 = vmatprep.subr.bf16.mxu0 %v8709
    %10916 = vmatpush1.bf16.msra.mxu0 %v8708
    %10917 = vmatprep.subr.bf16.mxu0 %v8725
    %10918 = vmatpush1.bf16.msra.mxu0 %v8724
    %10919 = vmatprep.subr.bf16.mxu0 %v8741
    %10920 = vmatpush1.bf16.msra.mxu0 %v8740
    %10921 = vmatprep.subr.bf16.mxu0 %v8757
    %10922 = vmatpush1.bf16.msra.mxu0 %v8756
    %10923 = vmatprep.subr.bf16.mxu0 %v8773
    %10924 = vmatpush1.bf16.msra.mxu0 %v8772
    %10925 = vmatprep.subr.bf16.mxu0 %v8789
    %10926 = vmatpush1.bf16.msra.mxu0 %v8788
    %10927 = vmatprep.subr.bf16.mxu0 %v8805
    %10928 = vmatpush1.bf16.msra.mxu0 %v8804
    %10929 = vmatprep.subr.bf16.mxu0 %v8821
    %10930 = vmatpush1.bf16.msra.mxu0 %v8820
    %10931 = vmatprep.mubr.bf16.mxu0 %v4133
    %10932 = vmatmul.mubr.bf16.gmra.mrb[0].mxu0 %v4132
    %v10933 = vpop.f32.mrb[0].mxu0
    %v10934 = vadd.f32 %v10893, %v10933
    %v10935 = vpop.f32.mrb[0].mxu0
    %v10936 = vadd.f32 %v10895, %v10935
    %v10937 = vpop.f32.mrb[0].mxu0
    %v10938 = vpop.f32.mrb[0].mxu0
    %10939 = vdwg.mxu0
    %10940 = vmatprep.subr.bf16.mxu0 %v8837
    %10941 = vmatpush1.bf16.msra.mxu0 %v8836
    %10942 = vmatprep.subr.bf16.mxu0 %v8853
    %10943 = vmatpush1.bf16.msra.mxu0 %v8852
    %10944 = vmatprep.subr.bf16.mxu0 %v8869
    %10945 = vmatpush1.bf16.msra.mxu0 %v8868
    %10946 = vmatprep.subr.bf16.mxu0 %v8885
    %10947 = vmatpush1.bf16.msra.mxu0 %v8884
    %10948 = vmatprep.subr.bf16.mxu0 %v8901
    %10949 = vmatpush1.bf16.msra.mxu0 %v8900
    %10950 = vmatprep.subr.bf16.mxu0 %v8917
    %10951 = vmatpush1.bf16.msra.mxu0 %v8916
    %10952 = vmatprep.subr.bf16.mxu0 %v8933
    %10953 = vmatpush1.bf16.msra.mxu0 %v8932
    %10954 = vmatprep.subr.bf16.mxu0 %v8949
    %10955 = vmatpush1.bf16.msra.mxu0 %v8948
    %10956 = vmatprep.subr.bf16.mxu0 %v8965
    %10957 = vmatpush1.bf16.msra.mxu0 %v8964
    %10958 = vmatprep.subr.bf16.mxu0 %v8981
    %10959 = vmatpush1.bf16.msra.mxu0 %v8980
    %10960 = vmatprep.subr.bf16.mxu0 %v8997
    %10961 = vmatpush1.bf16.msra.mxu0 %v8996
    %10962 = vmatprep.subr.bf16.mxu0 %v9013
    %10963 = vmatpush1.bf16.msra.mxu0 %v9012
    %10964 = vmatprep.subr.bf16.mxu0 %v9029
    %10965 = vmatpush1.bf16.msra.mxu0 %v9028
    %10966 = vmatprep.subr.bf16.mxu0 %v9045
    %10967 = vmatpush1.bf16.msra.mxu0 %v9044
    %10968 = vmatprep.subr.bf16.mxu0 %v9061
    %10969 = vmatpush1.bf16.msra.mxu0 %v9060
    %10970 = vmatprep.subr.bf16.mxu0 %v9077
    %10971 = vmatpush1.bf16.msra.mxu0 %v9076
    %10972 = vmatprep.mubr.bf16.mxu0 %v4135
    %10973 = vmatmul.mubr.bf16.gmra.mrb[0].mxu0 %v4134
    %v10974 = vpop.f32.mrb[0].mxu0
    %v10975 = vadd.f32 %v10934, %v10974
    %v10976 = vpop.f32.mrb[0].mxu0
    %v10977 = vadd.f32 %v10936, %v10976
    %v10978 = vpop.f32.mrb[0].mxu0
    %v10979 = vpop.f32.mrb[0].mxu0
    %10980 = vdwg.mxu0
    %10981 = vmatprep.subr.bf16.mxu0 %v9093
    %10982 = vmatpush1.bf16.msra.mxu0 %v9092
    %10983 = vmatprep.subr.bf16.mxu0 %v9109
    %10984 = vmatpush1.bf16.msra.mxu0 %v9108
    %10985 = vmatprep.subr.bf16.mxu0 %v9125
    %10986 = vmatpush1.bf16.msra.mxu0 %v9124
    %10987 = vmatprep.subr.bf16.mxu0 %v9141
    %10988 = vmatpush1.bf16.msra.mxu0 %v9140
    %10989 = vmatprep.subr.bf16.mxu0 %v9157
    %10990 = vmatpush1.bf16.msra.mxu0 %v9156
    %10991 = vmatprep.subr.bf16.mxu0 %v9173
    %10992 = vmatpush1.bf16.msra.mxu0 %v9172
    %10993 = vmatprep.subr.bf16.mxu0 %v9189
    %10994 = vmatpush1.bf16.msra.mxu0 %v9188
    %10995 = vmatprep.subr.bf16.mxu0 %v9205
    %10996 = vmatpush1.bf16.msra.mxu0 %v9204
    %10997 = vmatprep.subr.bf16.mxu0 %v9221
    %10998 = vmatpush1.bf16.msra.mxu0 %v9220
    %10999 = vmatprep.subr.bf16.mxu0 %v9237
    %11000 = vmatpush1.bf16.msra.mxu0 %v9236
    %11001 = vmatprep.subr.bf16.mxu0 %v9253
    %11002 = vmatpush1.bf16.msra.mxu0 %v9252
    %11003 = vmatprep.subr.bf16.mxu0 %v9269
    %11004 = vmatpush1.bf16.msra.mxu0 %v9268
    %11005 = vmatprep.subr.bf16.mxu0 %v9285
    %11006 = vmatpush1.bf16.msra.mxu0 %v9284
    %11007 = vmatprep.subr.bf16.mxu0 %v9301
    %11008 = vmatpush1.bf16.msra.mxu0 %v9300
    %11009 = vmatprep.subr.bf16.mxu0 %v9317
    %11010 = vmatpush1.bf16.msra.mxu0 %v9316
    %11011 = vmatprep.subr.bf16.mxu0 %v9333
    %11012 = vmatpush1.bf16.msra.mxu0 %v9332
    %11013 = vmatprep.mubr.bf16.mxu0 %v4137
    %11014 = vmatmul.mubr.bf16.gmra.mrb[0].mxu0 %v4136
    %v11015 = vpop.f32.mrb[0].mxu0
    %v11016 = vadd.f32 %v10975, %v11015
    %v11017 = vpop.f32.mrb[0].mxu0
    %v11018 = vadd.f32 %v10977, %v11017
    %v11019 = vpop.f32.mrb[0].mxu0
    %v11020 = vpop.f32.mrb[0].mxu0
    %11021 = vdwg.mxu0
    %11022 = vmatprep.subr.bf16.mxu0 %v8327
    %11023 = vmatpush1.bf16.msra.mxu0 %v8326
    %11024 = vmatprep.subr.bf16.mxu0 %v8343
    %11025 = vmatpush1.bf16.msra.mxu0 %v8342
    %11026 = vmatprep.subr.bf16.mxu0 %v8359
    %11027 = vmatpush1.bf16.msra.mxu0 %v8358
    %11028 = vmatprep.subr.bf16.mxu0 %v8375
    %11029 = vmatpush1.bf16.msra.mxu0 %v8374
    %11030 = vmatprep.subr.bf16.mxu0 %v8391
    %11031 = vmatpush1.bf16.msra.mxu0 %v8390
    %11032 = vmatprep.subr.bf16.mxu0 %v8407
    %11033 = vmatpush1.bf16.msra.mxu0 %v8406
    %11034 = vmatprep.subr.bf16.mxu0 %v8423
    %11035 = vmatpush1.bf16.msra.mxu0 %v8422
    %11036 = vmatprep.subr.bf16.mxu0 %v8439
    %11037 = vmatpush1.bf16.msra.mxu0 %v8438
    %11038 = vmatprep.subr.bf16.mxu0 %v8455
    %11039 = vmatpush1.bf16.msra.mxu0 %v8454
    %11040 = vmatprep.subr.bf16.mxu0 %v8471
    %11041 = vmatpush1.bf16.msra.mxu0 %v8470
    %11042 = vmatprep.subr.bf16.mxu0 %v8487
    %11043 = vmatpush1.bf16.msra.mxu0 %v8486
    %11044 = vmatprep.subr.bf16.mxu0 %v8503
    %11045 = vmatpush1.bf16.msra.mxu0 %v8502
    %11046 = vmatprep.subr.bf16.mxu0 %v8519
    %11047 = vmatpush1.bf16.msra.mxu0 %v8518
    %11048 = vmatprep.subr.bf16.mxu0 %v8535
    %11049 = vmatpush1.bf16.msra.mxu0 %v8534
    %11050 = vmatprep.subr.bf16.mxu0 %v8551
    %11051 = vmatpush1.bf16.msra.mxu0 %v8550
    %11052 = vmatprep.subr.bf16.mxu0 %v8567
    %11053 = vmatpush1.bf16.msra.mxu0 %v8566
    %11054 = vmatprep.mubr.bf16.mxu0 %v4131
    %11055 = vmatmul.mubr.bf16.gmra.mrb[0].mxu0 %v4130
    %v11056 = vpop.f32.mrb[0].mxu0
    %v11057 = vadd.f32 %v5201, %v11056
    %v11058 = vpop.f32.mrb[0].mxu0
    %v11059 = vadd.f32 %v5205, %v11058
    %v11060 = vpop.f32.mrb[0].mxu0
    %v11061 = vpop.f32.mrb[0].mxu0
    %11062 = vdwg.mxu0
    %11063 = vmatprep.subr.bf16.mxu0 %v8583
    %11064 = vmatpush1.bf16.msra.mxu0 %v8582
    %11065 = vmatprep.subr.bf16.mxu0 %v8599
    %11066 = vmatpush1.bf16.msra.mxu0 %v8598
    %11067 = vmatprep.subr.bf16.mxu0 %v8615
    %11068 = vmatpush1.bf16.msra.mxu0 %v8614
    %11069 = vmatprep.subr.bf16.mxu0 %v8631
    %11070 = vmatpush1.bf16.msra.mxu0 %v8630
    %11071 = vmatprep.subr.bf16.mxu0 %v8647
    %11072 = vmatpush1.bf16.msra.mxu0 %v8646
    %11073 = vmatprep.subr.bf16.mxu0 %v8663
    %11074 = vmatpush1.bf16.msra.mxu0 %v8662
    %11075 = vmatprep.subr.bf16.mxu0 %v8679
    %11076 = vmatpush1.bf16.msra.mxu0 %v8678
    %11077 = vmatprep.subr.bf16.mxu0 %v8695
    %11078 = vmatpush1.bf16.msra.mxu0 %v8694
    %11079 = vmatprep.subr.bf16.mxu0 %v8711
    %11080 = vmatpush1.bf16.msra.mxu0 %v8710
    %11081 = vmatprep.subr.bf16.mxu0 %v8727
    %11082 = vmatpush1.bf16.msra.mxu0 %v8726
    %11083 = vmatprep.subr.bf16.mxu0 %v8743
    %11084 = vmatpush1.bf16.msra.mxu0 %v8742
    %11085 = vmatprep.subr.bf16.mxu0 %v8759
    %11086 = vmatpush1.bf16.msra.mxu0 %v8758
    %11087 = vmatprep.subr.bf16.mxu0 %v8775
    %11088 = vmatpush1.bf16.msra.mxu0 %v8774
    %11089 = vmatprep.subr.bf16.mxu0 %v8791
    %11090 = vmatpush1.bf16.msra.mxu0 %v8790
    %11091 = vmatprep.subr.bf16.mxu0 %v8807
    %11092 = vmatpush1.bf16.msra.mxu0 %v8806
    %11093 = vmatprep.subr.bf16.mxu0 %v8823
    %11094 = vmatpush1.bf16.msra.mxu0 %v8822
    %11095 = vmatprep.mubr.bf16.mxu0 %v4133
    %11096 = vmatmul.mubr.bf16.gmra.mrb[0].mxu0 %v4132
    %v11097 = vpop.f32.mrb[0].mxu0
    %v11098 = vadd.f32 %v11057, %v11097
    %v11099 = vpop.f32.mrb[0].mxu0
    %v11100 = vadd.f32 %v11059, %v11099
    %v11101 = vpop.f32.mrb[0].mxu0
    %v11102 = vpop.f32.mrb[0].mxu0
    %11103 = vdwg.mxu0
    %11104 = vmatprep.subr.bf16.mxu0 %v8839
    %11105 = vmatpush1.bf16.msra.mxu0 %v8838
    %11106 = vmatprep.subr.bf16.mxu0 %v8855
    %11107 = vmatpush1.bf16.msra.mxu0 %v8854
    %11108 = vmatprep.subr.bf16.mxu0 %v8871
    %11109 = vmatpush1.bf16.msra.mxu0 %v8870
    %11110 = vmatprep.subr.bf16.mxu0 %v8887
    %11111 = vmatpush1.bf16.msra.mxu0 %v8886
    %11112 = vmatprep.subr.bf16.mxu0 %v8903
    %11113 = vmatpush1.bf16.msra.mxu0 %v8902
    %11114 = vmatprep.subr.bf16.mxu0 %v8919
    %11115 = vmatpush1.bf16.msra.mxu0 %v8918
    %11116 = vmatprep.subr.bf16.mxu0 %v8935
    %11117 = vmatpush1.bf16.msra.mxu0 %v8934
    %11118 = vmatprep.subr.bf16.mxu0 %v8951
    %11119 = vmatpush1.bf16.msra.mxu0 %v8950
    %11120 = vmatprep.subr.bf16.mxu0 %v8967
    %11121 = vmatpush1.bf16.msra.mxu0 %v8966
    %11122 = vmatprep.subr.bf16.mxu0 %v8983
    %11123 = vmatpush1.bf16.msra.mxu0 %v8982
    %11124 = vmatprep.subr.bf16.mxu0 %v8999
    %11125 = vmatpush1.bf16.msra.mxu0 %v8998
    %11126 = vmatprep.subr.bf16.mxu0 %v9015
    %11127 = vmatpush1.bf16.msra.mxu0 %v9014
    %11128 = vmatprep.subr.bf16.mxu0 %v9031
    %11129 = vmatpush1.bf16.msra.mxu0 %v9030
    %11130 = vmatprep.subr.bf16.mxu0 %v9047
    %11131 = vmatpush1.bf16.msra.mxu0 %v9046
    %11132 = vmatprep.subr.bf16.mxu0 %v9063
    %11133 = vmatpush1.bf16.msra.mxu0 %v9062
    %11134 = vmatprep.subr.bf16.mxu0 %v9079
    %11135 = vmatpush1.bf16.msra.mxu0 %v9078
    %11136 = vmatprep.mubr.bf16.mxu0 %v4135
    %11137 = vmatmul.mubr.bf16.gmra.mrb[0].mxu0 %v4134
    %v11138 = vpop.f32.mrb[0].mxu0
    %v11139 = vadd.f32 %v11098, %v11138
    %v11140 = vpop.f32.mrb[0].mxu0
    %v11141 = vadd.f32 %v11100, %v11140
    %v11142 = vpop.f32.mrb[0].mxu0
    %v11143 = vpop.f32.mrb[0].mxu0
    %11144 = vdwg.mxu0
    %11145 = vmatprep.subr.bf16.mxu0 %v9095
    %11146 = vmatpush1.bf16.msra.mxu0 %v9094
    %11147 = vmatprep.subr.bf16.mxu0 %v9111
    %11148 = vmatpush1.bf16.msra.mxu0 %v9110
    %11149 = vmatprep.subr.bf16.mxu0 %v9127
    %11150 = vmatpush1.bf16.msra.mxu0 %v9126
    %11151 = vmatprep.subr.bf16.mxu0 %v9143
    %11152 = vmatpush1.bf16.msra.mxu0 %v9142
    %11153 = vmatprep.subr.bf16.mxu0 %v9159
    %11154 = vmatpush1.bf16.msra.mxu0 %v9158
    %11155 = vmatprep.subr.bf16.mxu0 %v9175
    %11156 = vmatpush1.bf16.msra.mxu0 %v9174
    %11157 = vmatprep.subr.bf16.mxu0 %v9191
    %11158 = vmatpush1.bf16.msra.mxu0 %v9190
    %11159 = vmatprep.subr.bf16.mxu0 %v9207
    %11160 = vmatpush1.bf16.msra.mxu0 %v9206
    %11161 = vmatprep.subr.bf16.mxu0 %v9223
    %11162 = vmatpush1.bf16.msra.mxu0 %v9222
    %11163 = vmatprep.subr.bf16.mxu0 %v9239
    %11164 = vmatpush1.bf16.msra.mxu0 %v9238
    %11165 = vmatprep.subr.bf16.mxu0 %v9255
    %11166 = vmatpush1.bf16.msra.mxu0 %v9254
    %11167 = vmatprep.subr.bf16.mxu0 %v9271
    %11168 = vmatpush1.bf16.msra.mxu0 %v9270
    %11169 = vmatprep.subr.bf16.mxu0 %v9287
    %11170 = vmatpush1.bf16.msra.mxu0 %v9286
    %11171 = vmatprep.subr.bf16.mxu0 %v9303
    %11172 = vmatpush1.bf16.msra.mxu0 %v9302
    %11173 = vmatprep.subr.bf16.mxu0 %v9319
    %11174 = vmatpush1.bf16.msra.mxu0 %v9318
    %11175 = vmatprep.subr.bf16.mxu0 %v9335
    %11176 = vmatpush1.bf16.msra.mxu0 %v9334
    %11177 = vmatprep.mubr.bf16.mxu0 %v4137
    %11178 = vmatmul.mubr.bf16.gmra.mrb[0].mxu0 %v4136
    %v11179 = vpop.f32.mrb[0].mxu0
    %v11180 = vadd.f32 %v11139, %v11179
    %v11181 = vpop.f32.mrb[0].mxu0
    %v11182 = vadd.f32 %v11141, %v11181
    %v11183 = vpop.f32.mrb[0].mxu0
    %v11184 = vpop.f32.mrb[0].mxu0
    %11185 = vdwg.mxu0
    %11186 = vmatprep.subr.bf16.mxu0 %v8329
    %11187 = vmatpush1.bf16.msra.mxu0 %v8328
    %11188 = vmatprep.subr.bf16.mxu0 %v8345
    %11189 = vmatpush1.bf16.msra.mxu0 %v8344
    %11190 = vmatprep.subr.bf16.mxu0 %v8361
    %11191 = vmatpush1.bf16.msra.mxu0 %v8360
    %11192 = vmatprep.subr.bf16.mxu0 %v8377
    %11193 = vmatpush1.bf16.msra.mxu0 %v8376
    %11194 = vmatprep.subr.bf16.mxu0 %v8393
    %11195 = vmatpush1.bf16.msra.mxu0 %v8392
    %11196 = vmatprep.subr.bf16.mxu0 %v8409
    %11197 = vmatpush1.bf16.msra.mxu0 %v8408
    %11198 = vmatprep.subr.bf16.mxu0 %v8425
    %11199 = vmatpush1.bf16.msra.mxu0 %v8424
    %11200 = vmatprep.subr.bf16.mxu0 %v8441
    %11201 = vmatpush1.bf16.msra.mxu0 %v8440
    %11202 = vmatprep.subr.bf16.mxu0 %v8457
    %11203 = vmatpush1.bf16.msra.mxu0 %v8456
    %11204 = vmatprep.subr.bf16.mxu0 %v8473
    %11205 = vmatpush1.bf16.msra.mxu0 %v8472
    %11206 = vmatprep.subr.bf16.mxu0 %v8489
    %11207 = vmatpush1.bf16.msra.mxu0 %v8488
    %11208 = vmatprep.subr.bf16.mxu0 %v8505
    %11209 = vmatpush1.bf16.msra.mxu0 %v8504
    %11210 = vmatprep.subr.bf16.mxu0 %v8521
    %11211 = vmatpush1.bf16.msra.mxu0 %v8520
    %11212 = vmatprep.subr.bf16.mxu0 %v8537
    %11213 = vmatpush1.bf16.msra.mxu0 %v8536
    %11214 = vmatprep.subr.bf16.mxu0 %v8553
    %11215 = vmatpush1.bf16.msra.mxu0 %v8552
    %11216 = vmatprep.subr.bf16.mxu0 %v8569
    %11217 = vmatpush1.bf16.msra.mxu0 %v8568
    %11218 = vmatprep.mubr.bf16.mxu0 %v4131
    %11219 = vmatmul.mubr.bf16.gmra.mrb[0].mxu0 %v4130
    %v11220 = vpop.f32.mrb[0].mxu0
    %v11221 = vadd.f32 %v5209, %v11220
    %v11222 = vpop.f32.mrb[0].mxu0
    %v11223 = vadd.f32 %v5213, %v11222
    %v11224 = vpop.f32.mrb[0].mxu0
    %v11225 = vpop.f32.mrb[0].mxu0
    %11226 = vdwg.mxu0
    %11227 = vmatprep.subr.bf16.mxu0 %v8585
    %11228 = vmatpush1.bf16.msra.mxu0 %v8584
    %11229 = vmatprep.subr.bf16.mxu0 %v8601
    %11230 = vmatpush1.bf16.msra.mxu0 %v8600
    %11231 = vmatprep.subr.bf16.mxu0 %v8617
    %11232 = vmatpush1.bf16.msra.mxu0 %v8616
    %11233 = vmatprep.subr.bf16.mxu0 %v8633
    %11234 = vmatpush1.bf16.msra.mxu0 %v8632
    %11235 = vmatprep.subr.bf16.mxu0 %v8649
    %11236 = vmatpush1.bf16.msra.mxu0 %v8648
    %11237 = vmatprep.subr.bf16.mxu0 %v8665
    %11238 = vmatpush1.bf16.msra.mxu0 %v8664
    %11239 = vmatprep.subr.bf16.mxu0 %v8681
    %11240 = vmatpush1.bf16.msra.mxu0 %v8680
    %11241 = vmatprep.subr.bf16.mxu0 %v8697
    %11242 = vmatpush1.bf16.msra.mxu0 %v8696
    %11243 = vmatprep.subr.bf16.mxu0 %v8713
    %11244 = vmatpush1.bf16.msra.mxu0 %v8712
    %11245 = vmatprep.subr.bf16.mxu0 %v8729
    %11246 = vmatpush1.bf16.msra.mxu0 %v8728
    %11247 = vmatprep.subr.bf16.mxu0 %v8745
    %11248 = vmatpush1.bf16.msra.mxu0 %v8744
    %11249 = vmatprep.subr.bf16.mxu0 %v8761
    %11250 = vmatpush1.bf16.msra.mxu0 %v8760
    %11251 = vmatprep.subr.bf16.mxu0 %v8777
    %11252 = vmatpush1.bf16.msra.mxu0 %v8776
    %11253 = vmatprep.subr.bf16.mxu0 %v8793
    %11254 = vmatpush1.bf16.msra.mxu0 %v8792
    %11255 = vmatprep.subr.bf16.mxu0 %v8809
    %11256 = vmatpush1.bf16.msra.mxu0 %v8808
    %11257 = vmatprep.subr.bf16.mxu0 %v8825
    %11258 = vmatpush1.bf16.msra.mxu0 %v8824
    %11259 = vmatprep.mubr.bf16.mxu0 %v4133
    %11260 = vmatmul.mubr.bf16.gmra.mrb[0].mxu0 %v4132
    %v11261 = vpop.f32.mrb[0].mxu0
    %v11262 = vadd.f32 %v11221, %v11261
    %v11263 = vpop.f32.mrb[0].mxu0
    %v11264 = vadd.f32 %v11223, %v11263
    %v11265 = vpop.f32.mrb[0].mxu0
    %v11266 = vpop.f32.mrb[0].mxu0
    %11267 = vdwg.mxu0
    %11268 = vmatprep.subr.bf16.mxu0 %v8841
    %11269 = vmatpush1.bf16.msra.mxu0 %v8840
    %11270 = vmatprep.subr.bf16.mxu0 %v8857
    %11271 = vmatpush1.bf16.msra.mxu0 %v8856
    %11272 = vmatprep.subr.bf16.mxu0 %v8873
    %11273 = vmatpush1.bf16.msra.mxu0 %v8872
    %11274 = vmatprep.subr.bf16.mxu0 %v8889
    %11275 = vmatpush1.bf16.msra.mxu0 %v8888
    %11276 = vmatprep.subr.bf16.mxu0 %v8905
    %11277 = vmatpush1.bf16.msra.mxu0 %v8904
    %11278 = vmatprep.subr.bf16.mxu0 %v8921
    %11279 = vmatpush1.bf16.msra.mxu0 %v8920
    %11280 = vmatprep.subr.bf16.mxu0 %v8937
    %11281 = vmatpush1.bf16.msra.mxu0 %v8936
    %11282 = vmatprep.subr.bf16.mxu0 %v8953
    %11283 = vmatpush1.bf16.msra.mxu0 %v8952
    %11284 = vmatprep.subr.bf16.mxu0 %v8969
    %11285 = vmatpush1.bf16.msra.mxu0 %v8968
    %11286 = vmatprep.subr.bf16.mxu0 %v8985
    %11287 = vmatpush1.bf16.msra.mxu0 %v8984
    %11288 = vmatprep.subr.bf16.mxu0 %v9001
    %11289 = vmatpush1.bf16.msra.mxu0 %v9000
    %11290 = vmatprep.subr.bf16.mxu0 %v9017
    %11291 = vmatpush1.bf16.msra.mxu0 %v9016
    %11292 = vmatprep.subr.bf16.mxu0 %v9033
    %11293 = vmatpush1.bf16.msra.mxu0 %v9032
    %11294 = vmatprep.subr.bf16.mxu0 %v9049
    %11295 = vmatpush1.bf16.msra.mxu0 %v9048
    %11296 = vmatprep.subr.bf16.mxu0 %v9065
    %11297 = vmatpush1.bf16.msra.mxu0 %v9064
    %11298 = vmatprep.subr.bf16.mxu0 %v9081
    %11299 = vmatpush1.bf16.msra.mxu0 %v9080
    %11300 = vmatprep.mubr.bf16.mxu0 %v4135
    %11301 = vmatmul.mubr.bf16.gmra.mrb[0].mxu0 %v4134
    %v11302 = vpop.f32.mrb[0].mxu0
    %v11303 = vadd.f32 %v11262, %v11302
    %v11304 = vpop.f32.mrb[0].mxu0
    %v11305 = vadd.f32 %v11264, %v11304
    %v11306 = vpop.f32.mrb[0].mxu0
    %v11307 = vpop.f32.mrb[0].mxu0
    %11308 = vdwg.mxu0
    %11309 = vmatprep.subr.bf16.mxu0 %v9097
    %11310 = vmatpush1.bf16.msra.mxu0 %v9096
    %11311 = vmatprep.subr.bf16.mxu0 %v9113
    %11312 = vmatpush1.bf16.msra.mxu0 %v9112
    %11313 = vmatprep.subr.bf16.mxu0 %v9129
    %11314 = vmatpush1.bf16.msra.mxu0 %v9128
    %11315 = vmatprep.subr.bf16.mxu0 %v9145
    %11316 = vmatpush1.bf16.msra.mxu0 %v9144
    %11317 = vmatprep.subr.bf16.mxu0 %v9161
    %11318 = vmatpush1.bf16.msra.mxu0 %v9160
    %11319 = vmatprep.subr.bf16.mxu0 %v9177
    %11320 = vmatpush1.bf16.msra.mxu0 %v9176
    %11321 = vmatprep.subr.bf16.mxu0 %v9193
    %11322 = vmatpush1.bf16.msra.mxu0 %v9192
    %11323 = vmatprep.subr.bf16.mxu0 %v9209
    %11324 = vmatpush1.bf16.msra.mxu0 %v9208
    %11325 = vmatprep.subr.bf16.mxu0 %v9225
    %11326 = vmatpush1.bf16.msra.mxu0 %v9224
    %11327 = vmatprep.subr.bf16.mxu0 %v9241
    %11328 = vmatpush1.bf16.msra.mxu0 %v9240
    %11329 = vmatprep.subr.bf16.mxu0 %v9257
    %11330 = vmatpush1.bf16.msra.mxu0 %v9256
    %11331 = vmatprep.subr.bf16.mxu0 %v9273
    %11332 = vmatpush1.bf16.msra.mxu0 %v9272
    %11333 = vmatprep.subr.bf16.mxu0 %v9289
    %11334 = vmatpush1.bf16.msra.mxu0 %v9288
    %11335 = vmatprep.subr.bf16.mxu0 %v9305
    %11336 = vmatpush1.bf16.msra.mxu0 %v9304
    %11337 = vmatprep.subr.bf16.mxu0 %v9321
    %11338 = vmatpush1.bf16.msra.mxu0 %v9320
    %11339 = vmatprep.subr.bf16.mxu0 %v9337
    %11340 = vmatpush1.bf16.msra.mxu0 %v9336
    %11341 = vmatprep.mubr.bf16.mxu0 %v4137
    %11342 = vmatmul.mubr.bf16.gmra.mrb[0].mxu0 %v4136
    %v11343 = vpop.f32.mrb[0].mxu0
    %v11344 = vadd.f32 %v11303, %v11343
    %v11345 = vpop.f32.mrb[0].mxu0
    %v11346 = vadd.f32 %v11305, %v11345
    %v11347 = vpop.f32.mrb[0].mxu0
    %v11348 = vpop.f32.mrb[0].mxu0
    %11349 = vdwg.mxu0
    %11350 = vmatprep.subr.bf16.mxu0 %v8331
    %11351 = vmatpush1.bf16.msra.mxu0 %v8330
    %11352 = vmatprep.subr.bf16.mxu0 %v8347
    %11353 = vmatpush1.bf16.msra.mxu0 %v8346
    %11354 = vmatprep.subr.bf16.mxu0 %v8363
    %11355 = vmatpush1.bf16.msra.mxu0 %v8362
    %11356 = vmatprep.subr.bf16.mxu0 %v8379
    %11357 = vmatpush1.bf16.msra.mxu0 %v8378
    %11358 = vmatprep.subr.bf16.mxu0 %v8395
    %11359 = vmatpush1.bf16.msra.mxu0 %v8394
    %11360 = vmatprep.subr.bf16.mxu0 %v8411
    %11361 = vmatpush1.bf16.msra.mxu0 %v8410
    %11362 = vmatprep.subr.bf16.mxu0 %v8427
    %11363 = vmatpush1.bf16.msra.mxu0 %v8426
    %11364 = vmatprep.subr.bf16.mxu0 %v8443
    %11365 = vmatpush1.bf16.msra.mxu0 %v8442
    %11366 = vmatprep.subr.bf16.mxu0 %v8459
    %11367 = vmatpush1.bf16.msra.mxu0 %v8458
    %11368 = vmatprep.subr.bf16.mxu0 %v8475
    %11369 = vmatpush1.bf16.msra.mxu0 %v8474
    %11370 = vmatprep.subr.bf16.mxu0 %v8491
    %11371 = vmatpush1.bf16.msra.mxu0 %v8490
    %11372 = vmatprep.subr.bf16.mxu0 %v8507
    %11373 = vmatpush1.bf16.msra.mxu0 %v8506
    %11374 = vmatprep.subr.bf16.mxu0 %v8523
    %11375 = vmatpush1.bf16.msra.mxu0 %v8522
    %11376 = vmatprep.subr.bf16.mxu0 %v8539
    %11377 = vmatpush1.bf16.msra.mxu0 %v8538
    %11378 = vmatprep.subr.bf16.mxu0 %v8555
    %11379 = vmatpush1.bf16.msra.mxu0 %v8554
    %11380 = vmatprep.subr.bf16.mxu0 %v8571
    %11381 = vmatpush1.bf16.msra.mxu0 %v8570
    %11382 = vmatprep.mubr.bf16.mxu0 %v4131
    %11383 = vmatmul.mubr.bf16.gmra.mrb[0].mxu0 %v4130
    %v11384 = vpop.f32.mrb[0].mxu0
    %v11385 = vadd.f32 %v5217, %v11384
    %v11386 = vpop.f32.mrb[0].mxu0
    %v11387 = vadd.f32 %v5221, %v11386
    %v11388 = vpop.f32.mrb[0].mxu0
    %v11389 = vpop.f32.mrb[0].mxu0
    %11390 = vdwg.mxu0
    %11391 = vmatprep.subr.bf16.mxu0 %v8587
    %11392 = vmatpush1.bf16.msra.mxu0 %v8586
    %11393 = vmatprep.subr.bf16.mxu0 %v8603
    %11394 = vmatpush1.bf16.msra.mxu0 %v8602
    %11395 = vmatprep.subr.bf16.mxu0 %v8619
    %11396 = vmatpush1.bf16.msra.mxu0 %v8618
    %11397 = vmatprep.subr.bf16.mxu0 %v8635
    %11398 = vmatpush1.bf16.msra.mxu0 %v8634
    %11399 = vmatprep.subr.bf16.mxu0 %v8651
    %11400 = vmatpush1.bf16.msra.mxu0 %v8650
    %11401 = vmatprep.subr.bf16.mxu0 %v8667
    %11402 = vmatpush1.bf16.msra.mxu0 %v8666
    %11403 = vmatprep.subr.bf16.mxu0 %v8683
    %11404 = vmatpush1.bf16.msra.mxu0 %v8682
    %11405 = vmatprep.subr.bf16.mxu0 %v8699
    %11406 = vmatpush1.bf16.msra.mxu0 %v8698
    %11407 = vmatprep.subr.bf16.mxu0 %v8715
    %11408 = vmatpush1.bf16.msra.mxu0 %v8714
    %11409 = vmatprep.subr.bf16.mxu0 %v8731
    %11410 = vmatpush1.bf16.msra.mxu0 %v8730
    %11411 = vmatprep.subr.bf16.mxu0 %v8747
    %11412 = vmatpush1.bf16.msra.mxu0 %v8746
    %11413 = vmatprep.subr.bf16.mxu0 %v8763
    %11414 = vmatpush1.bf16.msra.mxu0 %v8762
    %11415 = vmatprep.subr.bf16.mxu0 %v8779
    %11416 = vmatpush1.bf16.msra.mxu0 %v8778
    %11417 = vmatprep.subr.bf16.mxu0 %v8795
    %11418 = vmatpush1.bf16.msra.mxu0 %v8794
    %11419 = vmatprep.subr.bf16.mxu0 %v8811
    %11420 = vmatpush1.bf16.msra.mxu0 %v8810
    %11421 = vmatprep.subr.bf16.mxu0 %v8827
    %11422 = vmatpush1.bf16.msra.mxu0 %v8826
    %11423 = vmatprep.mubr.bf16.mxu0 %v4133
    %11424 = vmatmul.mubr.bf16.gmra.mrb[0].mxu0 %v4132
    %v11425 = vpop.f32.mrb[0].mxu0
    %v11426 = vadd.f32 %v11385, %v11425
    %v11427 = vpop.f32.mrb[0].mxu0
    %v11428 = vadd.f32 %v11387, %v11427
    %v11429 = vpop.f32.mrb[0].mxu0
    %v11430 = vpop.f32.mrb[0].mxu0
    %11431 = vdwg.mxu0
    %11432 = vmatprep.subr.bf16.mxu0 %v8843
    %11433 = vmatpush1.bf16.msra.mxu0 %v8842
    %11434 = vmatprep.subr.bf16.mxu0 %v8859
    %11435 = vmatpush1.bf16.msra.mxu0 %v8858
    %11436 = vmatprep.subr.bf16.mxu0 %v8875
    %11437 = vmatpush1.bf16.msra.mxu0 %v8874
    %11438 = vmatprep.subr.bf16.mxu0 %v8891
    %11439 = vmatpush1.bf16.msra.mxu0 %v8890
    %11440 = vmatprep.subr.bf16.mxu0 %v8907
    %11441 = vmatpush1.bf16.msra.mxu0 %v8906
    %11442 = vmatprep.subr.bf16.mxu0 %v8923
    %11443 = vmatpush1.bf16.msra.mxu0 %v8922
    %11444 = vmatprep.subr.bf16.mxu0 %v8939
    %11445 = vmatpush1.bf16.msra.mxu0 %v8938
    %11446 = vmatprep.subr.bf16.mxu0 %v8955
    %11447 = vmatpush1.bf16.msra.mxu0 %v8954
    %11448 = vmatprep.subr.bf16.mxu0 %v8971
    %11449 = vmatpush1.bf16.msra.mxu0 %v8970
    %11450 = vmatprep.subr.bf16.mxu0 %v8987
    %11451 = vmatpush1.bf16.msra.mxu0 %v8986
    %11452 = vmatprep.subr.bf16.mxu0 %v9003
    %11453 = vmatpush1.bf16.msra.mxu0 %v9002
    %11454 = vmatprep.subr.bf16.mxu0 %v9019
    %11455 = vmatpush1.bf16.msra.mxu0 %v9018
    %11456 = vmatprep.subr.bf16.mxu0 %v9035
    %11457 = vmatpush1.bf16.msra.mxu0 %v9034
    %11458 = vmatprep.subr.bf16.mxu0 %v9051
    %11459 = vmatpush1.bf16.msra.mxu0 %v9050
    %11460 = vmatprep.subr.bf16.mxu0 %v9067
    %11461 = vmatpush1.bf16.msra.mxu0 %v9066
    %11462 = vmatprep.subr.bf16.mxu0 %v9083
    %11463 = vmatpush1.bf16.msra.mxu0 %v9082
    %11464 = vmatprep.mubr.bf16.mxu0 %v4135
    %11465 = vmatmul.mubr.bf16.gmra.mrb[0].mxu0 %v4134
    %v11466 = vpop.f32.mrb[0].mxu0
    %v11467 = vadd.f32 %v11426, %v11466
    %v11468 = vpop.f32.mrb[0].mxu0
    %v11469 = vadd.f32 %v11428, %v11468
    %v11470 = vpop.f32.mrb[0].mxu0
    %v11471 = vpop.f32.mrb[0].mxu0
    %11472 = vdwg.mxu0
    %11473 = vmatprep.subr.bf16.mxu0 %v9099
    %11474 = vmatpush1.bf16.msra.mxu0 %v9098
    %11475 = vmatprep.subr.bf16.mxu0 %v9115
    %11476 = vmatpush1.bf16.msra.mxu0 %v9114
    %11477 = vmatprep.subr.bf16.mxu0 %v9131
    %11478 = vmatpush1.bf16.msra.mxu0 %v9130
    %11479 = vmatprep.subr.bf16.mxu0 %v9147
    %11480 = vmatpush1.bf16.msra.mxu0 %v9146
    %11481 = vmatprep.subr.bf16.mxu0 %v9163
    %11482 = vmatpush1.bf16.msra.mxu0 %v9162
    %11483 = vmatprep.subr.bf16.mxu0 %v9179
    %11484 = vmatpush1.bf16.msra.mxu0 %v9178
    %11485 = vmatprep.subr.bf16.mxu0 %v9195
    %11486 = vmatpush1.bf16.msra.mxu0 %v9194
    %11487 = vmatprep.subr.bf16.mxu0 %v9211
    %11488 = vmatpush1.bf16.msra.mxu0 %v9210
    %11489 = vmatprep.subr.bf16.mxu0 %v9227
    %11490 = vmatpush1.bf16.msra.mxu0 %v9226
    %11491 = vmatprep.subr.bf16.mxu0 %v9243
    %11492 = vmatpush1.bf16.msra.mxu0 %v9242
    %11493 = vmatprep.subr.bf16.mxu0 %v9259
    %11494 = vmatpush1.bf16.msra.mxu0 %v9258
    %11495 = vmatprep.subr.bf16.mxu0 %v9275
    %11496 = vmatpush1.bf16.msra.mxu0 %v9274
    %11497 = vmatprep.subr.bf16.mxu0 %v9291
    %11498 = vmatpush1.bf16.msra.mxu0 %v9290
    %11499 = vmatprep.subr.bf16.mxu0 %v9307
    %11500 = vmatpush1.bf16.msra.mxu0 %v9306
    %11501 = vmatprep.subr.bf16.mxu0 %v9323
    %11502 = vmatpush1.bf16.msra.mxu0 %v9322
    %11503 = vmatprep.subr.bf16.mxu0 %v9339
    %11504 = vmatpush1.bf16.msra.mxu0 %v9338
    %11505 = vmatprep.mubr.bf16.mxu0 %v4137
    %11506 = vmatmul.mubr.bf16.gmra.mrb[0].mxu0 %v4136
    %v11507 = vpop.f32.mrb[0].mxu0
    %v11508 = vadd.f32 %v11467, %v11507
    %v11509 = vpop.f32.mrb[0].mxu0
    %v11510 = vadd.f32 %v11469, %v11509
    %v11511 = vpop.f32.mrb[0].mxu0
    %v11512 = vpop.f32.mrb[0].mxu0
    %11513 = vdwg.mxu0
    %11514 = vmatprep.subr.bf16.mxu0 %v8333
    %11515 = vmatpush1.bf16.msra.mxu0 %v8332
    %11516 = vmatprep.subr.bf16.mxu0 %v8349
    %11517 = vmatpush1.bf16.msra.mxu0 %v8348
    %11518 = vmatprep.subr.bf16.mxu0 %v8365
    %11519 = vmatpush1.bf16.msra.mxu0 %v8364
    %11520 = vmatprep.subr.bf16.mxu0 %v8381
    %11521 = vmatpush1.bf16.msra.mxu0 %v8380
    %11522 = vmatprep.subr.bf16.mxu0 %v8397
    %11523 = vmatpush1.bf16.msra.mxu0 %v8396
    %11524 = vmatprep.subr.bf16.mxu0 %v8413
    %11525 = vmatpush1.bf16.msra.mxu0 %v8412
    %11526 = vmatprep.subr.bf16.mxu0 %v8429
    %11527 = vmatpush1.bf16.msra.mxu0 %v8428
    %11528 = vmatprep.subr.bf16.mxu0 %v8445
    %11529 = vmatpush1.bf16.msra.mxu0 %v8444
    %11530 = vmatprep.subr.bf16.mxu0 %v8461
    %11531 = vmatpush1.bf16.msra.mxu0 %v8460
    %11532 = vmatprep.subr.bf16.mxu0 %v8477
    %11533 = vmatpush1.bf16.msra.mxu0 %v8476
    %11534 = vmatprep.subr.bf16.mxu0 %v8493
    %11535 = vmatpush1.bf16.msra.mxu0 %v8492
    %11536 = vmatprep.subr.bf16.mxu0 %v8509
    %11537 = vmatpush1.bf16.msra.mxu0 %v8508
    %11538 = vmatprep.subr.bf16.mxu0 %v8525
    %11539 = vmatpush1.bf16.msra.mxu0 %v8524
    %11540 = vmatprep.subr.bf16.mxu0 %v8541
    %11541 = vmatpush1.bf16.msra.mxu0 %v8540
    %11542 = vmatprep.subr.bf16.mxu0 %v8557
    %11543 = vmatpush1.bf16.msra.mxu0 %v8556
    %11544 = vmatprep.subr.bf16.mxu0 %v8573
    %11545 = vmatpush1.bf16.msra.mxu0 %v8572
    %11546 = vmatprep.mubr.bf16.mxu0 %v4131
    %11547 = vmatmul.mubr.bf16.gmra.mrb[0].mxu0 %v4130
    %v11548 = vpop.f32.mrb[0].mxu0
    %v11549 = vadd.f32 %v5225, %v11548
    %v11550 = vpop.f32.mrb[0].mxu0
    %v11551 = vadd.f32 %v5229, %v11550
    %v11552 = vpop.f32.mrb[0].mxu0
    %v11553 = vpop.f32.mrb[0].mxu0
    %11554 = vdwg.mxu0
    %11555 = vmatprep.subr.bf16.mxu0 %v8589
    %11556 = vmatpush1.bf16.msra.mxu0 %v8588
    %11557 = vmatprep.subr.bf16.mxu0 %v8605
    %11558 = vmatpush1.bf16.msra.mxu0 %v8604
    %11559 = vmatprep.subr.bf16.mxu0 %v8621
    %11560 = vmatpush1.bf16.msra.mxu0 %v8620
    %11561 = vmatprep.subr.bf16.mxu0 %v8637
    %11562 = vmatpush1.bf16.msra.mxu0 %v8636
    %11563 = vmatprep.subr.bf16.mxu0 %v8653
    %11564 = vmatpush1.bf16.msra.mxu0 %v8652
    %11565 = vmatprep.subr.bf16.mxu0 %v8669
    %11566 = vmatpush1.bf16.msra.mxu0 %v8668
    %11567 = vmatprep.subr.bf16.mxu0 %v8685
    %11568 = vmatpush1.bf16.msra.mxu0 %v8684
    %11569 = vmatprep.subr.bf16.mxu0 %v8701
    %11570 = vmatpush1.bf16.msra.mxu0 %v8700
    %11571 = vmatprep.subr.bf16.mxu0 %v8717
    %11572 = vmatpush1.bf16.msra.mxu0 %v8716
    %11573 = vmatprep.subr.bf16.mxu0 %v8733
    %11574 = vmatpush1.bf16.msra.mxu0 %v8732
    %11575 = vmatprep.subr.bf16.mxu0 %v8749
    %11576 = vmatpush1.bf16.msra.mxu0 %v8748
    %11577 = vmatprep.subr.bf16.mxu0 %v8765
    %11578 = vmatpush1.bf16.msra.mxu0 %v8764
    %11579 = vmatprep.subr.bf16.mxu0 %v8781
    %11580 = vmatpush1.bf16.msra.mxu0 %v8780
    %11581 = vmatprep.subr.bf16.mxu0 %v8797
    %11582 = vmatpush1.bf16.msra.mxu0 %v8796
    %11583 = vmatprep.subr.bf16.mxu0 %v8813
    %11584 = vmatpush1.bf16.msra.mxu0 %v8812
    %11585 = vmatprep.subr.bf16.mxu0 %v8829
    %11586 = vmatpush1.bf16.msra.mxu0 %v8828
    %11587 = vmatprep.mubr.bf16.mxu0 %v4133
    %11588 = vmatmul.mubr.bf16.gmra.mrb[0].mxu0 %v4132
    %v11589 = vpop.f32.mrb[0].mxu0
    %v11590 = vadd.f32 %v11549, %v11589
    %v11591 = vpop.f32.mrb[0].mxu0
    %v11592 = vadd.f32 %v11551, %v11591
    %v11593 = vpop.f32.mrb[0].mxu0
    %v11594 = vpop.f32.mrb[0].mxu0
    %11595 = vdwg.mxu0
    %11596 = vmatprep.subr.bf16.mxu0 %v8845
    %11597 = vmatpush1.bf16.msra.mxu0 %v8844
    %11598 = vmatprep.subr.bf16.mxu0 %v8861
    %11599 = vmatpush1.bf16.msra.mxu0 %v8860
    %11600 = vmatprep.subr.bf16.mxu0 %v8877
    %11601 = vmatpush1.bf16.msra.mxu0 %v8876
    %11602 = vmatprep.subr.bf16.mxu0 %v8893
    %11603 = vmatpush1.bf16.msra.mxu0 %v8892
    %11604 = vmatprep.subr.bf16.mxu0 %v8909
    %11605 = vmatpush1.bf16.msra.mxu0 %v8908
    %11606 = vmatprep.subr.bf16.mxu0 %v8925
    %11607 = vmatpush1.bf16.msra.mxu0 %v8924
    %11608 = vmatprep.subr.bf16.mxu0 %v8941
    %11609 = vmatpush1.bf16.msra.mxu0 %v8940
    %11610 = vmatprep.subr.bf16.mxu0 %v8957
    %11611 = vmatpush1.bf16.msra.mxu0 %v8956
    %11612 = vmatprep.subr.bf16.mxu0 %v8973
    %11613 = vmatpush1.bf16.msra.mxu0 %v8972
    %11614 = vmatprep.subr.bf16.mxu0 %v8989
    %11615 = vmatpush1.bf16.msra.mxu0 %v8988
    %11616 = vmatprep.subr.bf16.mxu0 %v9005
    %11617 = vmatpush1.bf16.msra.mxu0 %v9004
    %11618 = vmatprep.subr.bf16.mxu0 %v9021
    %11619 = vmatpush1.bf16.msra.mxu0 %v9020
    %11620 = vmatprep.subr.bf16.mxu0 %v9037
    %11621 = vmatpush1.bf16.msra.mxu0 %v9036
    %11622 = vmatprep.subr.bf16.mxu0 %v9053
    %11623 = vmatpush1.bf16.msra.mxu0 %v9052
    %11624 = vmatprep.subr.bf16.mxu0 %v9069
    %11625 = vmatpush1.bf16.msra.mxu0 %v9068
    %11626 = vmatprep.subr.bf16.mxu0 %v9085
    %11627 = vmatpush1.bf16.msra.mxu0 %v9084
    %11628 = vmatprep.mubr.bf16.mxu0 %v4135
    %11629 = vmatmul.mubr.bf16.gmra.mrb[0].mxu0 %v4134
    %v11630 = vpop.f32.mrb[0].mxu0
    %v11631 = vadd.f32 %v11590, %v11630
    %v11632 = vpop.f32.mrb[0].mxu0
    %v11633 = vadd.f32 %v11592, %v11632
    %v11634 = vpop.f32.mrb[0].mxu0
    %v11635 = vpop.f32.mrb[0].mxu0
    %11636 = vdwg.mxu0
    %11637 = vmatprep.subr.bf16.mxu0 %v9101
    %11638 = vmatpush1.bf16.msra.mxu0 %v9100
    %11639 = vmatprep.subr.bf16.mxu0 %v9117
    %11640 = vmatpush1.bf16.msra.mxu0 %v9116
    %11641 = vmatprep.subr.bf16.mxu0 %v9133
    %11642 = vmatpush1.bf16.msra.mxu0 %v9132
    %11643 = vmatprep.subr.bf16.mxu0 %v9149
    %11644 = vmatpush1.bf16.msra.mxu0 %v9148
    %11645 = vmatprep.subr.bf16.mxu0 %v9165
    %11646 = vmatpush1.bf16.msra.mxu0 %v9164
    %11647 = vmatprep.subr.bf16.mxu0 %v9181
    %11648 = vmatpush1.bf16.msra.mxu0 %v9180
    %11649 = vmatprep.subr.bf16.mxu0 %v9197
    %11650 = vmatpush1.bf16.msra.mxu0 %v9196
    %11651 = vmatprep.subr.bf16.mxu0 %v9213
    %11652 = vmatpush1.bf16.msra.mxu0 %v9212
    %11653 = vmatprep.subr.bf16.mxu0 %v9229
    %11654 = vmatpush1.bf16.msra.mxu0 %v9228
    %11655 = vmatprep.subr.bf16.mxu0 %v9245
    %11656 = vmatpush1.bf16.msra.mxu0 %v9244
    %11657 = vmatprep.subr.bf16.mxu0 %v9261
    %11658 = vmatpush1.bf16.msra.mxu0 %v9260
    %11659 = vmatprep.subr.bf16.mxu0 %v9277
    %11660 = vmatpush1.bf16.msra.mxu0 %v9276
    %11661 = vmatprep.subr.bf16.mxu0 %v9293
    %11662 = vmatpush1.bf16.msra.mxu0 %v9292
    %11663 = vmatprep.subr.bf16.mxu0 %v9309
    %11664 = vmatpush1.bf16.msra.mxu0 %v9308
    %11665 = vmatprep.subr.bf16.mxu0 %v9325
    %11666 = vmatpush1.bf16.msra.mxu0 %v9324
    %11667 = vmatprep.subr.bf16.mxu0 %v9341
    %11668 = vmatpush1.bf16.msra.mxu0 %v9340
    %11669 = vmatprep.mubr.bf16.mxu0 %v4137
    %11670 = vmatmul.mubr.bf16.gmra.mrb[0].mxu0 %v4136
    %v11671 = vpop.f32.mrb[0].mxu0
    %v11672 = vadd.f32 %v11631, %v11671
    %v11673 = vpop.f32.mrb[0].mxu0
    %v11674 = vadd.f32 %v11633, %v11673
    %v11675 = vpop.f32.mrb[0].mxu0
    %v11676 = vpop.f32.mrb[0].mxu0
    %11677 = vdwg.mxu0
    %v11678 = vmax.f32 %v10524, 0.0
    %v11679 = vmax.f32 %v10526, 0.0
    %v11680 = vmax.f32 %v10688, 0.0
    %v11681 = vmax.f32 %v10690, 0.0
    %v11682 = vmax.f32 %v10852, 0.0
    %v11683 = vmax.f32 %v10854, 0.0
    %v11684 = vmax.f32 %v11016, 0.0
    %v11685 = vmax.f32 %v11018, 0.0
    %v11686 = vmax.f32 %v11180, 0.0
    %v11687 = vmax.f32 %v11182, 0.0
    %v11688 = vmax.f32 %v11344, 0.0
    %v11689 = vmax.f32 %v11346, 0.0
    %v11690 = vmax.f32 %v11508, 0.0
    %v11691 = vmax.f32 %v11510, 0.0
    %v11692 = vmax.f32 %v11672, 0.0
    %v11693 = vmax.f32 %v11674, 0.0
    %v11694 = vpack.c.bf16 %v11678, %v11678
    %v11695 = vpack.c.bf16 %v11679, %v11679
    %v11696 = vpack.c.bf16 %v11680, %v11680
    %v11697 = vpack.c.bf16 %v11681, %v11681
    %v11698 = vpack.c.bf16 %v11682, %v11682
    %v11699 = vpack.c.bf16 %v11683, %v11683
    %v11700 = vpack.c.bf16 %v11684, %v11684
    %v11701 = vpack.c.bf16 %v11685, %v11685
    %v11702 = vpack.c.bf16 %v11686, %v11686
    %v11703 = vpack.c.bf16 %v11687, %v11687
    %v11704 = vpack.c.bf16 %v11688, %v11688
    %v11705 = vpack.c.bf16 %v11689, %v11689
    %v11706 = vpack.c.bf16 %v11690, %v11690
    %v11707 = vpack.c.bf16 %v11691, %v11691
    %v11708 = vpack.c.bf16 %v11692, %v11692
    %v11709 = vpack.c.bf16 %v11693, %v11693
    %v11710 = vld [vmem:[#allocation16] sm:$0xf]
    %v11711 = vld [vmem:[#allocation16 + $0x4] sm:$0xf]
    %v11712 = vld [vmem:[#allocation16 + $0x8] sm:$0xf]
    %v11713 = vld [vmem:[#allocation16 + $0xc] sm:$0xf]
    %v11714 = vld [vmem:[#allocation16 + $0x10] sm:$0xf]
    %v11715 = vld [vmem:[#allocation16 + $0x14] sm:$0xf]
    %v11716 = vld [vmem:[#allocation16 + $0x18] sm:$0xf]
    %v11717 = vld [vmem:[#allocation16 + $0x1c] sm:$0xf]
    %v11718 = vld [vmem:[#allocation16 + $0x20] sm:$0xf]
    %v11719 = vld [vmem:[#allocation16 + $0x24] sm:$0xf]
    %v11720 = vld [vmem:[#allocation16 + $0x28] sm:$0xf]
    %v11721 = vld [vmem:[#allocation16 + $0x2c] sm:$0xf]
    %v11722 = vld [vmem:[#allocation16 + $0x30] sm:$0xf]
    %v11723 = vld [vmem:[#allocation16 + $0x34] sm:$0xf]
    %v11724 = vld [vmem:[#allocation16 + $0x38] sm:$0xf]
    %v11725 = vld [vmem:[#allocation16 + $0x3c] sm:$0xf]
    %v11726 = vld [vmem:[#allocation16 + $0x40] sm:$0xf]
    %v11727 = vld [vmem:[#allocation16 + $0x44] sm:$0xf]
    %v11728 = vld [vmem:[#allocation16 + $0x48] sm:$0xf]
    %v11729 = vld [vmem:[#allocation16 + $0x4c] sm:$0xf]
    %v11730 = vld [vmem:[#allocation16 + $0x50] sm:$0xf]
    %v11731 = vld [vmem:[#allocation16 + $0x54] sm:$0xf]
    %v11732 = vld [vmem:[#allocation16 + $0x58] sm:$0xf]
    %v11733 = vld [vmem:[#allocation16 + $0x5c] sm:$0xf]
    %v11734 = vld [vmem:[#allocation16 + $0x60] sm:$0xf]
    %v11735 = vld [vmem:[#allocation16 + $0x64] sm:$0xf]
    %v11736 = vld [vmem:[#allocation16 + $0x68] sm:$0xf]
    %v11737 = vld [vmem:[#allocation16 + $0x6c] sm:$0xf]
    %v11738 = vld [vmem:[#allocation16 + $0x70] sm:$0xf]
    %v11739 = vld [vmem:[#allocation16 + $0x74] sm:$0xf]
    %v11740 = vld [vmem:[#allocation16 + $0x78] sm:$0xf]
    %v11741 = vld [vmem:[#allocation16 + $0x7c] sm:$0xf]
    %v11742 = vld [vmem:[#allocation16 + $0x80] sm:$0xf]
    %v11743 = vld [vmem:[#allocation16 + $0x84] sm:$0xf]
    %v11744 = vld [vmem:[#allocation16 + $0x88] sm:$0xf]
    %v11745 = vld [vmem:[#allocation16 + $0x8c] sm:$0xf]
    %v11746 = vld [vmem:[#allocation16 + $0x90] sm:$0xf]
    %v11747 = vld [vmem:[#allocation16 + $0x94] sm:$0xf]
    %v11748 = vld [vmem:[#allocation16 + $0x98] sm:$0xf]
    %v11749 = vld [vmem:[#allocation16 + $0x9c] sm:$0xf]
    %v11750 = vld [vmem:[#allocation16 + $0xa0] sm:$0xf]
    %v11751 = vld [vmem:[#allocation16 + $0xa4] sm:$0xf]
    %v11752 = vld [vmem:[#allocation16 + $0xa8] sm:$0xf]
    %v11753 = vld [vmem:[#allocation16 + $0xac] sm:$0xf]
    %v11754 = vld [vmem:[#allocation16 + $0xb0] sm:$0xf]
    %v11755 = vld [vmem:[#allocation16 + $0xb4] sm:$0xf]
    %v11756 = vld [vmem:[#allocation16 + $0xb8] sm:$0xf]
    %v11757 = vld [vmem:[#allocation16 + $0xbc] sm:$0xf]
    %v11758 = vld [vmem:[#allocation16 + $0xc0] sm:$0xf]
    %v11759 = vld [vmem:[#allocation16 + $0xc4] sm:$0xf]
    %v11760 = vld [vmem:[#allocation16 + $0xc8] sm:$0xf]
    %v11761 = vld [vmem:[#allocation16 + $0xcc] sm:$0xf]
    %v11762 = vld [vmem:[#allocation16 + $0xd0] sm:$0xf]
    %v11763 = vld [vmem:[#allocation16 + $0xd4] sm:$0xf]
    %v11764 = vld [vmem:[#allocation16 + $0xd8] sm:$0xf]
    %v11765 = vld [vmem:[#allocation16 + $0xdc] sm:$0xf]
    %v11766 = vld [vmem:[#allocation16 + $0xe0] sm:$0xf]
    %v11767 = vld [vmem:[#allocation16 + $0xe4] sm:$0xf]
    %v11768 = vld [vmem:[#allocation16 + $0xe8] sm:$0xf]
    %v11769 = vld [vmem:[#allocation16 + $0xec] sm:$0xf]
    %v11770 = vld [vmem:[#allocation16 + $0xf0] sm:$0xf]
    %v11771 = vld [vmem:[#allocation16 + $0xf4] sm:$0xf]
    %v11772 = vld [vmem:[#allocation16 + $0xf8] sm:$0xf]
    %v11773 = vld [vmem:[#allocation16 + $0xfc] sm:$0xf]
    %v11774 = vld [vmem:[#allocation16 + $0x100] sm:$0xf]
    %v11775 = vld [vmem:[#allocation16 + $0x104] sm:$0xf]
    %v11776 = vld [vmem:[#allocation16 + $0x108] sm:$0xf]
    %v11777 = vld [vmem:[#allocation16 + $0x10c] sm:$0xf]
    %v11778 = vld [vmem:[#allocation16 + $0x110] sm:$0xf]
    %v11779 = vld [vmem:[#allocation16 + $0x114] sm:$0xf]
    %v11780 = vld [vmem:[#allocation16 + $0x118] sm:$0xf]
    %v11781 = vld [vmem:[#allocation16 + $0x11c] sm:$0xf]
    %v11782 = vld [vmem:[#allocation16 + $0x120] sm:$0xf]
    %v11783 = vld [vmem:[#allocation16 + $0x124] sm:$0xf]
    %v11784 = vld [vmem:[#allocation16 + $0x128] sm:$0xf]
    %v11785 = vld [vmem:[#allocation16 + $0x12c] sm:$0xf]
    %v11786 = vld [vmem:[#allocation16 + $0x130] sm:$0xf]
    %v11787 = vld [vmem:[#allocation16 + $0x134] sm:$0xf]
    %v11788 = vld [vmem:[#allocation16 + $0x138] sm:$0xf]
    %v11789 = vld [vmem:[#allocation16 + $0x13c] sm:$0xf]
    %v11790 = vld [vmem:[#allocation16 + $0x140] sm:$0xf]
    %v11791 = vld [vmem:[#allocation16 + $0x144] sm:$0xf]
    %v11792 = vld [vmem:[#allocation16 + $0x148] sm:$0xf]
    %v11793 = vld [vmem:[#allocation16 + $0x14c] sm:$0xf]
    %v11794 = vld [vmem:[#allocation16 + $0x150] sm:$0xf]
    %v11795 = vld [vmem:[#allocation16 + $0x154] sm:$0xf]
    %v11796 = vld [vmem:[#allocation16 + $0x158] sm:$0xf]
    %v11797 = vld [vmem:[#allocation16 + $0x15c] sm:$0xf]
    %v11798 = vld [vmem:[#allocation16 + $0x160] sm:$0xf]
    %v11799 = vld [vmem:[#allocation16 + $0x164] sm:$0xf]
    %v11800 = vld [vmem:[#allocation16 + $0x168] sm:$0xf]
    %v11801 = vld [vmem:[#allocation16 + $0x16c] sm:$0xf]
    %v11802 = vld [vmem:[#allocation16 + $0x170] sm:$0xf]
    %v11803 = vld [vmem:[#allocation16 + $0x174] sm:$0xf]
    %v11804 = vld [vmem:[#allocation16 + $0x178] sm:$0xf]
    %v11805 = vld [vmem:[#allocation16 + $0x17c] sm:$0xf]
    %v11806 = vld [vmem:[#allocation16 + $0x180] sm:$0xf]
    %v11807 = vld [vmem:[#allocation16 + $0x184] sm:$0xf]
    %v11808 = vld [vmem:[#allocation16 + $0x188] sm:$0xf]
    %v11809 = vld [vmem:[#allocation16 + $0x18c] sm:$0xf]
    %v11810 = vld [vmem:[#allocation16 + $0x190] sm:$0xf]
    %v11811 = vld [vmem:[#allocation16 + $0x194] sm:$0xf]
    %v11812 = vld [vmem:[#allocation16 + $0x198] sm:$0xf]
    %v11813 = vld [vmem:[#allocation16 + $0x19c] sm:$0xf]
    %v11814 = vld [vmem:[#allocation16 + $0x1a0] sm:$0xf]
    %v11815 = vld [vmem:[#allocation16 + $0x1a4] sm:$0xf]
    %v11816 = vld [vmem:[#allocation16 + $0x1a8] sm:$0xf]
    %v11817 = vld [vmem:[#allocation16 + $0x1ac] sm:$0xf]
    %v11818 = vld [vmem:[#allocation16 + $0x1b0] sm:$0xf]
    %v11819 = vld [vmem:[#allocation16 + $0x1b4] sm:$0xf]
    %v11820 = vld [vmem:[#allocation16 + $0x1b8] sm:$0xf]
    %v11821 = vld [vmem:[#allocation16 + $0x1bc] sm:$0xf]
    %v11822 = vld [vmem:[#allocation16 + $0x1c0] sm:$0xf]
    %v11823 = vld [vmem:[#allocation16 + $0x1c4] sm:$0xf]
    %v11824 = vld [vmem:[#allocation16 + $0x1c8] sm:$0xf]
    %v11825 = vld [vmem:[#allocation16 + $0x1cc] sm:$0xf]
    %v11826 = vld [vmem:[#allocation16 + $0x1d0] sm:$0xf]
    %v11827 = vld [vmem:[#allocation16 + $0x1d4] sm:$0xf]
    %v11828 = vld [vmem:[#allocation16 + $0x1d8] sm:$0xf]
    %v11829 = vld [vmem:[#allocation16 + $0x1dc] sm:$0xf]
    %v11830 = vld [vmem:[#allocation16 + $0x1e0] sm:$0xf]
    %v11831 = vld [vmem:[#allocation16 + $0x1e4] sm:$0xf]
    %v11832 = vld [vmem:[#allocation16 + $0x1e8] sm:$0xf]
    %v11833 = vld [vmem:[#allocation16 + $0x1ec] sm:$0xf]
    %v11834 = vld [vmem:[#allocation16 + $0x1f0] sm:$0xf]
    %v11835 = vld [vmem:[#allocation16 + $0x1f4] sm:$0xf]
    %v11836 = vld [vmem:[#allocation16 + $0x1f8] sm:$0xf]
    %v11837 = vld [vmem:[#allocation16 + $0x1fc] sm:$0xf]
    %v11838 = vld [vmem:[#allocation16 + $0x200] sm:$0xf]
    %v11839 = vld [vmem:[#allocation16 + $0x204] sm:$0xf]
    %v11840 = vld [vmem:[#allocation16 + $0x208] sm:$0xf]
    %v11841 = vld [vmem:[#allocation16 + $0x20c] sm:$0xf]
    %v11842 = vld [vmem:[#allocation16 + $0x210] sm:$0xf]
    %v11843 = vld [vmem:[#allocation16 + $0x214] sm:$0xf]
    %v11844 = vld [vmem:[#allocation16 + $0x218] sm:$0xf]
    %v11845 = vld [vmem:[#allocation16 + $0x21c] sm:$0xf]
    %v11846 = vld [vmem:[#allocation16 + $0x220] sm:$0xf]
    %v11847 = vld [vmem:[#allocation16 + $0x224] sm:$0xf]
    %v11848 = vld [vmem:[#allocation16 + $0x228] sm:$0xf]
    %v11849 = vld [vmem:[#allocation16 + $0x22c] sm:$0xf]
    %v11850 = vld [vmem:[#allocation16 + $0x230] sm:$0xf]
    %v11851 = vld [vmem:[#allocation16 + $0x234] sm:$0xf]
    %v11852 = vld [vmem:[#allocation16 + $0x238] sm:$0xf]
    %v11853 = vld [vmem:[#allocation16 + $0x23c] sm:$0xf]
    %v11854 = vld [vmem:[#allocation16 + $0x240] sm:$0xf]
    %v11855 = vld [vmem:[#allocation16 + $0x244] sm:$0xf]
    %v11856 = vld [vmem:[#allocation16 + $0x248] sm:$0xf]
    %v11857 = vld [vmem:[#allocation16 + $0x24c] sm:$0xf]
    %v11858 = vld [vmem:[#allocation16 + $0x250] sm:$0xf]
    %v11859 = vld [vmem:[#allocation16 + $0x254] sm:$0xf]
    %v11860 = vld [vmem:[#allocation16 + $0x258] sm:$0xf]
    %v11861 = vld [vmem:[#allocation16 + $0x25c] sm:$0xf]
    %v11862 = vld [vmem:[#allocation16 + $0x260] sm:$0xf]
    %v11863 = vld [vmem:[#allocation16 + $0x264] sm:$0xf]
    %v11864 = vld [vmem:[#allocation16 + $0x268] sm:$0xf]
    %v11865 = vld [vmem:[#allocation16 + $0x26c] sm:$0xf]
    %v11866 = vld [vmem:[#allocation16 + $0x270] sm:$0xf]
    %v11867 = vld [vmem:[#allocation16 + $0x274] sm:$0xf]
    %v11868 = vld [vmem:[#allocation16 + $0x278] sm:$0xf]
    %v11869 = vld [vmem:[#allocation16 + $0x27c] sm:$0xf]
    %v11870 = vld [vmem:[#allocation16 + $0x280] sm:$0xf]
    %v11871 = vld [vmem:[#allocation16 + $0x284] sm:$0xf]
    %v11872 = vld [vmem:[#allocation16 + $0x288] sm:$0xf]
    %v11873 = vld [vmem:[#allocation16 + $0x28c] sm:$0xf]
    %v11874 = vld [vmem:[#allocation16 + $0x290] sm:$0xf]
    %v11875 = vld [vmem:[#allocation16 + $0x294] sm:$0xf]
    %v11876 = vld [vmem:[#allocation16 + $0x298] sm:$0xf]
    %v11877 = vld [vmem:[#allocation16 + $0x29c] sm:$0xf]
    %v11878 = vld [vmem:[#allocation16 + $0x2a0] sm:$0xf]
    %v11879 = vld [vmem:[#allocation16 + $0x2a4] sm:$0xf]
    %v11880 = vld [vmem:[#allocation16 + $0x2a8] sm:$0xf]
    %v11881 = vld [vmem:[#allocation16 + $0x2ac] sm:$0xf]
    %v11882 = vld [vmem:[#allocation16 + $0x2b0] sm:$0xf]
    %v11883 = vld [vmem:[#allocation16 + $0x2b4] sm:$0xf]
    %v11884 = vld [vmem:[#allocation16 + $0x2b8] sm:$0xf]
    %v11885 = vld [vmem:[#allocation16 + $0x2bc] sm:$0xf]
    %v11886 = vld [vmem:[#allocation16 + $0x2c0] sm:$0xf]
    %v11887 = vld [vmem:[#allocation16 + $0x2c4] sm:$0xf]
    %v11888 = vld [vmem:[#allocation16 + $0x2c8] sm:$0xf]
    %v11889 = vld [vmem:[#allocation16 + $0x2cc] sm:$0xf]
    %v11890 = vld [vmem:[#allocation16 + $0x2d0] sm:$0xf]
    %v11891 = vld [vmem:[#allocation16 + $0x2d4] sm:$0xf]
    %v11892 = vld [vmem:[#allocation16 + $0x2d8] sm:$0xf]
    %v11893 = vld [vmem:[#allocation16 + $0x2dc] sm:$0xf]
    %v11894 = vld [vmem:[#allocation16 + $0x2e0] sm:$0xf]
    %v11895 = vld [vmem:[#allocation16 + $0x2e4] sm:$0xf]
    %v11896 = vld [vmem:[#allocation16 + $0x2e8] sm:$0xf]
    %v11897 = vld [vmem:[#allocation16 + $0x2ec] sm:$0xf]
    %v11898 = vld [vmem:[#allocation16 + $0x2f0] sm:$0xf]
    %v11899 = vld [vmem:[#allocation16 + $0x2f4] sm:$0xf]
    %v11900 = vld [vmem:[#allocation16 + $0x2f8] sm:$0xf]
    %v11901 = vld [vmem:[#allocation16 + $0x2fc] sm:$0xf]
    %v11902 = vld [vmem:[#allocation16 + $0x300] sm:$0xf]
    %v11903 = vld [vmem:[#allocation16 + $0x304] sm:$0xf]
    %v11904 = vld [vmem:[#allocation16 + $0x308] sm:$0xf]
    %v11905 = vld [vmem:[#allocation16 + $0x30c] sm:$0xf]
    %v11906 = vld [vmem:[#allocation16 + $0x310] sm:$0xf]
    %v11907 = vld [vmem:[#allocation16 + $0x314] sm:$0xf]
    %v11908 = vld [vmem:[#allocation16 + $0x318] sm:$0xf]
    %v11909 = vld [vmem:[#allocation16 + $0x31c] sm:$0xf]
    %v11910 = vld [vmem:[#allocation16 + $0x320] sm:$0xf]
    %v11911 = vld [vmem:[#allocation16 + $0x324] sm:$0xf]
    %v11912 = vld [vmem:[#allocation16 + $0x328] sm:$0xf]
    %v11913 = vld [vmem:[#allocation16 + $0x32c] sm:$0xf]
    %v11914 = vld [vmem:[#allocation16 + $0x330] sm:$0xf]
    %v11915 = vld [vmem:[#allocation16 + $0x334] sm:$0xf]
    %v11916 = vld [vmem:[#allocation16 + $0x338] sm:$0xf]
    %v11917 = vld [vmem:[#allocation16 + $0x33c] sm:$0xf]
    %v11918 = vld [vmem:[#allocation16 + $0x340] sm:$0xf]
    %v11919 = vld [vmem:[#allocation16 + $0x344] sm:$0xf]
    %v11920 = vld [vmem:[#allocation16 + $0x348] sm:$0xf]
    %v11921 = vld [vmem:[#allocation16 + $0x34c] sm:$0xf]
    %v11922 = vld [vmem:[#allocation16 + $0x350] sm:$0xf]
    %v11923 = vld [vmem:[#allocation16 + $0x354] sm:$0xf]
    %v11924 = vld [vmem:[#allocation16 + $0x358] sm:$0xf]
    %v11925 = vld [vmem:[#allocation16 + $0x35c] sm:$0xf]
    %v11926 = vld [vmem:[#allocation16 + $0x360] sm:$0xf]
    %v11927 = vld [vmem:[#allocation16 + $0x364] sm:$0xf]
    %v11928 = vld [vmem:[#allocation16 + $0x368] sm:$0xf]
    %v11929 = vld [vmem:[#allocation16 + $0x36c] sm:$0xf]
    %v11930 = vld [vmem:[#allocation16 + $0x370] sm:$0xf]
    %v11931 = vld [vmem:[#allocation16 + $0x374] sm:$0xf]
    %v11932 = vld [vmem:[#allocation16 + $0x378] sm:$0xf]
    %v11933 = vld [vmem:[#allocation16 + $0x37c] sm:$0xf]
    %v11934 = vld [vmem:[#allocation16 + $0x380] sm:$0xf]
    %v11935 = vld [vmem:[#allocation16 + $0x384] sm:$0xf]
    %v11936 = vld [vmem:[#allocation16 + $0x388] sm:$0xf]
    %v11937 = vld [vmem:[#allocation16 + $0x38c] sm:$0xf]
    %v11938 = vld [vmem:[#allocation16 + $0x390] sm:$0xf]
    %v11939 = vld [vmem:[#allocation16 + $0x394] sm:$0xf]
    %v11940 = vld [vmem:[#allocation16 + $0x398] sm:$0xf]
    %v11941 = vld [vmem:[#allocation16 + $0x39c] sm:$0xf]
    %v11942 = vld [vmem:[#allocation16 + $0x3a0] sm:$0xf]
    %v11943 = vld [vmem:[#allocation16 + $0x3a4] sm:$0xf]
    %v11944 = vld [vmem:[#allocation16 + $0x3a8] sm:$0xf]
    %v11945 = vld [vmem:[#allocation16 + $0x3ac] sm:$0xf]
    %v11946 = vld [vmem:[#allocation16 + $0x3b0] sm:$0xf]
    %v11947 = vld [vmem:[#allocation16 + $0x3b4] sm:$0xf]
    %v11948 = vld [vmem:[#allocation16 + $0x3b8] sm:$0xf]
    %v11949 = vld [vmem:[#allocation16 + $0x3bc] sm:$0xf]
    %v11950 = vld [vmem:[#allocation16 + $0x3c0] sm:$0xf]
    %v11951 = vld [vmem:[#allocation16 + $0x3c4] sm:$0xf]
    %v11952 = vld [vmem:[#allocation16 + $0x3c8] sm:$0xf]
    %v11953 = vld [vmem:[#allocation16 + $0x3cc] sm:$0xf]
    %v11954 = vld [vmem:[#allocation16 + $0x3d0] sm:$0xf]
    %v11955 = vld [vmem:[#allocation16 + $0x3d4] sm:$0xf]
    %v11956 = vld [vmem:[#allocation16 + $0x3d8] sm:$0xf]
    %v11957 = vld [vmem:[#allocation16 + $0x3dc] sm:$0xf]
    %v11958 = vld [vmem:[#allocation16 + $0x3e0] sm:$0xf]
    %v11959 = vld [vmem:[#allocation16 + $0x3e4] sm:$0xf]
    %v11960 = vld [vmem:[#allocation16 + $0x3e8] sm:$0xf]
    %v11961 = vld [vmem:[#allocation16 + $0x3ec] sm:$0xf]
    %v11962 = vld [vmem:[#allocation16 + $0x3f0] sm:$0xf]
    %v11963 = vld [vmem:[#allocation16 + $0x3f4] sm:$0xf]
    %v11964 = vld [vmem:[#allocation16 + $0x3f8] sm:$0xf]
    %v11965 = vld [vmem:[#allocation16 + $0x3fc] sm:$0xf]
    %v11966 = vld [vmem:[#allocation17] sm:$0x1]
    %v11968 = vlaneseq
    %v11969 = vshrl.u32 %v11968, 7
    %v11970 = vsub.s32 0, %v11969
    %v11971 = vrot.slane %v11966, %v11970
    %v12229 = vunpack.c.l.b16 %v11710
    %v12230 = vunpack.c.l.b16 %v11711
    %v12231 = vunpack.c.l.b16 %v11712
    %v12232 = vunpack.c.l.b16 %v11713
    %v12233 = vunpack.c.l.b16 %v11714
    %v12234 = vunpack.c.l.b16 %v11715
    %v12235 = vunpack.c.l.b16 %v11716
    %v12236 = vunpack.c.l.b16 %v11717
    %v12237 = vunpack.c.l.b16 %v11718
    %v12238 = vunpack.c.l.b16 %v11719
    %v12239 = vunpack.c.l.b16 %v11720
    %v12240 = vunpack.c.l.b16 %v11721
    %v12241 = vunpack.c.l.b16 %v11722
    %v12242 = vunpack.c.l.b16 %v11723
    %v12243 = vunpack.c.l.b16 %v11724
    %v12244 = vunpack.c.l.b16 %v11725
    %v12245 = vunpack.c.l.b16 %v11726
    %v12246 = vunpack.c.l.b16 %v11727
    %v12247 = vunpack.c.l.b16 %v11728
    %v12248 = vunpack.c.l.b16 %v11729
    %v12249 = vunpack.c.l.b16 %v11730
    %v12250 = vunpack.c.l.b16 %v11731
    %v12251 = vunpack.c.l.b16 %v11732
    %v12252 = vunpack.c.l.b16 %v11733
    %v12253 = vunpack.c.l.b16 %v11734
    %v12254 = vunpack.c.l.b16 %v11735
    %v12255 = vunpack.c.l.b16 %v11736
    %v12256 = vunpack.c.l.b16 %v11737
    %v12257 = vunpack.c.l.b16 %v11738
    %v12258 = vunpack.c.l.b16 %v11739
    %v12259 = vunpack.c.l.b16 %v11740
    %v12260 = vunpack.c.l.b16 %v11741
    %v12261 = vunpack.c.l.b16 %v11742
    %v12262 = vunpack.c.l.b16 %v11743
    %v12263 = vunpack.c.l.b16 %v11744
    %v12264 = vunpack.c.l.b16 %v11745
    %v12265 = vunpack.c.l.b16 %v11746
    %v12266 = vunpack.c.l.b16 %v11747
    %v12267 = vunpack.c.l.b16 %v11748
    %v12268 = vunpack.c.l.b16 %v11749
    %v12269 = vunpack.c.l.b16 %v11750
    %v12270 = vunpack.c.l.b16 %v11751
    %v12271 = vunpack.c.l.b16 %v11752
    %v12272 = vunpack.c.l.b16 %v11753
    %v12273 = vunpack.c.l.b16 %v11754
    %v12274 = vunpack.c.l.b16 %v11755
    %v12275 = vunpack.c.l.b16 %v11756
    %v12276 = vunpack.c.l.b16 %v11757
    %v12277 = vunpack.c.l.b16 %v11758
    %v12278 = vunpack.c.l.b16 %v11759
    %v12279 = vunpack.c.l.b16 %v11760
    %v12280 = vunpack.c.l.b16 %v11761
    %v12281 = vunpack.c.l.b16 %v11762
    %v12282 = vunpack.c.l.b16 %v11763
    %v12283 = vunpack.c.l.b16 %v11764
    %v12284 = vunpack.c.l.b16 %v11765
    %v12285 = vunpack.c.l.b16 %v11766
    %v12286 = vunpack.c.l.b16 %v11767
    %v12287 = vunpack.c.l.b16 %v11768
    %v12288 = vunpack.c.l.b16 %v11769
    %v12289 = vunpack.c.l.b16 %v11770
    %v12290 = vunpack.c.l.b16 %v11771
    %v12291 = vunpack.c.l.b16 %v11772
    %v12292 = vunpack.c.l.b16 %v11773
    %v12293 = vunpack.c.l.b16 %v11774
    %v12294 = vunpack.c.l.b16 %v11775
    %v12295 = vunpack.c.l.b16 %v11776
    %v12296 = vunpack.c.l.b16 %v11777
    %v12297 = vunpack.c.l.b16 %v11778
    %v12298 = vunpack.c.l.b16 %v11779
    %v12299 = vunpack.c.l.b16 %v11780
    %v12300 = vunpack.c.l.b16 %v11781
    %v12301 = vunpack.c.l.b16 %v11782
    %v12302 = vunpack.c.l.b16 %v11783
    %v12303 = vunpack.c.l.b16 %v11784
    %v12304 = vunpack.c.l.b16 %v11785
    %v12305 = vunpack.c.l.b16 %v11786
    %v12306 = vunpack.c.l.b16 %v11787
    %v12307 = vunpack.c.l.b16 %v11788
    %v12308 = vunpack.c.l.b16 %v11789
    %v12309 = vunpack.c.l.b16 %v11790
    %v12310 = vunpack.c.l.b16 %v11791
    %v12311 = vunpack.c.l.b16 %v11792
    %v12312 = vunpack.c.l.b16 %v11793
    %v12313 = vunpack.c.l.b16 %v11794
    %v12314 = vunpack.c.l.b16 %v11795
    %v12315 = vunpack.c.l.b16 %v11796
    %v12316 = vunpack.c.l.b16 %v11797
    %v12317 = vunpack.c.l.b16 %v11798
    %v12318 = vunpack.c.l.b16 %v11799
    %v12319 = vunpack.c.l.b16 %v11800
    %v12320 = vunpack.c.l.b16 %v11801
    %v12321 = vunpack.c.l.b16 %v11802
    %v12322 = vunpack.c.l.b16 %v11803
    %v12323 = vunpack.c.l.b16 %v11804
    %v12324 = vunpack.c.l.b16 %v11805
    %v12325 = vunpack.c.l.b16 %v11806
    %v12326 = vunpack.c.l.b16 %v11807
    %v12327 = vunpack.c.l.b16 %v11808
    %v12328 = vunpack.c.l.b16 %v11809
    %v12329 = vunpack.c.l.b16 %v11810
    %v12330 = vunpack.c.l.b16 %v11811
    %v12331 = vunpack.c.l.b16 %v11812
    %v12332 = vunpack.c.l.b16 %v11813
    %v12333 = vunpack.c.l.b16 %v11814
    %v12334 = vunpack.c.l.b16 %v11815
    %v12335 = vunpack.c.l.b16 %v11816
    %v12336 = vunpack.c.l.b16 %v11817
    %v12337 = vunpack.c.l.b16 %v11818
    %v12338 = vunpack.c.l.b16 %v11819
    %v12339 = vunpack.c.l.b16 %v11820
    %v12340 = vunpack.c.l.b16 %v11821
    %v12341 = vunpack.c.l.b16 %v11822
    %v12342 = vunpack.c.l.b16 %v11823
    %v12343 = vunpack.c.l.b16 %v11824
    %v12344 = vunpack.c.l.b16 %v11825
    %v12345 = vunpack.c.l.b16 %v11826
    %v12346 = vunpack.c.l.b16 %v11827
    %v12347 = vunpack.c.l.b16 %v11828
    %v12348 = vunpack.c.l.b16 %v11829
    %v12349 = vunpack.c.l.b16 %v11830
    %v12350 = vunpack.c.l.b16 %v11831
    %v12351 = vunpack.c.l.b16 %v11832
    %v12352 = vunpack.c.l.b16 %v11833
    %v12353 = vunpack.c.l.b16 %v11834
    %v12354 = vunpack.c.l.b16 %v11835
    %v12355 = vunpack.c.l.b16 %v11836
    %v12356 = vunpack.c.l.b16 %v11837
    %v12357 = vunpack.c.l.b16 %v11838
    %v12358 = vunpack.c.l.b16 %v11839
    %v12359 = vunpack.c.l.b16 %v11840
    %v12360 = vunpack.c.l.b16 %v11841
    %v12361 = vunpack.c.l.b16 %v11842
    %v12362 = vunpack.c.l.b16 %v11843
    %v12363 = vunpack.c.l.b16 %v11844
    %v12364 = vunpack.c.l.b16 %v11845
    %v12365 = vunpack.c.l.b16 %v11846
    %v12366 = vunpack.c.l.b16 %v11847
    %v12367 = vunpack.c.l.b16 %v11848
    %v12368 = vunpack.c.l.b16 %v11849
    %v12369 = vunpack.c.l.b16 %v11850
    %v12370 = vunpack.c.l.b16 %v11851
    %v12371 = vunpack.c.l.b16 %v11852
    %v12372 = vunpack.c.l.b16 %v11853
    %v12373 = vunpack.c.l.b16 %v11854
    %v12374 = vunpack.c.l.b16 %v11855
    %v12375 = vunpack.c.l.b16 %v11856
    %v12376 = vunpack.c.l.b16 %v11857
    %v12377 = vunpack.c.l.b16 %v11858
    %v12378 = vunpack.c.l.b16 %v11859
    %v12379 = vunpack.c.l.b16 %v11860
    %v12380 = vunpack.c.l.b16 %v11861
    %v12381 = vunpack.c.l.b16 %v11862
    %v12382 = vunpack.c.l.b16 %v11863
    %v12383 = vunpack.c.l.b16 %v11864
    %v12384 = vunpack.c.l.b16 %v11865
    %v12385 = vunpack.c.l.b16 %v11866
    %v12386 = vunpack.c.l.b16 %v11867
    %v12387 = vunpack.c.l.b16 %v11868
    %v12388 = vunpack.c.l.b16 %v11869
    %v12389 = vunpack.c.l.b16 %v11870
    %v12390 = vunpack.c.l.b16 %v11871
    %v12391 = vunpack.c.l.b16 %v11872
    %v12392 = vunpack.c.l.b16 %v11873
    %v12393 = vunpack.c.l.b16 %v11874
    %v12394 = vunpack.c.l.b16 %v11875
    %v12395 = vunpack.c.l.b16 %v11876
    %v12396 = vunpack.c.l.b16 %v11877
    %v12397 = vunpack.c.l.b16 %v11878
    %v12398 = vunpack.c.l.b16 %v11879
    %v12399 = vunpack.c.l.b16 %v11880
    %v12400 = vunpack.c.l.b16 %v11881
    %v12401 = vunpack.c.l.b16 %v11882
    %v12402 = vunpack.c.l.b16 %v11883
    %v12403 = vunpack.c.l.b16 %v11884
    %v12404 = vunpack.c.l.b16 %v11885
    %v12405 = vunpack.c.l.b16 %v11886
    %v12406 = vunpack.c.l.b16 %v11887
    %v12407 = vunpack.c.l.b16 %v11888
    %v12408 = vunpack.c.l.b16 %v11889
    %v12409 = vunpack.c.l.b16 %v11890
    %v12410 = vunpack.c.l.b16 %v11891
    %v12411 = vunpack.c.l.b16 %v11892
    %v12412 = vunpack.c.l.b16 %v11893
    %v12413 = vunpack.c.l.b16 %v11894
    %v12414 = vunpack.c.l.b16 %v11895
    %v12415 = vunpack.c.l.b16 %v11896
    %v12416 = vunpack.c.l.b16 %v11897
    %v12417 = vunpack.c.l.b16 %v11898
    %v12418 = vunpack.c.l.b16 %v11899
    %v12419 = vunpack.c.l.b16 %v11900
    %v12420 = vunpack.c.l.b16 %v11901
    %v12421 = vunpack.c.l.b16 %v11902
    %v12422 = vunpack.c.l.b16 %v11903
    %v12423 = vunpack.c.l.b16 %v11904
    %v12424 = vunpack.c.l.b16 %v11905
    %v12425 = vunpack.c.l.b16 %v11906
    %v12426 = vunpack.c.l.b16 %v11907
    %v12427 = vunpack.c.l.b16 %v11908
    %v12428 = vunpack.c.l.b16 %v11909
    %v12429 = vunpack.c.l.b16 %v11910
    %v12430 = vunpack.c.l.b16 %v11911
    %v12431 = vunpack.c.l.b16 %v11912
    %v12432 = vunpack.c.l.b16 %v11913
    %v12433 = vunpack.c.l.b16 %v11914
    %v12434 = vunpack.c.l.b16 %v11915
    %v12435 = vunpack.c.l.b16 %v11916
    %v12436 = vunpack.c.l.b16 %v11917
    %v12437 = vunpack.c.l.b16 %v11918
    %v12438 = vunpack.c.l.b16 %v11919
    %v12439 = vunpack.c.l.b16 %v11920
    %v12440 = vunpack.c.l.b16 %v11921
    %v12441 = vunpack.c.l.b16 %v11922
    %v12442 = vunpack.c.l.b16 %v11923
    %v12443 = vunpack.c.l.b16 %v11924
    %v12444 = vunpack.c.l.b16 %v11925
    %v12445 = vunpack.c.l.b16 %v11926
    %v12446 = vunpack.c.l.b16 %v11927
    %v12447 = vunpack.c.l.b16 %v11928
    %v12448 = vunpack.c.l.b16 %v11929
    %v12449 = vunpack.c.l.b16 %v11930
    %v12450 = vunpack.c.l.b16 %v11931
    %v12451 = vunpack.c.l.b16 %v11932
    %v12452 = vunpack.c.l.b16 %v11933
    %v12453 = vunpack.c.l.b16 %v11934
    %v12454 = vunpack.c.l.b16 %v11935
    %v12455 = vunpack.c.l.b16 %v11936
    %v12456 = vunpack.c.l.b16 %v11937
    %v12457 = vunpack.c.l.b16 %v11938
    %v12458 = vunpack.c.l.b16 %v11939
    %v12459 = vunpack.c.l.b16 %v11940
    %v12460 = vunpack.c.l.b16 %v11941
    %v12461 = vunpack.c.l.b16 %v11942
    %v12462 = vunpack.c.l.b16 %v11943
    %v12463 = vunpack.c.l.b16 %v11944
    %v12464 = vunpack.c.l.b16 %v11945
    %v12465 = vunpack.c.l.b16 %v11946
    %v12466 = vunpack.c.l.b16 %v11947
    %v12467 = vunpack.c.l.b16 %v11948
    %v12468 = vunpack.c.l.b16 %v11949
    %v12469 = vunpack.c.l.b16 %v11950
    %v12470 = vunpack.c.l.b16 %v11951
    %v12471 = vunpack.c.l.b16 %v11952
    %v12472 = vunpack.c.l.b16 %v11953
    %v12473 = vunpack.c.l.b16 %v11954
    %v12474 = vunpack.c.l.b16 %v11955
    %v12475 = vunpack.c.l.b16 %v11956
    %v12476 = vunpack.c.l.b16 %v11957
    %v12477 = vunpack.c.l.b16 %v11958
    %v12478 = vunpack.c.l.b16 %v11959
    %v12479 = vunpack.c.l.b16 %v11960
    %v12480 = vunpack.c.l.b16 %v11961
    %v12481 = vunpack.c.l.b16 %v11962
    %v12482 = vunpack.c.l.b16 %v11963
    %v12483 = vunpack.c.l.b16 %v11964
    %v12484 = vunpack.c.l.b16 %v11965
    %v12485 = vpack.c.b16 %v12230, %v12229
    %v12486 = vpack.c.b16 %v12232, %v12231
    %v12487 = vpack.c.b16 %v12234, %v12233
    %v12488 = vpack.c.b16 %v12236, %v12235
    %v12489 = vpack.c.b16 %v12238, %v12237
    %v12490 = vpack.c.b16 %v12240, %v12239
    %v12491 = vpack.c.b16 %v12242, %v12241
    %v12492 = vpack.c.b16 %v12244, %v12243
    %v12493 = vpack.c.b16 %v12246, %v12245
    %v12494 = vpack.c.b16 %v12248, %v12247
    %v12495 = vpack.c.b16 %v12250, %v12249
    %v12496 = vpack.c.b16 %v12252, %v12251
    %v12497 = vpack.c.b16 %v12254, %v12253
    %v12498 = vpack.c.b16 %v12256, %v12255
    %v12499 = vpack.c.b16 %v12258, %v12257
    %v12500 = vpack.c.b16 %v12260, %v12259
    %v12501 = vpack.c.b16 %v12262, %v12261
    %v12502 = vpack.c.b16 %v12264, %v12263
    %v12503 = vpack.c.b16 %v12266, %v12265
    %v12504 = vpack.c.b16 %v12268, %v12267
    %v12505 = vpack.c.b16 %v12270, %v12269
    %v12506 = vpack.c.b16 %v12272, %v12271
    %v12507 = vpack.c.b16 %v12274, %v12273
    %v12508 = vpack.c.b16 %v12276, %v12275
    %v12509 = vpack.c.b16 %v12278, %v12277
    %v12510 = vpack.c.b16 %v12280, %v12279
    %v12511 = vpack.c.b16 %v12282, %v12281
    %v12512 = vpack.c.b16 %v12284, %v12283
    %v12513 = vpack.c.b16 %v12286, %v12285
    %v12514 = vpack.c.b16 %v12288, %v12287
    %v12515 = vpack.c.b16 %v12290, %v12289
    %v12516 = vpack.c.b16 %v12292, %v12291
    %v12517 = vpack.c.b16 %v12294, %v12293
    %v12518 = vpack.c.b16 %v12296, %v12295
    %v12519 = vpack.c.b16 %v12298, %v12297
    %v12520 = vpack.c.b16 %v12300, %v12299
    %v12521 = vpack.c.b16 %v12302, %v12301
    %v12522 = vpack.c.b16 %v12304, %v12303
    %v12523 = vpack.c.b16 %v12306, %v12305
    %v12524 = vpack.c.b16 %v12308, %v12307
    %v12525 = vpack.c.b16 %v12310, %v12309
    %v12526 = vpack.c.b16 %v12312, %v12311
    %v12527 = vpack.c.b16 %v12314, %v12313
    %v12528 = vpack.c.b16 %v12316, %v12315
    %v12529 = vpack.c.b16 %v12318, %v12317
    %v12530 = vpack.c.b16 %v12320, %v12319
    %v12531 = vpack.c.b16 %v12322, %v12321
    %v12532 = vpack.c.b16 %v12324, %v12323
    %v12533 = vpack.c.b16 %v12326, %v12325
    %v12534 = vpack.c.b16 %v12328, %v12327
    %v12535 = vpack.c.b16 %v12330, %v12329
    %v12536 = vpack.c.b16 %v12332, %v12331
    %v12537 = vpack.c.b16 %v12334, %v12333
    %v12538 = vpack.c.b16 %v12336, %v12335
    %v12539 = vpack.c.b16 %v12338, %v12337
    %v12540 = vpack.c.b16 %v12340, %v12339
    %v12541 = vpack.c.b16 %v12342, %v12341
    %v12542 = vpack.c.b16 %v12344, %v12343
    %v12543 = vpack.c.b16 %v12346, %v12345
    %v12544 = vpack.c.b16 %v12348, %v12347
    %v12545 = vpack.c.b16 %v12350, %v12349
    %v12546 = vpack.c.b16 %v12352, %v12351
    %v12547 = vpack.c.b16 %v12354, %v12353
    %v12548 = vpack.c.b16 %v12356, %v12355
    %v12549 = vpack.c.b16 %v12358, %v12357
    %v12550 = vpack.c.b16 %v12360, %v12359
    %v12551 = vpack.c.b16 %v12362, %v12361
    %v12552 = vpack.c.b16 %v12364, %v12363
    %v12553 = vpack.c.b16 %v12366, %v12365
    %v12554 = vpack.c.b16 %v12368, %v12367
    %v12555 = vpack.c.b16 %v12370, %v12369
    %v12556 = vpack.c.b16 %v12372, %v12371
    %v12557 = vpack.c.b16 %v12374, %v12373
    %v12558 = vpack.c.b16 %v12376, %v12375
    %v12559 = vpack.c.b16 %v12378, %v12377
    %v12560 = vpack.c.b16 %v12380, %v12379
    %v12561 = vpack.c.b16 %v12382, %v12381
    %v12562 = vpack.c.b16 %v12384, %v12383
    %v12563 = vpack.c.b16 %v12386, %v12385
    %v12564 = vpack.c.b16 %v12388, %v12387
    %v12565 = vpack.c.b16 %v12390, %v12389
    %v12566 = vpack.c.b16 %v12392, %v12391
    %v12567 = vpack.c.b16 %v12394, %v12393
    %v12568 = vpack.c.b16 %v12396, %v12395
    %v12569 = vpack.c.b16 %v12398, %v12397
    %v12570 = vpack.c.b16 %v12400, %v12399
    %v12571 = vpack.c.b16 %v12402, %v12401
    %v12572 = vpack.c.b16 %v12404, %v12403
    %v12573 = vpack.c.b16 %v12406, %v12405
    %v12574 = vpack.c.b16 %v12408, %v12407
    %v12575 = vpack.c.b16 %v12410, %v12409
    %v12576 = vpack.c.b16 %v12412, %v12411
    %v12577 = vpack.c.b16 %v12414, %v12413
    %v12578 = vpack.c.b16 %v12416, %v12415
    %v12579 = vpack.c.b16 %v12418, %v12417
    %v12580 = vpack.c.b16 %v12420, %v12419
    %v12581 = vpack.c.b16 %v12422, %v12421
    %v12582 = vpack.c.b16 %v12424, %v12423
    %v12583 = vpack.c.b16 %v12426, %v12425
    %v12584 = vpack.c.b16 %v12428, %v12427
    %v12585 = vpack.c.b16 %v12430, %v12429
    %v12586 = vpack.c.b16 %v12432, %v12431
    %v12587 = vpack.c.b16 %v12434, %v12433
    %v12588 = vpack.c.b16 %v12436, %v12435
    %v12589 = vpack.c.b16 %v12438, %v12437
    %v12590 = vpack.c.b16 %v12440, %v12439
    %v12591 = vpack.c.b16 %v12442, %v12441
    %v12592 = vpack.c.b16 %v12444, %v12443
    %v12593 = vpack.c.b16 %v12446, %v12445
    %v12594 = vpack.c.b16 %v12448, %v12447
    %v12595 = vpack.c.b16 %v12450, %v12449
    %v12596 = vpack.c.b16 %v12452, %v12451
    %v12597 = vpack.c.b16 %v12454, %v12453
    %v12598 = vpack.c.b16 %v12456, %v12455
    %v12599 = vpack.c.b16 %v12458, %v12457
    %v12600 = vpack.c.b16 %v12460, %v12459
    %v12601 = vpack.c.b16 %v12462, %v12461
    %v12602 = vpack.c.b16 %v12464, %v12463
    %v12603 = vpack.c.b16 %v12466, %v12465
    %v12604 = vpack.c.b16 %v12468, %v12467
    %v12605 = vpack.c.b16 %v12470, %v12469
    %v12606 = vpack.c.b16 %v12472, %v12471
    %v12607 = vpack.c.b16 %v12474, %v12473
    %v12608 = vpack.c.b16 %v12476, %v12475
    %v12609 = vpack.c.b16 %v12478, %v12477
    %v12610 = vpack.c.b16 %v12480, %v12479
    %v12611 = vpack.c.b16 %v12482, %v12481
    %v12612 = vpack.c.b16 %v12484, %v12483
    %12741 = vmatprep.subr.bf16.mxu0 0
    %12742 = vmatpush1.bf16.msra.mxu0 %v12485
    %12743 = vmatprep.subr.bf16.mxu0 0
    %12744 = vmatpush1.bf16.msra.mxu0 %v12486
    %12745 = vmatprep.subr.bf16.mxu0 0
    %12746 = vmatpush1.bf16.msra.mxu0 %v12487
    %12747 = vmatprep.subr.bf16.mxu0 0
    %12748 = vmatpush1.bf16.msra.mxu0 %v12488
    %12749 = vmatprep.subr.bf16.mxu0 0
    %12750 = vmatpush1.bf16.msra.mxu0 %v12489
    %12751 = vmatprep.subr.bf16.mxu0 0
    %12752 = vmatpush1.bf16.msra.mxu0 %v12490
    %12753 = vmatprep.subr.bf16.mxu0 0
    %12754 = vmatpush1.bf16.msra.mxu0 %v12491
    %12755 = vmatprep.subr.bf16.mxu0 0
    %12756 = vmatpush1.bf16.msra.mxu0 %v12492
    %12757 = vmatprep.subr.bf16.mxu0 0
    %12758 = vmatpush1.bf16.msra.mxu0 %v12493
    %12759 = vmatprep.subr.bf16.mxu0 0
    %12760 = vmatpush1.bf16.msra.mxu0 %v12494
    %12761 = vmatprep.subr.bf16.mxu0 0
    %12762 = vmatpush1.bf16.msra.mxu0 %v12495
    %12763 = vmatprep.subr.bf16.mxu0 0
    %12764 = vmatpush1.bf16.msra.mxu0 %v12496
    %12765 = vmatprep.subr.bf16.mxu0 0
    %12766 = vmatpush1.bf16.msra.mxu0 %v12497
    %12767 = vmatprep.subr.bf16.mxu0 0
    %12768 = vmatpush1.bf16.msra.mxu0 %v12498
    %12769 = vmatprep.subr.bf16.mxu0 0
    %12770 = vmatpush1.bf16.msra.mxu0 %v12499
    %12771 = vmatprep.subr.bf16.mxu0 0
    %12772 = vmatpush1.bf16.msra.mxu0 %v12500
    %12773 = vmatprep.mubr.bf16.mxu0 %v11695
    %12774 = vmatmul.mubr.bf16.gmra.mrb[0].mxu0 %v11694
    %v12775 = vpop.f32.mrb[0].mxu0
    %v12776 = vadd.f32 %v11971, %v12775
    %v12777 = vpop.f32.mrb[0].mxu0
    %v12778 = vpop.f32.mrb[0].mxu0
    %v12779 = vpop.f32.mrb[0].mxu0
    %12780 = vdwg.mxu0
    %12781 = vmatprep.subr.bf16.mxu0 0
    %12782 = vmatpush1.bf16.msra.mxu0 %v12501
    %12783 = vmatprep.subr.bf16.mxu0 0
    %12784 = vmatpush1.bf16.msra.mxu0 %v12502
    %12785 = vmatprep.subr.bf16.mxu0 0
    %12786 = vmatpush1.bf16.msra.mxu0 %v12503
    %12787 = vmatprep.subr.bf16.mxu0 0
    %12788 = vmatpush1.bf16.msra.mxu0 %v12504
    %12789 = vmatprep.subr.bf16.mxu0 0
    %12790 = vmatpush1.bf16.msra.mxu0 %v12505
    %12791 = vmatprep.subr.bf16.mxu0 0
    %12792 = vmatpush1.bf16.msra.mxu0 %v12506
    %12793 = vmatprep.subr.bf16.mxu0 0
    %12794 = vmatpush1.bf16.msra.mxu0 %v12507
    %12795 = vmatprep.subr.bf16.mxu0 0
    %12796 = vmatpush1.bf16.msra.mxu0 %v12508
    %12797 = vmatprep.subr.bf16.mxu0 0
    %12798 = vmatpush1.bf16.msra.mxu0 %v12509
    %12799 = vmatprep.subr.bf16.mxu0 0
    %12800 = vmatpush1.bf16.msra.mxu0 %v12510
    %12801 = vmatprep.subr.bf16.mxu0 0
    %12802 = vmatpush1.bf16.msra.mxu0 %v12511
    %12803 = vmatprep.subr.bf16.mxu0 0
    %12804 = vmatpush1.bf16.msra.mxu0 %v12512
    %12805 = vmatprep.subr.bf16.mxu0 0
    %12806 = vmatpush1.bf16.msra.mxu0 %v12513
    %12807 = vmatprep.subr.bf16.mxu0 0
    %12808 = vmatpush1.bf16.msra.mxu0 %v12514
    %12809 = vmatprep.subr.bf16.mxu0 0
    %12810 = vmatpush1.bf16.msra.mxu0 %v12515
    %12811 = vmatprep.subr.bf16.mxu0 0
    %12812 = vmatpush1.bf16.msra.mxu0 %v12516
    %12813 = vmatprep.mubr.bf16.mxu0 %v11697
    %12814 = vmatmul.mubr.bf16.gmra.mrb[0].mxu0 %v11696
    %v12815 = vpop.f32.mrb[0].mxu0
    %v12816 = vadd.f32 %v12776, %v12815
    %v12817 = vpop.f32.mrb[0].mxu0
    %v12818 = vpop.f32.mrb[0].mxu0
    %v12819 = vpop.f32.mrb[0].mxu0
    %12820 = vdwg.mxu0
    %12821 = vmatprep.subr.bf16.mxu0 0
    %12822 = vmatpush1.bf16.msra.mxu0 %v12517
    %12823 = vmatprep.subr.bf16.mxu0 0
    %12824 = vmatpush1.bf16.msra.mxu0 %v12518
    %12825 = vmatprep.subr.bf16.mxu0 0
    %12826 = vmatpush1.bf16.msra.mxu0 %v12519
    %12827 = vmatprep.subr.bf16.mxu0 0
    %12828 = vmatpush1.bf16.msra.mxu0 %v12520
    %12829 = vmatprep.subr.bf16.mxu0 0
    %12830 = vmatpush1.bf16.msra.mxu0 %v12521
    %12831 = vmatprep.subr.bf16.mxu0 0
    %12832 = vmatpush1.bf16.msra.mxu0 %v12522
    %12833 = vmatprep.subr.bf16.mxu0 0
    %12834 = vmatpush1.bf16.msra.mxu0 %v12523
    %12835 = vmatprep.subr.bf16.mxu0 0
    %12836 = vmatpush1.bf16.msra.mxu0 %v12524
    %12837 = vmatprep.subr.bf16.mxu0 0
    %12838 = vmatpush1.bf16.msra.mxu0 %v12525
    %12839 = vmatprep.subr.bf16.mxu0 0
    %12840 = vmatpush1.bf16.msra.mxu0 %v12526
    %12841 = vmatprep.subr.bf16.mxu0 0
    %12842 = vmatpush1.bf16.msra.mxu0 %v12527
    %12843 = vmatprep.subr.bf16.mxu0 0
    %12844 = vmatpush1.bf16.msra.mxu0 %v12528
    %12845 = vmatprep.subr.bf16.mxu0 0
    %12846 = vmatpush1.bf16.msra.mxu0 %v12529
    %12847 = vmatprep.subr.bf16.mxu0 0
    %12848 = vmatpush1.bf16.msra.mxu0 %v12530
    %12849 = vmatprep.subr.bf16.mxu0 0
    %12850 = vmatpush1.bf16.msra.mxu0 %v12531
    %12851 = vmatprep.subr.bf16.mxu0 0
    %12852 = vmatpush1.bf16.msra.mxu0 %v12532
    %12853 = vmatprep.mubr.bf16.mxu0 %v11699
    %12854 = vmatmul.mubr.bf16.gmra.mrb[0].mxu0 %v11698
    %v12855 = vpop.f32.mrb[0].mxu0
    %v12856 = vadd.f32 %v12816, %v12855
    %v12857 = vpop.f32.mrb[0].mxu0
    %v12858 = vpop.f32.mrb[0].mxu0
    %v12859 = vpop.f32.mrb[0].mxu0
    %12860 = vdwg.mxu0
    %12861 = vmatprep.subr.bf16.mxu0 0
    %12862 = vmatpush1.bf16.msra.mxu0 %v12533
    %12863 = vmatprep.subr.bf16.mxu0 0
    %12864 = vmatpush1.bf16.msra.mxu0 %v12534
    %12865 = vmatprep.subr.bf16.mxu0 0
    %12866 = vmatpush1.bf16.msra.mxu0 %v12535
    %12867 = vmatprep.subr.bf16.mxu0 0
    %12868 = vmatpush1.bf16.msra.mxu0 %v12536
    %12869 = vmatprep.subr.bf16.mxu0 0
    %12870 = vmatpush1.bf16.msra.mxu0 %v12537
    %12871 = vmatprep.subr.bf16.mxu0 0
    %12872 = vmatpush1.bf16.msra.mxu0 %v12538
    %12873 = vmatprep.subr.bf16.mxu0 0
    %12874 = vmatpush1.bf16.msra.mxu0 %v12539
    %12875 = vmatprep.subr.bf16.mxu0 0
    %12876 = vmatpush1.bf16.msra.mxu0 %v12540
    %12877 = vmatprep.subr.bf16.mxu0 0
    %12878 = vmatpush1.bf16.msra.mxu0 %v12541
    %12879 = vmatprep.subr.bf16.mxu0 0
    %12880 = vmatpush1.bf16.msra.mxu0 %v12542
    %12881 = vmatprep.subr.bf16.mxu0 0
    %12882 = vmatpush1.bf16.msra.mxu0 %v12543
    %12883 = vmatprep.subr.bf16.mxu0 0
    %12884 = vmatpush1.bf16.msra.mxu0 %v12544
    %12885 = vmatprep.subr.bf16.mxu0 0
    %12886 = vmatpush1.bf16.msra.mxu0 %v12545
    %12887 = vmatprep.subr.bf16.mxu0 0
    %12888 = vmatpush1.bf16.msra.mxu0 %v12546
    %12889 = vmatprep.subr.bf16.mxu0 0
    %12890 = vmatpush1.bf16.msra.mxu0 %v12547
    %12891 = vmatprep.subr.bf16.mxu0 0
    %12892 = vmatpush1.bf16.msra.mxu0 %v12548
    %12893 = vmatprep.mubr.bf16.mxu0 %v11701
    %12894 = vmatmul.mubr.bf16.gmra.mrb[0].mxu0 %v11700
    %v12895 = vpop.f32.mrb[0].mxu0
    %v12896 = vadd.f32 %v12856, %v12895
    %v12897 = vpop.f32.mrb[0].mxu0
    %v12898 = vpop.f32.mrb[0].mxu0
    %v12899 = vpop.f32.mrb[0].mxu0
    %12900 = vdwg.mxu0
    %12901 = vmatprep.subr.bf16.mxu0 0
    %12902 = vmatpush1.bf16.msra.mxu0 %v12549
    %12903 = vmatprep.subr.bf16.mxu0 0
    %12904 = vmatpush1.bf16.msra.mxu0 %v12550
    %12905 = vmatprep.subr.bf16.mxu0 0
    %12906 = vmatpush1.bf16.msra.mxu0 %v12551
    %12907 = vmatprep.subr.bf16.mxu0 0
    %12908 = vmatpush1.bf16.msra.mxu0 %v12552
    %12909 = vmatprep.subr.bf16.mxu0 0
    %12910 = vmatpush1.bf16.msra.mxu0 %v12553
    %12911 = vmatprep.subr.bf16.mxu0 0
    %12912 = vmatpush1.bf16.msra.mxu0 %v12554
    %12913 = vmatprep.subr.bf16.mxu0 0
    %12914 = vmatpush1.bf16.msra.mxu0 %v12555
    %12915 = vmatprep.subr.bf16.mxu0 0
    %12916 = vmatpush1.bf16.msra.mxu0 %v12556
    %12917 = vmatprep.subr.bf16.mxu0 0
    %12918 = vmatpush1.bf16.msra.mxu0 %v12557
    %12919 = vmatprep.subr.bf16.mxu0 0
    %12920 = vmatpush1.bf16.msra.mxu0 %v12558
    %12921 = vmatprep.subr.bf16.mxu0 0
    %12922 = vmatpush1.bf16.msra.mxu0 %v12559
    %12923 = vmatprep.subr.bf16.mxu0 0
    %12924 = vmatpush1.bf16.msra.mxu0 %v12560
    %12925 = vmatprep.subr.bf16.mxu0 0
    %12926 = vmatpush1.bf16.msra.mxu0 %v12561
    %12927 = vmatprep.subr.bf16.mxu0 0
    %12928 = vmatpush1.bf16.msra.mxu0 %v12562
    %12929 = vmatprep.subr.bf16.mxu0 0
    %12930 = vmatpush1.bf16.msra.mxu0 %v12563
    %12931 = vmatprep.subr.bf16.mxu0 0
    %12932 = vmatpush1.bf16.msra.mxu0 %v12564
    %12933 = vmatprep.mubr.bf16.mxu0 %v11703
    %12934 = vmatmul.mubr.bf16.gmra.mrb[0].mxu0 %v11702
    %v12935 = vpop.f32.mrb[0].mxu0
    %v12936 = vadd.f32 %v12896, %v12935
    %v12937 = vpop.f32.mrb[0].mxu0
    %v12938 = vpop.f32.mrb[0].mxu0
    %v12939 = vpop.f32.mrb[0].mxu0
    %12940 = vdwg.mxu0
    %12941 = vmatprep.subr.bf16.mxu0 0
    %12942 = vmatpush1.bf16.msra.mxu0 %v12565
    %12943 = vmatprep.subr.bf16.mxu0 0
    %12944 = vmatpush1.bf16.msra.mxu0 %v12566
    %12945 = vmatprep.subr.bf16.mxu0 0
    %12946 = vmatpush1.bf16.msra.mxu0 %v12567
    %12947 = vmatprep.subr.bf16.mxu0 0
    %12948 = vmatpush1.bf16.msra.mxu0 %v12568
    %12949 = vmatprep.subr.bf16.mxu0 0
    %12950 = vmatpush1.bf16.msra.mxu0 %v12569
    %12951 = vmatprep.subr.bf16.mxu0 0
    %12952 = vmatpush1.bf16.msra.mxu0 %v12570
    %12953 = vmatprep.subr.bf16.mxu0 0
    %12954 = vmatpush1.bf16.msra.mxu0 %v12571
    %12955 = vmatprep.subr.bf16.mxu0 0
    %12956 = vmatpush1.bf16.msra.mxu0 %v12572
    %12957 = vmatprep.subr.bf16.mxu0 0
    %12958 = vmatpush1.bf16.msra.mxu0 %v12573
    %12959 = vmatprep.subr.bf16.mxu0 0
    %12960 = vmatpush1.bf16.msra.mxu0 %v12574
    %12961 = vmatprep.subr.bf16.mxu0 0
    %12962 = vmatpush1.bf16.msra.mxu0 %v12575
    %12963 = vmatprep.subr.bf16.mxu0 0
    %12964 = vmatpush1.bf16.msra.mxu0 %v12576
    %12965 = vmatprep.subr.bf16.mxu0 0
    %12966 = vmatpush1.bf16.msra.mxu0 %v12577
    %12967 = vmatprep.subr.bf16.mxu0 0
    %12968 = vmatpush1.bf16.msra.mxu0 %v12578
    %12969 = vmatprep.subr.bf16.mxu0 0
    %12970 = vmatpush1.bf16.msra.mxu0 %v12579
    %12971 = vmatprep.subr.bf16.mxu0 0
    %12972 = vmatpush1.bf16.msra.mxu0 %v12580
    %12973 = vmatprep.mubr.bf16.mxu0 %v11705
    %12974 = vmatmul.mubr.bf16.gmra.mrb[0].mxu0 %v11704
    %v12975 = vpop.f32.mrb[0].mxu0
    %v12976 = vadd.f32 %v12936, %v12975
    %v12977 = vpop.f32.mrb[0].mxu0
    %v12978 = vpop.f32.mrb[0].mxu0
    %v12979 = vpop.f32.mrb[0].mxu0
    %12980 = vdwg.mxu0
    %12981 = vmatprep.subr.bf16.mxu0 0
    %12982 = vmatpush1.bf16.msra.mxu0 %v12581
    %12983 = vmatprep.subr.bf16.mxu0 0
    %12984 = vmatpush1.bf16.msra.mxu0 %v12582
    %12985 = vmatprep.subr.bf16.mxu0 0
    %12986 = vmatpush1.bf16.msra.mxu0 %v12583
    %12987 = vmatprep.subr.bf16.mxu0 0
    %12988 = vmatpush1.bf16.msra.mxu0 %v12584
    %12989 = vmatprep.subr.bf16.mxu0 0
    %12990 = vmatpush1.bf16.msra.mxu0 %v12585
    %12991 = vmatprep.subr.bf16.mxu0 0
    %12992 = vmatpush1.bf16.msra.mxu0 %v12586
    %12993 = vmatprep.subr.bf16.mxu0 0
    %12994 = vmatpush1.bf16.msra.mxu0 %v12587
    %12995 = vmatprep.subr.bf16.mxu0 0
    %12996 = vmatpush1.bf16.msra.mxu0 %v12588
    %12997 = vmatprep.subr.bf16.mxu0 0
    %12998 = vmatpush1.bf16.msra.mxu0 %v12589
    %12999 = vmatprep.subr.bf16.mxu0 0
    %13000 = vmatpush1.bf16.msra.mxu0 %v12590
    %13001 = vmatprep.subr.bf16.mxu0 0
    %13002 = vmatpush1.bf16.msra.mxu0 %v12591
    %13003 = vmatprep.subr.bf16.mxu0 0
    %13004 = vmatpush1.bf16.msra.mxu0 %v12592
    %13005 = vmatprep.subr.bf16.mxu0 0
    %13006 = vmatpush1.bf16.msra.mxu0 %v12593
    %13007 = vmatprep.subr.bf16.mxu0 0
    %13008 = vmatpush1.bf16.msra.mxu0 %v12594
    %13009 = vmatprep.subr.bf16.mxu0 0
    %13010 = vmatpush1.bf16.msra.mxu0 %v12595
    %13011 = vmatprep.subr.bf16.mxu0 0
    %13012 = vmatpush1.bf16.msra.mxu0 %v12596
    %13013 = vmatprep.mubr.bf16.mxu0 %v11707
    %13014 = vmatmul.mubr.bf16.gmra.mrb[0].mxu0 %v11706
    %v13015 = vpop.f32.mrb[0].mxu0
    %v13016 = vadd.f32 %v12976, %v13015
    %v13017 = vpop.f32.mrb[0].mxu0
    %v13018 = vpop.f32.mrb[0].mxu0
    %v13019 = vpop.f32.mrb[0].mxu0
    %13020 = vdwg.mxu0
    %13021 = vmatprep.subr.bf16.mxu0 0
    %13022 = vmatpush1.bf16.msra.mxu0 %v12597
    %13023 = vmatprep.subr.bf16.mxu0 0
    %13024 = vmatpush1.bf16.msra.mxu0 %v12598
    %13025 = vmatprep.subr.bf16.mxu0 0
    %13026 = vmatpush1.bf16.msra.mxu0 %v12599
    %13027 = vmatprep.subr.bf16.mxu0 0
    %13028 = vmatpush1.bf16.msra.mxu0 %v12600
    %13029 = vmatprep.subr.bf16.mxu0 0
    %13030 = vmatpush1.bf16.msra.mxu0 %v12601
    %13031 = vmatprep.subr.bf16.mxu0 0
    %13032 = vmatpush1.bf16.msra.mxu0 %v12602
    %13033 = vmatprep.subr.bf16.mxu0 0
    %13034 = vmatpush1.bf16.msra.mxu0 %v12603
    %13035 = vmatprep.subr.bf16.mxu0 0
    %13036 = vmatpush1.bf16.msra.mxu0 %v12604
    %13037 = vmatprep.subr.bf16.mxu0 0
    %13038 = vmatpush1.bf16.msra.mxu0 %v12605
    %13039 = vmatprep.subr.bf16.mxu0 0
    %13040 = vmatpush1.bf16.msra.mxu0 %v12606
    %13041 = vmatprep.subr.bf16.mxu0 0
    %13042 = vmatpush1.bf16.msra.mxu0 %v12607
    %13043 = vmatprep.subr.bf16.mxu0 0
    %13044 = vmatpush1.bf16.msra.mxu0 %v12608
    %13045 = vmatprep.subr.bf16.mxu0 0
    %13046 = vmatpush1.bf16.msra.mxu0 %v12609
    %13047 = vmatprep.subr.bf16.mxu0 0
    %13048 = vmatpush1.bf16.msra.mxu0 %v12610
    %13049 = vmatprep.subr.bf16.mxu0 0
    %13050 = vmatpush1.bf16.msra.mxu0 %v12611
    %13051 = vmatprep.subr.bf16.mxu0 0
    %13052 = vmatpush1.bf16.msra.mxu0 %v12612
    %13053 = vmatprep.mubr.bf16.mxu0 %v11709
    %13054 = vmatmul.mubr.bf16.gmra.mrb[0].mxu0 %v11708
    %v13055 = vpop.f32.mrb[0].mxu0
    %v13056 = vadd.f32 %v13016, %v13055
    %v13057 = vpop.f32.mrb[0].mxu0
    %v13058 = vpop.f32.mrb[0].mxu0
    %v13059 = vpop.f32.mrb[0].mxu0
    %13060 = vdwg.mxu0
    %13061 = vst [vmem:[#allocation19] sm:$0xff] %v13056
    // Predicated region
    $region86: #{tpu_custom_call.1} parent=1 // pred_check
      _
    $region87: #{tpu_custom_call.1} parent=1 // pred_check_branch
      %13063 = sbr.rel (0) target = $region89
    $region88: #{tpu_custom_call.1} parent=1 // pred_region
      %s13065 = ssub.s32 128, 128
      %13066 = vsyncadd [#allocation4], %s13065
      %s13068 = sshll.u32 [#allocation19], 4
      %s13069 = int_to_ptr.vmem [resolvable:$true] %s13068
      %13071 = dma.vmem_to_hbm [thread:$0]  %s13069, 128, %s11, [#allocation4]
    $region89: #{tpu_custom_call.1} parent=1 // pred_fallthru
      _
    // Predicated region
    $region90: #{tpu_custom_call.1} parent=1 // pred_check
      _
    $region91: #{tpu_custom_call.1} parent=1 // pred_check_branch
      %13073 = sbr.rel (0) target = $region93
    $region92: #{tpu_custom_call.1} parent=1 // pred_region
      %13074 = dma.done [#allocation4], 128
    $region93: #{tpu_custom_call.1} parent=1 // pred_fallthru
      _
    %13075 = vsyncpa [#allocation3], 1
    %13076 = vsyncpa [#allocation6], 1
    %13077 = vsyncpa [#allocation9], 1
    %13078 = vsyncpa [#allocation12], 1
    %13079 = vsyncpa [#allocation15], 1
    %13080 = vsyncpa [#allocation18], 1
    %13081 = vsyncpa [#allocation4], 1

</llo_original>
